<compile_context>
chip_gen: v5e
topology: v5e:2x2
jax: 0.10.0
libtpu: 0.0.40
codegen_flags: <defaults>
</compile_context>

<pallas_src>
import functools

import numpy as np
import jax
import jax.numpy as jnp
from jax import lax
from jax.experimental import pallas as pl
from jax.experimental.pallas import tpu as pltpu


# (Cin, Cout) per layer.
CONV_CFG = [(3, 32), (32, 32), (32, 32), (32, 32), (32, 32)]   # k=5, s=2, p=2, ReLU
CONVT_CFG = [(32, 8), (8, 8), (8, 8), (8, 8), (8, 2)]          # k=4, s=2, p=1


# ----------------------------------------------------------------------------
# One-time weight preparation (numpy, hoisted out of the traced forward)
# ----------------------------------------------------------------------------
def _prep_conv(wt, bias, H, W, stride, pad):
    """PyTorch Conv2d (OIHW weight) -> (S, T, bias_row) for the fused kernel."""
    Cout, Cin, K, _ = wt.shape
    Ho = (H + 2 * pad - K) // stride + 1
    Wo = (W + 2 * pad - K) // stride + 1
    # S[kh, ho, h] = 1  iff  h == stride*ho - pad + kh  (in range)
    S = np.zeros((K, Ho, H), np.float32)
    for kh in range(K):
        for ho in range(Ho):
            h = stride * ho - pad + kh
            if 0 <= h < H:
                S[kh, ho, h] = 1.0
    # T[kh, w*Cin+ci, wo*Cout+co] = wt[co, ci, kh, kw]  with kw = w - stride*wo + pad
    T = np.zeros((K, W * Cin, Wo * Cout), np.float32)
    for kh in range(K):
        for wo in range(Wo):
            for kw in range(K):
                w_in = stride * wo - pad + kw
                if 0 <= w_in < W:
                    T[kh, w_in * Cin:(w_in + 1) * Cin,
                      wo * Cout:(wo + 1) * Cout] = wt[:, :, kh, kw].T
    bias_row = np.tile(bias, Wo)[None, :].astype(np.float32)     # (1, Wo*Cout)
    return S, T, bias_row, Ho, Wo


def _prep_convt(wt, bias, Hi, Wi, stride, pad):
    """PyTorch ConvTranspose2d (IOHW weight) -> (S, T, bias_row), gather form."""
    Cin, Cout, K, _ = wt.shape
    Ho = (Hi - 1) * stride - 2 * pad + K
    Wo = (Wi - 1) * stride - 2 * pad + K
    # S[kh, oh, ih] = 1  iff  oh == stride*ih - pad + kh  (ih in range)
    S = np.zeros((K, Ho, Hi), np.float32)
    for kh in range(K):
        for oh in range(Ho):
            num = oh + pad - kh
            if num % stride == 0:
                ih = num // stride
                if 0 <= ih < Hi:
                    S[kh, oh, ih] = 1.0
    # T[kh, iw*Cin+ci, ow*Cout+co] = wt[ci, co, kh, kw]  with ow = stride*iw - pad + kw
    T = np.zeros((K, Wi * Cin, Wo * Cout), np.float32)
    for kh in range(K):
        for iw in range(Wi):
            for kw in range(K):
                ow = stride * iw - pad + kw
                if 0 <= ow < Wo:
                    T[kh, iw * Cin:(iw + 1) * Cin,
                      ow * Cout:(ow + 1) * Cout] = wt[:, :, kh, kw]
    bias_row = np.tile(bias, Wo)[None, :].astype(np.float32)     # (1, Wo*Cout)
    return S, T, bias_row, Ho, Wo


def prepare_network(params, H=32, W=32):
    """Precompute all fused-kernel weight matrices (done once, outside jit)."""
    weights = []          # flat: [S1, T1, b1, S2, T2, b2, ...]
    meta = []             # per layer: (K, Ho, Wo*Cout, relu)
    h, w = H, W
    for i, (_, co) in enumerate(CONV_CFG):
        wt = np.asarray(params[f"conv{i+1}_w"], np.float32)
        bs = np.asarray(params[f"conv{i+1}_b"], np.float32)
        S, T, b, h, w = _prep_conv(wt, bs, h, w, stride=2, pad=2)
        weights += [jnp.asarray(S), jnp.asarray(T), jnp.asarray(b)]
        meta.append((5, h, w * co, True))
    for i, (_, co) in enumerate(CONVT_CFG):
        wt = np.asarray(params[f"convt{i+1}_w"], np.float32)
        bs = np.asarray(params[f"convt{i+1}_b"], np.float32)
        S, T, b, h, w = _prep_convt(wt, bs, h, w, stride=2, pad=1)
        weights += [jnp.asarray(S), jnp.asarray(T), jnp.asarray(b)]
        meta.append((4, h, w * co, False))
    c_final = CONVT_CFG[-1][1]
    return weights, tuple(meta), (h, w, c_final)


# ----------------------------------------------------------------------------
# Fused Pallas kernel: the whole network for one sample per grid step
# ----------------------------------------------------------------------------
def _select_rows(s_kh, x):
    """A = s_kh @ x ; broadcast fallback when the contraction dim is tiny."""
    h = x.shape[0]
    if h <= 2:
        acc = s_kh[:, 0:1] * x[0:1, :]
        for r in range(1, h):
            acc = acc + s_kh[:, r:r + 1] * x[r:r + 1, :]
        return acc
    return jnp.dot(s_kh, x, preferred_element_type=jnp.float32)


def _make_fused_kernel(meta):
    n_layers = len(meta)

    def kernel(*refs):
        x_ref = refs[0]
        o_ref = refs[1 + 3 * n_layers]
        x = x_ref[0, :, :]                           # (H0, W0*C0), one sample
        for li, (k, ho, woc, relu) in enumerate(meta):
            s_ref = refs[1 + 3 * li]                 # (K, Ho, H)
            t_ref = refs[2 + 3 * li]                 # (K, W*Cin, Wo*Cout)
            b_ref = refs[3 + 3 * li]                 # (1, Wo*Cout)
            acc = jnp.zeros((ho, woc), jnp.float32)
            for kh in range(k):
                a = _select_rows(s_ref[kh], x)                       # (Ho, W*Cin)
                acc = acc + jnp.dot(a, t_ref[kh],
                                    preferred_element_type=jnp.float32)
            acc = acc + b_ref[...]
            if relu:
                acc = jnp.maximum(acc, 0.0)
            x = acc
        o_ref[0, :, :] = x.astype(o_ref.dtype)

    return kernel


def _const_map(nd, n):
    return (0,) * nd


def fused_forward(x_nchw, weights, meta, out_shape_info):
    """Entire network in a single pallas_call; grid over the batch dimension."""
    N, C, H, W = x_nchw.shape
    Hf, Wf, Cf = out_shape_info
    x = jnp.transpose(x_nchw, (0, 2, 3, 1)).reshape(N, H, W * C)   # flat-row NHWC

    in_specs = [pl.BlockSpec((1, H, W * C), lambda n: (n, 0, 0))]
    for wgt in weights:
        in_specs.append(pl.BlockSpec(wgt.shape,
                                     functools.partial(_const_map, wgt.ndim)))

    out = pl.pallas_call(
        _make_fused_kernel(tuple(meta)),
        out_shape=jax.ShapeDtypeStruct((N, Hf, Wf * Cf), jnp.float32),
        grid=(N,),
        in_specs=in_specs,
        out_specs=pl.BlockSpec((1, Hf, Wf * Cf), lambda n: (n, 0, 0)),
        compiler_params=pltpu.CompilerParams(
            dimension_semantics=("parallel",)),
    )(x, *weights)

    y = out.reshape(N, Hf, Wf, Cf)
    return jnp.transpose(y, (0, 3, 1, 2))            # back to NCHW


# ----------------------------------------------------------------------------
# Parameter init (matches the PyTorch module's layer shapes)
# ----------------------------------------------------------------------------
def init_params(key):
    params = {}

    def conv_w(key, cout, cin, k):
        fan_in = cin * k * k
        return jax.random.normal(key, (cout, cin, k, k), jnp.float32) * jnp.sqrt(2.0 / fan_in)

    def convt_w(key, cin, cout, k):
        fan_in = cin * k * k
        return jax.random.normal(key, (cin, cout, k, k), jnp.float32) * jnp.sqrt(2.0 / fan_in)

    keys = jax.random.split(key, 20)
    conv_shapes = [(32, 3), (32, 32), (32, 32), (32, 32), (32, 32)]
    for i, (co, ci) in enumerate(conv_shapes):
        params[f"conv{i+1}_w"] = conv_w(keys[2 * i], co, ci, 5)
        params[f"conv{i+1}_b"] = jax.random.normal(keys[2 * i + 1], (co,), jnp.float32) * 0.01
    convt_shapes = [(32, 8), (8, 8), (8, 8), (8, 8), (8, 2)]
    for i, (ci, co) in enumerate(convt_shapes):
        params[f"convt{i+1}_w"] = convt_w(keys[10 + 2 * i], ci, co, 4)
        params[f"convt{i+1}_b"] = jax.random.normal(keys[10 + 2 * i + 1], (co,), jnp.float32) * 0.01
    return params


# ----------------------------------------------------------------------------
# Pure-XLA reference (for correctness check)
# ----------------------------------------------------------------------------
def _ref_conv(x, w, b, stride, pad):
    y = lax.conv_general_dilated(x, w, (stride, stride), [(pad, pad), (pad, pad)],
                                 dimension_numbers=("NCHW", "OIHW", "NCHW"))
    return y + b[None, :, None, None]


def _ref_convt(x, w_iohw, b, stride, pad):
    K = w_iohw.shape[2]
    w_eq = jnp.transpose(jnp.flip(w_iohw, axis=(2, 3)), (1, 0, 2, 3))
    y = lax.conv_general_dilated(x, w_eq, (1, 1),
                                 [(K - 1 - pad, K - 1 - pad)] * 2,
                                 lhs_dilation=(stride, stride),
                                 dimension_numbers=("NCHW", "OIHW", "NCHW"))
    return y + b[None, :, None, None]


def network_reference(params, x):
    for i in range(1, 6):
        x = jnp.maximum(_ref_conv(x, params[f"conv{i}_w"], params[f"conv{i}_b"], 2, 2), 0.0)
    for i in range(1, 6):
        x = _ref_convt(x, params[f"convt{i}_w"], params[f"convt{i}_b"], 2, 1)
    return x


if __name__ == "__main__":
    key = jax.random.PRNGKey(0)
    pkey, xkey = jax.random.split(key)
    params = init_params(pkey)

    # N=2, C=3, H=W=32 (5x stride-2 down, then 5x stride-2 up).
    x = jax.random.normal(xkey, (2, 3, 32, 32), jnp.float32)

    # Weight prep hoisted out of the forward: done exactly once.
    weights, meta, out_info = prepare_network(params, H=32, W=32)
    fwd = jax.jit(functools.partial(fused_forward, meta=meta,
                                    out_shape_info=out_info))

    out = jax.block_until_ready(fwd(x, weights))
    assert out.shape == (2, 2, 32, 32), out.shape

    ref = jax.block_until_ready(network_reference(params, x))
    np.testing.assert_allclose(np.asarray(out), np.asarray(ref),
                               rtol=2e-3, atol=2e-3)

    print("KERNEL_OK")
</pallas_src>

<mosaic_0001>
module attributes {stable_mosaic.version = 11 : i64} {
  func.func @kernel(%arg0: i32, %arg1: memref<1x32x96xf32, #tpu.memory_space<vmem>>, %arg2: memref<5x16x32xf32, #tpu.memory_space<vmem>>, %arg3: memref<5x96x512xf32, #tpu.memory_space<vmem>>, %arg4: memref<1x512xf32, #tpu.memory_space<vmem>>, %arg5: memref<5x8x16xf32, #tpu.memory_space<vmem>>, %arg6: memref<5x512x256xf32, #tpu.memory_space<vmem>>, %arg7: memref<1x256xf32, #tpu.memory_space<vmem>>, %arg8: memref<5x4x8xf32, #tpu.memory_space<vmem>>, %arg9: memref<5x256x128xf32, #tpu.memory_space<vmem>>, %arg10: memref<1x128xf32, #tpu.memory_space<vmem>>, %arg11: memref<5x2x4xf32, #tpu.memory_space<vmem>>, %arg12: memref<5x128x64xf32, #tpu.memory_space<vmem>>, %arg13: memref<1x64xf32, #tpu.memory_space<vmem>>, %arg14: memref<5x1x2xf32, #tpu.memory_space<vmem>>, %arg15: memref<5x64x32xf32, #tpu.memory_space<vmem>>, %arg16: memref<1x32xf32, #tpu.memory_space<vmem>>, %arg17: memref<4x2x1xf32, #tpu.memory_space<vmem>>, %arg18: memref<4x32x16xf32, #tpu.memory_space<vmem>>, %arg19: memref<1x16xf32, #tpu.memory_space<vmem>>, %arg20: memref<4x4x2xf32, #tpu.memory_space<vmem>>, %arg21: memref<4x16x32xf32, #tpu.memory_space<vmem>>, %arg22: memref<1x32xf32, #tpu.memory_space<vmem>>, %arg23: memref<4x8x4xf32, #tpu.memory_space<vmem>>, %arg24: memref<4x32x64xf32, #tpu.memory_space<vmem>>, %arg25: memref<1x64xf32, #tpu.memory_space<vmem>>, %arg26: memref<4x16x8xf32, #tpu.memory_space<vmem>>, %arg27: memref<4x64x128xf32, #tpu.memory_space<vmem>>, %arg28: memref<1x128xf32, #tpu.memory_space<vmem>>, %arg29: memref<4x32x16xf32, #tpu.memory_space<vmem>>, %arg30: memref<4x128x64xf32, #tpu.memory_space<vmem>>, %arg31: memref<1x64xf32, #tpu.memory_space<vmem>>, %arg32: memref<1x32x64xf32, #tpu.memory_space<vmem>>) attributes {dimension_semantics = [#tpu.dimension_semantics<parallel>], iteration_bounds = array<i64: 2>, scalar_prefetch = 0 : i64, scratch_operands = 0 : i64, tpu.core_type = #tpu.core_type<tc>, window_params = [{transform_indices = @transform_0, window_bounds = array<i64: 1, 32, 96>}, {pipeline_mode = #tpu.pipeline_mode<synchronous>, transform_indices = @transform_1, window_bounds = array<i64: 5, 16, 32>}, {pipeline_mode = #tpu.pipeline_mode<synchronous>, transform_indices = @transform_2, window_bounds = array<i64: 5, 96, 512>}, {pipeline_mode = #tpu.pipeline_mode<synchronous>, transform_indices = @transform_3, window_bounds = array<i64: 1, 512>}, {pipeline_mode = #tpu.pipeline_mode<synchronous>, transform_indices = @transform_4, window_bounds = array<i64: 5, 8, 16>}, {pipeline_mode = #tpu.pipeline_mode<synchronous>, transform_indices = @transform_5, window_bounds = array<i64: 5, 512, 256>}, {pipeline_mode = #tpu.pipeline_mode<synchronous>, transform_indices = @transform_6, window_bounds = array<i64: 1, 256>}, {pipeline_mode = #tpu.pipeline_mode<synchronous>, transform_indices = @transform_7, window_bounds = array<i64: 5, 4, 8>}, {pipeline_mode = #tpu.pipeline_mode<synchronous>, transform_indices = @transform_8, window_bounds = array<i64: 5, 256, 128>}, {pipeline_mode = #tpu.pipeline_mode<synchronous>, transform_indices = @transform_9, window_bounds = array<i64: 1, 128>}, {pipeline_mode = #tpu.pipeline_mode<synchronous>, transform_indices = @transform_10, window_bounds = array<i64: 5, 2, 4>}, {pipeline_mode = #tpu.pipeline_mode<synchronous>, transform_indices = @transform_11, window_bounds = array<i64: 5, 128, 64>}, {pipeline_mode = #tpu.pipeline_mode<synchronous>, transform_indices = @transform_12, window_bounds = array<i64: 1, 64>}, {pipeline_mode = #tpu.pipeline_mode<synchronous>, transform_indices = @transform_13, window_bounds = array<i64: 5, 1, 2>}, {pipeline_mode = #tpu.pipeline_mode<synchronous>, transform_indices = @transform_14, window_bounds = array<i64: 5, 64, 32>}, {pipeline_mode = #tpu.pipeline_mode<synchronous>, transform_indices = @transform_15, window_bounds = array<i64: 1, 32>}, {pipeline_mode = #tpu.pipeline_mode<synchronous>, transform_indices = @transform_16, window_bounds = array<i64: 4, 2, 1>}, {pipeline_mode = #tpu.pipeline_mode<synchronous>, transform_indices = @transform_17, window_bounds = array<i64: 4, 32, 16>}, {pipeline_mode = #tpu.pipeline_mode<synchronous>, transform_indices = @transform_18, window_bounds = array<i64: 1, 16>}, {pipeline_mode = #tpu.pipeline_mode<synchronous>, transform_indices = @transform_19, window_bounds = array<i64: 4, 4, 2>}, {pipeline_mode = #tpu.pipeline_mode<synchronous>, transform_indices = @transform_20, window_bounds = array<i64: 4, 16, 32>}, {pipeline_mode = #tpu.pipeline_mode<synchronous>, transform_indices = @transform_21, window_bounds = array<i64: 1, 32>}, {pipeline_mode = #tpu.pipeline_mode<synchronous>, transform_indices = @transform_22, window_bounds = array<i64: 4, 8, 4>}, {pipeline_mode = #tpu.pipeline_mode<synchronous>, transform_indices = @transform_23, window_bounds = array<i64: 4, 32, 64>}, {pipeline_mode = #tpu.pipeline_mode<synchronous>, transform_indices = @transform_24, window_bounds = array<i64: 1, 64>}, {pipeline_mode = #tpu.pipeline_mode<synchronous>, transform_indices = @transform_25, window_bounds = array<i64: 4, 16, 8>}, {pipeline_mode = #tpu.pipeline_mode<synchronous>, transform_indices = @transform_26, window_bounds = array<i64: 4, 64, 128>}, {pipeline_mode = #tpu.pipeline_mode<synchronous>, transform_indices = @transform_27, window_bounds = array<i64: 1, 128>}, {pipeline_mode = #tpu.pipeline_mode<synchronous>, transform_indices = @transform_28, window_bounds = array<i64: 4, 32, 16>}, {pipeline_mode = #tpu.pipeline_mode<synchronous>, transform_indices = @transform_29, window_bounds = array<i64: 4, 128, 64>}, {pipeline_mode = #tpu.pipeline_mode<synchronous>, transform_indices = @transform_30, window_bounds = array<i64: 1, 64>}, {transform_indices = @transform_31, window_bounds = array<i64: 1, 32, 64>}]} {
    %c0 = arith.constant 0 : index
    %c0_0 = arith.constant 0 : index
    %c0_1 = arith.constant 0 : index
    %0 = vector.load %arg1[%c0, %c0_0, %c0_1] : memref<1x32x96xf32, #tpu.memory_space<vmem>>, vector<1x32x96xf32>
    %1 = vector.shape_cast %0 : vector<1x32x96xf32> to vector<32x96xf32>
    %cst = arith.constant 0.000000e+00 : f32
    %2 = vector.broadcast %cst : f32 to vector<16x512xf32>
    %c0_2 = arith.constant 0 : index
    %c0_3 = arith.constant 0 : index
    %c0_4 = arith.constant 0 : index
    %3 = vector.load %arg2[%c0_2, %c0_3, %c0_4] : memref<5x16x32xf32, #tpu.memory_space<vmem>>, vector<1x16x32xf32>
    %4 = vector.shape_cast %3 : vector<1x16x32xf32> to vector<16x32xf32>
    %cst_5 = arith.constant dense<0.000000e+00> : vector<16x96xf32>
    %5 = tpu.matmul %4, %1, %cst_5 {dimension_numbers = #tpu.dot_dimension_numbers<[1], [0], [0], [1], [0, 0, 1, 1], [], []>} : vector<16x32xf32>, vector<32x96xf32>, vector<16x96xf32> -> vector<16x96xf32>
    %c0_6 = arith.constant 0 : index
    %c0_7 = arith.constant 0 : index
    %c0_8 = arith.constant 0 : index
    %6 = vector.load %arg3[%c0_6, %c0_7, %c0_8] : memref<5x96x512xf32, #tpu.memory_space<vmem>>, vector<1x96x512xf32>
    %7 = vector.shape_cast %6 : vector<1x96x512xf32> to vector<96x512xf32>
    %cst_9 = arith.constant dense<0.000000e+00> : vector<16x512xf32>
    %8 = tpu.matmul %5, %7, %cst_9 {dimension_numbers = #tpu.dot_dimension_numbers<[1], [0], [0], [1], [0, 0, 1, 1], [], []>} : vector<16x96xf32>, vector<96x512xf32>, vector<16x512xf32> -> vector<16x512xf32>
    %9 = arith.addf %2, %8 : vector<16x512xf32>
    %c1 = arith.constant 1 : index
    %c0_10 = arith.constant 0 : index
    %c0_11 = arith.constant 0 : index
    %10 = vector.load %arg2[%c1, %c0_10, %c0_11] : memref<5x16x32xf32, #tpu.memory_space<vmem>>, vector<1x16x32xf32>
    %11 = vector.shape_cast %10 : vector<1x16x32xf32> to vector<16x32xf32>
    %cst_12 = arith.constant dense<0.000000e+00> : vector<16x96xf32>
    %12 = tpu.matmul %11, %1, %cst_12 {dimension_numbers = #tpu.dot_dimension_numbers<[1], [0], [0], [1], [0, 0, 1, 1], [], []>} : vector<16x32xf32>, vector<32x96xf32>, vector<16x96xf32> -> vector<16x96xf32>
    %c1_13 = arith.constant 1 : index
    %c0_14 = arith.constant 0 : index
    %c0_15 = arith.constant 0 : index
    %13 = vector.load %arg3[%c1_13, %c0_14, %c0_15] : memref<5x96x512xf32, #tpu.memory_space<vmem>>, vector<1x96x512xf32>
    %14 = vector.shape_cast %13 : vector<1x96x512xf32> to vector<96x512xf32>
    %cst_16 = arith.constant dense<0.000000e+00> : vector<16x512xf32>
    %15 = tpu.matmul %12, %14, %cst_16 {dimension_numbers = #tpu.dot_dimension_numbers<[1], [0], [0], [1], [0, 0, 1, 1], [], []>} : vector<16x96xf32>, vector<96x512xf32>, vector<16x512xf32> -> vector<16x512xf32>
    %16 = arith.addf %9, %15 : vector<16x512xf32>
    %c2 = arith.constant 2 : index
    %c0_17 = arith.constant 0 : index
    %c0_18 = arith.constant 0 : index
    %17 = vector.load %arg2[%c2, %c0_17, %c0_18] : memref<5x16x32xf32, #tpu.memory_space<vmem>>, vector<1x16x32xf32>
    %18 = vector.shape_cast %17 : vector<1x16x32xf32> to vector<16x32xf32>
    %cst_19 = arith.constant dense<0.000000e+00> : vector<16x96xf32>
    %19 = tpu.matmul %18, %1, %cst_19 {dimension_numbers = #tpu.dot_dimension_numbers<[1], [0], [0], [1], [0, 0, 1, 1], [], []>} : vector<16x32xf32>, vector<32x96xf32>, vector<16x96xf32> -> vector<16x96xf32>
    %c2_20 = arith.constant 2 : index
    %c0_21 = arith.constant 0 : index
    %c0_22 = arith.constant 0 : index
    %20 = vector.load %arg3[%c2_20, %c0_21, %c0_22] : memref<5x96x512xf32, #tpu.memory_space<vmem>>, vector<1x96x512xf32>
    %21 = vector.shape_cast %20 : vector<1x96x512xf32> to vector<96x512xf32>
    %cst_23 = arith.constant dense<0.000000e+00> : vector<16x512xf32>
    %22 = tpu.matmul %19, %21, %cst_23 {dimension_numbers = #tpu.dot_dimension_numbers<[1], [0], [0], [1], [0, 0, 1, 1], [], []>} : vector<16x96xf32>, vector<96x512xf32>, vector<16x512xf32> -> vector<16x512xf32>
    %23 = arith.addf %16, %22 : vector<16x512xf32>
    %c3 = arith.constant 3 : index
    %c0_24 = arith.constant 0 : index
    %c0_25 = arith.constant 0 : index
    %24 = vector.load %arg2[%c3, %c0_24, %c0_25] : memref<5x16x32xf32, #tpu.memory_space<vmem>>, vector<1x16x32xf32>
    %25 = vector.shape_cast %24 : vector<1x16x32xf32> to vector<16x32xf32>
    %cst_26 = arith.constant dense<0.000000e+00> : vector<16x96xf32>
    %26 = tpu.matmul %25, %1, %cst_26 {dimension_numbers = #tpu.dot_dimension_numbers<[1], [0], [0], [1], [0, 0, 1, 1], [], []>} : vector<16x32xf32>, vector<32x96xf32>, vector<16x96xf32> -> vector<16x96xf32>
    %c3_27 = arith.constant 3 : index
    %c0_28 = arith.constant 0 : index
    %c0_29 = arith.constant 0 : index
    %27 = vector.load %arg3[%c3_27, %c0_28, %c0_29] : memref<5x96x512xf32, #tpu.memory_space<vmem>>, vector<1x96x512xf32>
    %28 = vector.shape_cast %27 : vector<1x96x512xf32> to vector<96x512xf32>
    %cst_30 = arith.constant dense<0.000000e+00> : vector<16x512xf32>
    %29 = tpu.matmul %26, %28, %cst_30 {dimension_numbers = #tpu.dot_dimension_numbers<[1], [0], [0], [1], [0, 0, 1, 1], [], []>} : vector<16x96xf32>, vector<96x512xf32>, vector<16x512xf32> -> vector<16x512xf32>
    %30 = arith.addf %23, %29 : vector<16x512xf32>
    %c4 = arith.constant 4 : index
    %c0_31 = arith.constant 0 : index
    %c0_32 = arith.constant 0 : index
    %31 = vector.load %arg2[%c4, %c0_31, %c0_32] : memref<5x16x32xf32, #tpu.memory_space<vmem>>, vector<1x16x32xf32>
    %32 = vector.shape_cast %31 : vector<1x16x32xf32> to vector<16x32xf32>
    %cst_33 = arith.constant dense<0.000000e+00> : vector<16x96xf32>
    %33 = tpu.matmul %32, %1, %cst_33 {dimension_numbers = #tpu.dot_dimension_numbers<[1], [0], [0], [1], [0, 0, 1, 1], [], []>} : vector<16x32xf32>, vector<32x96xf32>, vector<16x96xf32> -> vector<16x96xf32>
    %c4_34 = arith.constant 4 : index
    %c0_35 = arith.constant 0 : index
    %c0_36 = arith.constant 0 : index
    %34 = vector.load %arg3[%c4_34, %c0_35, %c0_36] : memref<5x96x512xf32, #tpu.memory_space<vmem>>, vector<1x96x512xf32>
    %35 = vector.shape_cast %34 : vector<1x96x512xf32> to vector<96x512xf32>
    %cst_37 = arith.constant dense<0.000000e+00> : vector<16x512xf32>
    %36 = tpu.matmul %33, %35, %cst_37 {dimension_numbers = #tpu.dot_dimension_numbers<[1], [0], [0], [1], [0, 0, 1, 1], [], []>} : vector<16x96xf32>, vector<96x512xf32>, vector<16x512xf32> -> vector<16x512xf32>
    %37 = arith.addf %30, %36 : vector<16x512xf32>
    %c0_38 = arith.constant 0 : index
    %c0_39 = arith.constant 0 : index
    %38 = vector.load %arg4[%c0_38, %c0_39] : memref<1x512xf32, #tpu.memory_space<vmem>>, vector<1x512xf32>
    %39 = vector.broadcast %38 : vector<1x512xf32> to vector<16x512xf32>
    %40 = arith.addf %37, %39 : vector<16x512xf32>
    %cst_40 = arith.constant 0.000000e+00 : f32
    %41 = vector.broadcast %cst_40 : f32 to vector<16x512xf32>
    %42 = arith.maximumf %40, %41 : vector<16x512xf32>
    %cst_41 = arith.constant 0.000000e+00 : f32
    %43 = vector.broadcast %cst_41 : f32 to vector<8x256xf32>
    %c0_42 = arith.constant 0 : index
    %c0_43 = arith.constant 0 : index
    %c0_44 = arith.constant 0 : index
    %44 = vector.load %arg5[%c0_42, %c0_43, %c0_44] : memref<5x8x16xf32, #tpu.memory_space<vmem>>, vector<1x8x16xf32>
    %45 = vector.shape_cast %44 : vector<1x8x16xf32> to vector<8x16xf32>
    %cst_45 = arith.constant dense<0.000000e+00> : vector<8x512xf32>
    %46 = tpu.matmul %45, %42, %cst_45 {dimension_numbers = #tpu.dot_dimension_numbers<[1], [0], [0], [1], [0, 0, 1, 1], [], []>} : vector<8x16xf32>, vector<16x512xf32>, vector<8x512xf32> -> vector<8x512xf32>
    %c0_46 = arith.constant 0 : index
    %c0_47 = arith.constant 0 : index
    %c0_48 = arith.constant 0 : index
    %47 = vector.load %arg6[%c0_46, %c0_47, %c0_48] : memref<5x512x256xf32, #tpu.memory_space<vmem>>, vector<1x512x256xf32>
    %48 = vector.shape_cast %47 : vector<1x512x256xf32> to vector<512x256xf32>
    %cst_49 = arith.constant dense<0.000000e+00> : vector<8x256xf32>
    %49 = tpu.matmul %46, %48, %cst_49 {dimension_numbers = #tpu.dot_dimension_numbers<[1], [0], [0], [1], [0, 0, 1, 1], [], []>} : vector<8x512xf32>, vector<512x256xf32>, vector<8x256xf32> -> vector<8x256xf32>
    %50 = arith.addf %43, %49 : vector<8x256xf32>
    %c1_50 = arith.constant 1 : index
    %c0_51 = arith.constant 0 : index
    %c0_52 = arith.constant 0 : index
    %51 = vector.load %arg5[%c1_50, %c0_51, %c0_52] : memref<5x8x16xf32, #tpu.memory_space<vmem>>, vector<1x8x16xf32>
    %52 = vector.shape_cast %51 : vector<1x8x16xf32> to vector<8x16xf32>
    %cst_53 = arith.constant dense<0.000000e+00> : vector<8x512xf32>
    %53 = tpu.matmul %52, %42, %cst_53 {dimension_numbers = #tpu.dot_dimension_numbers<[1], [0], [0], [1], [0, 0, 1, 1], [], []>} : vector<8x16xf32>, vector<16x512xf32>, vector<8x512xf32> -> vector<8x512xf32>
    %c1_54 = arith.constant 1 : index
    %c0_55 = arith.constant 0 : index
    %c0_56 = arith.constant 0 : index
    %54 = vector.load %arg6[%c1_54, %c0_55, %c0_56] : memref<5x512x256xf32, #tpu.memory_space<vmem>>, vector<1x512x256xf32>
    %55 = vector.shape_cast %54 : vector<1x512x256xf32> to vector<512x256xf32>
    %cst_57 = arith.constant dense<0.000000e+00> : vector<8x256xf32>
    %56 = tpu.matmul %53, %55, %cst_57 {dimension_numbers = #tpu.dot_dimension_numbers<[1], [0], [0], [1], [0, 0, 1, 1], [], []>} : vector<8x512xf32>, vector<512x256xf32>, vector<8x256xf32> -> vector<8x256xf32>
    %57 = arith.addf %50, %56 : vector<8x256xf32>
    %c2_58 = arith.constant 2 : index
    %c0_59 = arith.constant 0 : index
    %c0_60 = arith.constant 0 : index
    %58 = vector.load %arg5[%c2_58, %c0_59, %c0_60] : memref<5x8x16xf32, #tpu.memory_space<vmem>>, vector<1x8x16xf32>
    %59 = vector.shape_cast %58 : vector<1x8x16xf32> to vector<8x16xf32>
    %cst_61 = arith.constant dense<0.000000e+00> : vector<8x512xf32>
    %60 = tpu.matmul %59, %42, %cst_61 {dimension_numbers = #tpu.dot_dimension_numbers<[1], [0], [0], [1], [0, 0, 1, 1], [], []>} : vector<8x16xf32>, vector<16x512xf32>, vector<8x512xf32> -> vector<8x512xf32>
    %c2_62 = arith.constant 2 : index
    %c0_63 = arith.constant 0 : index
    %c0_64 = arith.constant 0 : index
    %61 = vector.load %arg6[%c2_62, %c0_63, %c0_64] : memref<5x512x256xf32, #tpu.memory_space<vmem>>, vector<1x512x256xf32>
    %62 = vector.shape_cast %61 : vector<1x512x256xf32> to vector<512x256xf32>
    %cst_65 = arith.constant dense<0.000000e+00> : vector<8x256xf32>
    %63 = tpu.matmul %60, %62, %cst_65 {dimension_numbers = #tpu.dot_dimension_numbers<[1], [0], [0], [1], [0, 0, 1, 1], [], []>} : vector<8x512xf32>, vector<512x256xf32>, vector<8x256xf32> -> vector<8x256xf32>
    %64 = arith.addf %57, %63 : vector<8x256xf32>
    %c3_66 = arith.constant 3 : index
    %c0_67 = arith.constant 0 : index
    %c0_68 = arith.constant 0 : index
    %65 = vector.load %arg5[%c3_66, %c0_67, %c0_68] : memref<5x8x16xf32, #tpu.memory_space<vmem>>, vector<1x8x16xf32>
    %66 = vector.shape_cast %65 : vector<1x8x16xf32> to vector<8x16xf32>
    %cst_69 = arith.constant dense<0.000000e+00> : vector<8x512xf32>
    %67 = tpu.matmul %66, %42, %cst_69 {dimension_numbers = #tpu.dot_dimension_numbers<[1], [0], [0], [1], [0, 0, 1, 1], [], []>} : vector<8x16xf32>, vector<16x512xf32>, vector<8x512xf32> -> vector<8x512xf32>
    %c3_70 = arith.constant 3 : index
    %c0_71 = arith.constant 0 : index
    %c0_72 = arith.constant 0 : index
    %68 = vector.load %arg6[%c3_70, %c0_71, %c0_72] : memref<5x512x256xf32, #tpu.memory_space<vmem>>, vector<1x512x256xf32>
    %69 = vector.shape_cast %68 : vector<1x512x256xf32> to vector<512x256xf32>
    %cst_73 = arith.constant dense<0.000000e+00> : vector<8x256xf32>
    %70 = tpu.matmul %67, %69, %cst_73 {dimension_numbers = #tpu.dot_dimension_numbers<[1], [0], [0], [1], [0, 0, 1, 1], [], []>} : vector<8x512xf32>, vector<512x256xf32>, vector<8x256xf32> -> vector<8x256xf32>
    %71 = arith.addf %64, %70 : vector<8x256xf32>
    %c4_74 = arith.constant 4 : index
    %c0_75 = arith.constant 0 : index
    %c0_76 = arith.constant 0 : index
    %72 = vector.load %arg5[%c4_74, %c0_75, %c0_76] : memref<5x8x16xf32, #tpu.memory_space<vmem>>, vector<1x8x16xf32>
    %73 = vector.shape_cast %72 : vector<1x8x16xf32> to vector<8x16xf32>
    %cst_77 = arith.constant dense<0.000000e+00> : vector<8x512xf32>
    %74 = tpu.matmul %73, %42, %cst_77 {dimension_numbers = #tpu.dot_dimension_numbers<[1], [0], [0], [1], [0, 0, 1, 1], [], []>} : vector<8x16xf32>, vector<16x512xf32>, vector<8x512xf32> -> vector<8x512xf32>
    %c4_78 = arith.constant 4 : index
    %c0_79 = arith.constant 0 : index
    %c0_80 = arith.constant 0 : index
    %75 = vector.load %arg6[%c4_78, %c0_79, %c0_80] : memref<5x512x256xf32, #tpu.memory_space<vmem>>, vector<1x512x256xf32>
    %76 = vector.shape_cast %75 : vector<1x512x256xf32> to vector<512x256xf32>
    %cst_81 = arith.constant dense<0.000000e+00> : vector<8x256xf32>
    %77 = tpu.matmul %74, %76, %cst_81 {dimension_numbers = #tpu.dot_dimension_numbers<[1], [0], [0], [1], [0, 0, 1, 1], [], []>} : vector<8x512xf32>, vector<512x256xf32>, vector<8x256xf32> -> vector<8x256xf32>
    %78 = arith.addf %71, %77 : vector<8x256xf32>
    %c0_82 = arith.constant 0 : index
    %c0_83 = arith.constant 0 : index
    %79 = vector.load %arg7[%c0_82, %c0_83] : memref<1x256xf32, #tpu.memory_space<vmem>>, vector<1x256xf32>
    %80 = vector.broadcast %79 : vector<1x256xf32> to vector<8x256xf32>
    %81 = arith.addf %78, %80 : vector<8x256xf32>
    %cst_84 = arith.constant 0.000000e+00 : f32
    %82 = vector.broadcast %cst_84 : f32 to vector<8x256xf32>
    %83 = arith.maximumf %81, %82 : vector<8x256xf32>
    %cst_85 = arith.constant 0.000000e+00 : f32
    %84 = vector.broadcast %cst_85 : f32 to vector<4x128xf32>
    %c0_86 = arith.constant 0 : index
    %c0_87 = arith.constant 0 : index
    %c0_88 = arith.constant 0 : index
    %85 = vector.load %arg8[%c0_86, %c0_87, %c0_88] : memref<5x4x8xf32, #tpu.memory_space<vmem>>, vector<1x4x8xf32>
    %86 = vector.shape_cast %85 : vector<1x4x8xf32> to vector<4x8xf32>
    %cst_89 = arith.constant dense<0.000000e+00> : vector<4x256xf32>
    %87 = tpu.matmul %86, %83, %cst_89 {dimension_numbers = #tpu.dot_dimension_numbers<[1], [0], [0], [1], [0, 0, 1, 1], [], []>} : vector<4x8xf32>, vector<8x256xf32>, vector<4x256xf32> -> vector<4x256xf32>
    %c0_90 = arith.constant 0 : index
    %c0_91 = arith.constant 0 : index
    %c0_92 = arith.constant 0 : index
    %88 = vector.load %arg9[%c0_90, %c0_91, %c0_92] : memref<5x256x128xf32, #tpu.memory_space<vmem>>, vector<1x256x128xf32>
    %89 = vector.shape_cast %88 : vector<1x256x128xf32> to vector<256x128xf32>
    %cst_93 = arith.constant dense<0.000000e+00> : vector<4x128xf32>
    %90 = tpu.matmul %87, %89, %cst_93 {dimension_numbers = #tpu.dot_dimension_numbers<[1], [0], [0], [1], [0, 0, 1, 1], [], []>} : vector<4x256xf32>, vector<256x128xf32>, vector<4x128xf32> -> vector<4x128xf32>
    %91 = arith.addf %84, %90 : vector<4x128xf32>
    %c1_94 = arith.constant 1 : index
    %c0_95 = arith.constant 0 : index
    %c0_96 = arith.constant 0 : index
    %92 = vector.load %arg8[%c1_94, %c0_95, %c0_96] : memref<5x4x8xf32, #tpu.memory_space<vmem>>, vector<1x4x8xf32>
    %93 = vector.shape_cast %92 : vector<1x4x8xf32> to vector<4x8xf32>
    %cst_97 = arith.constant dense<0.000000e+00> : vector<4x256xf32>
    %94 = tpu.matmul %93, %83, %cst_97 {dimension_numbers = #tpu.dot_dimension_numbers<[1], [0], [0], [1], [0, 0, 1, 1], [], []>} : vector<4x8xf32>, vector<8x256xf32>, vector<4x256xf32> -> vector<4x256xf32>
    %c1_98 = arith.constant 1 : index
    %c0_99 = arith.constant 0 : index
    %c0_100 = arith.constant 0 : index
    %95 = vector.load %arg9[%c1_98, %c0_99, %c0_100] : memref<5x256x128xf32, #tpu.memory_space<vmem>>, vector<1x256x128xf32>
    %96 = vector.shape_cast %95 : vector<1x256x128xf32> to vector<256x128xf32>
    %cst_101 = arith.constant dense<0.000000e+00> : vector<4x128xf32>
    %97 = tpu.matmul %94, %96, %cst_101 {dimension_numbers = #tpu.dot_dimension_numbers<[1], [0], [0], [1], [0, 0, 1, 1], [], []>} : vector<4x256xf32>, vector<256x128xf32>, vector<4x128xf32> -> vector<4x128xf32>
    %98 = arith.addf %91, %97 : vector<4x128xf32>
    %c2_102 = arith.constant 2 : index
    %c0_103 = arith.constant 0 : index
    %c0_104 = arith.constant 0 : index
    %99 = vector.load %arg8[%c2_102, %c0_103, %c0_104] : memref<5x4x8xf32, #tpu.memory_space<vmem>>, vector<1x4x8xf32>
    %100 = vector.shape_cast %99 : vector<1x4x8xf32> to vector<4x8xf32>
    %cst_105 = arith.constant dense<0.000000e+00> : vector<4x256xf32>
    %101 = tpu.matmul %100, %83, %cst_105 {dimension_numbers = #tpu.dot_dimension_numbers<[1], [0], [0], [1], [0, 0, 1, 1], [], []>} : vector<4x8xf32>, vector<8x256xf32>, vector<4x256xf32> -> vector<4x256xf32>
    %c2_106 = arith.constant 2 : index
    %c0_107 = arith.constant 0 : index
    %c0_108 = arith.constant 0 : index
    %102 = vector.load %arg9[%c2_106, %c0_107, %c0_108] : memref<5x256x128xf32, #tpu.memory_space<vmem>>, vector<1x256x128xf32>
    %103 = vector.shape_cast %102 : vector<1x256x128xf32> to vector<256x128xf32>
    %cst_109 = arith.constant dense<0.000000e+00> : vector<4x128xf32>
    %104 = tpu.matmul %101, %103, %cst_109 {dimension_numbers = #tpu.dot_dimension_numbers<[1], [0], [0], [1], [0, 0, 1, 1], [], []>} : vector<4x256xf32>, vector<256x128xf32>, vector<4x128xf32> -> vector<4x128xf32>
    %105 = arith.addf %98, %104 : vector<4x128xf32>
    %c3_110 = arith.constant 3 : index
    %c0_111 = arith.constant 0 : index
    %c0_112 = arith.constant 0 : index
    %106 = vector.load %arg8[%c3_110, %c0_111, %c0_112] : memref<5x4x8xf32, #tpu.memory_space<vmem>>, vector<1x4x8xf32>
    %107 = vector.shape_cast %106 : vector<1x4x8xf32> to vector<4x8xf32>
    %cst_113 = arith.constant dense<0.000000e+00> : vector<4x256xf32>
    %108 = tpu.matmul %107, %83, %cst_113 {dimension_numbers = #tpu.dot_dimension_numbers<[1], [0], [0], [1], [0, 0, 1, 1], [], []>} : vector<4x8xf32>, vector<8x256xf32>, vector<4x256xf32> -> vector<4x256xf32>
    %c3_114 = arith.constant 3 : index
    %c0_115 = arith.constant 0 : index
    %c0_116 = arith.constant 0 : index
    %109 = vector.load %arg9[%c3_114, %c0_115, %c0_116] : memref<5x256x128xf32, #tpu.memory_space<vmem>>, vector<1x256x128xf32>
    %110 = vector.shape_cast %109 : vector<1x256x128xf32> to vector<256x128xf32>
    %cst_117 = arith.constant dense<0.000000e+00> : vector<4x128xf32>
    %111 = tpu.matmul %108, %110, %cst_117 {dimension_numbers = #tpu.dot_dimension_numbers<[1], [0], [0], [1], [0, 0, 1, 1], [], []>} : vector<4x256xf32>, vector<256x128xf32>, vector<4x128xf32> -> vector<4x128xf32>
    %112 = arith.addf %105, %111 : vector<4x128xf32>
    %c4_118 = arith.constant 4 : index
    %c0_119 = arith.constant 0 : index
    %c0_120 = arith.constant 0 : index
    %113 = vector.load %arg8[%c4_118, %c0_119, %c0_120] : memref<5x4x8xf32, #tpu.memory_space<vmem>>, vector<1x4x8xf32>
    %114 = vector.shape_cast %113 : vector<1x4x8xf32> to vector<4x8xf32>
    %cst_121 = arith.constant dense<0.000000e+00> : vector<4x256xf32>
    %115 = tpu.matmul %114, %83, %cst_121 {dimension_numbers = #tpu.dot_dimension_numbers<[1], [0], [0], [1], [0, 0, 1, 1], [], []>} : vector<4x8xf32>, vector<8x256xf32>, vector<4x256xf32> -> vector<4x256xf32>
    %c4_122 = arith.constant 4 : index
    %c0_123 = arith.constant 0 : index
    %c0_124 = arith.constant 0 : index
    %116 = vector.load %arg9[%c4_122, %c0_123, %c0_124] : memref<5x256x128xf32, #tpu.memory_space<vmem>>, vector<1x256x128xf32>
    %117 = vector.shape_cast %116 : vector<1x256x128xf32> to vector<256x128xf32>
    %cst_125 = arith.constant dense<0.000000e+00> : vector<4x128xf32>
    %118 = tpu.matmul %115, %117, %cst_125 {dimension_numbers = #tpu.dot_dimension_numbers<[1], [0], [0], [1], [0, 0, 1, 1], [], []>} : vector<4x256xf32>, vector<256x128xf32>, vector<4x128xf32> -> vector<4x128xf32>
    %119 = arith.addf %112, %118 : vector<4x128xf32>
    %c0_126 = arith.constant 0 : index
    %c0_127 = arith.constant 0 : index
    %120 = vector.load %arg10[%c0_126, %c0_127] : memref<1x128xf32, #tpu.memory_space<vmem>>, vector<1x128xf32>
    %121 = vector.broadcast %120 : vector<1x128xf32> to vector<4x128xf32>
    %122 = arith.addf %119, %121 : vector<4x128xf32>
    %cst_128 = arith.constant 0.000000e+00 : f32
    %123 = vector.broadcast %cst_128 : f32 to vector<4x128xf32>
    %124 = arith.maximumf %122, %123 : vector<4x128xf32>
    %cst_129 = arith.constant 0.000000e+00 : f32
    %125 = vector.broadcast %cst_129 : f32 to vector<2x64xf32>
    %c0_130 = arith.constant 0 : index
    %c0_131 = arith.constant 0 : index
    %c0_132 = arith.constant 0 : index
    %126 = vector.load %arg11[%c0_130, %c0_131, %c0_132] : memref<5x2x4xf32, #tpu.memory_space<vmem>>, vector<1x2x4xf32>
    %127 = vector.shape_cast %126 : vector<1x2x4xf32> to vector<2x4xf32>
    %cst_133 = arith.constant dense<0.000000e+00> : vector<2x128xf32>
    %128 = tpu.matmul %127, %124, %cst_133 {dimension_numbers = #tpu.dot_dimension_numbers<[1], [0], [0], [1], [0, 0, 1, 1], [], []>} : vector<2x4xf32>, vector<4x128xf32>, vector<2x128xf32> -> vector<2x128xf32>
    %c0_134 = arith.constant 0 : index
    %c0_135 = arith.constant 0 : index
    %c0_136 = arith.constant 0 : index
    %129 = vector.load %arg12[%c0_134, %c0_135, %c0_136] : memref<5x128x64xf32, #tpu.memory_space<vmem>>, vector<1x128x64xf32>
    %130 = vector.shape_cast %129 : vector<1x128x64xf32> to vector<128x64xf32>
    %cst_137 = arith.constant dense<0.000000e+00> : vector<2x64xf32>
    %131 = tpu.matmul %128, %130, %cst_137 {dimension_numbers = #tpu.dot_dimension_numbers<[1], [0], [0], [1], [0, 0, 1, 1], [], []>} : vector<2x128xf32>, vector<128x64xf32>, vector<2x64xf32> -> vector<2x64xf32>
    %132 = arith.addf %125, %131 : vector<2x64xf32>
    %c1_138 = arith.constant 1 : index
    %c0_139 = arith.constant 0 : index
    %c0_140 = arith.constant 0 : index
    %133 = vector.load %arg11[%c1_138, %c0_139, %c0_140] : memref<5x2x4xf32, #tpu.memory_space<vmem>>, vector<1x2x4xf32>
    %134 = vector.shape_cast %133 : vector<1x2x4xf32> to vector<2x4xf32>
    %cst_141 = arith.constant dense<0.000000e+00> : vector<2x128xf32>
    %135 = tpu.matmul %134, %124, %cst_141 {dimension_numbers = #tpu.dot_dimension_numbers<[1], [0], [0], [1], [0, 0, 1, 1], [], []>} : vector<2x4xf32>, vector<4x128xf32>, vector<2x128xf32> -> vector<2x128xf32>
    %c1_142 = arith.constant 1 : index
    %c0_143 = arith.constant 0 : index
    %c0_144 = arith.constant 0 : index
    %136 = vector.load %arg12[%c1_142, %c0_143, %c0_144] : memref<5x128x64xf32, #tpu.memory_space<vmem>>, vector<1x128x64xf32>
    %137 = vector.shape_cast %136 : vector<1x128x64xf32> to vector<128x64xf32>
    %cst_145 = arith.constant dense<0.000000e+00> : vector<2x64xf32>
    %138 = tpu.matmul %135, %137, %cst_145 {dimension_numbers = #tpu.dot_dimension_numbers<[1], [0], [0], [1], [0, 0, 1, 1], [], []>} : vector<2x128xf32>, vector<128x64xf32>, vector<2x64xf32> -> vector<2x64xf32>
    %139 = arith.addf %132, %138 : vector<2x64xf32>
    %c2_146 = arith.constant 2 : index
    %c0_147 = arith.constant 0 : index
    %c0_148 = arith.constant 0 : index
    %140 = vector.load %arg11[%c2_146, %c0_147, %c0_148] : memref<5x2x4xf32, #tpu.memory_space<vmem>>, vector<1x2x4xf32>
    %141 = vector.shape_cast %140 : vector<1x2x4xf32> to vector<2x4xf32>
    %cst_149 = arith.constant dense<0.000000e+00> : vector<2x128xf32>
    %142 = tpu.matmul %141, %124, %cst_149 {dimension_numbers = #tpu.dot_dimension_numbers<[1], [0], [0], [1], [0, 0, 1, 1], [], []>} : vector<2x4xf32>, vector<4x128xf32>, vector<2x128xf32> -> vector<2x128xf32>
    %c2_150 = arith.constant 2 : index
    %c0_151 = arith.constant 0 : index
    %c0_152 = arith.constant 0 : index
    %143 = vector.load %arg12[%c2_150, %c0_151, %c0_152] : memref<5x128x64xf32, #tpu.memory_space<vmem>>, vector<1x128x64xf32>
    %144 = vector.shape_cast %143 : vector<1x128x64xf32> to vector<128x64xf32>
    %cst_153 = arith.constant dense<0.000000e+00> : vector<2x64xf32>
    %145 = tpu.matmul %142, %144, %cst_153 {dimension_numbers = #tpu.dot_dimension_numbers<[1], [0], [0], [1], [0, 0, 1, 1], [], []>} : vector<2x128xf32>, vector<128x64xf32>, vector<2x64xf32> -> vector<2x64xf32>
    %146 = arith.addf %139, %145 : vector<2x64xf32>
    %c3_154 = arith.constant 3 : index
    %c0_155 = arith.constant 0 : index
    %c0_156 = arith.constant 0 : index
    %147 = vector.load %arg11[%c3_154, %c0_155, %c0_156] : memref<5x2x4xf32, #tpu.memory_space<vmem>>, vector<1x2x4xf32>
    %148 = vector.shape_cast %147 : vector<1x2x4xf32> to vector<2x4xf32>
    %cst_157 = arith.constant dense<0.000000e+00> : vector<2x128xf32>
    %149 = tpu.matmul %148, %124, %cst_157 {dimension_numbers = #tpu.dot_dimension_numbers<[1], [0], [0], [1], [0, 0, 1, 1], [], []>} : vector<2x4xf32>, vector<4x128xf32>, vector<2x128xf32> -> vector<2x128xf32>
    %c3_158 = arith.constant 3 : index
    %c0_159 = arith.constant 0 : index
    %c0_160 = arith.constant 0 : index
    %150 = vector.load %arg12[%c3_158, %c0_159, %c0_160] : memref<5x128x64xf32, #tpu.memory_space<vmem>>, vector<1x128x64xf32>
    %151 = vector.shape_cast %150 : vector<1x128x64xf32> to vector<128x64xf32>
    %cst_161 = arith.constant dense<0.000000e+00> : vector<2x64xf32>
    %152 = tpu.matmul %149, %151, %cst_161 {dimension_numbers = #tpu.dot_dimension_numbers<[1], [0], [0], [1], [0, 0, 1, 1], [], []>} : vector<2x128xf32>, vector<128x64xf32>, vector<2x64xf32> -> vector<2x64xf32>
    %153 = arith.addf %146, %152 : vector<2x64xf32>
    %c4_162 = arith.constant 4 : index
    %c0_163 = arith.constant 0 : index
    %c0_164 = arith.constant 0 : index
    %154 = vector.load %arg11[%c4_162, %c0_163, %c0_164] : memref<5x2x4xf32, #tpu.memory_space<vmem>>, vector<1x2x4xf32>
    %155 = vector.shape_cast %154 : vector<1x2x4xf32> to vector<2x4xf32>
    %cst_165 = arith.constant dense<0.000000e+00> : vector<2x128xf32>
    %156 = tpu.matmul %155, %124, %cst_165 {dimension_numbers = #tpu.dot_dimension_numbers<[1], [0], [0], [1], [0, 0, 1, 1], [], []>} : vector<2x4xf32>, vector<4x128xf32>, vector<2x128xf32> -> vector<2x128xf32>
    %c4_166 = arith.constant 4 : index
    %c0_167 = arith.constant 0 : index
    %c0_168 = arith.constant 0 : index
    %157 = vector.load %arg12[%c4_166, %c0_167, %c0_168] : memref<5x128x64xf32, #tpu.memory_space<vmem>>, vector<1x128x64xf32>
    %158 = vector.shape_cast %157 : vector<1x128x64xf32> to vector<128x64xf32>
    %cst_169 = arith.constant dense<0.000000e+00> : vector<2x64xf32>
    %159 = tpu.matmul %156, %158, %cst_169 {dimension_numbers = #tpu.dot_dimension_numbers<[1], [0], [0], [1], [0, 0, 1, 1], [], []>} : vector<2x128xf32>, vector<128x64xf32>, vector<2x64xf32> -> vector<2x64xf32>
    %160 = arith.addf %153, %159 : vector<2x64xf32>
    %c0_170 = arith.constant 0 : index
    %c0_171 = arith.constant 0 : index
    %161 = vector.load %arg13[%c0_170, %c0_171] : memref<1x64xf32, #tpu.memory_space<vmem>>, vector<1x64xf32>
    %162 = vector.broadcast %161 : vector<1x64xf32> to vector<2x64xf32>
    %163 = arith.addf %160, %162 : vector<2x64xf32>
    %cst_172 = arith.constant 0.000000e+00 : f32
    %164 = vector.broadcast %cst_172 : f32 to vector<2x64xf32>
    %165 = arith.maximumf %163, %164 : vector<2x64xf32>
    %cst_173 = arith.constant 0.000000e+00 : f32
    %166 = vector.broadcast %cst_173 : f32 to vector<1x32xf32>
    %c0_174 = arith.constant 0 : index
    %c0_175 = arith.constant 0 : index
    %c0_176 = arith.constant 0 : index
    %167 = vector.load %arg14[%c0_174, %c0_175, %c0_176] : memref<5x1x2xf32, #tpu.memory_space<vmem>>, vector<1x1x2xf32>
    %168 = vector.shape_cast %167 : vector<1x1x2xf32> to vector<1x2xf32>
    %169 = vector.extract_strided_slice %168 {offsets = [0, 0], sizes = [1, 1], strides = [1, 1]} : vector<1x2xf32> to vector<1x1xf32>
    %170 = vector.extract_strided_slice %165 {offsets = [0, 0], sizes = [1, 64], strides = [1, 1]} : vector<2x64xf32> to vector<1x64xf32>
    %171 = vector.broadcast %169 : vector<1x1xf32> to vector<1x64xf32>
    %172 = arith.mulf %171, %170 : vector<1x64xf32>
    %173 = vector.extract_strided_slice %168 {offsets = [0, 1], sizes = [1, 1], strides = [1, 1]} : vector<1x2xf32> to vector<1x1xf32>
    %174 = vector.extract_strided_slice %165 {offsets = [1, 0], sizes = [1, 64], strides = [1, 1]} : vector<2x64xf32> to vector<1x64xf32>
    %175 = vector.broadcast %173 : vector<1x1xf32> to vector<1x64xf32>
    %176 = arith.mulf %175, %174 : vector<1x64xf32>
    %177 = arith.addf %172, %176 : vector<1x64xf32>
    %c0_177 = arith.constant 0 : index
    %c0_178 = arith.constant 0 : index
    %c0_179 = arith.constant 0 : index
    %178 = vector.load %arg15[%c0_177, %c0_178, %c0_179] : memref<5x64x32xf32, #tpu.memory_space<vmem>>, vector<1x64x32xf32>
    %179 = vector.shape_cast %178 : vector<1x64x32xf32> to vector<64x32xf32>
    %cst_180 = arith.constant dense<0.000000e+00> : vector<1x32xf32>
    %180 = tpu.matmul %177, %179, %cst_180 {dimension_numbers = #tpu.dot_dimension_numbers<[1], [0], [0], [1], [0, 0, 1, 1], [], []>} : vector<1x64xf32>, vector<64x32xf32>, vector<1x32xf32> -> vector<1x32xf32>
    %181 = arith.addf %166, %180 : vector<1x32xf32>
    %c1_181 = arith.constant 1 : index
    %c0_182 = arith.constant 0 : index
    %c0_183 = arith.constant 0 : index
    %182 = vector.load %arg14[%c1_181, %c0_182, %c0_183] : memref<5x1x2xf32, #tpu.memory_space<vmem>>, vector<1x1x2xf32>
    %183 = vector.shape_cast %182 : vector<1x1x2xf32> to vector<1x2xf32>
    %184 = vector.extract_strided_slice %183 {offsets = [0, 0], sizes = [1, 1], strides = [1, 1]} : vector<1x2xf32> to vector<1x1xf32>
    %185 = vector.extract_strided_slice %165 {offsets = [0, 0], sizes = [1, 64], strides = [1, 1]} : vector<2x64xf32> to vector<1x64xf32>
    %186 = vector.broadcast %184 : vector<1x1xf32> to vector<1x64xf32>
    %187 = arith.mulf %186, %185 : vector<1x64xf32>
    %188 = vector.extract_strided_slice %183 {offsets = [0, 1], sizes = [1, 1], strides = [1, 1]} : vector<1x2xf32> to vector<1x1xf32>
    %189 = vector.extract_strided_slice %165 {offsets = [1, 0], sizes = [1, 64], strides = [1, 1]} : vector<2x64xf32> to vector<1x64xf32>
    %190 = vector.broadcast %188 : vector<1x1xf32> to vector<1x64xf32>
    %191 = arith.mulf %190, %189 : vector<1x64xf32>
    %192 = arith.addf %187, %191 : vector<1x64xf32>
    %c1_184 = arith.constant 1 : index
    %c0_185 = arith.constant 0 : index
    %c0_186 = arith.constant 0 : index
    %193 = vector.load %arg15[%c1_184, %c0_185, %c0_186] : memref<5x64x32xf32, #tpu.memory_space<vmem>>, vector<1x64x32xf32>
    %194 = vector.shape_cast %193 : vector<1x64x32xf32> to vector<64x32xf32>
    %cst_187 = arith.constant dense<0.000000e+00> : vector<1x32xf32>
    %195 = tpu.matmul %192, %194, %cst_187 {dimension_numbers = #tpu.dot_dimension_numbers<[1], [0], [0], [1], [0, 0, 1, 1], [], []>} : vector<1x64xf32>, vector<64x32xf32>, vector<1x32xf32> -> vector<1x32xf32>
    %196 = arith.addf %181, %195 : vector<1x32xf32>
    %c2_188 = arith.constant 2 : index
    %c0_189 = arith.constant 0 : index
    %c0_190 = arith.constant 0 : index
    %197 = vector.load %arg14[%c2_188, %c0_189, %c0_190] : memref<5x1x2xf32, #tpu.memory_space<vmem>>, vector<1x1x2xf32>
    %198 = vector.shape_cast %197 : vector<1x1x2xf32> to vector<1x2xf32>
    %199 = vector.extract_strided_slice %198 {offsets = [0, 0], sizes = [1, 1], strides = [1, 1]} : vector<1x2xf32> to vector<1x1xf32>
    %200 = vector.extract_strided_slice %165 {offsets = [0, 0], sizes = [1, 64], strides = [1, 1]} : vector<2x64xf32> to vector<1x64xf32>
    %201 = vector.broadcast %199 : vector<1x1xf32> to vector<1x64xf32>
    %202 = arith.mulf %201, %200 : vector<1x64xf32>
    %203 = vector.extract_strided_slice %198 {offsets = [0, 1], sizes = [1, 1], strides = [1, 1]} : vector<1x2xf32> to vector<1x1xf32>
    %204 = vector.extract_strided_slice %165 {offsets = [1, 0], sizes = [1, 64], strides = [1, 1]} : vector<2x64xf32> to vector<1x64xf32>
    %205 = vector.broadcast %203 : vector<1x1xf32> to vector<1x64xf32>
    %206 = arith.mulf %205, %204 : vector<1x64xf32>
    %207 = arith.addf %202, %206 : vector<1x64xf32>
    %c2_191 = arith.constant 2 : index
    %c0_192 = arith.constant 0 : index
    %c0_193 = arith.constant 0 : index
    %208 = vector.load %arg15[%c2_191, %c0_192, %c0_193] : memref<5x64x32xf32, #tpu.memory_space<vmem>>, vector<1x64x32xf32>
    %209 = vector.shape_cast %208 : vector<1x64x32xf32> to vector<64x32xf32>
    %cst_194 = arith.constant dense<0.000000e+00> : vector<1x32xf32>
    %210 = tpu.matmul %207, %209, %cst_194 {dimension_numbers = #tpu.dot_dimension_numbers<[1], [0], [0], [1], [0, 0, 1, 1], [], []>} : vector<1x64xf32>, vector<64x32xf32>, vector<1x32xf32> -> vector<1x32xf32>
    %211 = arith.addf %196, %210 : vector<1x32xf32>
    %c3_195 = arith.constant 3 : index
    %c0_196 = arith.constant 0 : index
    %c0_197 = arith.constant 0 : index
    %212 = vector.load %arg14[%c3_195, %c0_196, %c0_197] : memref<5x1x2xf32, #tpu.memory_space<vmem>>, vector<1x1x2xf32>
    %213 = vector.shape_cast %212 : vector<1x1x2xf32> to vector<1x2xf32>
    %214 = vector.extract_strided_slice %213 {offsets = [0, 0], sizes = [1, 1], strides = [1, 1]} : vector<1x2xf32> to vector<1x1xf32>
    %215 = vector.extract_strided_slice %165 {offsets = [0, 0], sizes = [1, 64], strides = [1, 1]} : vector<2x64xf32> to vector<1x64xf32>
    %216 = vector.broadcast %214 : vector<1x1xf32> to vector<1x64xf32>
    %217 = arith.mulf %216, %215 : vector<1x64xf32>
    %218 = vector.extract_strided_slice %213 {offsets = [0, 1], sizes = [1, 1], strides = [1, 1]} : vector<1x2xf32> to vector<1x1xf32>
    %219 = vector.extract_strided_slice %165 {offsets = [1, 0], sizes = [1, 64], strides = [1, 1]} : vector<2x64xf32> to vector<1x64xf32>
    %220 = vector.broadcast %218 : vector<1x1xf32> to vector<1x64xf32>
    %221 = arith.mulf %220, %219 : vector<1x64xf32>
    %222 = arith.addf %217, %221 : vector<1x64xf32>
    %c3_198 = arith.constant 3 : index
    %c0_199 = arith.constant 0 : index
    %c0_200 = arith.constant 0 : index
    %223 = vector.load %arg15[%c3_198, %c0_199, %c0_200] : memref<5x64x32xf32, #tpu.memory_space<vmem>>, vector<1x64x32xf32>
    %224 = vector.shape_cast %223 : vector<1x64x32xf32> to vector<64x32xf32>
    %cst_201 = arith.constant dense<0.000000e+00> : vector<1x32xf32>
    %225 = tpu.matmul %222, %224, %cst_201 {dimension_numbers = #tpu.dot_dimension_numbers<[1], [0], [0], [1], [0, 0, 1, 1], [], []>} : vector<1x64xf32>, vector<64x32xf32>, vector<1x32xf32> -> vector<1x32xf32>
    %226 = arith.addf %211, %225 : vector<1x32xf32>
    %c4_202 = arith.constant 4 : index
    %c0_203 = arith.constant 0 : index
    %c0_204 = arith.constant 0 : index
    %227 = vector.load %arg14[%c4_202, %c0_203, %c0_204] : memref<5x1x2xf32, #tpu.memory_space<vmem>>, vector<1x1x2xf32>
    %228 = vector.shape_cast %227 : vector<1x1x2xf32> to vector<1x2xf32>
    %229 = vector.extract_strided_slice %228 {offsets = [0, 0], sizes = [1, 1], strides = [1, 1]} : vector<1x2xf32> to vector<1x1xf32>
    %230 = vector.extract_strided_slice %165 {offsets = [0, 0], sizes = [1, 64], strides = [1, 1]} : vector<2x64xf32> to vector<1x64xf32>
    %231 = vector.broadcast %229 : vector<1x1xf32> to vector<1x64xf32>
    %232 = arith.mulf %231, %230 : vector<1x64xf32>
    %233 = vector.extract_strided_slice %228 {offsets = [0, 1], sizes = [1, 1], strides = [1, 1]} : vector<1x2xf32> to vector<1x1xf32>
    %234 = vector.extract_strided_slice %165 {offsets = [1, 0], sizes = [1, 64], strides = [1, 1]} : vector<2x64xf32> to vector<1x64xf32>
    %235 = vector.broadcast %233 : vector<1x1xf32> to vector<1x64xf32>
    %236 = arith.mulf %235, %234 : vector<1x64xf32>
    %237 = arith.addf %232, %236 : vector<1x64xf32>
    %c4_205 = arith.constant 4 : index
    %c0_206 = arith.constant 0 : index
    %c0_207 = arith.constant 0 : index
    %238 = vector.load %arg15[%c4_205, %c0_206, %c0_207] : memref<5x64x32xf32, #tpu.memory_space<vmem>>, vector<1x64x32xf32>
    %239 = vector.shape_cast %238 : vector<1x64x32xf32> to vector<64x32xf32>
    %cst_208 = arith.constant dense<0.000000e+00> : vector<1x32xf32>
    %240 = tpu.matmul %237, %239, %cst_208 {dimension_numbers = #tpu.dot_dimension_numbers<[1], [0], [0], [1], [0, 0, 1, 1], [], []>} : vector<1x64xf32>, vector<64x32xf32>, vector<1x32xf32> -> vector<1x32xf32>
    %241 = arith.addf %226, %240 : vector<1x32xf32>
    %c0_209 = arith.constant 0 : index
    %c0_210 = arith.constant 0 : index
    %242 = vector.load %arg16[%c0_209, %c0_210] : memref<1x32xf32, #tpu.memory_space<vmem>>, vector<1x32xf32>
    %243 = arith.addf %241, %242 : vector<1x32xf32>
    %cst_211 = arith.constant 0.000000e+00 : f32
    %244 = vector.broadcast %cst_211 : f32 to vector<1x32xf32>
    %245 = arith.maximumf %243, %244 : vector<1x32xf32>
    %cst_212 = arith.constant 0.000000e+00 : f32
    %246 = vector.broadcast %cst_212 : f32 to vector<2x16xf32>
    %c0_213 = arith.constant 0 : index
    %c0_214 = arith.constant 0 : index
    %c0_215 = arith.constant 0 : index
    %247 = vector.load %arg17[%c0_213, %c0_214, %c0_215] : memref<4x2x1xf32, #tpu.memory_space<vmem>>, vector<1x2x1xf32>
    %248 = vector.shape_cast %247 : vector<1x2x1xf32> to vector<2x1xf32>
    %249 = vector.broadcast %248 : vector<2x1xf32> to vector<2x32xf32>
    %250 = vector.broadcast %245 : vector<1x32xf32> to vector<2x32xf32>
    %251 = arith.mulf %249, %250 : vector<2x32xf32>
    %c0_216 = arith.constant 0 : index
    %c0_217 = arith.constant 0 : index
    %c0_218 = arith.constant 0 : index
    %252 = vector.load %arg18[%c0_216, %c0_217, %c0_218] : memref<4x32x16xf32, #tpu.memory_space<vmem>>, vector<1x32x16xf32>
    %253 = vector.shape_cast %252 : vector<1x32x16xf32> to vector<32x16xf32>
    %cst_219 = arith.constant dense<0.000000e+00> : vector<2x16xf32>
    %254 = tpu.matmul %251, %253, %cst_219 {dimension_numbers = #tpu.dot_dimension_numbers<[1], [0], [0], [1], [0, 0, 1, 1], [], []>} : vector<2x32xf32>, vector<32x16xf32>, vector<2x16xf32> -> vector<2x16xf32>
    %255 = arith.addf %246, %254 : vector<2x16xf32>
    %c1_220 = arith.constant 1 : index
    %c0_221 = arith.constant 0 : index
    %c0_222 = arith.constant 0 : index
    %256 = vector.load %arg17[%c1_220, %c0_221, %c0_222] : memref<4x2x1xf32, #tpu.memory_space<vmem>>, vector<1x2x1xf32>
    %257 = vector.shape_cast %256 : vector<1x2x1xf32> to vector<2x1xf32>
    %258 = vector.broadcast %257 : vector<2x1xf32> to vector<2x32xf32>
    %259 = vector.broadcast %245 : vector<1x32xf32> to vector<2x32xf32>
    %260 = arith.mulf %258, %259 : vector<2x32xf32>
    %c1_223 = arith.constant 1 : index
    %c0_224 = arith.constant 0 : index
    %c0_225 = arith.constant 0 : index
    %261 = vector.load %arg18[%c1_223, %c0_224, %c0_225] : memref<4x32x16xf32, #tpu.memory_space<vmem>>, vector<1x32x16xf32>
    %262 = vector.shape_cast %261 : vector<1x32x16xf32> to vector<32x16xf32>
    %cst_226 = arith.constant dense<0.000000e+00> : vector<2x16xf32>
    %263 = tpu.matmul %260, %262, %cst_226 {dimension_numbers = #tpu.dot_dimension_numbers<[1], [0], [0], [1], [0, 0, 1, 1], [], []>} : vector<2x32xf32>, vector<32x16xf32>, vector<2x16xf32> -> vector<2x16xf32>
    %264 = arith.addf %255, %263 : vector<2x16xf32>
    %c2_227 = arith.constant 2 : index
    %c0_228 = arith.constant 0 : index
    %c0_229 = arith.constant 0 : index
    %265 = vector.load %arg17[%c2_227, %c0_228, %c0_229] : memref<4x2x1xf32, #tpu.memory_space<vmem>>, vector<1x2x1xf32>
    %266 = vector.shape_cast %265 : vector<1x2x1xf32> to vector<2x1xf32>
    %267 = vector.broadcast %266 : vector<2x1xf32> to vector<2x32xf32>
    %268 = vector.broadcast %245 : vector<1x32xf32> to vector<2x32xf32>
    %269 = arith.mulf %267, %268 : vector<2x32xf32>
    %c2_230 = arith.constant 2 : index
    %c0_231 = arith.constant 0 : index
    %c0_232 = arith.constant 0 : index
    %270 = vector.load %arg18[%c2_230, %c0_231, %c0_232] : memref<4x32x16xf32, #tpu.memory_space<vmem>>, vector<1x32x16xf32>
    %271 = vector.shape_cast %270 : vector<1x32x16xf32> to vector<32x16xf32>
    %cst_233 = arith.constant dense<0.000000e+00> : vector<2x16xf32>
    %272 = tpu.matmul %269, %271, %cst_233 {dimension_numbers = #tpu.dot_dimension_numbers<[1], [0], [0], [1], [0, 0, 1, 1], [], []>} : vector<2x32xf32>, vector<32x16xf32>, vector<2x16xf32> -> vector<2x16xf32>
    %273 = arith.addf %264, %272 : vector<2x16xf32>
    %c3_234 = arith.constant 3 : index
    %c0_235 = arith.constant 0 : index
    %c0_236 = arith.constant 0 : index
    %274 = vector.load %arg17[%c3_234, %c0_235, %c0_236] : memref<4x2x1xf32, #tpu.memory_space<vmem>>, vector<1x2x1xf32>
    %275 = vector.shape_cast %274 : vector<1x2x1xf32> to vector<2x1xf32>
    %276 = vector.broadcast %275 : vector<2x1xf32> to vector<2x32xf32>
    %277 = vector.broadcast %245 : vector<1x32xf32> to vector<2x32xf32>
    %278 = arith.mulf %276, %277 : vector<2x32xf32>
    %c3_237 = arith.constant 3 : index
    %c0_238 = arith.constant 0 : index
    %c0_239 = arith.constant 0 : index
    %279 = vector.load %arg18[%c3_237, %c0_238, %c0_239] : memref<4x32x16xf32, #tpu.memory_space<vmem>>, vector<1x32x16xf32>
    %280 = vector.shape_cast %279 : vector<1x32x16xf32> to vector<32x16xf32>
    %cst_240 = arith.constant dense<0.000000e+00> : vector<2x16xf32>
    %281 = tpu.matmul %278, %280, %cst_240 {dimension_numbers = #tpu.dot_dimension_numbers<[1], [0], [0], [1], [0, 0, 1, 1], [], []>} : vector<2x32xf32>, vector<32x16xf32>, vector<2x16xf32> -> vector<2x16xf32>
    %282 = arith.addf %273, %281 : vector<2x16xf32>
    %c0_241 = arith.constant 0 : index
    %c0_242 = arith.constant 0 : index
    %283 = vector.load %arg19[%c0_241, %c0_242] : memref<1x16xf32, #tpu.memory_space<vmem>>, vector<1x16xf32>
    %284 = vector.broadcast %283 : vector<1x16xf32> to vector<2x16xf32>
    %285 = arith.addf %282, %284 : vector<2x16xf32>
    %cst_243 = arith.constant 0.000000e+00 : f32
    %286 = vector.broadcast %cst_243 : f32 to vector<4x32xf32>
    %c0_244 = arith.constant 0 : index
    %c0_245 = arith.constant 0 : index
    %c0_246 = arith.constant 0 : index
    %287 = vector.load %arg20[%c0_244, %c0_245, %c0_246] : memref<4x4x2xf32, #tpu.memory_space<vmem>>, vector<1x4x2xf32>
    %288 = vector.shape_cast %287 : vector<1x4x2xf32> to vector<4x2xf32>
    %289 = vector.extract_strided_slice %288 {offsets = [0, 0], sizes = [4, 1], strides = [1, 1]} : vector<4x2xf32> to vector<4x1xf32>
    %290 = vector.extract_strided_slice %285 {offsets = [0, 0], sizes = [1, 16], strides = [1, 1]} : vector<2x16xf32> to vector<1x16xf32>
    %291 = vector.broadcast %289 : vector<4x1xf32> to vector<4x16xf32>
    %292 = vector.broadcast %290 : vector<1x16xf32> to vector<4x16xf32>
    %293 = arith.mulf %291, %292 : vector<4x16xf32>
    %294 = vector.extract_strided_slice %288 {offsets = [0, 1], sizes = [4, 1], strides = [1, 1]} : vector<4x2xf32> to vector<4x1xf32>
    %295 = vector.extract_strided_slice %285 {offsets = [1, 0], sizes = [1, 16], strides = [1, 1]} : vector<2x16xf32> to vector<1x16xf32>
    %296 = vector.broadcast %294 : vector<4x1xf32> to vector<4x16xf32>
    %297 = vector.broadcast %295 : vector<1x16xf32> to vector<4x16xf32>
    %298 = arith.mulf %296, %297 : vector<4x16xf32>
    %299 = arith.addf %293, %298 : vector<4x16xf32>
    %c0_247 = arith.constant 0 : index
    %c0_248 = arith.constant 0 : index
    %c0_249 = arith.constant 0 : index
    %300 = vector.load %arg21[%c0_247, %c0_248, %c0_249] : memref<4x16x32xf32, #tpu.memory_space<vmem>>, vector<1x16x32xf32>
    %301 = vector.shape_cast %300 : vector<1x16x32xf32> to vector<16x32xf32>
    %cst_250 = arith.constant dense<0.000000e+00> : vector<4x32xf32>
    %302 = tpu.matmul %299, %301, %cst_250 {dimension_numbers = #tpu.dot_dimension_numbers<[1], [0], [0], [1], [0, 0, 1, 1], [], []>} : vector<4x16xf32>, vector<16x32xf32>, vector<4x32xf32> -> vector<4x32xf32>
    %303 = arith.addf %286, %302 : vector<4x32xf32>
    %c1_251 = arith.constant 1 : index
    %c0_252 = arith.constant 0 : index
    %c0_253 = arith.constant 0 : index
    %304 = vector.load %arg20[%c1_251, %c0_252, %c0_253] : memref<4x4x2xf32, #tpu.memory_space<vmem>>, vector<1x4x2xf32>
    %305 = vector.shape_cast %304 : vector<1x4x2xf32> to vector<4x2xf32>
    %306 = vector.extract_strided_slice %305 {offsets = [0, 0], sizes = [4, 1], strides = [1, 1]} : vector<4x2xf32> to vector<4x1xf32>
    %307 = vector.extract_strided_slice %285 {offsets = [0, 0], sizes = [1, 16], strides = [1, 1]} : vector<2x16xf32> to vector<1x16xf32>
    %308 = vector.broadcast %306 : vector<4x1xf32> to vector<4x16xf32>
    %309 = vector.broadcast %307 : vector<1x16xf32> to vector<4x16xf32>
    %310 = arith.mulf %308, %309 : vector<4x16xf32>
    %311 = vector.extract_strided_slice %305 {offsets = [0, 1], sizes = [4, 1], strides = [1, 1]} : vector<4x2xf32> to vector<4x1xf32>
    %312 = vector.extract_strided_slice %285 {offsets = [1, 0], sizes = [1, 16], strides = [1, 1]} : vector<2x16xf32> to vector<1x16xf32>
    %313 = vector.broadcast %311 : vector<4x1xf32> to vector<4x16xf32>
    %314 = vector.broadcast %312 : vector<1x16xf32> to vector<4x16xf32>
    %315 = arith.mulf %313, %314 : vector<4x16xf32>
    %316 = arith.addf %310, %315 : vector<4x16xf32>
    %c1_254 = arith.constant 1 : index
    %c0_255 = arith.constant 0 : index
    %c0_256 = arith.constant 0 : index
    %317 = vector.load %arg21[%c1_254, %c0_255, %c0_256] : memref<4x16x32xf32, #tpu.memory_space<vmem>>, vector<1x16x32xf32>
    %318 = vector.shape_cast %317 : vector<1x16x32xf32> to vector<16x32xf32>
    %cst_257 = arith.constant dense<0.000000e+00> : vector<4x32xf32>
    %319 = tpu.matmul %316, %318, %cst_257 {dimension_numbers = #tpu.dot_dimension_numbers<[1], [0], [0], [1], [0, 0, 1, 1], [], []>} : vector<4x16xf32>, vector<16x32xf32>, vector<4x32xf32> -> vector<4x32xf32>
    %320 = arith.addf %303, %319 : vector<4x32xf32>
    %c2_258 = arith.constant 2 : index
    %c0_259 = arith.constant 0 : index
    %c0_260 = arith.constant 0 : index
    %321 = vector.load %arg20[%c2_258, %c0_259, %c0_260] : memref<4x4x2xf32, #tpu.memory_space<vmem>>, vector<1x4x2xf32>
    %322 = vector.shape_cast %321 : vector<1x4x2xf32> to vector<4x2xf32>
    %323 = vector.extract_strided_slice %322 {offsets = [0, 0], sizes = [4, 1], strides = [1, 1]} : vector<4x2xf32> to vector<4x1xf32>
    %324 = vector.extract_strided_slice %285 {offsets = [0, 0], sizes = [1, 16], strides = [1, 1]} : vector<2x16xf32> to vector<1x16xf32>
    %325 = vector.broadcast %323 : vector<4x1xf32> to vector<4x16xf32>
    %326 = vector.broadcast %324 : vector<1x16xf32> to vector<4x16xf32>
    %327 = arith.mulf %325, %326 : vector<4x16xf32>
    %328 = vector.extract_strided_slice %322 {offsets = [0, 1], sizes = [4, 1], strides = [1, 1]} : vector<4x2xf32> to vector<4x1xf32>
    %329 = vector.extract_strided_slice %285 {offsets = [1, 0], sizes = [1, 16], strides = [1, 1]} : vector<2x16xf32> to vector<1x16xf32>
    %330 = vector.broadcast %328 : vector<4x1xf32> to vector<4x16xf32>
    %331 = vector.broadcast %329 : vector<1x16xf32> to vector<4x16xf32>
    %332 = arith.mulf %330, %331 : vector<4x16xf32>
    %333 = arith.addf %327, %332 : vector<4x16xf32>
    %c2_261 = arith.constant 2 : index
    %c0_262 = arith.constant 0 : index
    %c0_263 = arith.constant 0 : index
    %334 = vector.load %arg21[%c2_261, %c0_262, %c0_263] : memref<4x16x32xf32, #tpu.memory_space<vmem>>, vector<1x16x32xf32>
    %335 = vector.shape_cast %334 : vector<1x16x32xf32> to vector<16x32xf32>
    %cst_264 = arith.constant dense<0.000000e+00> : vector<4x32xf32>
    %336 = tpu.matmul %333, %335, %cst_264 {dimension_numbers = #tpu.dot_dimension_numbers<[1], [0], [0], [1], [0, 0, 1, 1], [], []>} : vector<4x16xf32>, vector<16x32xf32>, vector<4x32xf32> -> vector<4x32xf32>
    %337 = arith.addf %320, %336 : vector<4x32xf32>
    %c3_265 = arith.constant 3 : index
    %c0_266 = arith.constant 0 : index
    %c0_267 = arith.constant 0 : index
    %338 = vector.load %arg20[%c3_265, %c0_266, %c0_267] : memref<4x4x2xf32, #tpu.memory_space<vmem>>, vector<1x4x2xf32>
    %339 = vector.shape_cast %338 : vector<1x4x2xf32> to vector<4x2xf32>
    %340 = vector.extract_strided_slice %339 {offsets = [0, 0], sizes = [4, 1], strides = [1, 1]} : vector<4x2xf32> to vector<4x1xf32>
    %341 = vector.extract_strided_slice %285 {offsets = [0, 0], sizes = [1, 16], strides = [1, 1]} : vector<2x16xf32> to vector<1x16xf32>
    %342 = vector.broadcast %340 : vector<4x1xf32> to vector<4x16xf32>
    %343 = vector.broadcast %341 : vector<1x16xf32> to vector<4x16xf32>
    %344 = arith.mulf %342, %343 : vector<4x16xf32>
    %345 = vector.extract_strided_slice %339 {offsets = [0, 1], sizes = [4, 1], strides = [1, 1]} : vector<4x2xf32> to vector<4x1xf32>
    %346 = vector.extract_strided_slice %285 {offsets = [1, 0], sizes = [1, 16], strides = [1, 1]} : vector<2x16xf32> to vector<1x16xf32>
    %347 = vector.broadcast %345 : vector<4x1xf32> to vector<4x16xf32>
    %348 = vector.broadcast %346 : vector<1x16xf32> to vector<4x16xf32>
    %349 = arith.mulf %347, %348 : vector<4x16xf32>
    %350 = arith.addf %344, %349 : vector<4x16xf32>
    %c3_268 = arith.constant 3 : index
    %c0_269 = arith.constant 0 : index
    %c0_270 = arith.constant 0 : index
    %351 = vector.load %arg21[%c3_268, %c0_269, %c0_270] : memref<4x16x32xf32, #tpu.memory_space<vmem>>, vector<1x16x32xf32>
    %352 = vector.shape_cast %351 : vector<1x16x32xf32> to vector<16x32xf32>
    %cst_271 = arith.constant dense<0.000000e+00> : vector<4x32xf32>
    %353 = tpu.matmul %350, %352, %cst_271 {dimension_numbers = #tpu.dot_dimension_numbers<[1], [0], [0], [1], [0, 0, 1, 1], [], []>} : vector<4x16xf32>, vector<16x32xf32>, vector<4x32xf32> -> vector<4x32xf32>
    %354 = arith.addf %337, %353 : vector<4x32xf32>
    %c0_272 = arith.constant 0 : index
    %c0_273 = arith.constant 0 : index
    %355 = vector.load %arg22[%c0_272, %c0_273] : memref<1x32xf32, #tpu.memory_space<vmem>>, vector<1x32xf32>
    %356 = vector.broadcast %355 : vector<1x32xf32> to vector<4x32xf32>
    %357 = arith.addf %354, %356 : vector<4x32xf32>
    %cst_274 = arith.constant 0.000000e+00 : f32
    %358 = vector.broadcast %cst_274 : f32 to vector<8x64xf32>
    %c0_275 = arith.constant 0 : index
    %c0_276 = arith.constant 0 : index
    %c0_277 = arith.constant 0 : index
    %359 = vector.load %arg23[%c0_275, %c0_276, %c0_277] : memref<4x8x4xf32, #tpu.memory_space<vmem>>, vector<1x8x4xf32>
    %360 = vector.shape_cast %359 : vector<1x8x4xf32> to vector<8x4xf32>
    %cst_278 = arith.constant dense<0.000000e+00> : vector<8x32xf32>
    %361 = tpu.matmul %360, %357, %cst_278 {dimension_numbers = #tpu.dot_dimension_numbers<[1], [0], [0], [1], [0, 0, 1, 1], [], []>} : vector<8x4xf32>, vector<4x32xf32>, vector<8x32xf32> -> vector<8x32xf32>
    %c0_279 = arith.constant 0 : index
    %c0_280 = arith.constant 0 : index
    %c0_281 = arith.constant 0 : index
    %362 = vector.load %arg24[%c0_279, %c0_280, %c0_281] : memref<4x32x64xf32, #tpu.memory_space<vmem>>, vector<1x32x64xf32>
    %363 = vector.shape_cast %362 : vector<1x32x64xf32> to vector<32x64xf32>
    %cst_282 = arith.constant dense<0.000000e+00> : vector<8x64xf32>
    %364 = tpu.matmul %361, %363, %cst_282 {dimension_numbers = #tpu.dot_dimension_numbers<[1], [0], [0], [1], [0, 0, 1, 1], [], []>} : vector<8x32xf32>, vector<32x64xf32>, vector<8x64xf32> -> vector<8x64xf32>
    %365 = arith.addf %358, %364 : vector<8x64xf32>
    %c1_283 = arith.constant 1 : index
    %c0_284 = arith.constant 0 : index
    %c0_285 = arith.constant 0 : index
    %366 = vector.load %arg23[%c1_283, %c0_284, %c0_285] : memref<4x8x4xf32, #tpu.memory_space<vmem>>, vector<1x8x4xf32>
    %367 = vector.shape_cast %366 : vector<1x8x4xf32> to vector<8x4xf32>
    %cst_286 = arith.constant dense<0.000000e+00> : vector<8x32xf32>
    %368 = tpu.matmul %367, %357, %cst_286 {dimension_numbers = #tpu.dot_dimension_numbers<[1], [0], [0], [1], [0, 0, 1, 1], [], []>} : vector<8x4xf32>, vector<4x32xf32>, vector<8x32xf32> -> vector<8x32xf32>
    %c1_287 = arith.constant 1 : index
    %c0_288 = arith.constant 0 : index
    %c0_289 = arith.constant 0 : index
    %369 = vector.load %arg24[%c1_287, %c0_288, %c0_289] : memref<4x32x64xf32, #tpu.memory_space<vmem>>, vector<1x32x64xf32>
    %370 = vector.shape_cast %369 : vector<1x32x64xf32> to vector<32x64xf32>
    %cst_290 = arith.constant dense<0.000000e+00> : vector<8x64xf32>
    %371 = tpu.matmul %368, %370, %cst_290 {dimension_numbers = #tpu.dot_dimension_numbers<[1], [0], [0], [1], [0, 0, 1, 1], [], []>} : vector<8x32xf32>, vector<32x64xf32>, vector<8x64xf32> -> vector<8x64xf32>
    %372 = arith.addf %365, %371 : vector<8x64xf32>
    %c2_291 = arith.constant 2 : index
    %c0_292 = arith.constant 0 : index
    %c0_293 = arith.constant 0 : index
    %373 = vector.load %arg23[%c2_291, %c0_292, %c0_293] : memref<4x8x4xf32, #tpu.memory_space<vmem>>, vector<1x8x4xf32>
    %374 = vector.shape_cast %373 : vector<1x8x4xf32> to vector<8x4xf32>
    %cst_294 = arith.constant dense<0.000000e+00> : vector<8x32xf32>
    %375 = tpu.matmul %374, %357, %cst_294 {dimension_numbers = #tpu.dot_dimension_numbers<[1], [0], [0], [1], [0, 0, 1, 1], [], []>} : vector<8x4xf32>, vector<4x32xf32>, vector<8x32xf32> -> vector<8x32xf32>
    %c2_295 = arith.constant 2 : index
    %c0_296 = arith.constant 0 : index
    %c0_297 = arith.constant 0 : index
    %376 = vector.load %arg24[%c2_295, %c0_296, %c0_297] : memref<4x32x64xf32, #tpu.memory_space<vmem>>, vector<1x32x64xf32>
    %377 = vector.shape_cast %376 : vector<1x32x64xf32> to vector<32x64xf32>
    %cst_298 = arith.constant dense<0.000000e+00> : vector<8x64xf32>
    %378 = tpu.matmul %375, %377, %cst_298 {dimension_numbers = #tpu.dot_dimension_numbers<[1], [0], [0], [1], [0, 0, 1, 1], [], []>} : vector<8x32xf32>, vector<32x64xf32>, vector<8x64xf32> -> vector<8x64xf32>
    %379 = arith.addf %372, %378 : vector<8x64xf32>
    %c3_299 = arith.constant 3 : index
    %c0_300 = arith.constant 0 : index
    %c0_301 = arith.constant 0 : index
    %380 = vector.load %arg23[%c3_299, %c0_300, %c0_301] : memref<4x8x4xf32, #tpu.memory_space<vmem>>, vector<1x8x4xf32>
    %381 = vector.shape_cast %380 : vector<1x8x4xf32> to vector<8x4xf32>
    %cst_302 = arith.constant dense<0.000000e+00> : vector<8x32xf32>
    %382 = tpu.matmul %381, %357, %cst_302 {dimension_numbers = #tpu.dot_dimension_numbers<[1], [0], [0], [1], [0, 0, 1, 1], [], []>} : vector<8x4xf32>, vector<4x32xf32>, vector<8x32xf32> -> vector<8x32xf32>
    %c3_303 = arith.constant 3 : index
    %c0_304 = arith.constant 0 : index
    %c0_305 = arith.constant 0 : index
    %383 = vector.load %arg24[%c3_303, %c0_304, %c0_305] : memref<4x32x64xf32, #tpu.memory_space<vmem>>, vector<1x32x64xf32>
    %384 = vector.shape_cast %383 : vector<1x32x64xf32> to vector<32x64xf32>
    %cst_306 = arith.constant dense<0.000000e+00> : vector<8x64xf32>
    %385 = tpu.matmul %382, %384, %cst_306 {dimension_numbers = #tpu.dot_dimension_numbers<[1], [0], [0], [1], [0, 0, 1, 1], [], []>} : vector<8x32xf32>, vector<32x64xf32>, vector<8x64xf32> -> vector<8x64xf32>
    %386 = arith.addf %379, %385 : vector<8x64xf32>
    %c0_307 = arith.constant 0 : index
    %c0_308 = arith.constant 0 : index
    %387 = vector.load %arg25[%c0_307, %c0_308] : memref<1x64xf32, #tpu.memory_space<vmem>>, vector<1x64xf32>
    %388 = vector.broadcast %387 : vector<1x64xf32> to vector<8x64xf32>
    %389 = arith.addf %386, %388 : vector<8x64xf32>
    %cst_309 = arith.constant 0.000000e+00 : f32
    %390 = vector.broadcast %cst_309 : f32 to vector<16x128xf32>
    %c0_310 = arith.constant 0 : index
    %c0_311 = arith.constant 0 : index
    %c0_312 = arith.constant 0 : index
    %391 = vector.load %arg26[%c0_310, %c0_311, %c0_312] : memref<4x16x8xf32, #tpu.memory_space<vmem>>, vector<1x16x8xf32>
    %392 = vector.shape_cast %391 : vector<1x16x8xf32> to vector<16x8xf32>
    %cst_313 = arith.constant dense<0.000000e+00> : vector<16x64xf32>
    %393 = tpu.matmul %392, %389, %cst_313 {dimension_numbers = #tpu.dot_dimension_numbers<[1], [0], [0], [1], [0, 0, 1, 1], [], []>} : vector<16x8xf32>, vector<8x64xf32>, vector<16x64xf32> -> vector<16x64xf32>
    %c0_314 = arith.constant 0 : index
    %c0_315 = arith.constant 0 : index
    %c0_316 = arith.constant 0 : index
    %394 = vector.load %arg27[%c0_314, %c0_315, %c0_316] : memref<4x64x128xf32, #tpu.memory_space<vmem>>, vector<1x64x128xf32>
    %395 = vector.shape_cast %394 : vector<1x64x128xf32> to vector<64x128xf32>
    %cst_317 = arith.constant dense<0.000000e+00> : vector<16x128xf32>
    %396 = tpu.matmul %393, %395, %cst_317 {dimension_numbers = #tpu.dot_dimension_numbers<[1], [0], [0], [1], [0, 0, 1, 1], [], []>} : vector<16x64xf32>, vector<64x128xf32>, vector<16x128xf32> -> vector<16x128xf32>
    %397 = arith.addf %390, %396 : vector<16x128xf32>
    %c1_318 = arith.constant 1 : index
    %c0_319 = arith.constant 0 : index
    %c0_320 = arith.constant 0 : index
    %398 = vector.load %arg26[%c1_318, %c0_319, %c0_320] : memref<4x16x8xf32, #tpu.memory_space<vmem>>, vector<1x16x8xf32>
    %399 = vector.shape_cast %398 : vector<1x16x8xf32> to vector<16x8xf32>
    %cst_321 = arith.constant dense<0.000000e+00> : vector<16x64xf32>
    %400 = tpu.matmul %399, %389, %cst_321 {dimension_numbers = #tpu.dot_dimension_numbers<[1], [0], [0], [1], [0, 0, 1, 1], [], []>} : vector<16x8xf32>, vector<8x64xf32>, vector<16x64xf32> -> vector<16x64xf32>
    %c1_322 = arith.constant 1 : index
    %c0_323 = arith.constant 0 : index
    %c0_324 = arith.constant 0 : index
    %401 = vector.load %arg27[%c1_322, %c0_323, %c0_324] : memref<4x64x128xf32, #tpu.memory_space<vmem>>, vector<1x64x128xf32>
    %402 = vector.shape_cast %401 : vector<1x64x128xf32> to vector<64x128xf32>
    %cst_325 = arith.constant dense<0.000000e+00> : vector<16x128xf32>
    %403 = tpu.matmul %400, %402, %cst_325 {dimension_numbers = #tpu.dot_dimension_numbers<[1], [0], [0], [1], [0, 0, 1, 1], [], []>} : vector<16x64xf32>, vector<64x128xf32>, vector<16x128xf32> -> vector<16x128xf32>
    %404 = arith.addf %397, %403 : vector<16x128xf32>
    %c2_326 = arith.constant 2 : index
    %c0_327 = arith.constant 0 : index
    %c0_328 = arith.constant 0 : index
    %405 = vector.load %arg26[%c2_326, %c0_327, %c0_328] : memref<4x16x8xf32, #tpu.memory_space<vmem>>, vector<1x16x8xf32>
    %406 = vector.shape_cast %405 : vector<1x16x8xf32> to vector<16x8xf32>
    %cst_329 = arith.constant dense<0.000000e+00> : vector<16x64xf32>
    %407 = tpu.matmul %406, %389, %cst_329 {dimension_numbers = #tpu.dot_dimension_numbers<[1], [0], [0], [1], [0, 0, 1, 1], [], []>} : vector<16x8xf32>, vector<8x64xf32>, vector<16x64xf32> -> vector<16x64xf32>
    %c2_330 = arith.constant 2 : index
    %c0_331 = arith.constant 0 : index
    %c0_332 = arith.constant 0 : index
    %408 = vector.load %arg27[%c2_330, %c0_331, %c0_332] : memref<4x64x128xf32, #tpu.memory_space<vmem>>, vector<1x64x128xf32>
    %409 = vector.shape_cast %408 : vector<1x64x128xf32> to vector<64x128xf32>
    %cst_333 = arith.constant dense<0.000000e+00> : vector<16x128xf32>
    %410 = tpu.matmul %407, %409, %cst_333 {dimension_numbers = #tpu.dot_dimension_numbers<[1], [0], [0], [1], [0, 0, 1, 1], [], []>} : vector<16x64xf32>, vector<64x128xf32>, vector<16x128xf32> -> vector<16x128xf32>
    %411 = arith.addf %404, %410 : vector<16x128xf32>
    %c3_334 = arith.constant 3 : index
    %c0_335 = arith.constant 0 : index
    %c0_336 = arith.constant 0 : index
    %412 = vector.load %arg26[%c3_334, %c0_335, %c0_336] : memref<4x16x8xf32, #tpu.memory_space<vmem>>, vector<1x16x8xf32>
    %413 = vector.shape_cast %412 : vector<1x16x8xf32> to vector<16x8xf32>
    %cst_337 = arith.constant dense<0.000000e+00> : vector<16x64xf32>
    %414 = tpu.matmul %413, %389, %cst_337 {dimension_numbers = #tpu.dot_dimension_numbers<[1], [0], [0], [1], [0, 0, 1, 1], [], []>} : vector<16x8xf32>, vector<8x64xf32>, vector<16x64xf32> -> vector<16x64xf32>
    %c3_338 = arith.constant 3 : index
    %c0_339 = arith.constant 0 : index
    %c0_340 = arith.constant 0 : index
    %415 = vector.load %arg27[%c3_338, %c0_339, %c0_340] : memref<4x64x128xf32, #tpu.memory_space<vmem>>, vector<1x64x128xf32>
    %416 = vector.shape_cast %415 : vector<1x64x128xf32> to vector<64x128xf32>
    %cst_341 = arith.constant dense<0.000000e+00> : vector<16x128xf32>
    %417 = tpu.matmul %414, %416, %cst_341 {dimension_numbers = #tpu.dot_dimension_numbers<[1], [0], [0], [1], [0, 0, 1, 1], [], []>} : vector<16x64xf32>, vector<64x128xf32>, vector<16x128xf32> -> vector<16x128xf32>
    %418 = arith.addf %411, %417 : vector<16x128xf32>
    %c0_342 = arith.constant 0 : index
    %c0_343 = arith.constant 0 : index
    %419 = vector.load %arg28[%c0_342, %c0_343] : memref<1x128xf32, #tpu.memory_space<vmem>>, vector<1x128xf32>
    %420 = vector.broadcast %419 : vector<1x128xf32> to vector<16x128xf32>
    %421 = arith.addf %418, %420 : vector<16x128xf32>
    %cst_344 = arith.constant 0.000000e+00 : f32
    %422 = vector.broadcast %cst_344 : f32 to vector<32x64xf32>
    %c0_345 = arith.constant 0 : index
    %c0_346 = arith.constant 0 : index
    %c0_347 = arith.constant 0 : index
    %423 = vector.load %arg29[%c0_345, %c0_346, %c0_347] : memref<4x32x16xf32, #tpu.memory_space<vmem>>, vector<1x32x16xf32>
    %424 = vector.shape_cast %423 : vector<1x32x16xf32> to vector<32x16xf32>
    %cst_348 = arith.constant dense<0.000000e+00> : vector<32x128xf32>
    %425 = tpu.matmul %424, %421, %cst_348 {dimension_numbers = #tpu.dot_dimension_numbers<[1], [0], [0], [1], [0, 0, 1, 1], [], []>} : vector<32x16xf32>, vector<16x128xf32>, vector<32x128xf32> -> vector<32x128xf32>
    %c0_349 = arith.constant 0 : index
    %c0_350 = arith.constant 0 : index
    %c0_351 = arith.constant 0 : index
    %426 = vector.load %arg30[%c0_349, %c0_350, %c0_351] : memref<4x128x64xf32, #tpu.memory_space<vmem>>, vector<1x128x64xf32>
    %427 = vector.shape_cast %426 : vector<1x128x64xf32> to vector<128x64xf32>
    %cst_352 = arith.constant dense<0.000000e+00> : vector<32x64xf32>
    %428 = tpu.matmul %425, %427, %cst_352 {dimension_numbers = #tpu.dot_dimension_numbers<[1], [0], [0], [1], [0, 0, 1, 1], [], []>} : vector<32x128xf32>, vector<128x64xf32>, vector<32x64xf32> -> vector<32x64xf32>
    %429 = arith.addf %422, %428 : vector<32x64xf32>
    %c1_353 = arith.constant 1 : index
    %c0_354 = arith.constant 0 : index
    %c0_355 = arith.constant 0 : index
    %430 = vector.load %arg29[%c1_353, %c0_354, %c0_355] : memref<4x32x16xf32, #tpu.memory_space<vmem>>, vector<1x32x16xf32>
    %431 = vector.shape_cast %430 : vector<1x32x16xf32> to vector<32x16xf32>
    %cst_356 = arith.constant dense<0.000000e+00> : vector<32x128xf32>
    %432 = tpu.matmul %431, %421, %cst_356 {dimension_numbers = #tpu.dot_dimension_numbers<[1], [0], [0], [1], [0, 0, 1, 1], [], []>} : vector<32x16xf32>, vector<16x128xf32>, vector<32x128xf32> -> vector<32x128xf32>
    %c1_357 = arith.constant 1 : index
    %c0_358 = arith.constant 0 : index
    %c0_359 = arith.constant 0 : index
    %433 = vector.load %arg30[%c1_357, %c0_358, %c0_359] : memref<4x128x64xf32, #tpu.memory_space<vmem>>, vector<1x128x64xf32>
    %434 = vector.shape_cast %433 : vector<1x128x64xf32> to vector<128x64xf32>
    %cst_360 = arith.constant dense<0.000000e+00> : vector<32x64xf32>
    %435 = tpu.matmul %432, %434, %cst_360 {dimension_numbers = #tpu.dot_dimension_numbers<[1], [0], [0], [1], [0, 0, 1, 1], [], []>} : vector<32x128xf32>, vector<128x64xf32>, vector<32x64xf32> -> vector<32x64xf32>
    %436 = arith.addf %429, %435 : vector<32x64xf32>
    %c2_361 = arith.constant 2 : index
    %c0_362 = arith.constant 0 : index
    %c0_363 = arith.constant 0 : index
    %437 = vector.load %arg29[%c2_361, %c0_362, %c0_363] : memref<4x32x16xf32, #tpu.memory_space<vmem>>, vector<1x32x16xf32>
    %438 = vector.shape_cast %437 : vector<1x32x16xf32> to vector<32x16xf32>
    %cst_364 = arith.constant dense<0.000000e+00> : vector<32x128xf32>
    %439 = tpu.matmul %438, %421, %cst_364 {dimension_numbers = #tpu.dot_dimension_numbers<[1], [0], [0], [1], [0, 0, 1, 1], [], []>} : vector<32x16xf32>, vector<16x128xf32>, vector<32x128xf32> -> vector<32x128xf32>
    %c2_365 = arith.constant 2 : index
    %c0_366 = arith.constant 0 : index
    %c0_367 = arith.constant 0 : index
    %440 = vector.load %arg30[%c2_365, %c0_366, %c0_367] : memref<4x128x64xf32, #tpu.memory_space<vmem>>, vector<1x128x64xf32>
    %441 = vector.shape_cast %440 : vector<1x128x64xf32> to vector<128x64xf32>
    %cst_368 = arith.constant dense<0.000000e+00> : vector<32x64xf32>
    %442 = tpu.matmul %439, %441, %cst_368 {dimension_numbers = #tpu.dot_dimension_numbers<[1], [0], [0], [1], [0, 0, 1, 1], [], []>} : vector<32x128xf32>, vector<128x64xf32>, vector<32x64xf32> -> vector<32x64xf32>
    %443 = arith.addf %436, %442 : vector<32x64xf32>
    %c3_369 = arith.constant 3 : index
    %c0_370 = arith.constant 0 : index
    %c0_371 = arith.constant 0 : index
    %444 = vector.load %arg29[%c3_369, %c0_370, %c0_371] : memref<4x32x16xf32, #tpu.memory_space<vmem>>, vector<1x32x16xf32>
    %445 = vector.shape_cast %444 : vector<1x32x16xf32> to vector<32x16xf32>
    %cst_372 = arith.constant dense<0.000000e+00> : vector<32x128xf32>
    %446 = tpu.matmul %445, %421, %cst_372 {dimension_numbers = #tpu.dot_dimension_numbers<[1], [0], [0], [1], [0, 0, 1, 1], [], []>} : vector<32x16xf32>, vector<16x128xf32>, vector<32x128xf32> -> vector<32x128xf32>
    %c3_373 = arith.constant 3 : index
    %c0_374 = arith.constant 0 : index
    %c0_375 = arith.constant 0 : index
    %447 = vector.load %arg30[%c3_373, %c0_374, %c0_375] : memref<4x128x64xf32, #tpu.memory_space<vmem>>, vector<1x128x64xf32>
    %448 = vector.shape_cast %447 : vector<1x128x64xf32> to vector<128x64xf32>
    %cst_376 = arith.constant dense<0.000000e+00> : vector<32x64xf32>
    %449 = tpu.matmul %446, %448, %cst_376 {dimension_numbers = #tpu.dot_dimension_numbers<[1], [0], [0], [1], [0, 0, 1, 1], [], []>} : vector<32x128xf32>, vector<128x64xf32>, vector<32x64xf32> -> vector<32x64xf32>
    %450 = arith.addf %443, %449 : vector<32x64xf32>
    %c0_377 = arith.constant 0 : index
    %c0_378 = arith.constant 0 : index
    %451 = vector.load %arg31[%c0_377, %c0_378] : memref<1x64xf32, #tpu.memory_space<vmem>>, vector<1x64xf32>
    %452 = vector.broadcast %451 : vector<1x64xf32> to vector<32x64xf32>
    %453 = arith.addf %450, %452 : vector<32x64xf32>
    %c0_379 = arith.constant 0 : index
    %c0_380 = arith.constant 0 : index
    %c0_381 = arith.constant 0 : index
    %454 = vector.load %arg32[%c0_379, %c0_380, %c0_381] : memref<1x32x64xf32, #tpu.memory_space<vmem>>, vector<1x32x64xf32>
    %455 = vector.shape_cast %454 : vector<1x32x64xf32> to vector<32x64xf32>
    %456 = vector.shape_cast %453 : vector<32x64xf32> to vector<1x32x64xf32>
    tpu.vector_store %arg32[%c0_379, %c0_380, %c0_381], %456 {strides = array<i32>} : memref<1x32x64xf32, #tpu.memory_space<vmem>>, vector<1x32x64xf32>,
    return
  }
  func.func @transform_0(%arg0: i32) -> (i32, i32, i32) {
    %c0_i32 = arith.constant 0 : i32
    %c0_i32_0 = arith.constant 0 : i32
    %c0_i32_1 = arith.constant 0 : i32
    return %arg0, %c0_i32, %c0_i32_0 : i32, i32, i32
  }
  func.func @transform_1(%arg0: i32) -> (i32, i32, i32) {
    %c0_i32 = arith.constant 0 : i32
    %c0_i32_0 = arith.constant 0 : i32
    %c0_i32_1 = arith.constant 0 : i32
    %c0_i32_2 = arith.constant 0 : i32
    return %c0_i32, %c0_i32_0, %c0_i32_1 : i32, i32, i32
  }
  func.func @transform_2(%arg0: i32) -> (i32, i32, i32) {
    %c0_i32 = arith.constant 0 : i32
    %c0_i32_0 = arith.constant 0 : i32
    %c0_i32_1 = arith.constant 0 : i32
    %c0_i32_2 = arith.constant 0 : i32
    return %c0_i32, %c0_i32_0, %c0_i32_1 : i32, i32, i32
  }
  func.func @transform_3(%arg0: i32) -> (i32, i32) {
    %c0_i32 = arith.constant 0 : i32
    %c0_i32_0 = arith.constant 0 : i32
    %c0_i32_1 = arith.constant 0 : i32
    return %c0_i32, %c0_i32_0 : i32, i32
  }
  func.func @transform_4(%arg0: i32) -> (i32, i32, i32) {
    %c0_i32 = arith.constant 0 : i32
    %c0_i32_0 = arith.constant 0 : i32
    %c0_i32_1 = arith.constant 0 : i32
    %c0_i32_2 = arith.constant 0 : i32
    return %c0_i32, %c0_i32_0, %c0_i32_1 : i32, i32, i32
  }
  func.func @transform_5(%arg0: i32) -> (i32, i32, i32) {
    %c0_i32 = arith.constant 0 : i32
    %c0_i32_0 = arith.constant 0 : i32
    %c0_i32_1 = arith.constant 0 : i32
    %c0_i32_2 = arith.constant 0 : i32
    return %c0_i32, %c0_i32_0, %c0_i32_1 : i32, i32, i32
  }
  func.func @transform_6(%arg0: i32) -> (i32, i32) {
    %c0_i32 = arith.constant 0 : i32
    %c0_i32_0 = arith.constant 0 : i32
    %c0_i32_1 = arith.constant 0 : i32
    return %c0_i32, %c0_i32_0 : i32, i32
  }
  func.func @transform_7(%arg0: i32) -> (i32, i32, i32) {
    %c0_i32 = arith.constant 0 : i32
    %c0_i32_0 = arith.constant 0 : i32
    %c0_i32_1 = arith.constant 0 : i32
    %c0_i32_2 = arith.constant 0 : i32
    return %c0_i32, %c0_i32_0, %c0_i32_1 : i32, i32, i32
  }
  func.func @transform_8(%arg0: i32) -> (i32, i32, i32) {
    %c0_i32 = arith.constant 0 : i32
    %c0_i32_0 = arith.constant 0 : i32
    %c0_i32_1 = arith.constant 0 : i32
    %c0_i32_2 = arith.constant 0 : i32
    return %c0_i32, %c0_i32_0, %c0_i32_1 : i32, i32, i32
  }
  func.func @transform_9(%arg0: i32) -> (i32, i32) {
    %c0_i32 = arith.constant 0 : i32
    %c0_i32_0 = arith.constant 0 : i32
    %c0_i32_1 = arith.constant 0 : i32
    return %c0_i32, %c0_i32_0 : i32, i32
  }
  func.func @transform_10(%arg0: i32) -> (i32, i32, i32) {
    %c0_i32 = arith.constant 0 : i32
    %c0_i32_0 = arith.constant 0 : i32
    %c0_i32_1 = arith.constant 0 : i32
    %c0_i32_2 = arith.constant 0 : i32
    return %c0_i32, %c0_i32_0, %c0_i32_1 : i32, i32, i32
  }
  func.func @transform_11(%arg0: i32) -> (i32, i32, i32) {
    %c0_i32 = arith.constant 0 : i32
    %c0_i32_0 = arith.constant 0 : i32
    %c0_i32_1 = arith.constant 0 : i32
    %c0_i32_2 = arith.constant 0 : i32
    return %c0_i32, %c0_i32_0, %c0_i32_1 : i32, i32, i32
  }
  func.func @transform_12(%arg0: i32) -> (i32, i32) {
    %c0_i32 = arith.constant 0 : i32
    %c0_i32_0 = arith.constant 0 : i32
    %c0_i32_1 = arith.constant 0 : i32
    return %c0_i32, %c0_i32_0 : i32, i32
  }
  func.func @transform_13(%arg0: i32) -> (i32, i32, i32) {
    %c0_i32 = arith.constant 0 : i32
    %c0_i32_0 = arith.constant 0 : i32
    %c0_i32_1 = arith.constant 0 : i32
    %c0_i32_2 = arith.constant 0 : i32
    return %c0_i32, %c0_i32_0, %c0_i32_1 : i32, i32, i32
  }
  func.func @transform_14(%arg0: i32) -> (i32, i32, i32) {
    %c0_i32 = arith.constant 0 : i32
    %c0_i32_0 = arith.constant 0 : i32
    %c0_i32_1 = arith.constant 0 : i32
    %c0_i32_2 = arith.constant 0 : i32
    return %c0_i32, %c0_i32_0, %c0_i32_1 : i32, i32, i32
  }
  func.func @transform_15(%arg0: i32) -> (i32, i32) {
    %c0_i32 = arith.constant 0 : i32
    %c0_i32_0 = arith.constant 0 : i32
    %c0_i32_1 = arith.constant 0 : i32
    return %c0_i32, %c0_i32_0 : i32, i32
  }
  func.func @transform_16(%arg0: i32) -> (i32, i32, i32) {
    %c0_i32 = arith.constant 0 : i32
    %c0_i32_0 = arith.constant 0 : i32
    %c0_i32_1 = arith.constant 0 : i32
    %c0_i32_2 = arith.constant 0 : i32
    return %c0_i32, %c0_i32_0, %c0_i32_1 : i32, i32, i32
  }
  func.func @transform_17(%arg0: i32) -> (i32, i32, i32) {
    %c0_i32 = arith.constant 0 : i32
    %c0_i32_0 = arith.constant 0 : i32
    %c0_i32_1 = arith.constant 0 : i32
    %c0_i32_2 = arith.constant 0 : i32
    return %c0_i32, %c0_i32_0, %c0_i32_1 : i32, i32, i32
  }
  func.func @transform_18(%arg0: i32) -> (i32, i32) {
    %c0_i32 = arith.constant 0 : i32
    %c0_i32_0 = arith.constant 0 : i32
    %c0_i32_1 = arith.constant 0 : i32
    return %c0_i32, %c0_i32_0 : i32, i32
  }
  func.func @transform_19(%arg0: i32) -> (i32, i32, i32) {
    %c0_i32 = arith.constant 0 : i32
    %c0_i32_0 = arith.constant 0 : i32
    %c0_i32_1 = arith.constant 0 : i32
    %c0_i32_2 = arith.constant 0 : i32
    return %c0_i32, %c0_i32_0, %c0_i32_1 : i32, i32, i32
  }
  func.func @transform_20(%arg0: i32) -> (i32, i32, i32) {
    %c0_i32 = arith.constant 0 : i32
    %c0_i32_0 = arith.constant 0 : i32
    %c0_i32_1 = arith.constant 0 : i32
    %c0_i32_2 = arith.constant 0 : i32
    return %c0_i32, %c0_i32_0, %c0_i32_1 : i32, i32, i32
  }
  func.func @transform_21(%arg0: i32) -> (i32, i32) {
    %c0_i32 = arith.constant 0 : i32
    %c0_i32_0 = arith.constant 0 : i32
    %c0_i32_1 = arith.constant 0 : i32
    return %c0_i32, %c0_i32_0 : i32, i32
  }
  func.func @transform_22(%arg0: i32) -> (i32, i32, i32) {
    %c0_i32 = arith.constant 0 : i32
    %c0_i32_0 = arith.constant 0 : i32
    %c0_i32_1 = arith.constant 0 : i32
    %c0_i32_2 = arith.constant 0 : i32
    return %c0_i32, %c0_i32_0, %c0_i32_1 : i32, i32, i32
  }
  func.func @transform_23(%arg0: i32) -> (i32, i32, i32) {
    %c0_i32 = arith.constant 0 : i32
    %c0_i32_0 = arith.constant 0 : i32
    %c0_i32_1 = arith.constant 0 : i32
    %c0_i32_2 = arith.constant 0 : i32
    return %c0_i32, %c0_i32_0, %c0_i32_1 : i32, i32, i32
  }
  func.func @transform_24(%arg0: i32) -> (i32, i32) {
    %c0_i32 = arith.constant 0 : i32
    %c0_i32_0 = arith.constant 0 : i32
    %c0_i32_1 = arith.constant 0 : i32
    return %c0_i32, %c0_i32_0 : i32, i32
  }
  func.func @transform_25(%arg0: i32) -> (i32, i32, i32) {
    %c0_i32 = arith.constant 0 : i32
    %c0_i32_0 = arith.constant 0 : i32
    %c0_i32_1 = arith.constant 0 : i32
    %c0_i32_2 = arith.constant 0 : i32
    return %c0_i32, %c0_i32_0, %c0_i32_1 : i32, i32, i32
  }
  func.func @transform_26(%arg0: i32) -> (i32, i32, i32) {
    %c0_i32 = arith.constant 0 : i32
    %c0_i32_0 = arith.constant 0 : i32
    %c0_i32_1 = arith.constant 0 : i32
    %c0_i32_2 = arith.constant 0 : i32
    return %c0_i32, %c0_i32_0, %c0_i32_1 : i32, i32, i32
  }
  func.func @transform_27(%arg0: i32) -> (i32, i32) {
    %c0_i32 = arith.constant 0 : i32
    %c0_i32_0 = arith.constant 0 : i32
    %c0_i32_1 = arith.constant 0 : i32
    return %c0_i32, %c0_i32_0 : i32, i32
  }
  func.func @transform_28(%arg0: i32) -> (i32, i32, i32) {
    %c0_i32 = arith.constant 0 : i32
    %c0_i32_0 = arith.constant 0 : i32
    %c0_i32_1 = arith.constant 0 : i32
    %c0_i32_2 = arith.constant 0 : i32
    return %c0_i32, %c0_i32_0, %c0_i32_1 : i32, i32, i32
  }
  func.func @transform_29(%arg0: i32) -> (i32, i32, i32) {
    %c0_i32 = arith.constant 0 : i32
    %c0_i32_0 = arith.constant 0 : i32
    %c0_i32_1 = arith.constant 0 : i32
    %c0_i32_2 = arith.constant 0 : i32
    return %c0_i32, %c0_i32_0, %c0_i32_1 : i32, i32, i32
  }
  func.func @transform_30(%arg0: i32) -> (i32, i32) {
    %c0_i32 = arith.constant 0 : i32
    %c0_i32_0 = arith.constant 0 : i32
    %c0_i32_1 = arith.constant 0 : i32
    return %c0_i32, %c0_i32_0 : i32, i32
  }
  func.func @transform_31(%arg0: i32) -> (i32, i32, i32) {
    %c0_i32 = arith.constant 0 : i32
    %c0_i32_0 = arith.constant 0 : i32
    %c0_i32_1 = arith.constant 0 : i32
    return %arg0, %c0_i32, %c0_i32_0 : i32, i32, i32
  }
}

</mosaic_0001>

<llo_original>
// kernel: fused_forward.1
$region0: #{fused_forward.1}
  #allocation0 [shape = 'u32[]', space=smem, size = 0x4, offset = 0x4, fixed_abs, tag = 'smem constant byte address 0x4 - core index']
  #allocation1 [shape = 'u32[72,128]{1,0:T(1,128)}', space=vmem, size = 0x9000, scoped, tag = 'internal scratch']
  %s0 = inlined_call_operand.smem [shape: u32[32], index: -1, kind: input, shape index: {}]
  %s1 = sld [smem:[%s0]]
  %s2 = scalar_lea.smem %s0, 1
  %s3 = sld [smem:[%s2]]
  %s4 = scalar_lea.smem %s0, 2
  %s5 = sld [smem:[%s4]]
  %s6 = scalar_lea.smem %s0, 3
  %s7 = sld [smem:[%s6]]
  %s8 = scalar_lea.smem %s0, 4
  %s9 = sld [smem:[%s8]]
  %s10 = scalar_lea.smem %s0, 5
  %s11 = sld [smem:[%s10]]
  %s12 = scalar_lea.smem %s0, 6
  %s13 = sld [smem:[%s12]]
  %s14 = scalar_lea.smem %s0, 7
  %s15 = sld [smem:[%s14]]
  %s16 = scalar_lea.smem %s0, 8
  %s17 = sld [smem:[%s16]]
  %s18 = scalar_lea.smem %s0, 9
  %s19 = sld [smem:[%s18]]
  %s20 = scalar_lea.smem %s0, 10
  %s21 = sld [smem:[%s20]]
  %s22 = scalar_lea.smem %s0, 11
  %s23 = sld [smem:[%s22]]
  %s24 = scalar_lea.smem %s0, 12
  %s25 = sld [smem:[%s24]]
  %s26 = scalar_lea.smem %s0, 13
  %s27 = sld [smem:[%s26]]
  %s28 = scalar_lea.smem %s0, 14
  %s29 = sld [smem:[%s28]]
  %s30 = scalar_lea.smem %s0, 15
  %s31 = sld [smem:[%s30]]
  %s32 = scalar_lea.smem %s0, 16
  %s33 = sld [smem:[%s32]]
  %s34 = scalar_lea.smem %s0, 17
  %s35 = sld [smem:[%s34]]
  %s36 = scalar_lea.smem %s0, 18
  %s37 = sld [smem:[%s36]]
  %s38 = scalar_lea.smem %s0, 19
  %s39 = sld [smem:[%s38]]
  %s40 = scalar_lea.smem %s0, 20
  %s41 = sld [smem:[%s40]]
  %s42 = scalar_lea.smem %s0, 21
  %s43 = sld [smem:[%s42]]
  %s44 = scalar_lea.smem %s0, 22
  %s45 = sld [smem:[%s44]]
  %s46 = scalar_lea.smem %s0, 23
  %s47 = sld [smem:[%s46]]
  %s48 = scalar_lea.smem %s0, 24
  %s49 = sld [smem:[%s48]]
  %s50 = scalar_lea.smem %s0, 25
  %s51 = sld [smem:[%s50]]
  %s52 = scalar_lea.smem %s0, 26
  %s53 = sld [smem:[%s52]]
  %s54 = scalar_lea.smem %s0, 27
  %s55 = sld [smem:[%s54]]
  %s56 = scalar_lea.smem %s0, 28
  %s57 = sld [smem:[%s56]]
  %s58 = scalar_lea.smem %s0, 29
  %s59 = sld [smem:[%s58]]
  %s60 = scalar_lea.smem %s0, 30
  %s61 = sld [smem:[%s60]]
  %s62 = scalar_lea.smem %s0, 31
  %s63 = sld [smem:[%s62]]
  %s64 = sld [smem:[#allocation0]]
  $region233: #{fused_forward.1} parent=0
    _
  %s66 = ssub.s32 1, %s64
  %s67 = scalar_select 0, %s66, %s64
  $region1: #{fused_forward.1} parent=0
    #allocation2 [shape = 'u8[40960]{0}', space=vmem, size = 0xa000, scoped, tag = 'input window, operand 1, single buffered']
    #allocation3 [shape = 's32[2]{0}', space=sflag, size = 0x8, scoped, tag = 'scoped memory for fused_forward.1']
    #allocation4 [shape = 'u8[983040]{0}', space=vmem, size = 0xf0000, scoped, tag = 'input window, operand 2, single buffered']
    #allocation5 [shape = 's32[1]{0}', space=sflag, size = 0x4, scoped, tag = 'scoped memory for fused_forward.1']
    #allocation6 [shape = 'u8[2048]{0}', space=vmem, size = 0x800, scoped, tag = 'input window, operand 3, single buffered']
    #allocation7 [shape = 'u8[20480]{0}', space=vmem, size = 0x5000, scoped, tag = 'input window, operand 4, single buffered']
    #allocation8 [shape = 's32[1]{0}', space=sflag, size = 0x4, scoped, tag = 'scoped memory for fused_forward.1']
    #allocation9 [shape = 'u8[2621440]{0}', space=vmem, size = 0x280000, scoped, tag = 'input window, operand 5, single buffered']
    #allocation10 [shape = 'u8[1024]{0}', space=vmem, size = 0x400, scoped, tag = 'input window, operand 6, single buffered']
    #allocation11 [shape = 's32[1]{0}', space=sflag, size = 0x4, scoped, tag = 'scoped memory for fused_forward.1']
    #allocation12 [shape = 'u8[10240]{0}', space=vmem, size = 0x2800, scoped, tag = 'input window, operand 7, single buffered']
    #allocation13 [shape = 'u8[655360]{0}', space=vmem, size = 0xa0000, scoped, tag = 'input window, operand 8, single buffered']
    #allocation14 [shape = 's32[1]{0}', space=sflag, size = 0x4, scoped, tag = 'scoped memory for fused_forward.1']
    #allocation15 [shape = 'u8[512]{0}', space=vmem, size = 0x400, scoped, tag = 'input window, operand 9, single buffered']
    #allocation16 [shape = 'u8[512]{0}', space=vmem, size = 0x400, scoped, tag = 'input window, operand 12, single buffered']
    #allocation17 [shape = 's32[1]{0}', space=sflag, size = 0x4, scoped, tag = 'scoped memory for fused_forward.1']
    #allocation18 [shape = 'u8[512]{0}', space=vmem, size = 0x400, scoped, tag = 'input window, operand 15, single buffered']
    #allocation19 [shape = 'u8[512]{0}', space=vmem, size = 0x400, scoped, tag = 'input window, operand 18, single buffered']
    #allocation20 [shape = 's32[1]{0}', space=sflag, size = 0x4, scoped, tag = 'scoped memory for fused_forward.1']
    #allocation21 [shape = 'u8[32768]{0}', space=vmem, size = 0x8000, scoped, tag = 'input window, operand 20, single buffered']
    #allocation22 [shape = 'u8[512]{0}', space=vmem, size = 0x400, scoped, tag = 'input window, operand 21, single buffered']
    #allocation23 [shape = 's32[1]{0}', space=sflag, size = 0x4, scoped, tag = 'scoped memory for fused_forward.1']
    #allocation24 [shape = 'u8[65536]{0}', space=vmem, size = 0x10000, scoped, tag = 'input window, operand 23, single buffered']
    #allocation25 [shape = 'u8[512]{0}', space=vmem, size = 0x400, scoped, tag = 'input window, operand 24, single buffered']
    #allocation26 [shape = 's32[1]{0}', space=sflag, size = 0x4, scoped, tag = 'scoped memory for fused_forward.1']
    #allocation27 [shape = 'u8[131072]{0}', space=vmem, size = 0x20000, scoped, tag = 'input window, operand 26, single buffered']
    #allocation28 [shape = 'u8[512]{0}', space=vmem, size = 0x400, scoped, tag = 'input window, operand 27, single buffered']
    #allocation29 [shape = 's32[1]{0}', space=sflag, size = 0x4, scoped, tag = 'scoped memory for fused_forward.1']
    #allocation30 [shape = 'u8[512]{0}', space=vmem, size = 0x400, scoped, tag = 'input window, operand 30, single buffered']
    %68 = vsyncpa [#allocation3], 0
    %69 = vsyncpa [#allocation5], 0
    %70 = vsyncpa [#allocation8], 0
    %71 = vsyncpa [#allocation11], 0
    %72 = vsyncpa [#allocation14], 0
    %73 = vsyncpa [#allocation17], 0
    %74 = vsyncpa [#allocation20], 0
    %75 = vsyncpa [#allocation23], 0
    %76 = vsyncpa [#allocation26], 0
    %77 = vsyncpa [#allocation29], 0
    loop: start=0, step=1, limit=4
    $region2: #{fused_forward.1} parent=1 // loop_pre_header
      _
    $region3: #{fused_forward.1} parent=1 // loop_header
      %s79 = sphi 0, %s83
      %p80 = scmp.ge.s32.totalorder %s79, 4
      %s89 = sphi 0, %s91
      %s92 = sphi 0, %s89
      %s93 = sphi 0, %s92
      %s109 = sphi 0, %s93
      %s113 = sphi 0, %s113
      %s115 = sphi 0, %s113
      %s116 = sphi 0, %s115
      %s130 = sphi 0, %s116
      %s134 = sphi 0, %s134
      %s136 = sphi 0, %s134
      %s137 = sphi 0, %s136
      %s151 = sphi 0, %s137
      %s155 = sphi 0, %s155
      %s157 = sphi 0, %s155
      %s158 = sphi 0, %s157
      %s172 = sphi 0, %s158
      %s176 = sphi 0, %s176
      %s178 = sphi 0, %s176
      %s179 = sphi 0, %s178
      %s193 = sphi 0, %s179
      %s197 = sphi 0, %s197
      %s199 = sphi 0, %s197
      %s200 = sphi 0, %s199
      %s214 = sphi 0, %s200
      %s218 = sphi 0, %s218
      %s220 = sphi 0, %s218
      %s221 = sphi 0, %s220
      %s235 = sphi 0, %s221
      %s239 = sphi 0, %s239
      %s241 = sphi 0, %s239
      %s242 = sphi 0, %s241
      %s256 = sphi 0, %s242
      %s260 = sphi 0, %s260
      %s262 = sphi 0, %s260
      %s263 = sphi 0, %s262
      %s277 = sphi 0, %s263
      %s281 = sphi 0, %s281
      %s283 = sphi 0, %s281
      %s284 = sphi 0, %s283
      %s298 = sphi 0, %s284
      %s302 = sphi 0, %s302
      %s304 = sphi 0, %s302
      %s305 = sphi 0, %s304
      %s319 = sphi 0, %s305
      %s323 = sphi 0, %s323
      %s325 = sphi 0, %s323
      %s326 = sphi 0, %s325
      %s340 = sphi 0, %s326
      %s344 = sphi 0, %s344
      %s346 = sphi 0, %s344
      %s347 = sphi 0, %s346
      %s361 = sphi 0, %s347
      %s365 = sphi 0, %s365
      %s367 = sphi 0, %s365
      %s368 = sphi 0, %s367
      %s382 = sphi 0, %s368
      %s386 = sphi 0, %s386
      %s388 = sphi 0, %s386
      %s389 = sphi 0, %s388
      %s403 = sphi 0, %s389
      %s407 = sphi 0, %s407
      %s409 = sphi 0, %s407
      %s410 = sphi 0, %s409
      %s424 = sphi 0, %s410
      %s428 = sphi 0, %s428
      %s430 = sphi 0, %s428
      %s431 = sphi 0, %s430
      %s445 = sphi 0, %s431
      %s449 = sphi 0, %s449
      %s451 = sphi 0, %s449
      %s452 = sphi 0, %s451
      %s466 = sphi 0, %s452
      %s470 = sphi 0, %s470
      %s472 = sphi 0, %s470
      %s473 = sphi 0, %s472
      %s487 = sphi 0, %s473
      %s491 = sphi 0, %s491
      %s493 = sphi 0, %s491
      %s494 = sphi 0, %s493
      %s508 = sphi 0, %s494
      %s512 = sphi 0, %s512
      %s514 = sphi 0, %s512
      %s515 = sphi 0, %s514
      %s529 = sphi 0, %s515
      %s533 = sphi 0, %s533
      %s535 = sphi 0, %s533
      %s536 = sphi 0, %s535
      %s550 = sphi 0, %s536
      %s554 = sphi 0, %s554
      %s556 = sphi 0, %s554
      %s557 = sphi 0, %s556
      %s571 = sphi 0, %s557
      %s575 = sphi 0, %s575
      %s577 = sphi 0, %s575
      %s578 = sphi 0, %s577
      %s592 = sphi 0, %s578
      %s596 = sphi 0, %s596
      %s598 = sphi 0, %s596
      %s599 = sphi 0, %s598
      %s613 = sphi 0, %s599
      %s617 = sphi 0, %s617
      %s619 = sphi 0, %s617
      %s620 = sphi 0, %s619
      %s634 = sphi 0, %s620
      %s638 = sphi 0, %s638
      %s640 = sphi 0, %s638
      %s641 = sphi 0, %s640
      %s655 = sphi 0, %s641
      %s659 = sphi 0, %s659
      %s661 = sphi 0, %s659
      %s662 = sphi 0, %s661
      %s676 = sphi 0, %s662
      %s680 = sphi 0, %s680
      %s682 = sphi 0, %s680
      %s683 = sphi 0, %s682
      %s697 = sphi 0, %s683
      %s701 = sphi 0, %s701
      %s703 = sphi 0, %s701
      %s704 = sphi 0, %s703
      %s718 = sphi 0, %s704
      %s722 = sphi 0, %s722
      %s724 = sphi 0, %s722
      %s725 = sphi 0, %s724
      %s739 = sphi 0, %s725
      %s745 = sphi 0, %s747
      %s748 = sphi 0, %s745
      %s749 = sphi 0, %s748
      %s765 = sphi 0, %s749
    $region4: #{fused_forward.1} parent=1 // loop_header_branch
      %82 = sbr.rel (%p80) target = $region8
    $region5: #{fused_forward.1} parent=1 // loop_body
      %s84 = ssub.s32 %s79, 1
      %s85 = ssub.s32 %s79, 2
      %s86 = sadd.s32 %s79, 1
      %s87 = ssub.s32 %s79, %s86
      %p88 = scmp.eq.s32.totalorder %s87, 0
      %s90 = sadd.s32 %s89, 1
      %s91 = scalar_select %p88, %s89, %s90
      %p94 = pneg %p88
      %p95 = scmp.eq.s32.totalorder %s79, 1
      %p96 = por %p94, %p95
      %p97 = scmp.ne.s32.totalorder %s89, %s92
      %p98 = scmp.eq.s32.totalorder %s79, 0
      %p99 = por %p97, %p98
      %p100 = scmp.ne.s32.totalorder %s89, %s92
      %p101 = scmp.eq.s32.totalorder %s84, 1
      %p102 = por %p100, %p101
      %p103 = scmp.ne.s32.totalorder %s92, %s93
      %p104 = scmp.eq.s32.totalorder %s84, 0
      %p105 = por %p103, %p104
      %p106 = scmp.ne.s32.totalorder %s92, %s93
      %p107 = scmp.eq.s32.totalorder %s85, 1
      %p108 = por %p106, %p107
      %p110 = scmp.ne.s32.totalorder %s93, %s109
      %p111 = scmp.eq.s32.totalorder %s85, 0
      %p112 = por %p110, %p111
      %s114 = sadd.s32 %s113, 1
      %p117 = scmp.eq.s32.totalorder %s79, 1
      %p118 = scmp.ne.s32.totalorder %s113, %s115
      %p119 = scmp.eq.s32.totalorder %s79, 0
      %p120 = por %p118, %p119
      %p121 = scmp.ne.s32.totalorder %s113, %s115
      %p122 = scmp.eq.s32.totalorder %s84, 1
      %p123 = por %p121, %p122
      %p124 = scmp.ne.s32.totalorder %s115, %s116
      %p125 = scmp.eq.s32.totalorder %s84, 0
      %p126 = por %p124, %p125
      %p127 = scmp.ne.s32.totalorder %s115, %s116
      %p128 = scmp.eq.s32.totalorder %s85, 1
      %p129 = por %p127, %p128
      %p131 = scmp.ne.s32.totalorder %s116, %s130
      %p132 = scmp.eq.s32.totalorder %s85, 0
      %p133 = por %p131, %p132
      %s135 = sadd.s32 %s134, 1
      %p138 = scmp.eq.s32.totalorder %s79, 1
      %p139 = scmp.ne.s32.totalorder %s134, %s136
      %p140 = scmp.eq.s32.totalorder %s79, 0
      %p141 = por %p139, %p140
      %p142 = scmp.ne.s32.totalorder %s134, %s136
      %p143 = scmp.eq.s32.totalorder %s84, 1
      %p144 = por %p142, %p143
      %p145 = scmp.ne.s32.totalorder %s136, %s137
      %p146 = scmp.eq.s32.totalorder %s84, 0
      %p147 = por %p145, %p146
      %p148 = scmp.ne.s32.totalorder %s136, %s137
      %p149 = scmp.eq.s32.totalorder %s85, 1
      %p150 = por %p148, %p149
      %p152 = scmp.ne.s32.totalorder %s137, %s151
      %p153 = scmp.eq.s32.totalorder %s85, 0
      %p154 = por %p152, %p153
      %s156 = sadd.s32 %s155, 1
      %p159 = scmp.eq.s32.totalorder %s79, 1
      %p160 = scmp.ne.s32.totalorder %s155, %s157
      %p161 = scmp.eq.s32.totalorder %s79, 0
      %p162 = por %p160, %p161
      %p163 = scmp.ne.s32.totalorder %s155, %s157
      %p164 = scmp.eq.s32.totalorder %s84, 1
      %p165 = por %p163, %p164
      %p166 = scmp.ne.s32.totalorder %s157, %s158
      %p167 = scmp.eq.s32.totalorder %s84, 0
      %p168 = por %p166, %p167
      %p169 = scmp.ne.s32.totalorder %s157, %s158
      %p170 = scmp.eq.s32.totalorder %s85, 1
      %p171 = por %p169, %p170
      %p173 = scmp.ne.s32.totalorder %s158, %s172
      %p174 = scmp.eq.s32.totalorder %s85, 0
      %p175 = por %p173, %p174
      %s177 = sadd.s32 %s176, 1
      %p180 = scmp.eq.s32.totalorder %s79, 1
      %p181 = scmp.ne.s32.totalorder %s176, %s178
      %p182 = scmp.eq.s32.totalorder %s79, 0
      %p183 = por %p181, %p182
      %p184 = scmp.ne.s32.totalorder %s176, %s178
      %p185 = scmp.eq.s32.totalorder %s84, 1
      %p186 = por %p184, %p185
      %p187 = scmp.ne.s32.totalorder %s178, %s179
      %p188 = scmp.eq.s32.totalorder %s84, 0
      %p189 = por %p187, %p188
      %p190 = scmp.ne.s32.totalorder %s178, %s179
      %p191 = scmp.eq.s32.totalorder %s85, 1
      %p192 = por %p190, %p191
      %p194 = scmp.ne.s32.totalorder %s179, %s193
      %p195 = scmp.eq.s32.totalorder %s85, 0
      %p196 = por %p194, %p195
      %s198 = sadd.s32 %s197, 1
      %p201 = scmp.eq.s32.totalorder %s79, 1
      %p202 = scmp.ne.s32.totalorder %s197, %s199
      %p203 = scmp.eq.s32.totalorder %s79, 0
      %p204 = por %p202, %p203
      %p205 = scmp.ne.s32.totalorder %s197, %s199
      %p206 = scmp.eq.s32.totalorder %s84, 1
      %p207 = por %p205, %p206
      %p208 = scmp.ne.s32.totalorder %s199, %s200
      %p209 = scmp.eq.s32.totalorder %s84, 0
      %p210 = por %p208, %p209
      %p211 = scmp.ne.s32.totalorder %s199, %s200
      %p212 = scmp.eq.s32.totalorder %s85, 1
      %p213 = por %p211, %p212
      %p215 = scmp.ne.s32.totalorder %s200, %s214
      %p216 = scmp.eq.s32.totalorder %s85, 0
      %p217 = por %p215, %p216
      %s219 = sadd.s32 %s218, 1
      %p222 = scmp.eq.s32.totalorder %s79, 1
      %p223 = scmp.ne.s32.totalorder %s218, %s220
      %p224 = scmp.eq.s32.totalorder %s79, 0
      %p225 = por %p223, %p224
      %p226 = scmp.ne.s32.totalorder %s218, %s220
      %p227 = scmp.eq.s32.totalorder %s84, 1
      %p228 = por %p226, %p227
      %p229 = scmp.ne.s32.totalorder %s220, %s221
      %p230 = scmp.eq.s32.totalorder %s84, 0
      %p231 = por %p229, %p230
      %p232 = scmp.ne.s32.totalorder %s220, %s221
      %p233 = scmp.eq.s32.totalorder %s85, 1
      %p234 = por %p232, %p233
      %p236 = scmp.ne.s32.totalorder %s221, %s235
      %p237 = scmp.eq.s32.totalorder %s85, 0
      %p238 = por %p236, %p237
      %s240 = sadd.s32 %s239, 1
      %p243 = scmp.eq.s32.totalorder %s79, 1
      %p244 = scmp.ne.s32.totalorder %s239, %s241
      %p245 = scmp.eq.s32.totalorder %s79, 0
      %p246 = por %p244, %p245
      %p247 = scmp.ne.s32.totalorder %s239, %s241
      %p248 = scmp.eq.s32.totalorder %s84, 1
      %p249 = por %p247, %p248
      %p250 = scmp.ne.s32.totalorder %s241, %s242
      %p251 = scmp.eq.s32.totalorder %s84, 0
      %p252 = por %p250, %p251
      %p253 = scmp.ne.s32.totalorder %s241, %s242
      %p254 = scmp.eq.s32.totalorder %s85, 1
      %p255 = por %p253, %p254
      %p257 = scmp.ne.s32.totalorder %s242, %s256
      %p258 = scmp.eq.s32.totalorder %s85, 0
      %p259 = por %p257, %p258
      %s261 = sadd.s32 %s260, 1
      %p264 = scmp.eq.s32.totalorder %s79, 1
      %p265 = scmp.ne.s32.totalorder %s260, %s262
      %p266 = scmp.eq.s32.totalorder %s79, 0
      %p267 = por %p265, %p266
      %p268 = scmp.ne.s32.totalorder %s260, %s262
      %p269 = scmp.eq.s32.totalorder %s84, 1
      %p270 = por %p268, %p269
      %p271 = scmp.ne.s32.totalorder %s262, %s263
      %p272 = scmp.eq.s32.totalorder %s84, 0
      %p273 = por %p271, %p272
      %p274 = scmp.ne.s32.totalorder %s262, %s263
      %p275 = scmp.eq.s32.totalorder %s85, 1
      %p276 = por %p274, %p275
      %p278 = scmp.ne.s32.totalorder %s263, %s277
      %p279 = scmp.eq.s32.totalorder %s85, 0
      %p280 = por %p278, %p279
      %s282 = sadd.s32 %s281, 1
      %p285 = scmp.eq.s32.totalorder %s79, 1
      %p286 = scmp.ne.s32.totalorder %s281, %s283
      %p287 = scmp.eq.s32.totalorder %s79, 0
      %p288 = por %p286, %p287
      %p289 = scmp.ne.s32.totalorder %s281, %s283
      %p290 = scmp.eq.s32.totalorder %s84, 1
      %p291 = por %p289, %p290
      %p292 = scmp.ne.s32.totalorder %s283, %s284
      %p293 = scmp.eq.s32.totalorder %s84, 0
      %p294 = por %p292, %p293
      %p295 = scmp.ne.s32.totalorder %s283, %s284
      %p296 = scmp.eq.s32.totalorder %s85, 1
      %p297 = por %p295, %p296
      %p299 = scmp.ne.s32.totalorder %s284, %s298
      %p300 = scmp.eq.s32.totalorder %s85, 0
      %p301 = por %p299, %p300
      %s303 = sadd.s32 %s302, 1
      %p306 = scmp.eq.s32.totalorder %s79, 1
      %p307 = scmp.ne.s32.totalorder %s302, %s304
      %p308 = scmp.eq.s32.totalorder %s79, 0
      %p309 = por %p307, %p308
      %p310 = scmp.ne.s32.totalorder %s302, %s304
      %p311 = scmp.eq.s32.totalorder %s84, 1
      %p312 = por %p310, %p311
      %p313 = scmp.ne.s32.totalorder %s304, %s305
      %p314 = scmp.eq.s32.totalorder %s84, 0
      %p315 = por %p313, %p314
      %p316 = scmp.ne.s32.totalorder %s304, %s305
      %p317 = scmp.eq.s32.totalorder %s85, 1
      %p318 = por %p316, %p317
      %p320 = scmp.ne.s32.totalorder %s305, %s319
      %p321 = scmp.eq.s32.totalorder %s85, 0
      %p322 = por %p320, %p321
      %s324 = sadd.s32 %s323, 1
      %p327 = scmp.eq.s32.totalorder %s79, 1
      %p328 = scmp.ne.s32.totalorder %s323, %s325
      %p329 = scmp.eq.s32.totalorder %s79, 0
      %p330 = por %p328, %p329
      %p331 = scmp.ne.s32.totalorder %s323, %s325
      %p332 = scmp.eq.s32.totalorder %s84, 1
      %p333 = por %p331, %p332
      %p334 = scmp.ne.s32.totalorder %s325, %s326
      %p335 = scmp.eq.s32.totalorder %s84, 0
      %p336 = por %p334, %p335
      %p337 = scmp.ne.s32.totalorder %s325, %s326
      %p338 = scmp.eq.s32.totalorder %s85, 1
      %p339 = por %p337, %p338
      %p341 = scmp.ne.s32.totalorder %s326, %s340
      %p342 = scmp.eq.s32.totalorder %s85, 0
      %p343 = por %p341, %p342
      %s345 = sadd.s32 %s344, 1
      %p348 = scmp.eq.s32.totalorder %s79, 1
      %p349 = scmp.ne.s32.totalorder %s344, %s346
      %p350 = scmp.eq.s32.totalorder %s79, 0
      %p351 = por %p349, %p350
      %p352 = scmp.ne.s32.totalorder %s344, %s346
      %p353 = scmp.eq.s32.totalorder %s84, 1
      %p354 = por %p352, %p353
      %p355 = scmp.ne.s32.totalorder %s346, %s347
      %p356 = scmp.eq.s32.totalorder %s84, 0
      %p357 = por %p355, %p356
      %p358 = scmp.ne.s32.totalorder %s346, %s347
      %p359 = scmp.eq.s32.totalorder %s85, 1
      %p360 = por %p358, %p359
      %p362 = scmp.ne.s32.totalorder %s347, %s361
      %p363 = scmp.eq.s32.totalorder %s85, 0
      %p364 = por %p362, %p363
      %s366 = sadd.s32 %s365, 1
      %p369 = scmp.eq.s32.totalorder %s79, 1
      %p370 = scmp.ne.s32.totalorder %s365, %s367
      %p371 = scmp.eq.s32.totalorder %s79, 0
      %p372 = por %p370, %p371
      %p373 = scmp.ne.s32.totalorder %s365, %s367
      %p374 = scmp.eq.s32.totalorder %s84, 1
      %p375 = por %p373, %p374
      %p376 = scmp.ne.s32.totalorder %s367, %s368
      %p377 = scmp.eq.s32.totalorder %s84, 0
      %p378 = por %p376, %p377
      %p379 = scmp.ne.s32.totalorder %s367, %s368
      %p380 = scmp.eq.s32.totalorder %s85, 1
      %p381 = por %p379, %p380
      %p383 = scmp.ne.s32.totalorder %s368, %s382
      %p384 = scmp.eq.s32.totalorder %s85, 0
      %p385 = por %p383, %p384
      %s387 = sadd.s32 %s386, 1
      %p390 = scmp.eq.s32.totalorder %s79, 1
      %p391 = scmp.ne.s32.totalorder %s386, %s388
      %p392 = scmp.eq.s32.totalorder %s79, 0
      %p393 = por %p391, %p392
      %p394 = scmp.ne.s32.totalorder %s386, %s388
      %p395 = scmp.eq.s32.totalorder %s84, 1
      %p396 = por %p394, %p395
      %p397 = scmp.ne.s32.totalorder %s388, %s389
      %p398 = scmp.eq.s32.totalorder %s84, 0
      %p399 = por %p397, %p398
      %p400 = scmp.ne.s32.totalorder %s388, %s389
      %p401 = scmp.eq.s32.totalorder %s85, 1
      %p402 = por %p400, %p401
      %p404 = scmp.ne.s32.totalorder %s389, %s403
      %p405 = scmp.eq.s32.totalorder %s85, 0
      %p406 = por %p404, %p405
      %s408 = sadd.s32 %s407, 1
      %p411 = scmp.eq.s32.totalorder %s79, 1
      %p412 = scmp.ne.s32.totalorder %s407, %s409
      %p413 = scmp.eq.s32.totalorder %s79, 0
      %p414 = por %p412, %p413
      %p415 = scmp.ne.s32.totalorder %s407, %s409
      %p416 = scmp.eq.s32.totalorder %s84, 1
      %p417 = por %p415, %p416
      %p418 = scmp.ne.s32.totalorder %s409, %s410
      %p419 = scmp.eq.s32.totalorder %s84, 0
      %p420 = por %p418, %p419
      %p421 = scmp.ne.s32.totalorder %s409, %s410
      %p422 = scmp.eq.s32.totalorder %s85, 1
      %p423 = por %p421, %p422
      %p425 = scmp.ne.s32.totalorder %s410, %s424
      %p426 = scmp.eq.s32.totalorder %s85, 0
      %p427 = por %p425, %p426
      %s429 = sadd.s32 %s428, 1
      %p432 = scmp.eq.s32.totalorder %s79, 1
      %p433 = scmp.ne.s32.totalorder %s428, %s430
      %p434 = scmp.eq.s32.totalorder %s79, 0
      %p435 = por %p433, %p434
      %p436 = scmp.ne.s32.totalorder %s428, %s430
      %p437 = scmp.eq.s32.totalorder %s84, 1
      %p438 = por %p436, %p437
      %p439 = scmp.ne.s32.totalorder %s430, %s431
      %p440 = scmp.eq.s32.totalorder %s84, 0
      %p441 = por %p439, %p440
      %p442 = scmp.ne.s32.totalorder %s430, %s431
      %p443 = scmp.eq.s32.totalorder %s85, 1
      %p444 = por %p442, %p443
      %p446 = scmp.ne.s32.totalorder %s431, %s445
      %p447 = scmp.eq.s32.totalorder %s85, 0
      %p448 = por %p446, %p447
      %s450 = sadd.s32 %s449, 1
      %p453 = scmp.eq.s32.totalorder %s79, 1
      %p454 = scmp.ne.s32.totalorder %s449, %s451
      %p455 = scmp.eq.s32.totalorder %s79, 0
      %p456 = por %p454, %p455
      %p457 = scmp.ne.s32.totalorder %s449, %s451
      %p458 = scmp.eq.s32.totalorder %s84, 1
      %p459 = por %p457, %p458
      %p460 = scmp.ne.s32.totalorder %s451, %s452
      %p461 = scmp.eq.s32.totalorder %s84, 0
      %p462 = por %p460, %p461
      %p463 = scmp.ne.s32.totalorder %s451, %s452
      %p464 = scmp.eq.s32.totalorder %s85, 1
      %p465 = por %p463, %p464
      %p467 = scmp.ne.s32.totalorder %s452, %s466
      %p468 = scmp.eq.s32.totalorder %s85, 0
      %p469 = por %p467, %p468
      %s471 = sadd.s32 %s470, 1
      %p474 = scmp.eq.s32.totalorder %s79, 1
      %p475 = scmp.ne.s32.totalorder %s470, %s472
      %p476 = scmp.eq.s32.totalorder %s79, 0
      %p477 = por %p475, %p476
      %p478 = scmp.ne.s32.totalorder %s470, %s472
      %p479 = scmp.eq.s32.totalorder %s84, 1
      %p480 = por %p478, %p479
      %p481 = scmp.ne.s32.totalorder %s472, %s473
      %p482 = scmp.eq.s32.totalorder %s84, 0
      %p483 = por %p481, %p482
      %p484 = scmp.ne.s32.totalorder %s472, %s473
      %p485 = scmp.eq.s32.totalorder %s85, 1
      %p486 = por %p484, %p485
      %p488 = scmp.ne.s32.totalorder %s473, %s487
      %p489 = scmp.eq.s32.totalorder %s85, 0
      %p490 = por %p488, %p489
      %s492 = sadd.s32 %s491, 1
      %p495 = scmp.eq.s32.totalorder %s79, 1
      %p496 = scmp.ne.s32.totalorder %s491, %s493
      %p497 = scmp.eq.s32.totalorder %s79, 0
      %p498 = por %p496, %p497
      %p499 = scmp.ne.s32.totalorder %s491, %s493
      %p500 = scmp.eq.s32.totalorder %s84, 1
      %p501 = por %p499, %p500
      %p502 = scmp.ne.s32.totalorder %s493, %s494
      %p503 = scmp.eq.s32.totalorder %s84, 0
      %p504 = por %p502, %p503
      %p505 = scmp.ne.s32.totalorder %s493, %s494
      %p506 = scmp.eq.s32.totalorder %s85, 1
      %p507 = por %p505, %p506
      %p509 = scmp.ne.s32.totalorder %s494, %s508
      %p510 = scmp.eq.s32.totalorder %s85, 0
      %p511 = por %p509, %p510
      %s513 = sadd.s32 %s512, 1
      %p516 = scmp.eq.s32.totalorder %s79, 1
      %p517 = scmp.ne.s32.totalorder %s512, %s514
      %p518 = scmp.eq.s32.totalorder %s79, 0
      %p519 = por %p517, %p518
      %p520 = scmp.ne.s32.totalorder %s512, %s514
      %p521 = scmp.eq.s32.totalorder %s84, 1
      %p522 = por %p520, %p521
      %p523 = scmp.ne.s32.totalorder %s514, %s515
      %p524 = scmp.eq.s32.totalorder %s84, 0
      %p525 = por %p523, %p524
      %p526 = scmp.ne.s32.totalorder %s514, %s515
      %p527 = scmp.eq.s32.totalorder %s85, 1
      %p528 = por %p526, %p527
      %p530 = scmp.ne.s32.totalorder %s515, %s529
      %p531 = scmp.eq.s32.totalorder %s85, 0
      %p532 = por %p530, %p531
      %s534 = sadd.s32 %s533, 1
      %p537 = scmp.eq.s32.totalorder %s79, 1
      %p538 = scmp.ne.s32.totalorder %s533, %s535
      %p539 = scmp.eq.s32.totalorder %s79, 0
      %p540 = por %p538, %p539
      %p541 = scmp.ne.s32.totalorder %s533, %s535
      %p542 = scmp.eq.s32.totalorder %s84, 1
      %p543 = por %p541, %p542
      %p544 = scmp.ne.s32.totalorder %s535, %s536
      %p545 = scmp.eq.s32.totalorder %s84, 0
      %p546 = por %p544, %p545
      %p547 = scmp.ne.s32.totalorder %s535, %s536
      %p548 = scmp.eq.s32.totalorder %s85, 1
      %p549 = por %p547, %p548
      %p551 = scmp.ne.s32.totalorder %s536, %s550
      %p552 = scmp.eq.s32.totalorder %s85, 0
      %p553 = por %p551, %p552
      %s555 = sadd.s32 %s554, 1
      %p558 = scmp.eq.s32.totalorder %s79, 1
      %p559 = scmp.ne.s32.totalorder %s554, %s556
      %p560 = scmp.eq.s32.totalorder %s79, 0
      %p561 = por %p559, %p560
      %p562 = scmp.ne.s32.totalorder %s554, %s556
      %p563 = scmp.eq.s32.totalorder %s84, 1
      %p564 = por %p562, %p563
      %p565 = scmp.ne.s32.totalorder %s556, %s557
      %p566 = scmp.eq.s32.totalorder %s84, 0
      %p567 = por %p565, %p566
      %p568 = scmp.ne.s32.totalorder %s556, %s557
      %p569 = scmp.eq.s32.totalorder %s85, 1
      %p570 = por %p568, %p569
      %p572 = scmp.ne.s32.totalorder %s557, %s571
      %p573 = scmp.eq.s32.totalorder %s85, 0
      %p574 = por %p572, %p573
      %s576 = sadd.s32 %s575, 1
      %p579 = scmp.eq.s32.totalorder %s79, 1
      %p580 = scmp.ne.s32.totalorder %s575, %s577
      %p581 = scmp.eq.s32.totalorder %s79, 0
      %p582 = por %p580, %p581
      %p583 = scmp.ne.s32.totalorder %s575, %s577
      %p584 = scmp.eq.s32.totalorder %s84, 1
      %p585 = por %p583, %p584
      %p586 = scmp.ne.s32.totalorder %s577, %s578
      %p587 = scmp.eq.s32.totalorder %s84, 0
      %p588 = por %p586, %p587
      %p589 = scmp.ne.s32.totalorder %s577, %s578
      %p590 = scmp.eq.s32.totalorder %s85, 1
      %p591 = por %p589, %p590
      %p593 = scmp.ne.s32.totalorder %s578, %s592
      %p594 = scmp.eq.s32.totalorder %s85, 0
      %p595 = por %p593, %p594
      %s597 = sadd.s32 %s596, 1
      %p600 = scmp.eq.s32.totalorder %s79, 1
      %p601 = scmp.ne.s32.totalorder %s596, %s598
      %p602 = scmp.eq.s32.totalorder %s79, 0
      %p603 = por %p601, %p602
      %p604 = scmp.ne.s32.totalorder %s596, %s598
      %p605 = scmp.eq.s32.totalorder %s84, 1
      %p606 = por %p604, %p605
      %p607 = scmp.ne.s32.totalorder %s598, %s599
      %p608 = scmp.eq.s32.totalorder %s84, 0
      %p609 = por %p607, %p608
      %p610 = scmp.ne.s32.totalorder %s598, %s599
      %p611 = scmp.eq.s32.totalorder %s85, 1
      %p612 = por %p610, %p611
      %p614 = scmp.ne.s32.totalorder %s599, %s613
      %p615 = scmp.eq.s32.totalorder %s85, 0
      %p616 = por %p614, %p615
      %s618 = sadd.s32 %s617, 1
      %p621 = scmp.eq.s32.totalorder %s79, 1
      %p622 = scmp.ne.s32.totalorder %s617, %s619
      %p623 = scmp.eq.s32.totalorder %s79, 0
      %p624 = por %p622, %p623
      %p625 = scmp.ne.s32.totalorder %s617, %s619
      %p626 = scmp.eq.s32.totalorder %s84, 1
      %p627 = por %p625, %p626
      %p628 = scmp.ne.s32.totalorder %s619, %s620
      %p629 = scmp.eq.s32.totalorder %s84, 0
      %p630 = por %p628, %p629
      %p631 = scmp.ne.s32.totalorder %s619, %s620
      %p632 = scmp.eq.s32.totalorder %s85, 1
      %p633 = por %p631, %p632
      %p635 = scmp.ne.s32.totalorder %s620, %s634
      %p636 = scmp.eq.s32.totalorder %s85, 0
      %p637 = por %p635, %p636
      %s639 = sadd.s32 %s638, 1
      %p642 = scmp.eq.s32.totalorder %s79, 1
      %p643 = scmp.ne.s32.totalorder %s638, %s640
      %p644 = scmp.eq.s32.totalorder %s79, 0
      %p645 = por %p643, %p644
      %p646 = scmp.ne.s32.totalorder %s638, %s640
      %p647 = scmp.eq.s32.totalorder %s84, 1
      %p648 = por %p646, %p647
      %p649 = scmp.ne.s32.totalorder %s640, %s641
      %p650 = scmp.eq.s32.totalorder %s84, 0
      %p651 = por %p649, %p650
      %p652 = scmp.ne.s32.totalorder %s640, %s641
      %p653 = scmp.eq.s32.totalorder %s85, 1
      %p654 = por %p652, %p653
      %p656 = scmp.ne.s32.totalorder %s641, %s655
      %p657 = scmp.eq.s32.totalorder %s85, 0
      %p658 = por %p656, %p657
      %s660 = sadd.s32 %s659, 1
      %p663 = scmp.eq.s32.totalorder %s79, 1
      %p664 = scmp.ne.s32.totalorder %s659, %s661
      %p665 = scmp.eq.s32.totalorder %s79, 0
      %p666 = por %p664, %p665
      %p667 = scmp.ne.s32.totalorder %s659, %s661
      %p668 = scmp.eq.s32.totalorder %s84, 1
      %p669 = por %p667, %p668
      %p670 = scmp.ne.s32.totalorder %s661, %s662
      %p671 = scmp.eq.s32.totalorder %s84, 0
      %p672 = por %p670, %p671
      %p673 = scmp.ne.s32.totalorder %s661, %s662
      %p674 = scmp.eq.s32.totalorder %s85, 1
      %p675 = por %p673, %p674
      %p677 = scmp.ne.s32.totalorder %s662, %s676
      %p678 = scmp.eq.s32.totalorder %s85, 0
      %p679 = por %p677, %p678
      %s681 = sadd.s32 %s680, 1
      %p684 = scmp.eq.s32.totalorder %s79, 1
      %p685 = scmp.ne.s32.totalorder %s680, %s682
      %p686 = scmp.eq.s32.totalorder %s79, 0
      %p687 = por %p685, %p686
      %p688 = scmp.ne.s32.totalorder %s680, %s682
      %p689 = scmp.eq.s32.totalorder %s84, 1
      %p690 = por %p688, %p689
      %p691 = scmp.ne.s32.totalorder %s682, %s683
      %p692 = scmp.eq.s32.totalorder %s84, 0
      %p693 = por %p691, %p692
      %p694 = scmp.ne.s32.totalorder %s682, %s683
      %p695 = scmp.eq.s32.totalorder %s85, 1
      %p696 = por %p694, %p695
      %p698 = scmp.ne.s32.totalorder %s683, %s697
      %p699 = scmp.eq.s32.totalorder %s85, 0
      %p700 = por %p698, %p699
      %s702 = sadd.s32 %s701, 1
      %p705 = scmp.eq.s32.totalorder %s79, 1
      %p706 = scmp.ne.s32.totalorder %s701, %s703
      %p707 = scmp.eq.s32.totalorder %s79, 0
      %p708 = por %p706, %p707
      %p709 = scmp.ne.s32.totalorder %s701, %s703
      %p710 = scmp.eq.s32.totalorder %s84, 1
      %p711 = por %p709, %p710
      %p712 = scmp.ne.s32.totalorder %s703, %s704
      %p713 = scmp.eq.s32.totalorder %s84, 0
      %p714 = por %p712, %p713
      %p715 = scmp.ne.s32.totalorder %s703, %s704
      %p716 = scmp.eq.s32.totalorder %s85, 1
      %p717 = por %p715, %p716
      %p719 = scmp.ne.s32.totalorder %s704, %s718
      %p720 = scmp.eq.s32.totalorder %s85, 0
      %p721 = por %p719, %p720
      %s723 = sadd.s32 %s722, 1
      %p726 = scmp.eq.s32.totalorder %s79, 1
      %p727 = scmp.ne.s32.totalorder %s722, %s724
      %p728 = scmp.eq.s32.totalorder %s79, 0
      %p729 = por %p727, %p728
      %p730 = scmp.ne.s32.totalorder %s722, %s724
      %p731 = scmp.eq.s32.totalorder %s84, 1
      %p732 = por %p730, %p731
      %p733 = scmp.ne.s32.totalorder %s724, %s725
      %p734 = scmp.eq.s32.totalorder %s84, 0
      %p735 = por %p733, %p734
      %p736 = scmp.ne.s32.totalorder %s724, %s725
      %p737 = scmp.eq.s32.totalorder %s85, 1
      %p738 = por %p736, %p737
      %p740 = scmp.ne.s32.totalorder %s725, %s739
      %p741 = scmp.eq.s32.totalorder %s85, 0
      %p742 = por %p740, %p741
      %s743 = ssub.s32 %s79, %s86
      %p744 = scmp.eq.s32.totalorder %s743, 0
      %s746 = sadd.s32 %s745, 1
      %s747 = scalar_select %p744, %s745, %s746
      %p750 = pneg %p744
      %p751 = scmp.eq.s32.totalorder %s79, 1
      %p752 = por %p750, %p751
      %p753 = scmp.ne.s32.totalorder %s745, %s748
      %p754 = scmp.eq.s32.totalorder %s79, 0
      %p755 = por %p753, %p754
      %p756 = scmp.ne.s32.totalorder %s745, %s748
      %p757 = scmp.eq.s32.totalorder %s84, 1
      %p758 = por %p756, %p757
      %p759 = scmp.ne.s32.totalorder %s748, %s749
      %p760 = scmp.eq.s32.totalorder %s84, 0
      %p761 = por %p759, %p760
      %p762 = scmp.ne.s32.totalorder %s748, %s749
      %p763 = scmp.eq.s32.totalorder %s85, 1
      %p764 = por %p762, %p763
      %p766 = scmp.ne.s32.totalorder %s749, %s765
      %p767 = scmp.eq.s32.totalorder %s85, 0
      %p768 = por %p766, %p767
      %p769 = scmp.le.s32.totalorder 1, %s79
      %p770 = scmp.lt.s32.totalorder %s79, 3
      %p771 = pnand %p769, %p770
      %p772 = pneg %p771
      // Predicated region
      $region9: #{fused_forward.1} parent=5 // pred_check
        _
      $region10: #{fused_forward.1} parent=5 // pred_check_branch
        %774 = sbr.rel (%p771) target = $region12
      $region11: #{fused_forward.1} parent=5 // pred_region
        %s775 = ssub.s32 %s79, 1
        // Predicated region
        $region13: #{fused_forward.1} parent=11 // pred_check
          %p776 = pneg %p126
        $region14: #{fused_forward.1} parent=11 // pred_check_branch
          %778 = sbr.rel (%p776) target = $region16
        $region15: #{fused_forward.1} parent=11 // pred_region
          %780 = vsyncadd [#allocation3], 0
          %s781 = sshll.u32 %s3, 4
          %s782 = int_to_ptr.hbm [resolvable:$true] %s781
          %s783 = sshll.u32 [#allocation2], 4
          %s784 = int_to_ptr.vmem [resolvable:$true] %s783
          %789 = dma.hbm_to_vmem [thread:$0]  %s782, 1280, %s784, [#allocation3], 128, 128, 8
        $region16: #{fused_forward.1} parent=11 // pred_fallthru
          _
        // Predicated region
        $region17: #{fused_forward.1} parent=11 // pred_check
          %p790 = pneg %p147
        $region18: #{fused_forward.1} parent=11 // pred_check_branch
          %792 = sbr.rel (%p790) target = $region20
        $region19: #{fused_forward.1} parent=11 // pred_region
          %794 = vsyncadd [#allocation5], 0
          %s795 = sshll.u32 %s5, 4
          %s796 = int_to_ptr.hbm [resolvable:$true] %s795
          %s797 = sshll.u32 [#allocation4], 4
          %s798 = int_to_ptr.vmem [resolvable:$true] %s797
          %803 = dma.hbm_to_vmem [thread:$0]  %s796, 30720, %s798, [#allocation5], 512, 512, 32
        $region20: #{fused_forward.1} parent=11 // pred_fallthru
          _
        // Predicated region
        $region21: #{fused_forward.1} parent=11 // pred_check
          %p804 = pneg %p168
        $region22: #{fused_forward.1} parent=11 // pred_check_branch
          %806 = sbr.rel (%p804) target = $region24
        $region23: #{fused_forward.1} parent=11 // pred_region
          %808 = vsyncadd [#allocation5], 0
          %s810 = sshll.u32 %s7, 4
          %s811 = int_to_ptr.hbm [resolvable:$true] %s810
          %s812 = sshll.u32 [#allocation6], 4
          %s813 = int_to_ptr.vmem [resolvable:$true] %s812
          %815 = dma.hbm_to_vmem [thread:$0]  %s811, 64, %s813, [#allocation5]
        $region24: #{fused_forward.1} parent=11 // pred_fallthru
          _
        // Predicated region
        $region25: #{fused_forward.1} parent=11 // pred_check
          %p816 = pneg %p189
        $region26: #{fused_forward.1} parent=11 // pred_check_branch
          %818 = sbr.rel (%p816) target = $region28
        $region27: #{fused_forward.1} parent=11 // pred_region
          %820 = vsyncadd [#allocation8], 0
          %s821 = sshll.u32 %s9, 4
          %s822 = int_to_ptr.hbm [resolvable:$true] %s821
          %s823 = sshll.u32 [#allocation7], 4
          %s824 = int_to_ptr.vmem [resolvable:$true] %s823
          %829 = dma.hbm_to_vmem [thread:$0]  %s822, 640, %s824, [#allocation8], 128, 128, 8
        $region28: #{fused_forward.1} parent=11 // pred_fallthru
          _
        // Predicated region
        $region29: #{fused_forward.1} parent=11 // pred_check
          %p830 = pneg %p210
        $region30: #{fused_forward.1} parent=11 // pred_check_branch
          %832 = sbr.rel (%p830) target = $region32
        $region31: #{fused_forward.1} parent=11 // pred_region
          %834 = vsyncadd [#allocation8], 0
          %s835 = sshll.u32 %s11, 4
          %s836 = int_to_ptr.hbm [resolvable:$true] %s835
          %s837 = sshll.u32 [#allocation9], 4
          %s838 = int_to_ptr.vmem [resolvable:$true] %s837
          %843 = dma.hbm_to_vmem [thread:$0]  %s836, 81920, %s838, [#allocation8], 256, 256, 16
        $region32: #{fused_forward.1} parent=11 // pred_fallthru
          _
        // Predicated region
        $region33: #{fused_forward.1} parent=11 // pred_check
          %p844 = pneg %p231
        $region34: #{fused_forward.1} parent=11 // pred_check_branch
          %846 = sbr.rel (%p844) target = $region36
        $region35: #{fused_forward.1} parent=11 // pred_region
          %848 = vsyncadd [#allocation11], 0
          %s850 = sshll.u32 %s13, 4
          %s851 = int_to_ptr.hbm [resolvable:$true] %s850
          %s852 = sshll.u32 [#allocation10], 4
          %s853 = int_to_ptr.vmem [resolvable:$true] %s852
          %855 = dma.hbm_to_vmem [thread:$0]  %s851, 32, %s853, [#allocation11]
        $region36: #{fused_forward.1} parent=11 // pred_fallthru
          _
        // Predicated region
        $region37: #{fused_forward.1} parent=11 // pred_check
          %p856 = pneg %p252
        $region38: #{fused_forward.1} parent=11 // pred_check_branch
          %858 = sbr.rel (%p856) target = $region40
        $region39: #{fused_forward.1} parent=11 // pred_region
          %860 = vsyncadd [#allocation11], 0
          %s861 = sshll.u32 %s15, 4
          %s862 = int_to_ptr.hbm [resolvable:$true] %s861
          %s863 = sshll.u32 [#allocation12], 4
          %s864 = int_to_ptr.vmem [resolvable:$true] %s863
          %869 = dma.hbm_to_vmem [thread:$0]  %s862, 320, %s864, [#allocation11], 64, 64, 4
        $region40: #{fused_forward.1} parent=11 // pred_fallthru
          _
        // Predicated region
        $region41: #{fused_forward.1} parent=11 // pred_check
          %p870 = pneg %p273
        $region42: #{fused_forward.1} parent=11 // pred_check_branch
          %872 = sbr.rel (%p870) target = $region44
        $region43: #{fused_forward.1} parent=11 // pred_region
          %874 = vsyncadd [#allocation14], 0
          %s875 = sshll.u32 %s17, 4
          %s876 = int_to_ptr.hbm [resolvable:$true] %s875
          %s877 = sshll.u32 [#allocation13], 4
          %s878 = int_to_ptr.vmem [resolvable:$true] %s877
          %883 = dma.hbm_to_vmem [thread:$0]  %s876, 20480, %s878, [#allocation14], 128, 128, 8
        $region44: #{fused_forward.1} parent=11 // pred_fallthru
          _
        // Predicated region
        $region45: #{fused_forward.1} parent=11 // pred_check
          %p884 = pneg %p294
        $region46: #{fused_forward.1} parent=11 // pred_check_branch
          %886 = sbr.rel (%p884) target = $region48
        $region47: #{fused_forward.1} parent=11 // pred_region
          %888 = vsyncadd [#allocation14], 0
          %s890 = sshll.u32 %s19, 4
          %s891 = int_to_ptr.hbm [resolvable:$true] %s890
          %s892 = sshll.u32 [#allocation15], 4
          %s893 = int_to_ptr.vmem [resolvable:$true] %s892
          %895 = dma.hbm_to_vmem [thread:$0]  %s891, 16, %s893, [#allocation14]
        $region48: #{fused_forward.1} parent=11 // pred_fallthru
          _
        // Predicated region
        $region49: #{fused_forward.1} parent=11 // pred_check
          %p896 = pneg %p315
        $region50: #{fused_forward.1} parent=11 // pred_check_branch
          %898 = sbr.rel (%p896) target = $region52
        $region51: #{fused_forward.1} parent=11 // pred_region
          _
        $region52: #{fused_forward.1} parent=11 // pred_fallthru
          _
        // Predicated region
        $region53: #{fused_forward.1} parent=11 // pred_check
          %p899 = pneg %p336
        $region54: #{fused_forward.1} parent=11 // pred_check_branch
          %901 = sbr.rel (%p899) target = $region56
        $region55: #{fused_forward.1} parent=11 // pred_region
          _
        $region56: #{fused_forward.1} parent=11 // pred_fallthru
          _
        // Predicated region
        $region57: #{fused_forward.1} parent=11 // pred_check
          %p902 = pneg %p357
        $region58: #{fused_forward.1} parent=11 // pred_check_branch
          %904 = sbr.rel (%p902) target = $region60
        $region59: #{fused_forward.1} parent=11 // pred_region
          %906 = vsyncadd [#allocation17], 0
          %s908 = sshll.u32 %s25, 4
          %s909 = int_to_ptr.hbm [resolvable:$true] %s908
          %s910 = sshll.u32 [#allocation16], 4
          %s911 = int_to_ptr.vmem [resolvable:$true] %s910
          %913 = dma.hbm_to_vmem [thread:$0]  %s909, 16, %s911, [#allocation17]
        $region60: #{fused_forward.1} parent=11 // pred_fallthru
          _
        // Predicated region
        $region61: #{fused_forward.1} parent=11 // pred_check
          %p914 = pneg %p378
        $region62: #{fused_forward.1} parent=11 // pred_check_branch
          %916 = sbr.rel (%p914) target = $region64
        $region63: #{fused_forward.1} parent=11 // pred_region
          _
        $region64: #{fused_forward.1} parent=11 // pred_fallthru
          _
        // Predicated region
        $region65: #{fused_forward.1} parent=11 // pred_check
          %p917 = pneg %p399
        $region66: #{fused_forward.1} parent=11 // pred_check_branch
          %919 = sbr.rel (%p917) target = $region68
        $region67: #{fused_forward.1} parent=11 // pred_region
          _
        $region68: #{fused_forward.1} parent=11 // pred_fallthru
          _
        // Predicated region
        $region69: #{fused_forward.1} parent=11 // pred_check
          %p920 = pneg %p420
        $region70: #{fused_forward.1} parent=11 // pred_check_branch
          %922 = sbr.rel (%p920) target = $region72
        $region71: #{fused_forward.1} parent=11 // pred_region
          %924 = vsyncadd [#allocation17], 0
          %s926 = sshll.u32 %s31, 4
          %s927 = int_to_ptr.hbm [resolvable:$true] %s926
          %s928 = sshll.u32 [#allocation18], 4
          %s929 = int_to_ptr.vmem [resolvable:$true] %s928
          %931 = dma.hbm_to_vmem [thread:$0]  %s927, 16, %s929, [#allocation17]
        $region72: #{fused_forward.1} parent=11 // pred_fallthru
          _
        // Predicated region
        $region73: #{fused_forward.1} parent=11 // pred_check
          %p932 = pneg %p441
        $region74: #{fused_forward.1} parent=11 // pred_check_branch
          %934 = sbr.rel (%p932) target = $region76
        $region75: #{fused_forward.1} parent=11 // pred_region
          _
        $region76: #{fused_forward.1} parent=11 // pred_fallthru
          _
        // Predicated region
        $region77: #{fused_forward.1} parent=11 // pred_check
          %p935 = pneg %p462
        $region78: #{fused_forward.1} parent=11 // pred_check_branch
          %937 = sbr.rel (%p935) target = $region80
        $region79: #{fused_forward.1} parent=11 // pred_region
          _
        $region80: #{fused_forward.1} parent=11 // pred_fallthru
          _
        // Predicated region
        $region81: #{fused_forward.1} parent=11 // pred_check
          %p938 = pneg %p483
        $region82: #{fused_forward.1} parent=11 // pred_check_branch
          %940 = sbr.rel (%p938) target = $region84
        $region83: #{fused_forward.1} parent=11 // pred_region
          %942 = vsyncadd [#allocation20], 0
          %s944 = sshll.u32 %s37, 4
          %s945 = int_to_ptr.hbm [resolvable:$true] %s944
          %s946 = sshll.u32 [#allocation19], 4
          %s947 = int_to_ptr.vmem [resolvable:$true] %s946
          %949 = dma.hbm_to_vmem [thread:$0]  %s945, 16, %s947, [#allocation20]
        $region84: #{fused_forward.1} parent=11 // pred_fallthru
          _
        // Predicated region
        $region85: #{fused_forward.1} parent=11 // pred_check
          %p950 = pneg %p504
        $region86: #{fused_forward.1} parent=11 // pred_check_branch
          %952 = sbr.rel (%p950) target = $region88
        $region87: #{fused_forward.1} parent=11 // pred_region
          _
        $region88: #{fused_forward.1} parent=11 // pred_fallthru
          _
        // Predicated region
        $region89: #{fused_forward.1} parent=11 // pred_check
          %p953 = pneg %p525
        $region90: #{fused_forward.1} parent=11 // pred_check_branch
          %955 = sbr.rel (%p953) target = $region92
        $region91: #{fused_forward.1} parent=11 // pred_region
          %957 = vsyncadd [#allocation20], 0
          %s958 = sshll.u32 %s41, 4
          %s959 = int_to_ptr.hbm [resolvable:$true] %s958
          %s960 = sshll.u32 [#allocation21], 4
          %s961 = int_to_ptr.vmem [resolvable:$true] %s960
          %966 = dma.hbm_to_vmem [thread:$0]  %s959, 1024, %s961, [#allocation20], 128, 128, 8
        $region92: #{fused_forward.1} parent=11 // pred_fallthru
          _
        // Predicated region
        $region93: #{fused_forward.1} parent=11 // pred_check
          %p967 = pneg %p546
        $region94: #{fused_forward.1} parent=11 // pred_check_branch
          %969 = sbr.rel (%p967) target = $region96
        $region95: #{fused_forward.1} parent=11 // pred_region
          %971 = vsyncadd [#allocation23], 0
          %s973 = sshll.u32 %s43, 4
          %s974 = int_to_ptr.hbm [resolvable:$true] %s973
          %s975 = sshll.u32 [#allocation22], 4
          %s976 = int_to_ptr.vmem [resolvable:$true] %s975
          %978 = dma.hbm_to_vmem [thread:$0]  %s974, 16, %s976, [#allocation23]
        $region96: #{fused_forward.1} parent=11 // pred_fallthru
          _
        // Predicated region
        $region97: #{fused_forward.1} parent=11 // pred_check
          %p979 = pneg %p567
        $region98: #{fused_forward.1} parent=11 // pred_check_branch
          %981 = sbr.rel (%p979) target = $region100
        $region99: #{fused_forward.1} parent=11 // pred_region
          _
        $region100: #{fused_forward.1} parent=11 // pred_fallthru
          _
        // Predicated region
        $region101: #{fused_forward.1} parent=11 // pred_check
          %p982 = pneg %p588
        $region102: #{fused_forward.1} parent=11 // pred_check_branch
          %984 = sbr.rel (%p982) target = $region104
        $region103: #{fused_forward.1} parent=11 // pred_region
          %986 = vsyncadd [#allocation23], 0
          %s987 = sshll.u32 %s47, 4
          %s988 = int_to_ptr.hbm [resolvable:$true] %s987
          %s989 = sshll.u32 [#allocation24], 4
          %s990 = int_to_ptr.vmem [resolvable:$true] %s989
          %995 = dma.hbm_to_vmem [thread:$0]  %s988, 2048, %s990, [#allocation23], 128, 128, 8
        $region104: #{fused_forward.1} parent=11 // pred_fallthru
          _
        // Predicated region
        $region105: #{fused_forward.1} parent=11 // pred_check
          %p996 = pneg %p609
        $region106: #{fused_forward.1} parent=11 // pred_check_branch
          %998 = sbr.rel (%p996) target = $region108
        $region107: #{fused_forward.1} parent=11 // pred_region
          %1000 = vsyncadd [#allocation26], 0
          %s1002 = sshll.u32 %s49, 4
          %s1003 = int_to_ptr.hbm [resolvable:$true] %s1002
          %s1004 = sshll.u32 [#allocation25], 4
          %s1005 = int_to_ptr.vmem [resolvable:$true] %s1004
          %1007 = dma.hbm_to_vmem [thread:$0]  %s1003, 16, %s1005, [#allocation26]
        $region108: #{fused_forward.1} parent=11 // pred_fallthru
          _
        // Predicated region
        $region109: #{fused_forward.1} parent=11 // pred_check
          %p1008 = pneg %p630
        $region110: #{fused_forward.1} parent=11 // pred_check_branch
          %1010 = sbr.rel (%p1008) target = $region112
        $region111: #{fused_forward.1} parent=11 // pred_region
          _
        $region112: #{fused_forward.1} parent=11 // pred_fallthru
          _
        // Predicated region
        $region113: #{fused_forward.1} parent=11 // pred_check
          %p1011 = pneg %p651
        $region114: #{fused_forward.1} parent=11 // pred_check_branch
          %1013 = sbr.rel (%p1011) target = $region116
        $region115: #{fused_forward.1} parent=11 // pred_region
          %1015 = vsyncadd [#allocation26], 0
          %s1016 = sshll.u32 %s53, 4
          %s1017 = int_to_ptr.hbm [resolvable:$true] %s1016
          %s1018 = sshll.u32 [#allocation27], 4
          %s1019 = int_to_ptr.vmem [resolvable:$true] %s1018
          %1024 = dma.hbm_to_vmem [thread:$0]  %s1017, 4096, %s1019, [#allocation26], 128, 128, 8
        $region116: #{fused_forward.1} parent=11 // pred_fallthru
          _
        // Predicated region
        $region117: #{fused_forward.1} parent=11 // pred_check
          %p1025 = pneg %p672
        $region118: #{fused_forward.1} parent=11 // pred_check_branch
          %1027 = sbr.rel (%p1025) target = $region120
        $region119: #{fused_forward.1} parent=11 // pred_region
          %1029 = vsyncadd [#allocation29], 0
          %s1031 = sshll.u32 %s55, 4
          %s1032 = int_to_ptr.hbm [resolvable:$true] %s1031
          %s1033 = sshll.u32 [#allocation28], 4
          %s1034 = int_to_ptr.vmem [resolvable:$true] %s1033
          %1036 = dma.hbm_to_vmem [thread:$0]  %s1032, 16, %s1034, [#allocation29]
        $region120: #{fused_forward.1} parent=11 // pred_fallthru
          _
        // Predicated region
        $region121: #{fused_forward.1} parent=11 // pred_check
          %p1037 = pneg %p693
        $region122: #{fused_forward.1} parent=11 // pred_check_branch
          %1039 = sbr.rel (%p1037) target = $region124
        $region123: #{fused_forward.1} parent=11 // pred_region
          _
        $region124: #{fused_forward.1} parent=11 // pred_fallthru
          _
        // Predicated region
        $region125: #{fused_forward.1} parent=11 // pred_check
          %p1040 = pneg %p714
        $region126: #{fused_forward.1} parent=11 // pred_check_branch
          %1042 = sbr.rel (%p1040) target = $region128
        $region127: #{fused_forward.1} parent=11 // pred_region
          _
        $region128: #{fused_forward.1} parent=11 // pred_fallthru
          _
        // Predicated region
        $region129: #{fused_forward.1} parent=11 // pred_check
          %p1043 = pneg %p735
        $region130: #{fused_forward.1} parent=11 // pred_check_branch
          %1045 = sbr.rel (%p1043) target = $region132
        $region131: #{fused_forward.1} parent=11 // pred_region
          %1047 = vsyncadd [#allocation29], 0
          %s1049 = sshll.u32 %s61, 4
          %s1050 = int_to_ptr.hbm [resolvable:$true] %s1049
          %s1051 = sshll.u32 [#allocation30], 4
          %s1052 = int_to_ptr.vmem [resolvable:$true] %s1051
          %1054 = dma.hbm_to_vmem [thread:$0]  %s1050, 16, %s1052, [#allocation29]
        $region132: #{fused_forward.1} parent=11 // pred_fallthru
          _
      $region12: #{fused_forward.1} parent=5 // pred_fallthru
        _
      %p1055 = scmp.lt.s32.totalorder %s79, 2
      // Predicated region
      $region133: #{fused_forward.1} parent=5 // pred_check
        %p1056 = pneg %p1055
      $region134: #{fused_forward.1} parent=5 // pred_check_branch
        %1058 = sbr.rel (%p1056) target = $region136
      $region135: #{fused_forward.1} parent=5 // pred_region
        // Predicated region
        $region137: #{fused_forward.1} parent=135 // pred_check
          %p1059 = pneg %p99
        $region138: #{fused_forward.1} parent=135 // pred_check_branch
          %1061 = sbr.rel (%p1059) target = $region140
        $region139: #{fused_forward.1} parent=135 // pred_region
          %p1062 = scmp.lt.s32.totalorder %s79, 1
          %s1063 = scalar_select %p1062, %s79, 1
          %s1064 = smul.addr %s1063, 4
          %s1065 = smul.addr %s1064, 8
          %s1066 = scalar_lea.vmem %s1, %s1065
        $region140: #{fused_forward.1} parent=135 // pred_fallthru
          _
      $region136: #{fused_forward.1} parent=5 // pred_fallthru
        _
      %p1067 = scmp.le.s32.totalorder 1, %s79
      %p1068 = scmp.lt.s32.totalorder %s79, 3
      %p1069 = pnand %p1067, %p1068
      %p1070 = pneg %p1069
      // Predicated region
      $region141: #{fused_forward.1} parent=5 // pred_check
        _
      $region142: #{fused_forward.1} parent=5 // pred_check_branch
        %1072 = sbr.rel (%p1069) target = $region144
      $region143: #{fused_forward.1} parent=5 // pred_region
        %s1073 = ssub.s32 %s79, 1
        // Predicated region
        $region145: #{fused_forward.1} parent=143 // pred_check
          %p1074 = pneg %p126
        $region146: #{fused_forward.1} parent=143 // pred_check_branch
          %1076 = sbr.rel (%p1074) target = $region148
        $region147: #{fused_forward.1} parent=143 // pred_region
          %1078 = dma.done [#allocation3], 1280
        $region148: #{fused_forward.1} parent=143 // pred_fallthru
          _
        // Predicated region
        $region149: #{fused_forward.1} parent=143 // pred_check
          %p1079 = pneg %p147
        $region150: #{fused_forward.1} parent=143 // pred_check_branch
          %1081 = sbr.rel (%p1079) target = $region152
        $region151: #{fused_forward.1} parent=143 // pred_region
          %1083 = dma.done [#allocation5], 30720
        $region152: #{fused_forward.1} parent=143 // pred_fallthru
          _
        // Predicated region
        $region153: #{fused_forward.1} parent=143 // pred_check
          %p1084 = pneg %p168
        $region154: #{fused_forward.1} parent=143 // pred_check_branch
          %1086 = sbr.rel (%p1084) target = $region156
        $region155: #{fused_forward.1} parent=143 // pred_region
          %1088 = dma.done [#allocation5], 64
        $region156: #{fused_forward.1} parent=143 // pred_fallthru
          _
        // Predicated region
        $region157: #{fused_forward.1} parent=143 // pred_check
          %p1089 = pneg %p189
        $region158: #{fused_forward.1} parent=143 // pred_check_branch
          %1091 = sbr.rel (%p1089) target = $region160
        $region159: #{fused_forward.1} parent=143 // pred_region
          %1093 = dma.done [#allocation8], 640
        $region160: #{fused_forward.1} parent=143 // pred_fallthru
          _
        // Predicated region
        $region161: #{fused_forward.1} parent=143 // pred_check
          %p1094 = pneg %p210
        $region162: #{fused_forward.1} parent=143 // pred_check_branch
          %1096 = sbr.rel (%p1094) target = $region164
        $region163: #{fused_forward.1} parent=143 // pred_region
          %1098 = dma.done [#allocation8], 81920
        $region164: #{fused_forward.1} parent=143 // pred_fallthru
          _
        // Predicated region
        $region165: #{fused_forward.1} parent=143 // pred_check
          %p1099 = pneg %p231
        $region166: #{fused_forward.1} parent=143 // pred_check_branch
          %1101 = sbr.rel (%p1099) target = $region168
        $region167: #{fused_forward.1} parent=143 // pred_region
          %1103 = dma.done [#allocation11], 32
        $region168: #{fused_forward.1} parent=143 // pred_fallthru
          _
        // Predicated region
        $region169: #{fused_forward.1} parent=143 // pred_check
          %p1104 = pneg %p252
        $region170: #{fused_forward.1} parent=143 // pred_check_branch
          %1106 = sbr.rel (%p1104) target = $region172
        $region171: #{fused_forward.1} parent=143 // pred_region
          %1108 = dma.done [#allocation11], 320
        $region172: #{fused_forward.1} parent=143 // pred_fallthru
          _
        // Predicated region
        $region173: #{fused_forward.1} parent=143 // pred_check
          %p1109 = pneg %p273
        $region174: #{fused_forward.1} parent=143 // pred_check_branch
          %1111 = sbr.rel (%p1109) target = $region176
        $region175: #{fused_forward.1} parent=143 // pred_region
          %1113 = dma.done [#allocation14], 20480
        $region176: #{fused_forward.1} parent=143 // pred_fallthru
          _
        // Predicated region
        $region177: #{fused_forward.1} parent=143 // pred_check
          %p1114 = pneg %p294
        $region178: #{fused_forward.1} parent=143 // pred_check_branch
          %1116 = sbr.rel (%p1114) target = $region180
        $region179: #{fused_forward.1} parent=143 // pred_region
          %1118 = dma.done [#allocation14], 16
        $region180: #{fused_forward.1} parent=143 // pred_fallthru
          _
        // Predicated region
        $region181: #{fused_forward.1} parent=143 // pred_check
          %p1119 = pneg %p357
        $region182: #{fused_forward.1} parent=143 // pred_check_branch
          %1121 = sbr.rel (%p1119) target = $region184
        $region183: #{fused_forward.1} parent=143 // pred_region
          %1123 = dma.done [#allocation17], 16
        $region184: #{fused_forward.1} parent=143 // pred_fallthru
          _
        // Predicated region
        $region185: #{fused_forward.1} parent=143 // pred_check
          %p1124 = pneg %p420
        $region186: #{fused_forward.1} parent=143 // pred_check_branch
          %1126 = sbr.rel (%p1124) target = $region188
        $region187: #{fused_forward.1} parent=143 // pred_region
          %1128 = dma.done [#allocation17], 16
        $region188: #{fused_forward.1} parent=143 // pred_fallthru
          _
        // Predicated region
        $region189: #{fused_forward.1} parent=143 // pred_check
          %p1129 = pneg %p483
        $region190: #{fused_forward.1} parent=143 // pred_check_branch
          %1131 = sbr.rel (%p1129) target = $region192
        $region191: #{fused_forward.1} parent=143 // pred_region
          %1133 = dma.done [#allocation20], 16
        $region192: #{fused_forward.1} parent=143 // pred_fallthru
          _
        // Predicated region
        $region193: #{fused_forward.1} parent=143 // pred_check
          %p1134 = pneg %p525
        $region194: #{fused_forward.1} parent=143 // pred_check_branch
          %1136 = sbr.rel (%p1134) target = $region196
        $region195: #{fused_forward.1} parent=143 // pred_region
          %1138 = dma.done [#allocation20], 1024
        $region196: #{fused_forward.1} parent=143 // pred_fallthru
          _
        // Predicated region
        $region197: #{fused_forward.1} parent=143 // pred_check
          %p1139 = pneg %p546
        $region198: #{fused_forward.1} parent=143 // pred_check_branch
          %1141 = sbr.rel (%p1139) target = $region200
        $region199: #{fused_forward.1} parent=143 // pred_region
          %1143 = dma.done [#allocation23], 16
        $region200: #{fused_forward.1} parent=143 // pred_fallthru
          _
        // Predicated region
        $region201: #{fused_forward.1} parent=143 // pred_check
          %p1144 = pneg %p588
        $region202: #{fused_forward.1} parent=143 // pred_check_branch
          %1146 = sbr.rel (%p1144) target = $region204
        $region203: #{fused_forward.1} parent=143 // pred_region
          %1148 = dma.done [#allocation23], 2048
        $region204: #{fused_forward.1} parent=143 // pred_fallthru
          _
        // Predicated region
        $region205: #{fused_forward.1} parent=143 // pred_check
          %p1149 = pneg %p609
        $region206: #{fused_forward.1} parent=143 // pred_check_branch
          %1151 = sbr.rel (%p1149) target = $region208
        $region207: #{fused_forward.1} parent=143 // pred_region
          %1153 = dma.done [#allocation26], 16
        $region208: #{fused_forward.1} parent=143 // pred_fallthru
          _
        // Predicated region
        $region209: #{fused_forward.1} parent=143 // pred_check
          %p1154 = pneg %p651
        $region210: #{fused_forward.1} parent=143 // pred_check_branch
          %1156 = sbr.rel (%p1154) target = $region212
        $region211: #{fused_forward.1} parent=143 // pred_region
          %1158 = dma.done [#allocation26], 4096
        $region212: #{fused_forward.1} parent=143 // pred_fallthru
          _
        // Predicated region
        $region213: #{fused_forward.1} parent=143 // pred_check
          %p1159 = pneg %p672
        $region214: #{fused_forward.1} parent=143 // pred_check_branch
          %1161 = sbr.rel (%p1159) target = $region216
        $region215: #{fused_forward.1} parent=143 // pred_region
          %1163 = dma.done [#allocation29], 16
        $region216: #{fused_forward.1} parent=143 // pred_fallthru
          _
        // Predicated region
        $region217: #{fused_forward.1} parent=143 // pred_check
          %p1164 = pneg %p735
        $region218: #{fused_forward.1} parent=143 // pred_check_branch
          %1166 = sbr.rel (%p1164) target = $region220
        $region219: #{fused_forward.1} parent=143 // pred_region
          %1168 = dma.done [#allocation29], 16
        $region220: #{fused_forward.1} parent=143 // pred_fallthru
          _
        %p1169 = scmp.lt.s32.totalorder %s84, 1
        %s1170 = scalar_select %p1169, %s84, 1
        %s1171 = smul.addr %s1170, 4
        %s1172 = smul.addr %s1171, 8
        %s1173 = scalar_lea.vmem %s1, %s1172
        %p1174 = pneg %p105
        %p1175 = pneg %p102
        %p1176 = pneg %p126
        %p1177 = pneg %p123
        %p1178 = pneg %p147
        %p1179 = pneg %p144
        %p1180 = pneg %p168
        %p1181 = pneg %p165
        %p1182 = pneg %p189
        %p1183 = pneg %p186
        %p1184 = pneg %p210
        %p1185 = pneg %p207
        %p1186 = pneg %p231
        %p1187 = pneg %p228
        %p1188 = pneg %p252
        %p1189 = pneg %p249
        %p1190 = pneg %p273
        %p1191 = pneg %p270
        %p1192 = pneg %p294
        %p1193 = pneg %p291
        %p1194 = pneg %p315
        %p1195 = pneg %p312
        %p1196 = pneg %p336
        %p1197 = pneg %p333
        %p1198 = pneg %p357
        %p1199 = pneg %p354
        %p1200 = pneg %p378
        %p1201 = pneg %p375
        %p1202 = pneg %p399
        %p1203 = pneg %p396
        %p1204 = pneg %p420
        %p1205 = pneg %p417
        %p1206 = pneg %p441
        %p1207 = pneg %p438
        %p1208 = pneg %p462
        %p1209 = pneg %p459
        %p1210 = pneg %p483
        %p1211 = pneg %p480
        %p1212 = pneg %p504
        %p1213 = pneg %p501
        %p1214 = pneg %p525
        %p1215 = pneg %p522
        %p1216 = pneg %p546
        %p1217 = pneg %p543
        %p1218 = pneg %p567
        %p1219 = pneg %p564
        %p1220 = pneg %p588
        %p1221 = pneg %p585
        %p1222 = pneg %p609
        %p1223 = pneg %p606
        %p1224 = pneg %p630
        %p1225 = pneg %p627
        %p1226 = pneg %p651
        %p1227 = pneg %p648
        %p1228 = pneg %p672
        %p1229 = pneg %p669
        %p1230 = pneg %p693
        %p1231 = pneg %p690
        %p1232 = pneg %p714
        %p1233 = pneg %p711
        %p1234 = pneg %p735
        %p1235 = pneg %p732
        %p1236 = pneg %p761
        %p1237 = pneg %p758
        %p1238 = scmp.lt.s32.totalorder %s84, 1
        %s1239 = scalar_select %p1238, %s84, 1
        %s1240 = smul.addr %s1239, 4
        %s1241 = smul.addr %s1240, 8
        %s1242 = scalar_lea.vmem %s63, %s1241
        %p1243 = scmp.lt.s32.totalorder %s84, 1
        %s1244 = scalar_select %p1243, %s84, 1
        %s1245 = smul.addr %s1244, 4
        %s1246 = smul.addr %s1245, 8
        %s1247 = scalar_lea.vmem %s1, %s1246
        %p1248 = scmp.lt.s32.totalorder %s84, 1
        %s1249 = scalar_select %p1248, %s84, 1
        %s1250 = smul.addr %s1249, 4
        %s1251 = smul.addr %s1250, 8
        %s1252 = scalar_lea.vmem %s63, %s1251
        %v1253 = vld [vmem:[%s1247] sm:$0xff]
        %v1254 = vld [vmem:[%s1247 + $0x8] sm:$0xff]
        %v1255 = vld [vmem:[%s1247 + $0x10] sm:$0xff]
        %v1256 = vld [vmem:[%s1247 + $0x18] sm:$0xff]
        %v1257 = vld [vmem:[#allocation2] sm:$0xff]
        %v1258 = vld [vmem:[#allocation2 + $0x8] sm:$0xff]
        %vm1259 = vcmask 261120
        %v1261 = vsel %vm1259, %v1257, 0
        %v1264 = vsel %vm1259, %v1258, 0
        %1266 = vmatpush.msra.mxu0 0.0
        %1267 = vmatpush.msra.mxu0 0.0
        %1268 = vmatpush.msra.mxu0 0.0
        %1269 = vmatpush.msra.mxu0 0.0
        %1270 = vmatpush.msra.mxu0 0.0
        %1271 = vmatpush.msra.mxu0 0.0
        %1272 = vmatpush.msra.mxu0 0.0
        %1273 = vmatpush.msra.mxu0 0.0
        %1274 = vmatpush.msra.mxu0 0.0
        %1275 = vmatpush.msra.mxu0 0.0
        %1276 = vmatpush.msra.mxu0 0.0
        %1277 = vmatpush.msra.mxu0 0.0
        %1278 = vmatpush.msra.mxu0 %v1256
        %1279 = vmatpush.msra.mxu0 %v1255
        %1280 = vmatpush.msra.mxu0 %v1254
        %1281 = vmatpush.msra.mxu0 %v1253
        %1282 = vmatmul.f32.gmra.mxu0 %v1261
        %v1283 = vpop.f32.mrf.mxu0
        %v1284 = vadd.f32 0.0, %v1283
        %1285 = vmatmul.f32.gmra.mxu0 %v1264
        %v1286 = vpop.f32.mrf.mxu0
        %v1287 = vadd.f32 0.0, %v1286
        %1288 = vdwg.mxu0
        %v1289 = vld [vmem:[#allocation4] sm:$0xff]
        %v1290 = vld [vmem:[#allocation4 + $0x8] sm:$0xff]
        %v1291 = vld [vmem:[#allocation4 + $0x10] sm:$0xff]
        %v1292 = vld [vmem:[#allocation4 + $0x18] sm:$0xff]
        %v1293 = vld [vmem:[#allocation4 + $0x20] sm:$0xff]
        %v1294 = vld [vmem:[#allocation4 + $0x28] sm:$0xff]
        %v1295 = vld [vmem:[#allocation4 + $0x30] sm:$0xff]
        %v1296 = vld [vmem:[#allocation4 + $0x38] sm:$0xff]
        %v1297 = vld [vmem:[#allocation4 + $0x40] sm:$0xff]
        %v1298 = vld [vmem:[#allocation4 + $0x48] sm:$0xff]
        %v1299 = vld [vmem:[#allocation4 + $0x50] sm:$0xff]
        %v1300 = vld [vmem:[#allocation4 + $0x58] sm:$0xff]
        %v1301 = vld [vmem:[#allocation4 + $0x60] sm:$0xff]
        %v1302 = vld [vmem:[#allocation4 + $0x68] sm:$0xff]
        %v1303 = vld [vmem:[#allocation4 + $0x70] sm:$0xff]
        %v1304 = vld [vmem:[#allocation4 + $0x78] sm:$0xff]
        %v1305 = vld [vmem:[#allocation4 + $0x80] sm:$0xff]
        %v1306 = vld [vmem:[#allocation4 + $0x88] sm:$0xff]
        %v1307 = vld [vmem:[#allocation4 + $0x90] sm:$0xff]
        %v1308 = vld [vmem:[#allocation4 + $0x98] sm:$0xff]
        %v1309 = vld [vmem:[#allocation4 + $0xa0] sm:$0xff]
        %v1310 = vld [vmem:[#allocation4 + $0xa8] sm:$0xff]
        %v1311 = vld [vmem:[#allocation4 + $0xb0] sm:$0xff]
        %v1312 = vld [vmem:[#allocation4 + $0xb8] sm:$0xff]
        %v1313 = vld [vmem:[#allocation4 + $0xc0] sm:$0xff]
        %v1314 = vld [vmem:[#allocation4 + $0xc8] sm:$0xff]
        %v1315 = vld [vmem:[#allocation4 + $0xd0] sm:$0xff]
        %v1316 = vld [vmem:[#allocation4 + $0xd8] sm:$0xff]
        %v1317 = vld [vmem:[#allocation4 + $0xe0] sm:$0xff]
        %v1318 = vld [vmem:[#allocation4 + $0xe8] sm:$0xff]
        %v1319 = vld [vmem:[#allocation4 + $0xf0] sm:$0xff]
        %v1320 = vld [vmem:[#allocation4 + $0xf8] sm:$0xff]
        %v1321 = vld [vmem:[#allocation4 + $0x100] sm:$0xff]
        %v1322 = vld [vmem:[#allocation4 + $0x108] sm:$0xff]
        %v1323 = vld [vmem:[#allocation4 + $0x110] sm:$0xff]
        %v1324 = vld [vmem:[#allocation4 + $0x118] sm:$0xff]
        %v1325 = vld [vmem:[#allocation4 + $0x120] sm:$0xff]
        %v1326 = vld [vmem:[#allocation4 + $0x128] sm:$0xff]
        %v1327 = vld [vmem:[#allocation4 + $0x130] sm:$0xff]
        %v1328 = vld [vmem:[#allocation4 + $0x138] sm:$0xff]
        %v1329 = vld [vmem:[#allocation4 + $0x140] sm:$0xff]
        %v1330 = vld [vmem:[#allocation4 + $0x148] sm:$0xff]
        %v1331 = vld [vmem:[#allocation4 + $0x150] sm:$0xff]
        %v1332 = vld [vmem:[#allocation4 + $0x158] sm:$0xff]
        %v1333 = vld [vmem:[#allocation4 + $0x160] sm:$0xff]
        %v1334 = vld [vmem:[#allocation4 + $0x168] sm:$0xff]
        %v1335 = vld [vmem:[#allocation4 + $0x170] sm:$0xff]
        %v1336 = vld [vmem:[#allocation4 + $0x178] sm:$0xff]
        %s1337 = scalar_lea.vmem [#allocation2], 16
        %v1338 = vld [vmem:[%s1337] sm:$0xff]
        %v1339 = vld [vmem:[%s1337 + $0x8] sm:$0xff]
        %v1341 = vsel %vm1259, %v1338, 0
        %v1344 = vsel %vm1259, %v1339, 0
        %1346 = vmatpush.msra.mxu0 0.0
        %1347 = vmatpush.msra.mxu0 0.0
        %1348 = vmatpush.msra.mxu0 0.0
        %1349 = vmatpush.msra.mxu0 0.0
        %1350 = vmatpush.msra.mxu0 0.0
        %1351 = vmatpush.msra.mxu0 0.0
        %1352 = vmatpush.msra.mxu0 0.0
        %1353 = vmatpush.msra.mxu0 0.0
        %1354 = vmatpush.msra.mxu0 0.0
        %1355 = vmatpush.msra.mxu0 0.0
        %1356 = vmatpush.msra.mxu0 0.0
        %1357 = vmatpush.msra.mxu0 0.0
        %1358 = vmatpush.msra.mxu0 %v1256
        %1359 = vmatpush.msra.mxu0 %v1255
        %1360 = vmatpush.msra.mxu0 %v1254
        %1361 = vmatpush.msra.mxu0 %v1253
        %1362 = vmatmul.f32.gmra.mxu0 %v1341
        %v1363 = vpop.f32.mrf.mxu0
        %v1364 = vadd.f32 0.0, %v1363
        %1365 = vmatmul.f32.gmra.mxu0 %v1344
        %v1366 = vpop.f32.mrf.mxu0
        %v1367 = vadd.f32 0.0, %v1366
        %1368 = vdwg.mxu0
        %s1369 = scalar_lea.vmem [#allocation4], 384
        %v1370 = vld [vmem:[%s1369] sm:$0xff]
        %v1371 = vld [vmem:[%s1369 + $0x8] sm:$0xff]
        %v1372 = vld [vmem:[%s1369 + $0x10] sm:$0xff]
        %v1373 = vld [vmem:[%s1369 + $0x18] sm:$0xff]
        %v1374 = vld [vmem:[%s1369 + $0x20] sm:$0xff]
        %v1375 = vld [vmem:[%s1369 + $0x28] sm:$0xff]
        %v1376 = vld [vmem:[%s1369 + $0x30] sm:$0xff]
        %v1377 = vld [vmem:[%s1369 + $0x38] sm:$0xff]
        %v1378 = vld [vmem:[%s1369 + $0x40] sm:$0xff]
        %v1379 = vld [vmem:[%s1369 + $0x48] sm:$0xff]
        %v1380 = vld [vmem:[%s1369 + $0x50] sm:$0xff]
        %v1381 = vld [vmem:[%s1369 + $0x58] sm:$0xff]
        %v1382 = vld [vmem:[%s1369 + $0x60] sm:$0xff]
        %v1383 = vld [vmem:[%s1369 + $0x68] sm:$0xff]
        %v1384 = vld [vmem:[%s1369 + $0x70] sm:$0xff]
        %v1385 = vld [vmem:[%s1369 + $0x78] sm:$0xff]
        %v1386 = vld [vmem:[%s1369 + $0x80] sm:$0xff]
        %v1387 = vld [vmem:[%s1369 + $0x88] sm:$0xff]
        %v1388 = vld [vmem:[%s1369 + $0x90] sm:$0xff]
        %v1389 = vld [vmem:[%s1369 + $0x98] sm:$0xff]
        %v1390 = vld [vmem:[%s1369 + $0xa0] sm:$0xff]
        %v1391 = vld [vmem:[%s1369 + $0xa8] sm:$0xff]
        %v1392 = vld [vmem:[%s1369 + $0xb0] sm:$0xff]
        %v1393 = vld [vmem:[%s1369 + $0xb8] sm:$0xff]
        %v1394 = vld [vmem:[%s1369 + $0xc0] sm:$0xff]
        %v1395 = vld [vmem:[%s1369 + $0xc8] sm:$0xff]
        %v1396 = vld [vmem:[%s1369 + $0xd0] sm:$0xff]
        %v1397 = vld [vmem:[%s1369 + $0xd8] sm:$0xff]
        %v1398 = vld [vmem:[%s1369 + $0xe0] sm:$0xff]
        %v1399 = vld [vmem:[%s1369 + $0xe8] sm:$0xff]
        %v1400 = vld [vmem:[%s1369 + $0xf0] sm:$0xff]
        %v1401 = vld [vmem:[%s1369 + $0xf8] sm:$0xff]
        %v1402 = vld [vmem:[%s1369 + $0x100] sm:$0xff]
        %v1403 = vld [vmem:[%s1369 + $0x108] sm:$0xff]
        %v1404 = vld [vmem:[%s1369 + $0x110] sm:$0xff]
        %v1405 = vld [vmem:[%s1369 + $0x118] sm:$0xff]
        %v1406 = vld [vmem:[%s1369 + $0x120] sm:$0xff]
        %v1407 = vld [vmem:[%s1369 + $0x128] sm:$0xff]
        %v1408 = vld [vmem:[%s1369 + $0x130] sm:$0xff]
        %v1409 = vld [vmem:[%s1369 + $0x138] sm:$0xff]
        %v1410 = vld [vmem:[%s1369 + $0x140] sm:$0xff]
        %v1411 = vld [vmem:[%s1369 + $0x148] sm:$0xff]
        %v1412 = vld [vmem:[%s1369 + $0x150] sm:$0xff]
        %v1413 = vld [vmem:[%s1369 + $0x158] sm:$0xff]
        %v1414 = vld [vmem:[%s1369 + $0x160] sm:$0xff]
        %v1415 = vld [vmem:[%s1369 + $0x168] sm:$0xff]
        %v1416 = vld [vmem:[%s1369 + $0x170] sm:$0xff]
        %v1417 = vld [vmem:[%s1369 + $0x178] sm:$0xff]
        %vm1418 = vcmask 785408
        %v1420 = vsel %vm1418, %v1364, 0
        %v1423 = vsel %vm1418, %v1367, 0
        %1425 = vmatpush.msra.mxu0 0.0
        %1426 = vmatpush.msra.mxu0 0.0
        %1427 = vmatpush.msra.mxu0 0.0
        %1428 = vmatpush.msra.mxu0 0.0
        %1429 = vmatpush.msra.mxu0 %v1414
        %1430 = vmatpush.msra.mxu0 %v1410
        %1431 = vmatpush.msra.mxu0 %v1406
        %1432 = vmatpush.msra.mxu0 %v1402
        %1433 = vmatpush.msra.mxu0 %v1398
        %1434 = vmatpush.msra.mxu0 %v1394
        %1435 = vmatpush.msra.mxu0 %v1390
        %1436 = vmatpush.msra.mxu0 %v1386
        %1437 = vmatpush.msra.mxu0 %v1382
        %1438 = vmatpush.msra.mxu0 %v1378
        %1439 = vmatpush.msra.mxu0 %v1374
        %1440 = vmatpush.msra.mxu0 %v1370
        %1441 = vmatmul.f32.gmra.mxu0 %v1420
        %v1442 = vpop.f32.mrf.mxu0
        %v1443 = vadd.f32 0.0, %v1442
        %1444 = vmatmul.f32.gmra.mxu0 %v1423
        %v1445 = vpop.f32.mrf.mxu0
        %v1446 = vadd.f32 0.0, %v1445
        %1447 = vdwg.mxu0
        %1448 = vmatpush.msra.mxu0 0.0
        %1449 = vmatpush.msra.mxu0 0.0
        %1450 = vmatpush.msra.mxu0 0.0
        %1451 = vmatpush.msra.mxu0 0.0
        %1452 = vmatpush.msra.mxu0 %v1415
        %1453 = vmatpush.msra.mxu0 %v1411
        %1454 = vmatpush.msra.mxu0 %v1407
        %1455 = vmatpush.msra.mxu0 %v1403
        %1456 = vmatpush.msra.mxu0 %v1399
        %1457 = vmatpush.msra.mxu0 %v1395
        %1458 = vmatpush.msra.mxu0 %v1391
        %1459 = vmatpush.msra.mxu0 %v1387
        %1460 = vmatpush.msra.mxu0 %v1383
        %1461 = vmatpush.msra.mxu0 %v1379
        %1462 = vmatpush.msra.mxu0 %v1375
        %1463 = vmatpush.msra.mxu0 %v1371
        %1464 = vmatmul.f32.gmra.mxu0 %v1420
        %v1465 = vpop.f32.mrf.mxu0
        %v1466 = vadd.f32 0.0, %v1465
        %1467 = vmatmul.f32.gmra.mxu0 %v1423
        %v1468 = vpop.f32.mrf.mxu0
        %v1469 = vadd.f32 0.0, %v1468
        %1470 = vdwg.mxu0
        %1471 = vmatpush.msra.mxu0 0.0
        %1472 = vmatpush.msra.mxu0 0.0
        %1473 = vmatpush.msra.mxu0 0.0
        %1474 = vmatpush.msra.mxu0 0.0
        %1475 = vmatpush.msra.mxu0 %v1416
        %1476 = vmatpush.msra.mxu0 %v1412
        %1477 = vmatpush.msra.mxu0 %v1408
        %1478 = vmatpush.msra.mxu0 %v1404
        %1479 = vmatpush.msra.mxu0 %v1400
        %1480 = vmatpush.msra.mxu0 %v1396
        %1481 = vmatpush.msra.mxu0 %v1392
        %1482 = vmatpush.msra.mxu0 %v1388
        %1483 = vmatpush.msra.mxu0 %v1384
        %1484 = vmatpush.msra.mxu0 %v1380
        %1485 = vmatpush.msra.mxu0 %v1376
        %1486 = vmatpush.msra.mxu0 %v1372
        %1487 = vmatmul.f32.gmra.mxu0 %v1420
        %v1488 = vpop.f32.mrf.mxu0
        %v1489 = vadd.f32 0.0, %v1488
        %1490 = vmatmul.f32.gmra.mxu0 %v1423
        %v1491 = vpop.f32.mrf.mxu0
        %v1492 = vadd.f32 0.0, %v1491
        %1493 = vdwg.mxu0
        %1494 = vmatpush.msra.mxu0 0.0
        %1495 = vmatpush.msra.mxu0 0.0
        %1496 = vmatpush.msra.mxu0 0.0
        %1497 = vmatpush.msra.mxu0 0.0
        %1498 = vmatpush.msra.mxu0 %v1417
        %1499 = vmatpush.msra.mxu0 %v1413
        %1500 = vmatpush.msra.mxu0 %v1409
        %1501 = vmatpush.msra.mxu0 %v1405
        %1502 = vmatpush.msra.mxu0 %v1401
        %1503 = vmatpush.msra.mxu0 %v1397
        %1504 = vmatpush.msra.mxu0 %v1393
        %1505 = vmatpush.msra.mxu0 %v1389
        %1506 = vmatpush.msra.mxu0 %v1385
        %1507 = vmatpush.msra.mxu0 %v1381
        %1508 = vmatpush.msra.mxu0 %v1377
        %1509 = vmatpush.msra.mxu0 %v1373
        %1510 = vmatmul.f32.gmra.mxu0 %v1420
        %v1511 = vpop.f32.mrf.mxu0
        %v1512 = vadd.f32 0.0, %v1511
        %1513 = vmatmul.f32.gmra.mxu0 %v1423
        %v1514 = vpop.f32.mrf.mxu0
        %v1515 = vadd.f32 0.0, %v1514
        %1516 = vdwg.mxu0
        %v1518 = vsel %vm1418, %v1284, 0
        %v1521 = vsel %vm1418, %v1287, 0
        %1523 = vmatpush.msra.mxu0 0.0
        %1524 = vmatpush.msra.mxu0 0.0
        %1525 = vmatpush.msra.mxu0 0.0
        %1526 = vmatpush.msra.mxu0 0.0
        %1527 = vmatpush.msra.mxu0 %v1333
        %1528 = vmatpush.msra.mxu0 %v1329
        %1529 = vmatpush.msra.mxu0 %v1325
        %1530 = vmatpush.msra.mxu0 %v1321
        %1531 = vmatpush.msra.mxu0 %v1317
        %1532 = vmatpush.msra.mxu0 %v1313
        %1533 = vmatpush.msra.mxu0 %v1309
        %1534 = vmatpush.msra.mxu0 %v1305
        %1535 = vmatpush.msra.mxu0 %v1301
        %1536 = vmatpush.msra.mxu0 %v1297
        %1537 = vmatpush.msra.mxu0 %v1293
        %1538 = vmatpush.msra.mxu0 %v1289
        %1539 = vmatmul.f32.gmra.mxu0 %v1518
        %v1540 = vpop.f32.mrf.mxu0
        %v1541 = vadd.f32 %v1443, %v1540
        %1542 = vmatmul.f32.gmra.mxu0 %v1521
        %v1543 = vpop.f32.mrf.mxu0
        %v1544 = vadd.f32 %v1446, %v1543
        %1545 = vdwg.mxu0
        %1546 = vmatpush.msra.mxu0 0.0
        %1547 = vmatpush.msra.mxu0 0.0
        %1548 = vmatpush.msra.mxu0 0.0
        %1549 = vmatpush.msra.mxu0 0.0
        %1550 = vmatpush.msra.mxu0 %v1334
        %1551 = vmatpush.msra.mxu0 %v1330
        %1552 = vmatpush.msra.mxu0 %v1326
        %1553 = vmatpush.msra.mxu0 %v1322
        %1554 = vmatpush.msra.mxu0 %v1318
        %1555 = vmatpush.msra.mxu0 %v1314
        %1556 = vmatpush.msra.mxu0 %v1310
        %1557 = vmatpush.msra.mxu0 %v1306
        %1558 = vmatpush.msra.mxu0 %v1302
        %1559 = vmatpush.msra.mxu0 %v1298
        %1560 = vmatpush.msra.mxu0 %v1294
        %1561 = vmatpush.msra.mxu0 %v1290
        %1562 = vmatmul.f32.gmra.mxu0 %v1518
        %v1563 = vpop.f32.mrf.mxu0
        %v1564 = vadd.f32 %v1466, %v1563
        %1565 = vmatmul.f32.gmra.mxu0 %v1521
        %v1566 = vpop.f32.mrf.mxu0
        %v1567 = vadd.f32 %v1469, %v1566
        %1568 = vdwg.mxu0
        %1569 = vmatpush.msra.mxu0 0.0
        %1570 = vmatpush.msra.mxu0 0.0
        %1571 = vmatpush.msra.mxu0 0.0
        %1572 = vmatpush.msra.mxu0 0.0
        %1573 = vmatpush.msra.mxu0 %v1335
        %1574 = vmatpush.msra.mxu0 %v1331
        %1575 = vmatpush.msra.mxu0 %v1327
        %1576 = vmatpush.msra.mxu0 %v1323
        %1577 = vmatpush.msra.mxu0 %v1319
        %1578 = vmatpush.msra.mxu0 %v1315
        %1579 = vmatpush.msra.mxu0 %v1311
        %1580 = vmatpush.msra.mxu0 %v1307
        %1581 = vmatpush.msra.mxu0 %v1303
        %1582 = vmatpush.msra.mxu0 %v1299
        %1583 = vmatpush.msra.mxu0 %v1295
        %1584 = vmatpush.msra.mxu0 %v1291
        %1585 = vmatmul.f32.gmra.mxu0 %v1518
        %v1586 = vpop.f32.mrf.mxu0
        %v1587 = vadd.f32 %v1489, %v1586
        %1588 = vmatmul.f32.gmra.mxu0 %v1521
        %v1589 = vpop.f32.mrf.mxu0
        %v1590 = vadd.f32 %v1492, %v1589
        %1591 = vdwg.mxu0
        %1592 = vmatpush.msra.mxu0 0.0
        %1593 = vmatpush.msra.mxu0 0.0
        %1594 = vmatpush.msra.mxu0 0.0
        %1595 = vmatpush.msra.mxu0 0.0
        %1596 = vmatpush.msra.mxu0 %v1336
        %1597 = vmatpush.msra.mxu0 %v1332
        %1598 = vmatpush.msra.mxu0 %v1328
        %1599 = vmatpush.msra.mxu0 %v1324
        %1600 = vmatpush.msra.mxu0 %v1320
        %1601 = vmatpush.msra.mxu0 %v1316
        %1602 = vmatpush.msra.mxu0 %v1312
        %1603 = vmatpush.msra.mxu0 %v1308
        %1604 = vmatpush.msra.mxu0 %v1304
        %1605 = vmatpush.msra.mxu0 %v1300
        %1606 = vmatpush.msra.mxu0 %v1296
        %1607 = vmatpush.msra.mxu0 %v1292
        %1608 = vmatmul.f32.gmra.mxu0 %v1518
        %v1609 = vpop.f32.mrf.mxu0
        %v1610 = vadd.f32 %v1512, %v1609
        %1611 = vmatmul.f32.gmra.mxu0 %v1521
        %v1612 = vpop.f32.mrf.mxu0
        %v1613 = vadd.f32 %v1515, %v1612
        %1614 = vdwg.mxu0
        %s1615 = scalar_lea.vmem [#allocation2], 32
        %v1616 = vld [vmem:[%s1615] sm:$0xff]
        %v1617 = vld [vmem:[%s1615 + $0x8] sm:$0xff]
        %v1619 = vsel %vm1259, %v1616, 0
        %v1622 = vsel %vm1259, %v1617, 0
        %1624 = vmatpush.msra.mxu0 0.0
        %1625 = vmatpush.msra.mxu0 0.0
        %1626 = vmatpush.msra.mxu0 0.0
        %1627 = vmatpush.msra.mxu0 0.0
        %1628 = vmatpush.msra.mxu0 0.0
        %1629 = vmatpush.msra.mxu0 0.0
        %1630 = vmatpush.msra.mxu0 0.0
        %1631 = vmatpush.msra.mxu0 0.0
        %1632 = vmatpush.msra.mxu0 0.0
        %1633 = vmatpush.msra.mxu0 0.0
        %1634 = vmatpush.msra.mxu0 0.0
        %1635 = vmatpush.msra.mxu0 0.0
        %1636 = vmatpush.msra.mxu0 %v1256
        %1637 = vmatpush.msra.mxu0 %v1255
        %1638 = vmatpush.msra.mxu0 %v1254
        %1639 = vmatpush.msra.mxu0 %v1253
        %1640 = vmatmul.f32.gmra.mxu0 %v1619
        %v1641 = vpop.f32.mrf.mxu0
        %v1642 = vadd.f32 0.0, %v1641
        %1643 = vmatmul.f32.gmra.mxu0 %v1622
        %v1644 = vpop.f32.mrf.mxu0
        %v1645 = vadd.f32 0.0, %v1644
        %1646 = vdwg.mxu0
        %s1647 = scalar_lea.vmem [#allocation4], 768
        %v1648 = vld [vmem:[%s1647] sm:$0xff]
        %v1649 = vld [vmem:[%s1647 + $0x8] sm:$0xff]
        %v1650 = vld [vmem:[%s1647 + $0x10] sm:$0xff]
        %v1651 = vld [vmem:[%s1647 + $0x18] sm:$0xff]
        %v1652 = vld [vmem:[%s1647 + $0x20] sm:$0xff]
        %v1653 = vld [vmem:[%s1647 + $0x28] sm:$0xff]
        %v1654 = vld [vmem:[%s1647 + $0x30] sm:$0xff]
        %v1655 = vld [vmem:[%s1647 + $0x38] sm:$0xff]
        %v1656 = vld [vmem:[%s1647 + $0x40] sm:$0xff]
        %v1657 = vld [vmem:[%s1647 + $0x48] sm:$0xff]
        %v1658 = vld [vmem:[%s1647 + $0x50] sm:$0xff]
        %v1659 = vld [vmem:[%s1647 + $0x58] sm:$0xff]
        %v1660 = vld [vmem:[%s1647 + $0x60] sm:$0xff]
        %v1661 = vld [vmem:[%s1647 + $0x68] sm:$0xff]
        %v1662 = vld [vmem:[%s1647 + $0x70] sm:$0xff]
        %v1663 = vld [vmem:[%s1647 + $0x78] sm:$0xff]
        %v1664 = vld [vmem:[%s1647 + $0x80] sm:$0xff]
        %v1665 = vld [vmem:[%s1647 + $0x88] sm:$0xff]
        %v1666 = vld [vmem:[%s1647 + $0x90] sm:$0xff]
        %v1667 = vld [vmem:[%s1647 + $0x98] sm:$0xff]
        %v1668 = vld [vmem:[%s1647 + $0xa0] sm:$0xff]
        %v1669 = vld [vmem:[%s1647 + $0xa8] sm:$0xff]
        %v1670 = vld [vmem:[%s1647 + $0xb0] sm:$0xff]
        %v1671 = vld [vmem:[%s1647 + $0xb8] sm:$0xff]
        %v1672 = vld [vmem:[%s1647 + $0xc0] sm:$0xff]
        %v1673 = vld [vmem:[%s1647 + $0xc8] sm:$0xff]
        %v1674 = vld [vmem:[%s1647 + $0xd0] sm:$0xff]
        %v1675 = vld [vmem:[%s1647 + $0xd8] sm:$0xff]
        %v1676 = vld [vmem:[%s1647 + $0xe0] sm:$0xff]
        %v1677 = vld [vmem:[%s1647 + $0xe8] sm:$0xff]
        %v1678 = vld [vmem:[%s1647 + $0xf0] sm:$0xff]
        %v1679 = vld [vmem:[%s1647 + $0xf8] sm:$0xff]
        %v1680 = vld [vmem:[%s1647 + $0x100] sm:$0xff]
        %v1681 = vld [vmem:[%s1647 + $0x108] sm:$0xff]
        %v1682 = vld [vmem:[%s1647 + $0x110] sm:$0xff]
        %v1683 = vld [vmem:[%s1647 + $0x118] sm:$0xff]
        %v1684 = vld [vmem:[%s1647 + $0x120] sm:$0xff]
        %v1685 = vld [vmem:[%s1647 + $0x128] sm:$0xff]
        %v1686 = vld [vmem:[%s1647 + $0x130] sm:$0xff]
        %v1687 = vld [vmem:[%s1647 + $0x138] sm:$0xff]
        %v1688 = vld [vmem:[%s1647 + $0x140] sm:$0xff]
        %v1689 = vld [vmem:[%s1647 + $0x148] sm:$0xff]
        %v1690 = vld [vmem:[%s1647 + $0x150] sm:$0xff]
        %v1691 = vld [vmem:[%s1647 + $0x158] sm:$0xff]
        %v1692 = vld [vmem:[%s1647 + $0x160] sm:$0xff]
        %v1693 = vld [vmem:[%s1647 + $0x168] sm:$0xff]
        %v1694 = vld [vmem:[%s1647 + $0x170] sm:$0xff]
        %v1695 = vld [vmem:[%s1647 + $0x178] sm:$0xff]
        %v1697 = vsel %vm1418, %v1642, 0
        %v1700 = vsel %vm1418, %v1645, 0
        %1702 = vmatpush.msra.mxu0 0.0
        %1703 = vmatpush.msra.mxu0 0.0
        %1704 = vmatpush.msra.mxu0 0.0
        %1705 = vmatpush.msra.mxu0 0.0
        %1706 = vmatpush.msra.mxu0 %v1692
        %1707 = vmatpush.msra.mxu0 %v1688
        %1708 = vmatpush.msra.mxu0 %v1684
        %1709 = vmatpush.msra.mxu0 %v1680
        %1710 = vmatpush.msra.mxu0 %v1676
        %1711 = vmatpush.msra.mxu0 %v1672
        %1712 = vmatpush.msra.mxu0 %v1668
        %1713 = vmatpush.msra.mxu0 %v1664
        %1714 = vmatpush.msra.mxu0 %v1660
        %1715 = vmatpush.msra.mxu0 %v1656
        %1716 = vmatpush.msra.mxu0 %v1652
        %1717 = vmatpush.msra.mxu0 %v1648
        %1718 = vmatmul.f32.gmra.mxu0 %v1697
        %v1719 = vpop.f32.mrf.mxu0
        %v1720 = vadd.f32 0.0, %v1719
        %1721 = vmatmul.f32.gmra.mxu0 %v1700
        %v1722 = vpop.f32.mrf.mxu0
        %v1723 = vadd.f32 0.0, %v1722
        %1724 = vdwg.mxu0
        %1725 = vmatpush.msra.mxu0 0.0
        %1726 = vmatpush.msra.mxu0 0.0
        %1727 = vmatpush.msra.mxu0 0.0
        %1728 = vmatpush.msra.mxu0 0.0
        %1729 = vmatpush.msra.mxu0 %v1693
        %1730 = vmatpush.msra.mxu0 %v1689
        %1731 = vmatpush.msra.mxu0 %v1685
        %1732 = vmatpush.msra.mxu0 %v1681
        %1733 = vmatpush.msra.mxu0 %v1677
        %1734 = vmatpush.msra.mxu0 %v1673
        %1735 = vmatpush.msra.mxu0 %v1669
        %1736 = vmatpush.msra.mxu0 %v1665
        %1737 = vmatpush.msra.mxu0 %v1661
        %1738 = vmatpush.msra.mxu0 %v1657
        %1739 = vmatpush.msra.mxu0 %v1653
        %1740 = vmatpush.msra.mxu0 %v1649
        %1741 = vmatmul.f32.gmra.mxu0 %v1697
        %v1742 = vpop.f32.mrf.mxu0
        %v1743 = vadd.f32 0.0, %v1742
        %1744 = vmatmul.f32.gmra.mxu0 %v1700
        %v1745 = vpop.f32.mrf.mxu0
        %v1746 = vadd.f32 0.0, %v1745
        %1747 = vdwg.mxu0
        %1748 = vmatpush.msra.mxu0 0.0
        %1749 = vmatpush.msra.mxu0 0.0
        %1750 = vmatpush.msra.mxu0 0.0
        %1751 = vmatpush.msra.mxu0 0.0
        %1752 = vmatpush.msra.mxu0 %v1694
        %1753 = vmatpush.msra.mxu0 %v1690
        %1754 = vmatpush.msra.mxu0 %v1686
        %1755 = vmatpush.msra.mxu0 %v1682
        %1756 = vmatpush.msra.mxu0 %v1678
        %1757 = vmatpush.msra.mxu0 %v1674
        %1758 = vmatpush.msra.mxu0 %v1670
        %1759 = vmatpush.msra.mxu0 %v1666
        %1760 = vmatpush.msra.mxu0 %v1662
        %1761 = vmatpush.msra.mxu0 %v1658
        %1762 = vmatpush.msra.mxu0 %v1654
        %1763 = vmatpush.msra.mxu0 %v1650
        %1764 = vmatmul.f32.gmra.mxu0 %v1697
        %v1765 = vpop.f32.mrf.mxu0
        %v1766 = vadd.f32 0.0, %v1765
        %1767 = vmatmul.f32.gmra.mxu0 %v1700
        %v1768 = vpop.f32.mrf.mxu0
        %v1769 = vadd.f32 0.0, %v1768
        %1770 = vdwg.mxu0
        %1771 = vmatpush.msra.mxu0 0.0
        %1772 = vmatpush.msra.mxu0 0.0
        %1773 = vmatpush.msra.mxu0 0.0
        %1774 = vmatpush.msra.mxu0 0.0
        %1775 = vmatpush.msra.mxu0 %v1695
        %1776 = vmatpush.msra.mxu0 %v1691
        %1777 = vmatpush.msra.mxu0 %v1687
        %1778 = vmatpush.msra.mxu0 %v1683
        %1779 = vmatpush.msra.mxu0 %v1679
        %1780 = vmatpush.msra.mxu0 %v1675
        %1781 = vmatpush.msra.mxu0 %v1671
        %1782 = vmatpush.msra.mxu0 %v1667
        %1783 = vmatpush.msra.mxu0 %v1663
        %1784 = vmatpush.msra.mxu0 %v1659
        %1785 = vmatpush.msra.mxu0 %v1655
        %1786 = vmatpush.msra.mxu0 %v1651
        %1787 = vmatmul.f32.gmra.mxu0 %v1697
        %v1788 = vpop.f32.mrf.mxu0
        %v1789 = vadd.f32 0.0, %v1788
        %1790 = vmatmul.f32.gmra.mxu0 %v1700
        %v1791 = vpop.f32.mrf.mxu0
        %v1792 = vadd.f32 0.0, %v1791
        %1793 = vdwg.mxu0
        %v1794 = vadd.f32 %v1541, %v1720
        %v1795 = vadd.f32 %v1564, %v1743
        %v1796 = vadd.f32 %v1587, %v1766
        %v1797 = vadd.f32 %v1610, %v1789
        %v1798 = vadd.f32 %v1544, %v1723
        %v1799 = vadd.f32 %v1567, %v1746
        %v1800 = vadd.f32 %v1590, %v1769
        %v1801 = vadd.f32 %v1613, %v1792
        %s1802 = scalar_lea.vmem [#allocation2], 48
        %v1803 = vld [vmem:[%s1802] sm:$0xff]
        %v1804 = vld [vmem:[%s1802 + $0x8] sm:$0xff]
        %v1806 = vsel %vm1259, %v1803, 0
        %v1809 = vsel %vm1259, %v1804, 0
        %1811 = vmatpush.msra.mxu0 0.0
        %1812 = vmatpush.msra.mxu0 0.0
        %1813 = vmatpush.msra.mxu0 0.0
        %1814 = vmatpush.msra.mxu0 0.0
        %1815 = vmatpush.msra.mxu0 0.0
        %1816 = vmatpush.msra.mxu0 0.0
        %1817 = vmatpush.msra.mxu0 0.0
        %1818 = vmatpush.msra.mxu0 0.0
        %1819 = vmatpush.msra.mxu0 0.0
        %1820 = vmatpush.msra.mxu0 0.0
        %1821 = vmatpush.msra.mxu0 0.0
        %1822 = vmatpush.msra.mxu0 0.0
        %1823 = vmatpush.msra.mxu0 %v1256
        %1824 = vmatpush.msra.mxu0 %v1255
        %1825 = vmatpush.msra.mxu0 %v1254
        %1826 = vmatpush.msra.mxu0 %v1253
        %1827 = vmatmul.f32.gmra.mxu0 %v1806
        %v1828 = vpop.f32.mrf.mxu0
        %v1829 = vadd.f32 0.0, %v1828
        %1830 = vmatmul.f32.gmra.mxu0 %v1809
        %v1831 = vpop.f32.mrf.mxu0
        %v1832 = vadd.f32 0.0, %v1831
        %1833 = vdwg.mxu0
        %s1834 = scalar_lea.vmem [#allocation4], 1152
        %v1835 = vld [vmem:[%s1834] sm:$0xff]
        %v1836 = vld [vmem:[%s1834 + $0x8] sm:$0xff]
        %v1837 = vld [vmem:[%s1834 + $0x10] sm:$0xff]
        %v1838 = vld [vmem:[%s1834 + $0x18] sm:$0xff]
        %v1839 = vld [vmem:[%s1834 + $0x20] sm:$0xff]
        %v1840 = vld [vmem:[%s1834 + $0x28] sm:$0xff]
        %v1841 = vld [vmem:[%s1834 + $0x30] sm:$0xff]
        %v1842 = vld [vmem:[%s1834 + $0x38] sm:$0xff]
        %v1843 = vld [vmem:[%s1834 + $0x40] sm:$0xff]
        %v1844 = vld [vmem:[%s1834 + $0x48] sm:$0xff]
        %v1845 = vld [vmem:[%s1834 + $0x50] sm:$0xff]
        %v1846 = vld [vmem:[%s1834 + $0x58] sm:$0xff]
        %v1847 = vld [vmem:[%s1834 + $0x60] sm:$0xff]
        %v1848 = vld [vmem:[%s1834 + $0x68] sm:$0xff]
        %v1849 = vld [vmem:[%s1834 + $0x70] sm:$0xff]
        %v1850 = vld [vmem:[%s1834 + $0x78] sm:$0xff]
        %v1851 = vld [vmem:[%s1834 + $0x80] sm:$0xff]
        %v1852 = vld [vmem:[%s1834 + $0x88] sm:$0xff]
        %v1853 = vld [vmem:[%s1834 + $0x90] sm:$0xff]
        %v1854 = vld [vmem:[%s1834 + $0x98] sm:$0xff]
        %v1855 = vld [vmem:[%s1834 + $0xa0] sm:$0xff]
        %v1856 = vld [vmem:[%s1834 + $0xa8] sm:$0xff]
        %v1857 = vld [vmem:[%s1834 + $0xb0] sm:$0xff]
        %v1858 = vld [vmem:[%s1834 + $0xb8] sm:$0xff]
        %v1859 = vld [vmem:[%s1834 + $0xc0] sm:$0xff]
        %v1860 = vld [vmem:[%s1834 + $0xc8] sm:$0xff]
        %v1861 = vld [vmem:[%s1834 + $0xd0] sm:$0xff]
        %v1862 = vld [vmem:[%s1834 + $0xd8] sm:$0xff]
        %v1863 = vld [vmem:[%s1834 + $0xe0] sm:$0xff]
        %v1864 = vld [vmem:[%s1834 + $0xe8] sm:$0xff]
        %v1865 = vld [vmem:[%s1834 + $0xf0] sm:$0xff]
        %v1866 = vld [vmem:[%s1834 + $0xf8] sm:$0xff]
        %v1867 = vld [vmem:[%s1834 + $0x100] sm:$0xff]
        %v1868 = vld [vmem:[%s1834 + $0x108] sm:$0xff]
        %v1869 = vld [vmem:[%s1834 + $0x110] sm:$0xff]
        %v1870 = vld [vmem:[%s1834 + $0x118] sm:$0xff]
        %v1871 = vld [vmem:[%s1834 + $0x120] sm:$0xff]
        %v1872 = vld [vmem:[%s1834 + $0x128] sm:$0xff]
        %v1873 = vld [vmem:[%s1834 + $0x130] sm:$0xff]
        %v1874 = vld [vmem:[%s1834 + $0x138] sm:$0xff]
        %v1875 = vld [vmem:[%s1834 + $0x140] sm:$0xff]
        %v1876 = vld [vmem:[%s1834 + $0x148] sm:$0xff]
        %v1877 = vld [vmem:[%s1834 + $0x150] sm:$0xff]
        %v1878 = vld [vmem:[%s1834 + $0x158] sm:$0xff]
        %v1879 = vld [vmem:[%s1834 + $0x160] sm:$0xff]
        %v1880 = vld [vmem:[%s1834 + $0x168] sm:$0xff]
        %v1881 = vld [vmem:[%s1834 + $0x170] sm:$0xff]
        %v1882 = vld [vmem:[%s1834 + $0x178] sm:$0xff]
        %v1884 = vsel %vm1418, %v1829, 0
        %v1887 = vsel %vm1418, %v1832, 0
        %1889 = vmatpush.msra.mxu0 0.0
        %1890 = vmatpush.msra.mxu0 0.0
        %1891 = vmatpush.msra.mxu0 0.0
        %1892 = vmatpush.msra.mxu0 0.0
        %1893 = vmatpush.msra.mxu0 %v1879
        %1894 = vmatpush.msra.mxu0 %v1875
        %1895 = vmatpush.msra.mxu0 %v1871
        %1896 = vmatpush.msra.mxu0 %v1867
        %1897 = vmatpush.msra.mxu0 %v1863
        %1898 = vmatpush.msra.mxu0 %v1859
        %1899 = vmatpush.msra.mxu0 %v1855
        %1900 = vmatpush.msra.mxu0 %v1851
        %1901 = vmatpush.msra.mxu0 %v1847
        %1902 = vmatpush.msra.mxu0 %v1843
        %1903 = vmatpush.msra.mxu0 %v1839
        %1904 = vmatpush.msra.mxu0 %v1835
        %1905 = vmatmul.f32.gmra.mxu0 %v1884
        %v1906 = vpop.f32.mrf.mxu0
        %v1907 = vadd.f32 0.0, %v1906
        %1908 = vmatmul.f32.gmra.mxu0 %v1887
        %v1909 = vpop.f32.mrf.mxu0
        %v1910 = vadd.f32 0.0, %v1909
        %1911 = vdwg.mxu0
        %1912 = vmatpush.msra.mxu0 0.0
        %1913 = vmatpush.msra.mxu0 0.0
        %1914 = vmatpush.msra.mxu0 0.0
        %1915 = vmatpush.msra.mxu0 0.0
        %1916 = vmatpush.msra.mxu0 %v1880
        %1917 = vmatpush.msra.mxu0 %v1876
        %1918 = vmatpush.msra.mxu0 %v1872
        %1919 = vmatpush.msra.mxu0 %v1868
        %1920 = vmatpush.msra.mxu0 %v1864
        %1921 = vmatpush.msra.mxu0 %v1860
        %1922 = vmatpush.msra.mxu0 %v1856
        %1923 = vmatpush.msra.mxu0 %v1852
        %1924 = vmatpush.msra.mxu0 %v1848
        %1925 = vmatpush.msra.mxu0 %v1844
        %1926 = vmatpush.msra.mxu0 %v1840
        %1927 = vmatpush.msra.mxu0 %v1836
        %1928 = vmatmul.f32.gmra.mxu0 %v1884
        %v1929 = vpop.f32.mrf.mxu0
        %v1930 = vadd.f32 0.0, %v1929
        %1931 = vmatmul.f32.gmra.mxu0 %v1887
        %v1932 = vpop.f32.mrf.mxu0
        %v1933 = vadd.f32 0.0, %v1932
        %1934 = vdwg.mxu0
        %1935 = vmatpush.msra.mxu0 0.0
        %1936 = vmatpush.msra.mxu0 0.0
        %1937 = vmatpush.msra.mxu0 0.0
        %1938 = vmatpush.msra.mxu0 0.0
        %1939 = vmatpush.msra.mxu0 %v1881
        %1940 = vmatpush.msra.mxu0 %v1877
        %1941 = vmatpush.msra.mxu0 %v1873
        %1942 = vmatpush.msra.mxu0 %v1869
        %1943 = vmatpush.msra.mxu0 %v1865
        %1944 = vmatpush.msra.mxu0 %v1861
        %1945 = vmatpush.msra.mxu0 %v1857
        %1946 = vmatpush.msra.mxu0 %v1853
        %1947 = vmatpush.msra.mxu0 %v1849
        %1948 = vmatpush.msra.mxu0 %v1845
        %1949 = vmatpush.msra.mxu0 %v1841
        %1950 = vmatpush.msra.mxu0 %v1837
        %1951 = vmatmul.f32.gmra.mxu0 %v1884
        %v1952 = vpop.f32.mrf.mxu0
        %v1953 = vadd.f32 0.0, %v1952
        %1954 = vmatmul.f32.gmra.mxu0 %v1887
        %v1955 = vpop.f32.mrf.mxu0
        %v1956 = vadd.f32 0.0, %v1955
        %1957 = vdwg.mxu0
        %1958 = vmatpush.msra.mxu0 0.0
        %1959 = vmatpush.msra.mxu0 0.0
        %1960 = vmatpush.msra.mxu0 0.0
        %1961 = vmatpush.msra.mxu0 0.0
        %1962 = vmatpush.msra.mxu0 %v1882
        %1963 = vmatpush.msra.mxu0 %v1878
        %1964 = vmatpush.msra.mxu0 %v1874
        %1965 = vmatpush.msra.mxu0 %v1870
        %1966 = vmatpush.msra.mxu0 %v1866
        %1967 = vmatpush.msra.mxu0 %v1862
        %1968 = vmatpush.msra.mxu0 %v1858
        %1969 = vmatpush.msra.mxu0 %v1854
        %1970 = vmatpush.msra.mxu0 %v1850
        %1971 = vmatpush.msra.mxu0 %v1846
        %1972 = vmatpush.msra.mxu0 %v1842
        %1973 = vmatpush.msra.mxu0 %v1838
        %1974 = vmatmul.f32.gmra.mxu0 %v1884
        %v1975 = vpop.f32.mrf.mxu0
        %v1976 = vadd.f32 0.0, %v1975
        %1977 = vmatmul.f32.gmra.mxu0 %v1887
        %v1978 = vpop.f32.mrf.mxu0
        %v1979 = vadd.f32 0.0, %v1978
        %1980 = vdwg.mxu0
        %v1981 = vadd.f32 %v1794, %v1907
        %v1982 = vadd.f32 %v1795, %v1930
        %v1983 = vadd.f32 %v1796, %v1953
        %v1984 = vadd.f32 %v1797, %v1976
        %v1985 = vadd.f32 %v1798, %v1910
        %v1986 = vadd.f32 %v1799, %v1933
        %v1987 = vadd.f32 %v1800, %v1956
        %v1988 = vadd.f32 %v1801, %v1979
        %s1989 = scalar_lea.vmem [#allocation2], 64
        %v1990 = vld [vmem:[%s1989] sm:$0xff]
        %v1991 = vld [vmem:[%s1989 + $0x8] sm:$0xff]
        %v1993 = vsel %vm1259, %v1990, 0
        %v1996 = vsel %vm1259, %v1991, 0
        %1998 = vmatpush.msra.mxu0 0.0
        %1999 = vmatpush.msra.mxu0 0.0
        %2000 = vmatpush.msra.mxu0 0.0
        %2001 = vmatpush.msra.mxu0 0.0
        %2002 = vmatpush.msra.mxu0 0.0
        %2003 = vmatpush.msra.mxu0 0.0
        %2004 = vmatpush.msra.mxu0 0.0
        %2005 = vmatpush.msra.mxu0 0.0
        %2006 = vmatpush.msra.mxu0 0.0
        %2007 = vmatpush.msra.mxu0 0.0
        %2008 = vmatpush.msra.mxu0 0.0
        %2009 = vmatpush.msra.mxu0 0.0
        %2010 = vmatpush.msra.mxu0 %v1256
        %2011 = vmatpush.msra.mxu0 %v1255
        %2012 = vmatpush.msra.mxu0 %v1254
        %2013 = vmatpush.msra.mxu0 %v1253
        %2014 = vmatmul.f32.gmra.mxu0 %v1993
        %v2015 = vpop.f32.mrf.mxu0
        %v2016 = vadd.f32 0.0, %v2015
        %2017 = vmatmul.f32.gmra.mxu0 %v1996
        %v2018 = vpop.f32.mrf.mxu0
        %v2019 = vadd.f32 0.0, %v2018
        %2020 = vdwg.mxu0
        %s2021 = scalar_lea.vmem [#allocation4], 1536
        %v2022 = vld [vmem:[%s2021] sm:$0xff]
        %v2023 = vld [vmem:[%s2021 + $0x8] sm:$0xff]
        %v2024 = vld [vmem:[%s2021 + $0x10] sm:$0xff]
        %v2025 = vld [vmem:[%s2021 + $0x18] sm:$0xff]
        %v2026 = vld [vmem:[%s2021 + $0x20] sm:$0xff]
        %v2027 = vld [vmem:[%s2021 + $0x28] sm:$0xff]
        %v2028 = vld [vmem:[%s2021 + $0x30] sm:$0xff]
        %v2029 = vld [vmem:[%s2021 + $0x38] sm:$0xff]
        %v2030 = vld [vmem:[%s2021 + $0x40] sm:$0xff]
        %v2031 = vld [vmem:[%s2021 + $0x48] sm:$0xff]
        %v2032 = vld [vmem:[%s2021 + $0x50] sm:$0xff]
        %v2033 = vld [vmem:[%s2021 + $0x58] sm:$0xff]
        %v2034 = vld [vmem:[%s2021 + $0x60] sm:$0xff]
        %v2035 = vld [vmem:[%s2021 + $0x68] sm:$0xff]
        %v2036 = vld [vmem:[%s2021 + $0x70] sm:$0xff]
        %v2037 = vld [vmem:[%s2021 + $0x78] sm:$0xff]
        %v2038 = vld [vmem:[%s2021 + $0x80] sm:$0xff]
        %v2039 = vld [vmem:[%s2021 + $0x88] sm:$0xff]
        %v2040 = vld [vmem:[%s2021 + $0x90] sm:$0xff]
        %v2041 = vld [vmem:[%s2021 + $0x98] sm:$0xff]
        %v2042 = vld [vmem:[%s2021 + $0xa0] sm:$0xff]
        %v2043 = vld [vmem:[%s2021 + $0xa8] sm:$0xff]
        %v2044 = vld [vmem:[%s2021 + $0xb0] sm:$0xff]
        %v2045 = vld [vmem:[%s2021 + $0xb8] sm:$0xff]
        %v2046 = vld [vmem:[%s2021 + $0xc0] sm:$0xff]
        %v2047 = vld [vmem:[%s2021 + $0xc8] sm:$0xff]
        %v2048 = vld [vmem:[%s2021 + $0xd0] sm:$0xff]
        %v2049 = vld [vmem:[%s2021 + $0xd8] sm:$0xff]
        %v2050 = vld [vmem:[%s2021 + $0xe0] sm:$0xff]
        %v2051 = vld [vmem:[%s2021 + $0xe8] sm:$0xff]
        %v2052 = vld [vmem:[%s2021 + $0xf0] sm:$0xff]
        %v2053 = vld [vmem:[%s2021 + $0xf8] sm:$0xff]
        %v2054 = vld [vmem:[%s2021 + $0x100] sm:$0xff]
        %v2055 = vld [vmem:[%s2021 + $0x108] sm:$0xff]
        %v2056 = vld [vmem:[%s2021 + $0x110] sm:$0xff]
        %v2057 = vld [vmem:[%s2021 + $0x118] sm:$0xff]
        %v2058 = vld [vmem:[%s2021 + $0x120] sm:$0xff]
        %v2059 = vld [vmem:[%s2021 + $0x128] sm:$0xff]
        %v2060 = vld [vmem:[%s2021 + $0x130] sm:$0xff]
        %v2061 = vld [vmem:[%s2021 + $0x138] sm:$0xff]
        %v2062 = vld [vmem:[%s2021 + $0x140] sm:$0xff]
        %v2063 = vld [vmem:[%s2021 + $0x148] sm:$0xff]
        %v2064 = vld [vmem:[%s2021 + $0x150] sm:$0xff]
        %v2065 = vld [vmem:[%s2021 + $0x158] sm:$0xff]
        %v2066 = vld [vmem:[%s2021 + $0x160] sm:$0xff]
        %v2067 = vld [vmem:[%s2021 + $0x168] sm:$0xff]
        %v2068 = vld [vmem:[%s2021 + $0x170] sm:$0xff]
        %v2069 = vld [vmem:[%s2021 + $0x178] sm:$0xff]
        %v2071 = vsel %vm1418, %v2016, 0
        %v2074 = vsel %vm1418, %v2019, 0
        %2076 = vmatpush.msra.mxu0 0.0
        %2077 = vmatpush.msra.mxu0 0.0
        %2078 = vmatpush.msra.mxu0 0.0
        %2079 = vmatpush.msra.mxu0 0.0
        %2080 = vmatpush.msra.mxu0 %v2066
        %2081 = vmatpush.msra.mxu0 %v2062
        %2082 = vmatpush.msra.mxu0 %v2058
        %2083 = vmatpush.msra.mxu0 %v2054
        %2084 = vmatpush.msra.mxu0 %v2050
        %2085 = vmatpush.msra.mxu0 %v2046
        %2086 = vmatpush.msra.mxu0 %v2042
        %2087 = vmatpush.msra.mxu0 %v2038
        %2088 = vmatpush.msra.mxu0 %v2034
        %2089 = vmatpush.msra.mxu0 %v2030
        %2090 = vmatpush.msra.mxu0 %v2026
        %2091 = vmatpush.msra.mxu0 %v2022
        %2092 = vmatmul.f32.gmra.mxu0 %v2071
        %v2093 = vpop.f32.mrf.mxu0
        %v2094 = vadd.f32 0.0, %v2093
        %2095 = vmatmul.f32.gmra.mxu0 %v2074
        %v2096 = vpop.f32.mrf.mxu0
        %v2097 = vadd.f32 0.0, %v2096
        %2098 = vdwg.mxu0
        %2099 = vmatpush.msra.mxu0 0.0
        %2100 = vmatpush.msra.mxu0 0.0
        %2101 = vmatpush.msra.mxu0 0.0
        %2102 = vmatpush.msra.mxu0 0.0
        %2103 = vmatpush.msra.mxu0 %v2067
        %2104 = vmatpush.msra.mxu0 %v2063
        %2105 = vmatpush.msra.mxu0 %v2059
        %2106 = vmatpush.msra.mxu0 %v2055
        %2107 = vmatpush.msra.mxu0 %v2051
        %2108 = vmatpush.msra.mxu0 %v2047
        %2109 = vmatpush.msra.mxu0 %v2043
        %2110 = vmatpush.msra.mxu0 %v2039
        %2111 = vmatpush.msra.mxu0 %v2035
        %2112 = vmatpush.msra.mxu0 %v2031
        %2113 = vmatpush.msra.mxu0 %v2027
        %2114 = vmatpush.msra.mxu0 %v2023
        %2115 = vmatmul.f32.gmra.mxu0 %v2071
        %v2116 = vpop.f32.mrf.mxu0
        %v2117 = vadd.f32 0.0, %v2116
        %2118 = vmatmul.f32.gmra.mxu0 %v2074
        %v2119 = vpop.f32.mrf.mxu0
        %v2120 = vadd.f32 0.0, %v2119
        %2121 = vdwg.mxu0
        %2122 = vmatpush.msra.mxu0 0.0
        %2123 = vmatpush.msra.mxu0 0.0
        %2124 = vmatpush.msra.mxu0 0.0
        %2125 = vmatpush.msra.mxu0 0.0
        %2126 = vmatpush.msra.mxu0 %v2068
        %2127 = vmatpush.msra.mxu0 %v2064
        %2128 = vmatpush.msra.mxu0 %v2060
        %2129 = vmatpush.msra.mxu0 %v2056
        %2130 = vmatpush.msra.mxu0 %v2052
        %2131 = vmatpush.msra.mxu0 %v2048
        %2132 = vmatpush.msra.mxu0 %v2044
        %2133 = vmatpush.msra.mxu0 %v2040
        %2134 = vmatpush.msra.mxu0 %v2036
        %2135 = vmatpush.msra.mxu0 %v2032
        %2136 = vmatpush.msra.mxu0 %v2028
        %2137 = vmatpush.msra.mxu0 %v2024
        %2138 = vmatmul.f32.gmra.mxu0 %v2071
        %v2139 = vpop.f32.mrf.mxu0
        %v2140 = vadd.f32 0.0, %v2139
        %2141 = vmatmul.f32.gmra.mxu0 %v2074
        %v2142 = vpop.f32.mrf.mxu0
        %v2143 = vadd.f32 0.0, %v2142
        %2144 = vdwg.mxu0
        %2145 = vmatpush.msra.mxu0 0.0
        %2146 = vmatpush.msra.mxu0 0.0
        %2147 = vmatpush.msra.mxu0 0.0
        %2148 = vmatpush.msra.mxu0 0.0
        %2149 = vmatpush.msra.mxu0 %v2069
        %2150 = vmatpush.msra.mxu0 %v2065
        %2151 = vmatpush.msra.mxu0 %v2061
        %2152 = vmatpush.msra.mxu0 %v2057
        %2153 = vmatpush.msra.mxu0 %v2053
        %2154 = vmatpush.msra.mxu0 %v2049
        %2155 = vmatpush.msra.mxu0 %v2045
        %2156 = vmatpush.msra.mxu0 %v2041
        %2157 = vmatpush.msra.mxu0 %v2037
        %2158 = vmatpush.msra.mxu0 %v2033
        %2159 = vmatpush.msra.mxu0 %v2029
        %2160 = vmatpush.msra.mxu0 %v2025
        %2161 = vmatmul.f32.gmra.mxu0 %v2071
        %v2162 = vpop.f32.mrf.mxu0
        %v2163 = vadd.f32 0.0, %v2162
        %2164 = vmatmul.f32.gmra.mxu0 %v2074
        %v2165 = vpop.f32.mrf.mxu0
        %v2166 = vadd.f32 0.0, %v2165
        %2167 = vdwg.mxu0
        %v2168 = vadd.f32 %v1981, %v2094
        %v2169 = vadd.f32 %v1982, %v2117
        %v2170 = vadd.f32 %v1983, %v2140
        %v2171 = vadd.f32 %v1984, %v2163
        %v2172 = vadd.f32 %v1985, %v2097
        %v2173 = vadd.f32 %v1986, %v2120
        %v2174 = vadd.f32 %v1987, %v2143
        %v2175 = vadd.f32 %v1988, %v2166
        %v2176 = vld [vmem:[#allocation6] sm:$0xf]
        %v2178 = vperm.slane %v2176, 0
        %v2179 = vperm.slane %v2176, 1
        %v2180 = vperm.slane %v2176, 2
        %v2181 = vperm.slane %v2176, 3
        %v2186 = vadd.f32 %v2168, %v2178
        %v2187 = vadd.f32 %v2169, %v2179
        %v2188 = vadd.f32 %v2170, %v2180
        %v2189 = vadd.f32 %v2171, %v2181
        %v2190 = vadd.f32 %v2172, %v2178
        %v2191 = vadd.f32 %v2173, %v2179
        %v2192 = vadd.f32 %v2174, %v2180
        %v2193 = vadd.f32 %v2175, %v2181
        %v2194 = vmax.f32 %v2186, 0.0
        %v2195 = vmax.f32 %v2187, 0.0
        %v2196 = vmax.f32 %v2188, 0.0
        %v2197 = vmax.f32 %v2189, 0.0
        %v2198 = vmax.f32 %v2190, 0.0
        %v2199 = vmax.f32 %v2191, 0.0
        %v2200 = vmax.f32 %v2192, 0.0
        %v2201 = vmax.f32 %v2193, 0.0
        %v2202 = vld [vmem:[#allocation7] sm:$0xff]
        %vm2203 = vcmask 130048
        %v2205 = vsel %vm2203, %v2202, 0
        %2207 = vmatpush.msra.mxu0 0.0
        %2208 = vmatpush.msra.mxu0 0.0
        %2209 = vmatpush.msra.mxu0 0.0
        %2210 = vmatpush.msra.mxu0 0.0
        %2211 = vmatpush.msra.mxu0 0.0
        %2212 = vmatpush.msra.mxu0 0.0
        %2213 = vmatpush.msra.mxu0 0.0
        %2214 = vmatpush.msra.mxu0 0.0
        %2215 = vmatpush.msra.mxu0 0.0
        %2216 = vmatpush.msra.mxu0 0.0
        %2217 = vmatpush.msra.mxu0 0.0
        %2218 = vmatpush.msra.mxu0 0.0
        %2219 = vmatpush.msra.mxu0 0.0
        %2220 = vmatpush.msra.mxu0 0.0
        %2221 = vmatpush.msra.mxu0 %v2198
        %2222 = vmatpush.msra.mxu0 %v2194
        %2223 = vmatmul.f32.gmra.mxu0 %v2205
        %v2224 = vpop.f32.mrf.mxu0
        %v2225 = vadd.f32 0.0, %v2224
        %2226 = vdwg.mxu0
        %2227 = vmatpush.msra.mxu0 0.0
        %2228 = vmatpush.msra.mxu0 0.0
        %2229 = vmatpush.msra.mxu0 0.0
        %2230 = vmatpush.msra.mxu0 0.0
        %2231 = vmatpush.msra.mxu0 0.0
        %2232 = vmatpush.msra.mxu0 0.0
        %2233 = vmatpush.msra.mxu0 0.0
        %2234 = vmatpush.msra.mxu0 0.0
        %2235 = vmatpush.msra.mxu0 0.0
        %2236 = vmatpush.msra.mxu0 0.0
        %2237 = vmatpush.msra.mxu0 0.0
        %2238 = vmatpush.msra.mxu0 0.0
        %2239 = vmatpush.msra.mxu0 0.0
        %2240 = vmatpush.msra.mxu0 0.0
        %2241 = vmatpush.msra.mxu0 %v2199
        %2242 = vmatpush.msra.mxu0 %v2195
        %2243 = vmatmul.f32.gmra.mxu0 %v2205
        %v2244 = vpop.f32.mrf.mxu0
        %v2245 = vadd.f32 0.0, %v2244
        %2246 = vdwg.mxu0
        %2247 = vmatpush.msra.mxu0 0.0
        %2248 = vmatpush.msra.mxu0 0.0
        %2249 = vmatpush.msra.mxu0 0.0
        %2250 = vmatpush.msra.mxu0 0.0
        %2251 = vmatpush.msra.mxu0 0.0
        %2252 = vmatpush.msra.mxu0 0.0
        %2253 = vmatpush.msra.mxu0 0.0
        %2254 = vmatpush.msra.mxu0 0.0
        %2255 = vmatpush.msra.mxu0 0.0
        %2256 = vmatpush.msra.mxu0 0.0
        %2257 = vmatpush.msra.mxu0 0.0
        %2258 = vmatpush.msra.mxu0 0.0
        %2259 = vmatpush.msra.mxu0 0.0
        %2260 = vmatpush.msra.mxu0 0.0
        %2261 = vmatpush.msra.mxu0 %v2200
        %2262 = vmatpush.msra.mxu0 %v2196
        %2263 = vmatmul.f32.gmra.mxu0 %v2205
        %v2264 = vpop.f32.mrf.mxu0
        %v2265 = vadd.f32 0.0, %v2264
        %2266 = vdwg.mxu0
        %2267 = vmatpush.msra.mxu0 0.0
        %2268 = vmatpush.msra.mxu0 0.0
        %2269 = vmatpush.msra.mxu0 0.0
        %2270 = vmatpush.msra.mxu0 0.0
        %2271 = vmatpush.msra.mxu0 0.0
        %2272 = vmatpush.msra.mxu0 0.0
        %2273 = vmatpush.msra.mxu0 0.0
        %2274 = vmatpush.msra.mxu0 0.0
        %2275 = vmatpush.msra.mxu0 0.0
        %2276 = vmatpush.msra.mxu0 0.0
        %2277 = vmatpush.msra.mxu0 0.0
        %2278 = vmatpush.msra.mxu0 0.0
        %2279 = vmatpush.msra.mxu0 0.0
        %2280 = vmatpush.msra.mxu0 0.0
        %2281 = vmatpush.msra.mxu0 %v2201
        %2282 = vmatpush.msra.mxu0 %v2197
        %2283 = vmatmul.f32.gmra.mxu0 %v2205
        %v2284 = vpop.f32.mrf.mxu0
        %v2285 = vadd.f32 0.0, %v2284
        %2286 = vdwg.mxu0
        %v2287 = vld [vmem:[#allocation9] sm:$0xff]
        %v2288 = vld [vmem:[#allocation9 + $0x8] sm:$0xff]
        %v2289 = vld [vmem:[#allocation9 + $0x10] sm:$0xff]
        %v2290 = vld [vmem:[#allocation9 + $0x18] sm:$0xff]
        %v2291 = vld [vmem:[#allocation9 + $0x20] sm:$0xff]
        %v2292 = vld [vmem:[#allocation9 + $0x28] sm:$0xff]
        %v2293 = vld [vmem:[#allocation9 + $0x30] sm:$0xff]
        %v2294 = vld [vmem:[#allocation9 + $0x38] sm:$0xff]
        %v2295 = vld [vmem:[#allocation9 + $0x40] sm:$0xff]
        %v2296 = vld [vmem:[#allocation9 + $0x48] sm:$0xff]
        %v2297 = vld [vmem:[#allocation9 + $0x50] sm:$0xff]
        %v2298 = vld [vmem:[#allocation9 + $0x58] sm:$0xff]
        %v2299 = vld [vmem:[#allocation9 + $0x60] sm:$0xff]
        %v2300 = vld [vmem:[#allocation9 + $0x68] sm:$0xff]
        %v2301 = vld [vmem:[#allocation9 + $0x70] sm:$0xff]
        %v2302 = vld [vmem:[#allocation9 + $0x78] sm:$0xff]
        %v2303 = vld [vmem:[#allocation9 + $0x80] sm:$0xff]
        %v2304 = vld [vmem:[#allocation9 + $0x88] sm:$0xff]
        %v2305 = vld [vmem:[#allocation9 + $0x90] sm:$0xff]
        %v2306 = vld [vmem:[#allocation9 + $0x98] sm:$0xff]
        %v2307 = vld [vmem:[#allocation9 + $0xa0] sm:$0xff]
        %v2308 = vld [vmem:[#allocation9 + $0xa8] sm:$0xff]
        %v2309 = vld [vmem:[#allocation9 + $0xb0] sm:$0xff]
        %v2310 = vld [vmem:[#allocation9 + $0xb8] sm:$0xff]
        %v2311 = vld [vmem:[#allocation9 + $0xc0] sm:$0xff]
        %v2312 = vld [vmem:[#allocation9 + $0xc8] sm:$0xff]
        %v2313 = vld [vmem:[#allocation9 + $0xd0] sm:$0xff]
        %v2314 = vld [vmem:[#allocation9 + $0xd8] sm:$0xff]
        %v2315 = vld [vmem:[#allocation9 + $0xe0] sm:$0xff]
        %v2316 = vld [vmem:[#allocation9 + $0xe8] sm:$0xff]
        %v2317 = vld [vmem:[#allocation9 + $0xf0] sm:$0xff]
        %v2318 = vld [vmem:[#allocation9 + $0xf8] sm:$0xff]
        %v2319 = vld [vmem:[#allocation9 + $0x100] sm:$0xff]
        %v2320 = vld [vmem:[#allocation9 + $0x108] sm:$0xff]
        %v2321 = vld [vmem:[#allocation9 + $0x110] sm:$0xff]
        %v2322 = vld [vmem:[#allocation9 + $0x118] sm:$0xff]
        %v2323 = vld [vmem:[#allocation9 + $0x120] sm:$0xff]
        %v2324 = vld [vmem:[#allocation9 + $0x128] sm:$0xff]
        %v2325 = vld [vmem:[#allocation9 + $0x130] sm:$0xff]
        %v2326 = vld [vmem:[#allocation9 + $0x138] sm:$0xff]
        %v2327 = vld [vmem:[#allocation9 + $0x140] sm:$0xff]
        %v2328 = vld [vmem:[#allocation9 + $0x148] sm:$0xff]
        %v2329 = vld [vmem:[#allocation9 + $0x150] sm:$0xff]
        %v2330 = vld [vmem:[#allocation9 + $0x158] sm:$0xff]
        %v2331 = vld [vmem:[#allocation9 + $0x160] sm:$0xff]
        %v2332 = vld [vmem:[#allocation9 + $0x168] sm:$0xff]
        %v2333 = vld [vmem:[#allocation9 + $0x170] sm:$0xff]
        %v2334 = vld [vmem:[#allocation9 + $0x178] sm:$0xff]
        %v2335 = vld [vmem:[#allocation9 + $0x180] sm:$0xff]
        %v2336 = vld [vmem:[#allocation9 + $0x188] sm:$0xff]
        %v2337 = vld [vmem:[#allocation9 + $0x190] sm:$0xff]
        %v2338 = vld [vmem:[#allocation9 + $0x198] sm:$0xff]
        %v2339 = vld [vmem:[#allocation9 + $0x1a0] sm:$0xff]
        %v2340 = vld [vmem:[#allocation9 + $0x1a8] sm:$0xff]
        %v2341 = vld [vmem:[#allocation9 + $0x1b0] sm:$0xff]
        %v2342 = vld [vmem:[#allocation9 + $0x1b8] sm:$0xff]
        %v2343 = vld [vmem:[#allocation9 + $0x1c0] sm:$0xff]
        %v2344 = vld [vmem:[#allocation9 + $0x1c8] sm:$0xff]
        %v2345 = vld [vmem:[#allocation9 + $0x1d0] sm:$0xff]
        %v2346 = vld [vmem:[#allocation9 + $0x1d8] sm:$0xff]
        %v2347 = vld [vmem:[#allocation9 + $0x1e0] sm:$0xff]
        %v2348 = vld [vmem:[#allocation9 + $0x1e8] sm:$0xff]
        %v2349 = vld [vmem:[#allocation9 + $0x1f0] sm:$0xff]
        %v2350 = vld [vmem:[#allocation9 + $0x1f8] sm:$0xff]
        %v2351 = vld [vmem:[#allocation9 + $0x200] sm:$0xff]
        %v2352 = vld [vmem:[#allocation9 + $0x208] sm:$0xff]
        %v2353 = vld [vmem:[#allocation9 + $0x210] sm:$0xff]
        %v2354 = vld [vmem:[#allocation9 + $0x218] sm:$0xff]
        %v2355 = vld [vmem:[#allocation9 + $0x220] sm:$0xff]
        %v2356 = vld [vmem:[#allocation9 + $0x228] sm:$0xff]
        %v2357 = vld [vmem:[#allocation9 + $0x230] sm:$0xff]
        %v2358 = vld [vmem:[#allocation9 + $0x238] sm:$0xff]
        %v2359 = vld [vmem:[#allocation9 + $0x240] sm:$0xff]
        %v2360 = vld [vmem:[#allocation9 + $0x248] sm:$0xff]
        %v2361 = vld [vmem:[#allocation9 + $0x250] sm:$0xff]
        %v2362 = vld [vmem:[#allocation9 + $0x258] sm:$0xff]
        %v2363 = vld [vmem:[#allocation9 + $0x260] sm:$0xff]
        %v2364 = vld [vmem:[#allocation9 + $0x268] sm:$0xff]
        %v2365 = vld [vmem:[#allocation9 + $0x270] sm:$0xff]
        %v2366 = vld [vmem:[#allocation9 + $0x278] sm:$0xff]
        %v2367 = vld [vmem:[#allocation9 + $0x280] sm:$0xff]
        %v2368 = vld [vmem:[#allocation9 + $0x288] sm:$0xff]
        %v2369 = vld [vmem:[#allocation9 + $0x290] sm:$0xff]
        %v2370 = vld [vmem:[#allocation9 + $0x298] sm:$0xff]
        %v2371 = vld [vmem:[#allocation9 + $0x2a0] sm:$0xff]
        %v2372 = vld [vmem:[#allocation9 + $0x2a8] sm:$0xff]
        %v2373 = vld [vmem:[#allocation9 + $0x2b0] sm:$0xff]
        %v2374 = vld [vmem:[#allocation9 + $0x2b8] sm:$0xff]
        %v2375 = vld [vmem:[#allocation9 + $0x2c0] sm:$0xff]
        %v2376 = vld [vmem:[#allocation9 + $0x2c8] sm:$0xff]
        %v2377 = vld [vmem:[#allocation9 + $0x2d0] sm:$0xff]
        %v2378 = vld [vmem:[#allocation9 + $0x2d8] sm:$0xff]
        %v2379 = vld [vmem:[#allocation9 + $0x2e0] sm:$0xff]
        %v2380 = vld [vmem:[#allocation9 + $0x2e8] sm:$0xff]
        %v2381 = vld [vmem:[#allocation9 + $0x2f0] sm:$0xff]
        %v2382 = vld [vmem:[#allocation9 + $0x2f8] sm:$0xff]
        %v2383 = vld [vmem:[#allocation9 + $0x300] sm:$0xff]
        %v2384 = vld [vmem:[#allocation9 + $0x308] sm:$0xff]
        %v2385 = vld [vmem:[#allocation9 + $0x310] sm:$0xff]
        %v2386 = vld [vmem:[#allocation9 + $0x318] sm:$0xff]
        %v2387 = vld [vmem:[#allocation9 + $0x320] sm:$0xff]
        %v2388 = vld [vmem:[#allocation9 + $0x328] sm:$0xff]
        %v2389 = vld [vmem:[#allocation9 + $0x330] sm:$0xff]
        %v2390 = vld [vmem:[#allocation9 + $0x338] sm:$0xff]
        %v2391 = vld [vmem:[#allocation9 + $0x340] sm:$0xff]
        %v2392 = vld [vmem:[#allocation9 + $0x348] sm:$0xff]
        %v2393 = vld [vmem:[#allocation9 + $0x350] sm:$0xff]
        %v2394 = vld [vmem:[#allocation9 + $0x358] sm:$0xff]
        %v2395 = vld [vmem:[#allocation9 + $0x360] sm:$0xff]
        %v2396 = vld [vmem:[#allocation9 + $0x368] sm:$0xff]
        %v2397 = vld [vmem:[#allocation9 + $0x370] sm:$0xff]
        %v2398 = vld [vmem:[#allocation9 + $0x378] sm:$0xff]
        %v2399 = vld [vmem:[#allocation9 + $0x380] sm:$0xff]
        %v2400 = vld [vmem:[#allocation9 + $0x388] sm:$0xff]
        %v2401 = vld [vmem:[#allocation9 + $0x390] sm:$0xff]
        %v2402 = vld [vmem:[#allocation9 + $0x398] sm:$0xff]
        %v2403 = vld [vmem:[#allocation9 + $0x3a0] sm:$0xff]
        %v2404 = vld [vmem:[#allocation9 + $0x3a8] sm:$0xff]
        %v2405 = vld [vmem:[#allocation9 + $0x3b0] sm:$0xff]
        %v2406 = vld [vmem:[#allocation9 + $0x3b8] sm:$0xff]
        %v2407 = vld [vmem:[#allocation9 + $0x3c0] sm:$0xff]
        %v2408 = vld [vmem:[#allocation9 + $0x3c8] sm:$0xff]
        %v2409 = vld [vmem:[#allocation9 + $0x3d0] sm:$0xff]
        %v2410 = vld [vmem:[#allocation9 + $0x3d8] sm:$0xff]
        %v2411 = vld [vmem:[#allocation9 + $0x3e0] sm:$0xff]
        %v2412 = vld [vmem:[#allocation9 + $0x3e8] sm:$0xff]
        %v2413 = vld [vmem:[#allocation9 + $0x3f0] sm:$0xff]
        %v2414 = vld [vmem:[#allocation9 + $0x3f8] sm:$0xff]
        %s2415 = scalar_lea.vmem [#allocation7], 8
        %v2416 = vld [vmem:[%s2415] sm:$0xff]
        %v2418 = vsel %vm2203, %v2416, 0
        %2420 = vmatpush.msra.mxu0 0.0
        %2421 = vmatpush.msra.mxu0 0.0
        %2422 = vmatpush.msra.mxu0 0.0
        %2423 = vmatpush.msra.mxu0 0.0
        %2424 = vmatpush.msra.mxu0 0.0
        %2425 = vmatpush.msra.mxu0 0.0
        %2426 = vmatpush.msra.mxu0 0.0
        %2427 = vmatpush.msra.mxu0 0.0
        %2428 = vmatpush.msra.mxu0 0.0
        %2429 = vmatpush.msra.mxu0 0.0
        %2430 = vmatpush.msra.mxu0 0.0
        %2431 = vmatpush.msra.mxu0 0.0
        %2432 = vmatpush.msra.mxu0 0.0
        %2433 = vmatpush.msra.mxu0 0.0
        %2434 = vmatpush.msra.mxu0 %v2198
        %2435 = vmatpush.msra.mxu0 %v2194
        %2436 = vmatmul.f32.gmra.mxu0 %v2418
        %v2437 = vpop.f32.mrf.mxu0
        %v2438 = vadd.f32 0.0, %v2437
        %2439 = vdwg.mxu0
        %2440 = vmatpush.msra.mxu0 0.0
        %2441 = vmatpush.msra.mxu0 0.0
        %2442 = vmatpush.msra.mxu0 0.0
        %2443 = vmatpush.msra.mxu0 0.0
        %2444 = vmatpush.msra.mxu0 0.0
        %2445 = vmatpush.msra.mxu0 0.0
        %2446 = vmatpush.msra.mxu0 0.0
        %2447 = vmatpush.msra.mxu0 0.0
        %2448 = vmatpush.msra.mxu0 0.0
        %2449 = vmatpush.msra.mxu0 0.0
        %2450 = vmatpush.msra.mxu0 0.0
        %2451 = vmatpush.msra.mxu0 0.0
        %2452 = vmatpush.msra.mxu0 0.0
        %2453 = vmatpush.msra.mxu0 0.0
        %2454 = vmatpush.msra.mxu0 %v2199
        %2455 = vmatpush.msra.mxu0 %v2195
        %2456 = vmatmul.f32.gmra.mxu0 %v2418
        %v2457 = vpop.f32.mrf.mxu0
        %v2458 = vadd.f32 0.0, %v2457
        %2459 = vdwg.mxu0
        %2460 = vmatpush.msra.mxu0 0.0
        %2461 = vmatpush.msra.mxu0 0.0
        %2462 = vmatpush.msra.mxu0 0.0
        %2463 = vmatpush.msra.mxu0 0.0
        %2464 = vmatpush.msra.mxu0 0.0
        %2465 = vmatpush.msra.mxu0 0.0
        %2466 = vmatpush.msra.mxu0 0.0
        %2467 = vmatpush.msra.mxu0 0.0
        %2468 = vmatpush.msra.mxu0 0.0
        %2469 = vmatpush.msra.mxu0 0.0
        %2470 = vmatpush.msra.mxu0 0.0
        %2471 = vmatpush.msra.mxu0 0.0
        %2472 = vmatpush.msra.mxu0 0.0
        %2473 = vmatpush.msra.mxu0 0.0
        %2474 = vmatpush.msra.mxu0 %v2200
        %2475 = vmatpush.msra.mxu0 %v2196
        %2476 = vmatmul.f32.gmra.mxu0 %v2418
        %v2477 = vpop.f32.mrf.mxu0
        %v2478 = vadd.f32 0.0, %v2477
        %2479 = vdwg.mxu0
        %2480 = vmatpush.msra.mxu0 0.0
        %2481 = vmatpush.msra.mxu0 0.0
        %2482 = vmatpush.msra.mxu0 0.0
        %2483 = vmatpush.msra.mxu0 0.0
        %2484 = vmatpush.msra.mxu0 0.0
        %2485 = vmatpush.msra.mxu0 0.0
        %2486 = vmatpush.msra.mxu0 0.0
        %2487 = vmatpush.msra.mxu0 0.0
        %2488 = vmatpush.msra.mxu0 0.0
        %2489 = vmatpush.msra.mxu0 0.0
        %2490 = vmatpush.msra.mxu0 0.0
        %2491 = vmatpush.msra.mxu0 0.0
        %2492 = vmatpush.msra.mxu0 0.0
        %2493 = vmatpush.msra.mxu0 0.0
        %2494 = vmatpush.msra.mxu0 %v2201
        %2495 = vmatpush.msra.mxu0 %v2197
        %2496 = vmatmul.f32.gmra.mxu0 %v2418
        %v2497 = vpop.f32.mrf.mxu0
        %v2498 = vadd.f32 0.0, %v2497
        %2499 = vdwg.mxu0
        %s2500 = scalar_lea.vmem [#allocation9], 1024
        %v2501 = vld [vmem:[%s2500] sm:$0xff]
        %v2502 = vld [vmem:[%s2500 + $0x8] sm:$0xff]
        %v2503 = vld [vmem:[%s2500 + $0x10] sm:$0xff]
        %v2504 = vld [vmem:[%s2500 + $0x18] sm:$0xff]
        %v2505 = vld [vmem:[%s2500 + $0x20] sm:$0xff]
        %v2506 = vld [vmem:[%s2500 + $0x28] sm:$0xff]
        %v2507 = vld [vmem:[%s2500 + $0x30] sm:$0xff]
        %v2508 = vld [vmem:[%s2500 + $0x38] sm:$0xff]
        %v2509 = vld [vmem:[%s2500 + $0x40] sm:$0xff]
        %v2510 = vld [vmem:[%s2500 + $0x48] sm:$0xff]
        %v2511 = vld [vmem:[%s2500 + $0x50] sm:$0xff]
        %v2512 = vld [vmem:[%s2500 + $0x58] sm:$0xff]
        %v2513 = vld [vmem:[%s2500 + $0x60] sm:$0xff]
        %v2514 = vld [vmem:[%s2500 + $0x68] sm:$0xff]
        %v2515 = vld [vmem:[%s2500 + $0x70] sm:$0xff]
        %v2516 = vld [vmem:[%s2500 + $0x78] sm:$0xff]
        %v2517 = vld [vmem:[%s2500 + $0x80] sm:$0xff]
        %v2518 = vld [vmem:[%s2500 + $0x88] sm:$0xff]
        %v2519 = vld [vmem:[%s2500 + $0x90] sm:$0xff]
        %v2520 = vld [vmem:[%s2500 + $0x98] sm:$0xff]
        %v2521 = vld [vmem:[%s2500 + $0xa0] sm:$0xff]
        %v2522 = vld [vmem:[%s2500 + $0xa8] sm:$0xff]
        %v2523 = vld [vmem:[%s2500 + $0xb0] sm:$0xff]
        %v2524 = vld [vmem:[%s2500 + $0xb8] sm:$0xff]
        %v2525 = vld [vmem:[%s2500 + $0xc0] sm:$0xff]
        %v2526 = vld [vmem:[%s2500 + $0xc8] sm:$0xff]
        %v2527 = vld [vmem:[%s2500 + $0xd0] sm:$0xff]
        %v2528 = vld [vmem:[%s2500 + $0xd8] sm:$0xff]
        %v2529 = vld [vmem:[%s2500 + $0xe0] sm:$0xff]
        %v2530 = vld [vmem:[%s2500 + $0xe8] sm:$0xff]
        %v2531 = vld [vmem:[%s2500 + $0xf0] sm:$0xff]
        %v2532 = vld [vmem:[%s2500 + $0xf8] sm:$0xff]
        %v2533 = vld [vmem:[%s2500 + $0x100] sm:$0xff]
        %v2534 = vld [vmem:[%s2500 + $0x108] sm:$0xff]
        %v2535 = vld [vmem:[%s2500 + $0x110] sm:$0xff]
        %v2536 = vld [vmem:[%s2500 + $0x118] sm:$0xff]
        %v2537 = vld [vmem:[%s2500 + $0x120] sm:$0xff]
        %v2538 = vld [vmem:[%s2500 + $0x128] sm:$0xff]
        %v2539 = vld [vmem:[%s2500 + $0x130] sm:$0xff]
        %v2540 = vld [vmem:[%s2500 + $0x138] sm:$0xff]
        %v2541 = vld [vmem:[%s2500 + $0x140] sm:$0xff]
        %v2542 = vld [vmem:[%s2500 + $0x148] sm:$0xff]
        %v2543 = vld [vmem:[%s2500 + $0x150] sm:$0xff]
        %v2544 = vld [vmem:[%s2500 + $0x158] sm:$0xff]
        %v2545 = vld [vmem:[%s2500 + $0x160] sm:$0xff]
        %v2546 = vld [vmem:[%s2500 + $0x168] sm:$0xff]
        %v2547 = vld [vmem:[%s2500 + $0x170] sm:$0xff]
        %v2548 = vld [vmem:[%s2500 + $0x178] sm:$0xff]
        %v2549 = vld [vmem:[%s2500 + $0x180] sm:$0xff]
        %v2550 = vld [vmem:[%s2500 + $0x188] sm:$0xff]
        %v2551 = vld [vmem:[%s2500 + $0x190] sm:$0xff]
        %v2552 = vld [vmem:[%s2500 + $0x198] sm:$0xff]
        %v2553 = vld [vmem:[%s2500 + $0x1a0] sm:$0xff]
        %v2554 = vld [vmem:[%s2500 + $0x1a8] sm:$0xff]
        %v2555 = vld [vmem:[%s2500 + $0x1b0] sm:$0xff]
        %v2556 = vld [vmem:[%s2500 + $0x1b8] sm:$0xff]
        %v2557 = vld [vmem:[%s2500 + $0x1c0] sm:$0xff]
        %v2558 = vld [vmem:[%s2500 + $0x1c8] sm:$0xff]
        %v2559 = vld [vmem:[%s2500 + $0x1d0] sm:$0xff]
        %v2560 = vld [vmem:[%s2500 + $0x1d8] sm:$0xff]
        %v2561 = vld [vmem:[%s2500 + $0x1e0] sm:$0xff]
        %v2562 = vld [vmem:[%s2500 + $0x1e8] sm:$0xff]
        %v2563 = vld [vmem:[%s2500 + $0x1f0] sm:$0xff]
        %v2564 = vld [vmem:[%s2500 + $0x1f8] sm:$0xff]
        %v2565 = vld [vmem:[%s2500 + $0x200] sm:$0xff]
        %v2566 = vld [vmem:[%s2500 + $0x208] sm:$0xff]
        %v2567 = vld [vmem:[%s2500 + $0x210] sm:$0xff]
        %v2568 = vld [vmem:[%s2500 + $0x218] sm:$0xff]
        %v2569 = vld [vmem:[%s2500 + $0x220] sm:$0xff]
        %v2570 = vld [vmem:[%s2500 + $0x228] sm:$0xff]
        %v2571 = vld [vmem:[%s2500 + $0x230] sm:$0xff]
        %v2572 = vld [vmem:[%s2500 + $0x238] sm:$0xff]
        %v2573 = vld [vmem:[%s2500 + $0x240] sm:$0xff]
        %v2574 = vld [vmem:[%s2500 + $0x248] sm:$0xff]
        %v2575 = vld [vmem:[%s2500 + $0x250] sm:$0xff]
        %v2576 = vld [vmem:[%s2500 + $0x258] sm:$0xff]
        %v2577 = vld [vmem:[%s2500 + $0x260] sm:$0xff]
        %v2578 = vld [vmem:[%s2500 + $0x268] sm:$0xff]
        %v2579 = vld [vmem:[%s2500 + $0x270] sm:$0xff]
        %v2580 = vld [vmem:[%s2500 + $0x278] sm:$0xff]
        %v2581 = vld [vmem:[%s2500 + $0x280] sm:$0xff]
        %v2582 = vld [vmem:[%s2500 + $0x288] sm:$0xff]
        %v2583 = vld [vmem:[%s2500 + $0x290] sm:$0xff]
        %v2584 = vld [vmem:[%s2500 + $0x298] sm:$0xff]
        %v2585 = vld [vmem:[%s2500 + $0x2a0] sm:$0xff]
        %v2586 = vld [vmem:[%s2500 + $0x2a8] sm:$0xff]
        %v2587 = vld [vmem:[%s2500 + $0x2b0] sm:$0xff]
        %v2588 = vld [vmem:[%s2500 + $0x2b8] sm:$0xff]
        %v2589 = vld [vmem:[%s2500 + $0x2c0] sm:$0xff]
        %v2590 = vld [vmem:[%s2500 + $0x2c8] sm:$0xff]
        %v2591 = vld [vmem:[%s2500 + $0x2d0] sm:$0xff]
        %v2592 = vld [vmem:[%s2500 + $0x2d8] sm:$0xff]
        %v2593 = vld [vmem:[%s2500 + $0x2e0] sm:$0xff]
        %v2594 = vld [vmem:[%s2500 + $0x2e8] sm:$0xff]
        %v2595 = vld [vmem:[%s2500 + $0x2f0] sm:$0xff]
        %v2596 = vld [vmem:[%s2500 + $0x2f8] sm:$0xff]
        %v2597 = vld [vmem:[%s2500 + $0x300] sm:$0xff]
        %v2598 = vld [vmem:[%s2500 + $0x308] sm:$0xff]
        %v2599 = vld [vmem:[%s2500 + $0x310] sm:$0xff]
        %v2600 = vld [vmem:[%s2500 + $0x318] sm:$0xff]
        %v2601 = vld [vmem:[%s2500 + $0x320] sm:$0xff]
        %v2602 = vld [vmem:[%s2500 + $0x328] sm:$0xff]
        %v2603 = vld [vmem:[%s2500 + $0x330] sm:$0xff]
        %v2604 = vld [vmem:[%s2500 + $0x338] sm:$0xff]
        %v2605 = vld [vmem:[%s2500 + $0x340] sm:$0xff]
        %v2606 = vld [vmem:[%s2500 + $0x348] sm:$0xff]
        %v2607 = vld [vmem:[%s2500 + $0x350] sm:$0xff]
        %v2608 = vld [vmem:[%s2500 + $0x358] sm:$0xff]
        %v2609 = vld [vmem:[%s2500 + $0x360] sm:$0xff]
        %v2610 = vld [vmem:[%s2500 + $0x368] sm:$0xff]
        %v2611 = vld [vmem:[%s2500 + $0x370] sm:$0xff]
        %v2612 = vld [vmem:[%s2500 + $0x378] sm:$0xff]
        %v2613 = vld [vmem:[%s2500 + $0x380] sm:$0xff]
        %v2614 = vld [vmem:[%s2500 + $0x388] sm:$0xff]
        %v2615 = vld [vmem:[%s2500 + $0x390] sm:$0xff]
        %v2616 = vld [vmem:[%s2500 + $0x398] sm:$0xff]
        %v2617 = vld [vmem:[%s2500 + $0x3a0] sm:$0xff]
        %v2618 = vld [vmem:[%s2500 + $0x3a8] sm:$0xff]
        %v2619 = vld [vmem:[%s2500 + $0x3b0] sm:$0xff]
        %v2620 = vld [vmem:[%s2500 + $0x3b8] sm:$0xff]
        %v2621 = vld [vmem:[%s2500 + $0x3c0] sm:$0xff]
        %v2622 = vld [vmem:[%s2500 + $0x3c8] sm:$0xff]
        %v2623 = vld [vmem:[%s2500 + $0x3d0] sm:$0xff]
        %v2624 = vld [vmem:[%s2500 + $0x3d8] sm:$0xff]
        %v2625 = vld [vmem:[%s2500 + $0x3e0] sm:$0xff]
        %v2626 = vld [vmem:[%s2500 + $0x3e8] sm:$0xff]
        %v2627 = vld [vmem:[%s2500 + $0x3f0] sm:$0xff]
        %v2628 = vld [vmem:[%s2500 + $0x3f8] sm:$0xff]
        %2629 = vmatpush.msra.mxu0 %v2531
        %2630 = vmatpush.msra.mxu0 %v2529
        %2631 = vmatpush.msra.mxu0 %v2527
        %2632 = vmatpush.msra.mxu0 %v2525
        %2633 = vmatpush.msra.mxu0 %v2523
        %2634 = vmatpush.msra.mxu0 %v2521
        %2635 = vmatpush.msra.mxu0 %v2519
        %2636 = vmatpush.msra.mxu0 %v2517
        %2637 = vmatpush.msra.mxu0 %v2515
        %2638 = vmatpush.msra.mxu0 %v2513
        %2639 = vmatpush.msra.mxu0 %v2511
        %2640 = vmatpush.msra.mxu0 %v2509
        %2641 = vmatpush.msra.mxu0 %v2507
        %2642 = vmatpush.msra.mxu0 %v2505
        %2643 = vmatpush.msra.mxu0 %v2503
        %2644 = vmatpush.msra.mxu0 %v2501
        %2645 = vmatmul.f32.gmra.mxu0 %v2438
        %v2646 = vpop.f32.mrf.mxu0
        %v2647 = vadd.f32 0.0, %v2646
        %2648 = vdwg.mxu0
        %2649 = vmatpush.msra.mxu0 %v2563
        %2650 = vmatpush.msra.mxu0 %v2561
        %2651 = vmatpush.msra.mxu0 %v2559
        %2652 = vmatpush.msra.mxu0 %v2557
        %2653 = vmatpush.msra.mxu0 %v2555
        %2654 = vmatpush.msra.mxu0 %v2553
        %2655 = vmatpush.msra.mxu0 %v2551
        %2656 = vmatpush.msra.mxu0 %v2549
        %2657 = vmatpush.msra.mxu0 %v2547
        %2658 = vmatpush.msra.mxu0 %v2545
        %2659 = vmatpush.msra.mxu0 %v2543
        %2660 = vmatpush.msra.mxu0 %v2541
        %2661 = vmatpush.msra.mxu0 %v2539
        %2662 = vmatpush.msra.mxu0 %v2537
        %2663 = vmatpush.msra.mxu0 %v2535
        %2664 = vmatpush.msra.mxu0 %v2533
        %2665 = vmatmul.f32.gmra.mxu0 %v2458
        %v2666 = vpop.f32.mrf.mxu0
        %v2667 = vadd.f32 %v2647, %v2666
        %2668 = vdwg.mxu0
        %2669 = vmatpush.msra.mxu0 %v2595
        %2670 = vmatpush.msra.mxu0 %v2593
        %2671 = vmatpush.msra.mxu0 %v2591
        %2672 = vmatpush.msra.mxu0 %v2589
        %2673 = vmatpush.msra.mxu0 %v2587
        %2674 = vmatpush.msra.mxu0 %v2585
        %2675 = vmatpush.msra.mxu0 %v2583
        %2676 = vmatpush.msra.mxu0 %v2581
        %2677 = vmatpush.msra.mxu0 %v2579
        %2678 = vmatpush.msra.mxu0 %v2577
        %2679 = vmatpush.msra.mxu0 %v2575
        %2680 = vmatpush.msra.mxu0 %v2573
        %2681 = vmatpush.msra.mxu0 %v2571
        %2682 = vmatpush.msra.mxu0 %v2569
        %2683 = vmatpush.msra.mxu0 %v2567
        %2684 = vmatpush.msra.mxu0 %v2565
        %2685 = vmatmul.f32.gmra.mxu0 %v2478
        %v2686 = vpop.f32.mrf.mxu0
        %v2687 = vadd.f32 %v2667, %v2686
        %2688 = vdwg.mxu0
        %2689 = vmatpush.msra.mxu0 %v2627
        %2690 = vmatpush.msra.mxu0 %v2625
        %2691 = vmatpush.msra.mxu0 %v2623
        %2692 = vmatpush.msra.mxu0 %v2621
        %2693 = vmatpush.msra.mxu0 %v2619
        %2694 = vmatpush.msra.mxu0 %v2617
        %2695 = vmatpush.msra.mxu0 %v2615
        %2696 = vmatpush.msra.mxu0 %v2613
        %2697 = vmatpush.msra.mxu0 %v2611
        %2698 = vmatpush.msra.mxu0 %v2609
        %2699 = vmatpush.msra.mxu0 %v2607
        %2700 = vmatpush.msra.mxu0 %v2605
        %2701 = vmatpush.msra.mxu0 %v2603
        %2702 = vmatpush.msra.mxu0 %v2601
        %2703 = vmatpush.msra.mxu0 %v2599
        %2704 = vmatpush.msra.mxu0 %v2597
        %2705 = vmatmul.f32.gmra.mxu0 %v2498
        %v2706 = vpop.f32.mrf.mxu0
        %v2707 = vadd.f32 %v2687, %v2706
        %2708 = vdwg.mxu0
        %2709 = vmatpush.msra.mxu0 %v2532
        %2710 = vmatpush.msra.mxu0 %v2530
        %2711 = vmatpush.msra.mxu0 %v2528
        %2712 = vmatpush.msra.mxu0 %v2526
        %2713 = vmatpush.msra.mxu0 %v2524
        %2714 = vmatpush.msra.mxu0 %v2522
        %2715 = vmatpush.msra.mxu0 %v2520
        %2716 = vmatpush.msra.mxu0 %v2518
        %2717 = vmatpush.msra.mxu0 %v2516
        %2718 = vmatpush.msra.mxu0 %v2514
        %2719 = vmatpush.msra.mxu0 %v2512
        %2720 = vmatpush.msra.mxu0 %v2510
        %2721 = vmatpush.msra.mxu0 %v2508
        %2722 = vmatpush.msra.mxu0 %v2506
        %2723 = vmatpush.msra.mxu0 %v2504
        %2724 = vmatpush.msra.mxu0 %v2502
        %2725 = vmatmul.f32.gmra.mxu0 %v2438
        %v2726 = vpop.f32.mrf.mxu0
        %v2727 = vadd.f32 0.0, %v2726
        %2728 = vdwg.mxu0
        %2729 = vmatpush.msra.mxu0 %v2564
        %2730 = vmatpush.msra.mxu0 %v2562
        %2731 = vmatpush.msra.mxu0 %v2560
        %2732 = vmatpush.msra.mxu0 %v2558
        %2733 = vmatpush.msra.mxu0 %v2556
        %2734 = vmatpush.msra.mxu0 %v2554
        %2735 = vmatpush.msra.mxu0 %v2552
        %2736 = vmatpush.msra.mxu0 %v2550
        %2737 = vmatpush.msra.mxu0 %v2548
        %2738 = vmatpush.msra.mxu0 %v2546
        %2739 = vmatpush.msra.mxu0 %v2544
        %2740 = vmatpush.msra.mxu0 %v2542
        %2741 = vmatpush.msra.mxu0 %v2540
        %2742 = vmatpush.msra.mxu0 %v2538
        %2743 = vmatpush.msra.mxu0 %v2536
        %2744 = vmatpush.msra.mxu0 %v2534
        %2745 = vmatmul.f32.gmra.mxu0 %v2458
        %v2746 = vpop.f32.mrf.mxu0
        %v2747 = vadd.f32 %v2727, %v2746
        %2748 = vdwg.mxu0
        %2749 = vmatpush.msra.mxu0 %v2596
        %2750 = vmatpush.msra.mxu0 %v2594
        %2751 = vmatpush.msra.mxu0 %v2592
        %2752 = vmatpush.msra.mxu0 %v2590
        %2753 = vmatpush.msra.mxu0 %v2588
        %2754 = vmatpush.msra.mxu0 %v2586
        %2755 = vmatpush.msra.mxu0 %v2584
        %2756 = vmatpush.msra.mxu0 %v2582
        %2757 = vmatpush.msra.mxu0 %v2580
        %2758 = vmatpush.msra.mxu0 %v2578
        %2759 = vmatpush.msra.mxu0 %v2576
        %2760 = vmatpush.msra.mxu0 %v2574
        %2761 = vmatpush.msra.mxu0 %v2572
        %2762 = vmatpush.msra.mxu0 %v2570
        %2763 = vmatpush.msra.mxu0 %v2568
        %2764 = vmatpush.msra.mxu0 %v2566
        %2765 = vmatmul.f32.gmra.mxu0 %v2478
        %v2766 = vpop.f32.mrf.mxu0
        %v2767 = vadd.f32 %v2747, %v2766
        %2768 = vdwg.mxu0
        %2769 = vmatpush.msra.mxu0 %v2628
        %2770 = vmatpush.msra.mxu0 %v2626
        %2771 = vmatpush.msra.mxu0 %v2624
        %2772 = vmatpush.msra.mxu0 %v2622
        %2773 = vmatpush.msra.mxu0 %v2620
        %2774 = vmatpush.msra.mxu0 %v2618
        %2775 = vmatpush.msra.mxu0 %v2616
        %2776 = vmatpush.msra.mxu0 %v2614
        %2777 = vmatpush.msra.mxu0 %v2612
        %2778 = vmatpush.msra.mxu0 %v2610
        %2779 = vmatpush.msra.mxu0 %v2608
        %2780 = vmatpush.msra.mxu0 %v2606
        %2781 = vmatpush.msra.mxu0 %v2604
        %2782 = vmatpush.msra.mxu0 %v2602
        %2783 = vmatpush.msra.mxu0 %v2600
        %2784 = vmatpush.msra.mxu0 %v2598
        %2785 = vmatmul.f32.gmra.mxu0 %v2498
        %v2786 = vpop.f32.mrf.mxu0
        %v2787 = vadd.f32 %v2767, %v2786
        %2788 = vdwg.mxu0
        %2789 = vmatpush.msra.mxu0 %v2317
        %2790 = vmatpush.msra.mxu0 %v2315
        %2791 = vmatpush.msra.mxu0 %v2313
        %2792 = vmatpush.msra.mxu0 %v2311
        %2793 = vmatpush.msra.mxu0 %v2309
        %2794 = vmatpush.msra.mxu0 %v2307
        %2795 = vmatpush.msra.mxu0 %v2305
        %2796 = vmatpush.msra.mxu0 %v2303
        %2797 = vmatpush.msra.mxu0 %v2301
        %2798 = vmatpush.msra.mxu0 %v2299
        %2799 = vmatpush.msra.mxu0 %v2297
        %2800 = vmatpush.msra.mxu0 %v2295
        %2801 = vmatpush.msra.mxu0 %v2293
        %2802 = vmatpush.msra.mxu0 %v2291
        %2803 = vmatpush.msra.mxu0 %v2289
        %2804 = vmatpush.msra.mxu0 %v2287
        %2805 = vmatmul.f32.gmra.mxu0 %v2225
        %v2806 = vpop.f32.mrf.mxu0
        %v2807 = vadd.f32 %v2707, %v2806
        %2808 = vdwg.mxu0
        %2809 = vmatpush.msra.mxu0 %v2349
        %2810 = vmatpush.msra.mxu0 %v2347
        %2811 = vmatpush.msra.mxu0 %v2345
        %2812 = vmatpush.msra.mxu0 %v2343
        %2813 = vmatpush.msra.mxu0 %v2341
        %2814 = vmatpush.msra.mxu0 %v2339
        %2815 = vmatpush.msra.mxu0 %v2337
        %2816 = vmatpush.msra.mxu0 %v2335
        %2817 = vmatpush.msra.mxu0 %v2333
        %2818 = vmatpush.msra.mxu0 %v2331
        %2819 = vmatpush.msra.mxu0 %v2329
        %2820 = vmatpush.msra.mxu0 %v2327
        %2821 = vmatpush.msra.mxu0 %v2325
        %2822 = vmatpush.msra.mxu0 %v2323
        %2823 = vmatpush.msra.mxu0 %v2321
        %2824 = vmatpush.msra.mxu0 %v2319
        %2825 = vmatmul.f32.gmra.mxu0 %v2245
        %v2826 = vpop.f32.mrf.mxu0
        %v2827 = vadd.f32 %v2807, %v2826
        %2828 = vdwg.mxu0
        %2829 = vmatpush.msra.mxu0 %v2381
        %2830 = vmatpush.msra.mxu0 %v2379
        %2831 = vmatpush.msra.mxu0 %v2377
        %2832 = vmatpush.msra.mxu0 %v2375
        %2833 = vmatpush.msra.mxu0 %v2373
        %2834 = vmatpush.msra.mxu0 %v2371
        %2835 = vmatpush.msra.mxu0 %v2369
        %2836 = vmatpush.msra.mxu0 %v2367
        %2837 = vmatpush.msra.mxu0 %v2365
        %2838 = vmatpush.msra.mxu0 %v2363
        %2839 = vmatpush.msra.mxu0 %v2361
        %2840 = vmatpush.msra.mxu0 %v2359
        %2841 = vmatpush.msra.mxu0 %v2357
        %2842 = vmatpush.msra.mxu0 %v2355
        %2843 = vmatpush.msra.mxu0 %v2353
        %2844 = vmatpush.msra.mxu0 %v2351
        %2845 = vmatmul.f32.gmra.mxu0 %v2265
        %v2846 = vpop.f32.mrf.mxu0
        %v2847 = vadd.f32 %v2827, %v2846
        %2848 = vdwg.mxu0
        %2849 = vmatpush.msra.mxu0 %v2413
        %2850 = vmatpush.msra.mxu0 %v2411
        %2851 = vmatpush.msra.mxu0 %v2409
        %2852 = vmatpush.msra.mxu0 %v2407
        %2853 = vmatpush.msra.mxu0 %v2405
        %2854 = vmatpush.msra.mxu0 %v2403
        %2855 = vmatpush.msra.mxu0 %v2401
        %2856 = vmatpush.msra.mxu0 %v2399
        %2857 = vmatpush.msra.mxu0 %v2397
        %2858 = vmatpush.msra.mxu0 %v2395
        %2859 = vmatpush.msra.mxu0 %v2393
        %2860 = vmatpush.msra.mxu0 %v2391
        %2861 = vmatpush.msra.mxu0 %v2389
        %2862 = vmatpush.msra.mxu0 %v2387
        %2863 = vmatpush.msra.mxu0 %v2385
        %2864 = vmatpush.msra.mxu0 %v2383
        %2865 = vmatmul.f32.gmra.mxu0 %v2285
        %v2866 = vpop.f32.mrf.mxu0
        %v2867 = vadd.f32 %v2847, %v2866
        %2868 = vdwg.mxu0
        %2869 = vmatpush.msra.mxu0 %v2318
        %2870 = vmatpush.msra.mxu0 %v2316
        %2871 = vmatpush.msra.mxu0 %v2314
        %2872 = vmatpush.msra.mxu0 %v2312
        %2873 = vmatpush.msra.mxu0 %v2310
        %2874 = vmatpush.msra.mxu0 %v2308
        %2875 = vmatpush.msra.mxu0 %v2306
        %2876 = vmatpush.msra.mxu0 %v2304
        %2877 = vmatpush.msra.mxu0 %v2302
        %2878 = vmatpush.msra.mxu0 %v2300
        %2879 = vmatpush.msra.mxu0 %v2298
        %2880 = vmatpush.msra.mxu0 %v2296
        %2881 = vmatpush.msra.mxu0 %v2294
        %2882 = vmatpush.msra.mxu0 %v2292
        %2883 = vmatpush.msra.mxu0 %v2290
        %2884 = vmatpush.msra.mxu0 %v2288
        %2885 = vmatmul.f32.gmra.mxu0 %v2225
        %v2886 = vpop.f32.mrf.mxu0
        %v2887 = vadd.f32 %v2787, %v2886
        %2888 = vdwg.mxu0
        %2889 = vmatpush.msra.mxu0 %v2350
        %2890 = vmatpush.msra.mxu0 %v2348
        %2891 = vmatpush.msra.mxu0 %v2346
        %2892 = vmatpush.msra.mxu0 %v2344
        %2893 = vmatpush.msra.mxu0 %v2342
        %2894 = vmatpush.msra.mxu0 %v2340
        %2895 = vmatpush.msra.mxu0 %v2338
        %2896 = vmatpush.msra.mxu0 %v2336
        %2897 = vmatpush.msra.mxu0 %v2334
        %2898 = vmatpush.msra.mxu0 %v2332
        %2899 = vmatpush.msra.mxu0 %v2330
        %2900 = vmatpush.msra.mxu0 %v2328
        %2901 = vmatpush.msra.mxu0 %v2326
        %2902 = vmatpush.msra.mxu0 %v2324
        %2903 = vmatpush.msra.mxu0 %v2322
        %2904 = vmatpush.msra.mxu0 %v2320
        %2905 = vmatmul.f32.gmra.mxu0 %v2245
        %v2906 = vpop.f32.mrf.mxu0
        %v2907 = vadd.f32 %v2887, %v2906
        %2908 = vdwg.mxu0
        %2909 = vmatpush.msra.mxu0 %v2382
        %2910 = vmatpush.msra.mxu0 %v2380
        %2911 = vmatpush.msra.mxu0 %v2378
        %2912 = vmatpush.msra.mxu0 %v2376
        %2913 = vmatpush.msra.mxu0 %v2374
        %2914 = vmatpush.msra.mxu0 %v2372
        %2915 = vmatpush.msra.mxu0 %v2370
        %2916 = vmatpush.msra.mxu0 %v2368
        %2917 = vmatpush.msra.mxu0 %v2366
        %2918 = vmatpush.msra.mxu0 %v2364
        %2919 = vmatpush.msra.mxu0 %v2362
        %2920 = vmatpush.msra.mxu0 %v2360
        %2921 = vmatpush.msra.mxu0 %v2358
        %2922 = vmatpush.msra.mxu0 %v2356
        %2923 = vmatpush.msra.mxu0 %v2354
        %2924 = vmatpush.msra.mxu0 %v2352
        %2925 = vmatmul.f32.gmra.mxu0 %v2265
        %v2926 = vpop.f32.mrf.mxu0
        %v2927 = vadd.f32 %v2907, %v2926
        %2928 = vdwg.mxu0
        %2929 = vmatpush.msra.mxu0 %v2414
        %2930 = vmatpush.msra.mxu0 %v2412
        %2931 = vmatpush.msra.mxu0 %v2410
        %2932 = vmatpush.msra.mxu0 %v2408
        %2933 = vmatpush.msra.mxu0 %v2406
        %2934 = vmatpush.msra.mxu0 %v2404
        %2935 = vmatpush.msra.mxu0 %v2402
        %2936 = vmatpush.msra.mxu0 %v2400
        %2937 = vmatpush.msra.mxu0 %v2398
        %2938 = vmatpush.msra.mxu0 %v2396
        %2939 = vmatpush.msra.mxu0 %v2394
        %2940 = vmatpush.msra.mxu0 %v2392
        %2941 = vmatpush.msra.mxu0 %v2390
        %2942 = vmatpush.msra.mxu0 %v2388
        %2943 = vmatpush.msra.mxu0 %v2386
        %2944 = vmatpush.msra.mxu0 %v2384
        %2945 = vmatmul.f32.gmra.mxu0 %v2285
        %v2946 = vpop.f32.mrf.mxu0
        %v2947 = vadd.f32 %v2927, %v2946
        %2948 = vdwg.mxu0
        %s2949 = scalar_lea.vmem [#allocation7], 16
        %v2950 = vld [vmem:[%s2949] sm:$0xff]
        %v2952 = vsel %vm2203, %v2950, 0
        %2954 = vmatpush.msra.mxu0 0.0
        %2955 = vmatpush.msra.mxu0 0.0
        %2956 = vmatpush.msra.mxu0 0.0
        %2957 = vmatpush.msra.mxu0 0.0
        %2958 = vmatpush.msra.mxu0 0.0
        %2959 = vmatpush.msra.mxu0 0.0
        %2960 = vmatpush.msra.mxu0 0.0
        %2961 = vmatpush.msra.mxu0 0.0
        %2962 = vmatpush.msra.mxu0 0.0
        %2963 = vmatpush.msra.mxu0 0.0
        %2964 = vmatpush.msra.mxu0 0.0
        %2965 = vmatpush.msra.mxu0 0.0
        %2966 = vmatpush.msra.mxu0 0.0
        %2967 = vmatpush.msra.mxu0 0.0
        %2968 = vmatpush.msra.mxu0 %v2198
        %2969 = vmatpush.msra.mxu0 %v2194
        %2970 = vmatmul.f32.gmra.mxu0 %v2952
        %v2971 = vpop.f32.mrf.mxu0
        %v2972 = vadd.f32 0.0, %v2971
        %2973 = vdwg.mxu0
        %2974 = vmatpush.msra.mxu0 0.0
        %2975 = vmatpush.msra.mxu0 0.0
        %2976 = vmatpush.msra.mxu0 0.0
        %2977 = vmatpush.msra.mxu0 0.0
        %2978 = vmatpush.msra.mxu0 0.0
        %2979 = vmatpush.msra.mxu0 0.0
        %2980 = vmatpush.msra.mxu0 0.0
        %2981 = vmatpush.msra.mxu0 0.0
        %2982 = vmatpush.msra.mxu0 0.0
        %2983 = vmatpush.msra.mxu0 0.0
        %2984 = vmatpush.msra.mxu0 0.0
        %2985 = vmatpush.msra.mxu0 0.0
        %2986 = vmatpush.msra.mxu0 0.0
        %2987 = vmatpush.msra.mxu0 0.0
        %2988 = vmatpush.msra.mxu0 %v2199
        %2989 = vmatpush.msra.mxu0 %v2195
        %2990 = vmatmul.f32.gmra.mxu0 %v2952
        %v2991 = vpop.f32.mrf.mxu0
        %v2992 = vadd.f32 0.0, %v2991
        %2993 = vdwg.mxu0
        %2994 = vmatpush.msra.mxu0 0.0
        %2995 = vmatpush.msra.mxu0 0.0
        %2996 = vmatpush.msra.mxu0 0.0
        %2997 = vmatpush.msra.mxu0 0.0
        %2998 = vmatpush.msra.mxu0 0.0
        %2999 = vmatpush.msra.mxu0 0.0
        %3000 = vmatpush.msra.mxu0 0.0
        %3001 = vmatpush.msra.mxu0 0.0
        %3002 = vmatpush.msra.mxu0 0.0
        %3003 = vmatpush.msra.mxu0 0.0
        %3004 = vmatpush.msra.mxu0 0.0
        %3005 = vmatpush.msra.mxu0 0.0
        %3006 = vmatpush.msra.mxu0 0.0
        %3007 = vmatpush.msra.mxu0 0.0
        %3008 = vmatpush.msra.mxu0 %v2200
        %3009 = vmatpush.msra.mxu0 %v2196
        %3010 = vmatmul.f32.gmra.mxu0 %v2952
        %v3011 = vpop.f32.mrf.mxu0
        %v3012 = vadd.f32 0.0, %v3011
        %3013 = vdwg.mxu0
        %3014 = vmatpush.msra.mxu0 0.0
        %3015 = vmatpush.msra.mxu0 0.0
        %3016 = vmatpush.msra.mxu0 0.0
        %3017 = vmatpush.msra.mxu0 0.0
        %3018 = vmatpush.msra.mxu0 0.0
        %3019 = vmatpush.msra.mxu0 0.0
        %3020 = vmatpush.msra.mxu0 0.0
        %3021 = vmatpush.msra.mxu0 0.0
        %3022 = vmatpush.msra.mxu0 0.0
        %3023 = vmatpush.msra.mxu0 0.0
        %3024 = vmatpush.msra.mxu0 0.0
        %3025 = vmatpush.msra.mxu0 0.0
        %3026 = vmatpush.msra.mxu0 0.0
        %3027 = vmatpush.msra.mxu0 0.0
        %3028 = vmatpush.msra.mxu0 %v2201
        %3029 = vmatpush.msra.mxu0 %v2197
        %3030 = vmatmul.f32.gmra.mxu0 %v2952
        %v3031 = vpop.f32.mrf.mxu0
        %v3032 = vadd.f32 0.0, %v3031
        %3033 = vdwg.mxu0
        %s3034 = scalar_lea.vmem [#allocation9], 2048
        %v3035 = vld [vmem:[%s3034] sm:$0xff]
        %v3036 = vld [vmem:[%s3034 + $0x8] sm:$0xff]
        %v3037 = vld [vmem:[%s3034 + $0x10] sm:$0xff]
        %v3038 = vld [vmem:[%s3034 + $0x18] sm:$0xff]
        %v3039 = vld [vmem:[%s3034 + $0x20] sm:$0xff]
        %v3040 = vld [vmem:[%s3034 + $0x28] sm:$0xff]
        %v3041 = vld [vmem:[%s3034 + $0x30] sm:$0xff]
        %v3042 = vld [vmem:[%s3034 + $0x38] sm:$0xff]
        %v3043 = vld [vmem:[%s3034 + $0x40] sm:$0xff]
        %v3044 = vld [vmem:[%s3034 + $0x48] sm:$0xff]
        %v3045 = vld [vmem:[%s3034 + $0x50] sm:$0xff]
        %v3046 = vld [vmem:[%s3034 + $0x58] sm:$0xff]
        %v3047 = vld [vmem:[%s3034 + $0x60] sm:$0xff]
        %v3048 = vld [vmem:[%s3034 + $0x68] sm:$0xff]
        %v3049 = vld [vmem:[%s3034 + $0x70] sm:$0xff]
        %v3050 = vld [vmem:[%s3034 + $0x78] sm:$0xff]
        %v3051 = vld [vmem:[%s3034 + $0x80] sm:$0xff]
        %v3052 = vld [vmem:[%s3034 + $0x88] sm:$0xff]
        %v3053 = vld [vmem:[%s3034 + $0x90] sm:$0xff]
        %v3054 = vld [vmem:[%s3034 + $0x98] sm:$0xff]
        %v3055 = vld [vmem:[%s3034 + $0xa0] sm:$0xff]
        %v3056 = vld [vmem:[%s3034 + $0xa8] sm:$0xff]
        %v3057 = vld [vmem:[%s3034 + $0xb0] sm:$0xff]
        %v3058 = vld [vmem:[%s3034 + $0xb8] sm:$0xff]
        %v3059 = vld [vmem:[%s3034 + $0xc0] sm:$0xff]
        %v3060 = vld [vmem:[%s3034 + $0xc8] sm:$0xff]
        %v3061 = vld [vmem:[%s3034 + $0xd0] sm:$0xff]
        %v3062 = vld [vmem:[%s3034 + $0xd8] sm:$0xff]
        %v3063 = vld [vmem:[%s3034 + $0xe0] sm:$0xff]
        %v3064 = vld [vmem:[%s3034 + $0xe8] sm:$0xff]
        %v3065 = vld [vmem:[%s3034 + $0xf0] sm:$0xff]
        %v3066 = vld [vmem:[%s3034 + $0xf8] sm:$0xff]
        %v3067 = vld [vmem:[%s3034 + $0x100] sm:$0xff]
        %v3068 = vld [vmem:[%s3034 + $0x108] sm:$0xff]
        %v3069 = vld [vmem:[%s3034 + $0x110] sm:$0xff]
        %v3070 = vld [vmem:[%s3034 + $0x118] sm:$0xff]
        %v3071 = vld [vmem:[%s3034 + $0x120] sm:$0xff]
        %v3072 = vld [vmem:[%s3034 + $0x128] sm:$0xff]
        %v3073 = vld [vmem:[%s3034 + $0x130] sm:$0xff]
        %v3074 = vld [vmem:[%s3034 + $0x138] sm:$0xff]
        %v3075 = vld [vmem:[%s3034 + $0x140] sm:$0xff]
        %v3076 = vld [vmem:[%s3034 + $0x148] sm:$0xff]
        %v3077 = vld [vmem:[%s3034 + $0x150] sm:$0xff]
        %v3078 = vld [vmem:[%s3034 + $0x158] sm:$0xff]
        %v3079 = vld [vmem:[%s3034 + $0x160] sm:$0xff]
        %v3080 = vld [vmem:[%s3034 + $0x168] sm:$0xff]
        %v3081 = vld [vmem:[%s3034 + $0x170] sm:$0xff]
        %v3082 = vld [vmem:[%s3034 + $0x178] sm:$0xff]
        %v3083 = vld [vmem:[%s3034 + $0x180] sm:$0xff]
        %v3084 = vld [vmem:[%s3034 + $0x188] sm:$0xff]
        %v3085 = vld [vmem:[%s3034 + $0x190] sm:$0xff]
        %v3086 = vld [vmem:[%s3034 + $0x198] sm:$0xff]
        %v3087 = vld [vmem:[%s3034 + $0x1a0] sm:$0xff]
        %v3088 = vld [vmem:[%s3034 + $0x1a8] sm:$0xff]
        %v3089 = vld [vmem:[%s3034 + $0x1b0] sm:$0xff]
        %v3090 = vld [vmem:[%s3034 + $0x1b8] sm:$0xff]
        %v3091 = vld [vmem:[%s3034 + $0x1c0] sm:$0xff]
        %v3092 = vld [vmem:[%s3034 + $0x1c8] sm:$0xff]
        %v3093 = vld [vmem:[%s3034 + $0x1d0] sm:$0xff]
        %v3094 = vld [vmem:[%s3034 + $0x1d8] sm:$0xff]
        %v3095 = vld [vmem:[%s3034 + $0x1e0] sm:$0xff]
        %v3096 = vld [vmem:[%s3034 + $0x1e8] sm:$0xff]
        %v3097 = vld [vmem:[%s3034 + $0x1f0] sm:$0xff]
        %v3098 = vld [vmem:[%s3034 + $0x1f8] sm:$0xff]
        %v3099 = vld [vmem:[%s3034 + $0x200] sm:$0xff]
        %v3100 = vld [vmem:[%s3034 + $0x208] sm:$0xff]
        %v3101 = vld [vmem:[%s3034 + $0x210] sm:$0xff]
        %v3102 = vld [vmem:[%s3034 + $0x218] sm:$0xff]
        %v3103 = vld [vmem:[%s3034 + $0x220] sm:$0xff]
        %v3104 = vld [vmem:[%s3034 + $0x228] sm:$0xff]
        %v3105 = vld [vmem:[%s3034 + $0x230] sm:$0xff]
        %v3106 = vld [vmem:[%s3034 + $0x238] sm:$0xff]
        %v3107 = vld [vmem:[%s3034 + $0x240] sm:$0xff]
        %v3108 = vld [vmem:[%s3034 + $0x248] sm:$0xff]
        %v3109 = vld [vmem:[%s3034 + $0x250] sm:$0xff]
        %v3110 = vld [vmem:[%s3034 + $0x258] sm:$0xff]
        %v3111 = vld [vmem:[%s3034 + $0x260] sm:$0xff]
        %v3112 = vld [vmem:[%s3034 + $0x268] sm:$0xff]
        %v3113 = vld [vmem:[%s3034 + $0x270] sm:$0xff]
        %v3114 = vld [vmem:[%s3034 + $0x278] sm:$0xff]
        %v3115 = vld [vmem:[%s3034 + $0x280] sm:$0xff]
        %v3116 = vld [vmem:[%s3034 + $0x288] sm:$0xff]
        %v3117 = vld [vmem:[%s3034 + $0x290] sm:$0xff]
        %v3118 = vld [vmem:[%s3034 + $0x298] sm:$0xff]
        %v3119 = vld [vmem:[%s3034 + $0x2a0] sm:$0xff]
        %v3120 = vld [vmem:[%s3034 + $0x2a8] sm:$0xff]
        %v3121 = vld [vmem:[%s3034 + $0x2b0] sm:$0xff]
        %v3122 = vld [vmem:[%s3034 + $0x2b8] sm:$0xff]
        %v3123 = vld [vmem:[%s3034 + $0x2c0] sm:$0xff]
        %v3124 = vld [vmem:[%s3034 + $0x2c8] sm:$0xff]
        %v3125 = vld [vmem:[%s3034 + $0x2d0] sm:$0xff]
        %v3126 = vld [vmem:[%s3034 + $0x2d8] sm:$0xff]
        %v3127 = vld [vmem:[%s3034 + $0x2e0] sm:$0xff]
        %v3128 = vld [vmem:[%s3034 + $0x2e8] sm:$0xff]
        %v3129 = vld [vmem:[%s3034 + $0x2f0] sm:$0xff]
        %v3130 = vld [vmem:[%s3034 + $0x2f8] sm:$0xff]
        %v3131 = vld [vmem:[%s3034 + $0x300] sm:$0xff]
        %v3132 = vld [vmem:[%s3034 + $0x308] sm:$0xff]
        %v3133 = vld [vmem:[%s3034 + $0x310] sm:$0xff]
        %v3134 = vld [vmem:[%s3034 + $0x318] sm:$0xff]
        %v3135 = vld [vmem:[%s3034 + $0x320] sm:$0xff]
        %v3136 = vld [vmem:[%s3034 + $0x328] sm:$0xff]
        %v3137 = vld [vmem:[%s3034 + $0x330] sm:$0xff]
        %v3138 = vld [vmem:[%s3034 + $0x338] sm:$0xff]
        %v3139 = vld [vmem:[%s3034 + $0x340] sm:$0xff]
        %v3140 = vld [vmem:[%s3034 + $0x348] sm:$0xff]
        %v3141 = vld [vmem:[%s3034 + $0x350] sm:$0xff]
        %v3142 = vld [vmem:[%s3034 + $0x358] sm:$0xff]
        %v3143 = vld [vmem:[%s3034 + $0x360] sm:$0xff]
        %v3144 = vld [vmem:[%s3034 + $0x368] sm:$0xff]
        %v3145 = vld [vmem:[%s3034 + $0x370] sm:$0xff]
        %v3146 = vld [vmem:[%s3034 + $0x378] sm:$0xff]
        %v3147 = vld [vmem:[%s3034 + $0x380] sm:$0xff]
        %v3148 = vld [vmem:[%s3034 + $0x388] sm:$0xff]
        %v3149 = vld [vmem:[%s3034 + $0x390] sm:$0xff]
        %v3150 = vld [vmem:[%s3034 + $0x398] sm:$0xff]
        %v3151 = vld [vmem:[%s3034 + $0x3a0] sm:$0xff]
        %v3152 = vld [vmem:[%s3034 + $0x3a8] sm:$0xff]
        %v3153 = vld [vmem:[%s3034 + $0x3b0] sm:$0xff]
        %v3154 = vld [vmem:[%s3034 + $0x3b8] sm:$0xff]
        %v3155 = vld [vmem:[%s3034 + $0x3c0] sm:$0xff]
        %v3156 = vld [vmem:[%s3034 + $0x3c8] sm:$0xff]
        %v3157 = vld [vmem:[%s3034 + $0x3d0] sm:$0xff]
        %v3158 = vld [vmem:[%s3034 + $0x3d8] sm:$0xff]
        %v3159 = vld [vmem:[%s3034 + $0x3e0] sm:$0xff]
        %v3160 = vld [vmem:[%s3034 + $0x3e8] sm:$0xff]
        %v3161 = vld [vmem:[%s3034 + $0x3f0] sm:$0xff]
        %v3162 = vld [vmem:[%s3034 + $0x3f8] sm:$0xff]
        %3163 = vmatpush.msra.mxu0 %v3065
        %3164 = vmatpush.msra.mxu0 %v3063
        %3165 = vmatpush.msra.mxu0 %v3061
        %3166 = vmatpush.msra.mxu0 %v3059
        %3167 = vmatpush.msra.mxu0 %v3057
        %3168 = vmatpush.msra.mxu0 %v3055
        %3169 = vmatpush.msra.mxu0 %v3053
        %3170 = vmatpush.msra.mxu0 %v3051
        %3171 = vmatpush.msra.mxu0 %v3049
        %3172 = vmatpush.msra.mxu0 %v3047
        %3173 = vmatpush.msra.mxu0 %v3045
        %3174 = vmatpush.msra.mxu0 %v3043
        %3175 = vmatpush.msra.mxu0 %v3041
        %3176 = vmatpush.msra.mxu0 %v3039
        %3177 = vmatpush.msra.mxu0 %v3037
        %3178 = vmatpush.msra.mxu0 %v3035
        %3179 = vmatmul.f32.gmra.mxu0 %v2972
        %v3180 = vpop.f32.mrf.mxu0
        %v3181 = vadd.f32 0.0, %v3180
        %3182 = vdwg.mxu0
        %3183 = vmatpush.msra.mxu0 %v3097
        %3184 = vmatpush.msra.mxu0 %v3095
        %3185 = vmatpush.msra.mxu0 %v3093
        %3186 = vmatpush.msra.mxu0 %v3091
        %3187 = vmatpush.msra.mxu0 %v3089
        %3188 = vmatpush.msra.mxu0 %v3087
        %3189 = vmatpush.msra.mxu0 %v3085
        %3190 = vmatpush.msra.mxu0 %v3083
        %3191 = vmatpush.msra.mxu0 %v3081
        %3192 = vmatpush.msra.mxu0 %v3079
        %3193 = vmatpush.msra.mxu0 %v3077
        %3194 = vmatpush.msra.mxu0 %v3075
        %3195 = vmatpush.msra.mxu0 %v3073
        %3196 = vmatpush.msra.mxu0 %v3071
        %3197 = vmatpush.msra.mxu0 %v3069
        %3198 = vmatpush.msra.mxu0 %v3067
        %3199 = vmatmul.f32.gmra.mxu0 %v2992
        %v3200 = vpop.f32.mrf.mxu0
        %v3201 = vadd.f32 %v3181, %v3200
        %3202 = vdwg.mxu0
        %3203 = vmatpush.msra.mxu0 %v3129
        %3204 = vmatpush.msra.mxu0 %v3127
        %3205 = vmatpush.msra.mxu0 %v3125
        %3206 = vmatpush.msra.mxu0 %v3123
        %3207 = vmatpush.msra.mxu0 %v3121
        %3208 = vmatpush.msra.mxu0 %v3119
        %3209 = vmatpush.msra.mxu0 %v3117
        %3210 = vmatpush.msra.mxu0 %v3115
        %3211 = vmatpush.msra.mxu0 %v3113
        %3212 = vmatpush.msra.mxu0 %v3111
        %3213 = vmatpush.msra.mxu0 %v3109
        %3214 = vmatpush.msra.mxu0 %v3107
        %3215 = vmatpush.msra.mxu0 %v3105
        %3216 = vmatpush.msra.mxu0 %v3103
        %3217 = vmatpush.msra.mxu0 %v3101
        %3218 = vmatpush.msra.mxu0 %v3099
        %3219 = vmatmul.f32.gmra.mxu0 %v3012
        %v3220 = vpop.f32.mrf.mxu0
        %v3221 = vadd.f32 %v3201, %v3220
        %3222 = vdwg.mxu0
        %3223 = vmatpush.msra.mxu0 %v3161
        %3224 = vmatpush.msra.mxu0 %v3159
        %3225 = vmatpush.msra.mxu0 %v3157
        %3226 = vmatpush.msra.mxu0 %v3155
        %3227 = vmatpush.msra.mxu0 %v3153
        %3228 = vmatpush.msra.mxu0 %v3151
        %3229 = vmatpush.msra.mxu0 %v3149
        %3230 = vmatpush.msra.mxu0 %v3147
        %3231 = vmatpush.msra.mxu0 %v3145
        %3232 = vmatpush.msra.mxu0 %v3143
        %3233 = vmatpush.msra.mxu0 %v3141
        %3234 = vmatpush.msra.mxu0 %v3139
        %3235 = vmatpush.msra.mxu0 %v3137
        %3236 = vmatpush.msra.mxu0 %v3135
        %3237 = vmatpush.msra.mxu0 %v3133
        %3238 = vmatpush.msra.mxu0 %v3131
        %3239 = vmatmul.f32.gmra.mxu0 %v3032
        %v3240 = vpop.f32.mrf.mxu0
        %v3241 = vadd.f32 %v3221, %v3240
        %3242 = vdwg.mxu0
        %3243 = vmatpush.msra.mxu0 %v3066
        %3244 = vmatpush.msra.mxu0 %v3064
        %3245 = vmatpush.msra.mxu0 %v3062
        %3246 = vmatpush.msra.mxu0 %v3060
        %3247 = vmatpush.msra.mxu0 %v3058
        %3248 = vmatpush.msra.mxu0 %v3056
        %3249 = vmatpush.msra.mxu0 %v3054
        %3250 = vmatpush.msra.mxu0 %v3052
        %3251 = vmatpush.msra.mxu0 %v3050
        %3252 = vmatpush.msra.mxu0 %v3048
        %3253 = vmatpush.msra.mxu0 %v3046
        %3254 = vmatpush.msra.mxu0 %v3044
        %3255 = vmatpush.msra.mxu0 %v3042
        %3256 = vmatpush.msra.mxu0 %v3040
        %3257 = vmatpush.msra.mxu0 %v3038
        %3258 = vmatpush.msra.mxu0 %v3036
        %3259 = vmatmul.f32.gmra.mxu0 %v2972
        %v3260 = vpop.f32.mrf.mxu0
        %v3261 = vadd.f32 0.0, %v3260
        %3262 = vdwg.mxu0
        %3263 = vmatpush.msra.mxu0 %v3098
        %3264 = vmatpush.msra.mxu0 %v3096
        %3265 = vmatpush.msra.mxu0 %v3094
        %3266 = vmatpush.msra.mxu0 %v3092
        %3267 = vmatpush.msra.mxu0 %v3090
        %3268 = vmatpush.msra.mxu0 %v3088
        %3269 = vmatpush.msra.mxu0 %v3086
        %3270 = vmatpush.msra.mxu0 %v3084
        %3271 = vmatpush.msra.mxu0 %v3082
        %3272 = vmatpush.msra.mxu0 %v3080
        %3273 = vmatpush.msra.mxu0 %v3078
        %3274 = vmatpush.msra.mxu0 %v3076
        %3275 = vmatpush.msra.mxu0 %v3074
        %3276 = vmatpush.msra.mxu0 %v3072
        %3277 = vmatpush.msra.mxu0 %v3070
        %3278 = vmatpush.msra.mxu0 %v3068
        %3279 = vmatmul.f32.gmra.mxu0 %v2992
        %v3280 = vpop.f32.mrf.mxu0
        %v3281 = vadd.f32 %v3261, %v3280
        %3282 = vdwg.mxu0
        %3283 = vmatpush.msra.mxu0 %v3130
        %3284 = vmatpush.msra.mxu0 %v3128
        %3285 = vmatpush.msra.mxu0 %v3126
        %3286 = vmatpush.msra.mxu0 %v3124
        %3287 = vmatpush.msra.mxu0 %v3122
        %3288 = vmatpush.msra.mxu0 %v3120
        %3289 = vmatpush.msra.mxu0 %v3118
        %3290 = vmatpush.msra.mxu0 %v3116
        %3291 = vmatpush.msra.mxu0 %v3114
        %3292 = vmatpush.msra.mxu0 %v3112
        %3293 = vmatpush.msra.mxu0 %v3110
        %3294 = vmatpush.msra.mxu0 %v3108
        %3295 = vmatpush.msra.mxu0 %v3106
        %3296 = vmatpush.msra.mxu0 %v3104
        %3297 = vmatpush.msra.mxu0 %v3102
        %3298 = vmatpush.msra.mxu0 %v3100
        %3299 = vmatmul.f32.gmra.mxu0 %v3012
        %v3300 = vpop.f32.mrf.mxu0
        %v3301 = vadd.f32 %v3281, %v3300
        %3302 = vdwg.mxu0
        %3303 = vmatpush.msra.mxu0 %v3162
        %3304 = vmatpush.msra.mxu0 %v3160
        %3305 = vmatpush.msra.mxu0 %v3158
        %3306 = vmatpush.msra.mxu0 %v3156
        %3307 = vmatpush.msra.mxu0 %v3154
        %3308 = vmatpush.msra.mxu0 %v3152
        %3309 = vmatpush.msra.mxu0 %v3150
        %3310 = vmatpush.msra.mxu0 %v3148
        %3311 = vmatpush.msra.mxu0 %v3146
        %3312 = vmatpush.msra.mxu0 %v3144
        %3313 = vmatpush.msra.mxu0 %v3142
        %3314 = vmatpush.msra.mxu0 %v3140
        %3315 = vmatpush.msra.mxu0 %v3138
        %3316 = vmatpush.msra.mxu0 %v3136
        %3317 = vmatpush.msra.mxu0 %v3134
        %3318 = vmatpush.msra.mxu0 %v3132
        %3319 = vmatmul.f32.gmra.mxu0 %v3032
        %v3320 = vpop.f32.mrf.mxu0
        %v3321 = vadd.f32 %v3301, %v3320
        %3322 = vdwg.mxu0
        %v3323 = vadd.f32 %v2867, %v3241
        %v3324 = vadd.f32 %v2947, %v3321
        %s3325 = scalar_lea.vmem [#allocation7], 24
        %v3326 = vld [vmem:[%s3325] sm:$0xff]
        %v3328 = vsel %vm2203, %v3326, 0
        %3330 = vmatpush.msra.mxu0 0.0
        %3331 = vmatpush.msra.mxu0 0.0
        %3332 = vmatpush.msra.mxu0 0.0
        %3333 = vmatpush.msra.mxu0 0.0
        %3334 = vmatpush.msra.mxu0 0.0
        %3335 = vmatpush.msra.mxu0 0.0
        %3336 = vmatpush.msra.mxu0 0.0
        %3337 = vmatpush.msra.mxu0 0.0
        %3338 = vmatpush.msra.mxu0 0.0
        %3339 = vmatpush.msra.mxu0 0.0
        %3340 = vmatpush.msra.mxu0 0.0
        %3341 = vmatpush.msra.mxu0 0.0
        %3342 = vmatpush.msra.mxu0 0.0
        %3343 = vmatpush.msra.mxu0 0.0
        %3344 = vmatpush.msra.mxu0 %v2198
        %3345 = vmatpush.msra.mxu0 %v2194
        %3346 = vmatmul.f32.gmra.mxu0 %v3328
        %v3347 = vpop.f32.mrf.mxu0
        %v3348 = vadd.f32 0.0, %v3347
        %3349 = vdwg.mxu0
        %3350 = vmatpush.msra.mxu0 0.0
        %3351 = vmatpush.msra.mxu0 0.0
        %3352 = vmatpush.msra.mxu0 0.0
        %3353 = vmatpush.msra.mxu0 0.0
        %3354 = vmatpush.msra.mxu0 0.0
        %3355 = vmatpush.msra.mxu0 0.0
        %3356 = vmatpush.msra.mxu0 0.0
        %3357 = vmatpush.msra.mxu0 0.0
        %3358 = vmatpush.msra.mxu0 0.0
        %3359 = vmatpush.msra.mxu0 0.0
        %3360 = vmatpush.msra.mxu0 0.0
        %3361 = vmatpush.msra.mxu0 0.0
        %3362 = vmatpush.msra.mxu0 0.0
        %3363 = vmatpush.msra.mxu0 0.0
        %3364 = vmatpush.msra.mxu0 %v2199
        %3365 = vmatpush.msra.mxu0 %v2195
        %3366 = vmatmul.f32.gmra.mxu0 %v3328
        %v3367 = vpop.f32.mrf.mxu0
        %v3368 = vadd.f32 0.0, %v3367
        %3369 = vdwg.mxu0
        %3370 = vmatpush.msra.mxu0 0.0
        %3371 = vmatpush.msra.mxu0 0.0
        %3372 = vmatpush.msra.mxu0 0.0
        %3373 = vmatpush.msra.mxu0 0.0
        %3374 = vmatpush.msra.mxu0 0.0
        %3375 = vmatpush.msra.mxu0 0.0
        %3376 = vmatpush.msra.mxu0 0.0
        %3377 = vmatpush.msra.mxu0 0.0
        %3378 = vmatpush.msra.mxu0 0.0
        %3379 = vmatpush.msra.mxu0 0.0
        %3380 = vmatpush.msra.mxu0 0.0
        %3381 = vmatpush.msra.mxu0 0.0
        %3382 = vmatpush.msra.mxu0 0.0
        %3383 = vmatpush.msra.mxu0 0.0
        %3384 = vmatpush.msra.mxu0 %v2200
        %3385 = vmatpush.msra.mxu0 %v2196
        %3386 = vmatmul.f32.gmra.mxu0 %v3328
        %v3387 = vpop.f32.mrf.mxu0
        %v3388 = vadd.f32 0.0, %v3387
        %3389 = vdwg.mxu0
        %3390 = vmatpush.msra.mxu0 0.0
        %3391 = vmatpush.msra.mxu0 0.0
        %3392 = vmatpush.msra.mxu0 0.0
        %3393 = vmatpush.msra.mxu0 0.0
        %3394 = vmatpush.msra.mxu0 0.0
        %3395 = vmatpush.msra.mxu0 0.0
        %3396 = vmatpush.msra.mxu0 0.0
        %3397 = vmatpush.msra.mxu0 0.0
        %3398 = vmatpush.msra.mxu0 0.0
        %3399 = vmatpush.msra.mxu0 0.0
        %3400 = vmatpush.msra.mxu0 0.0
        %3401 = vmatpush.msra.mxu0 0.0
        %3402 = vmatpush.msra.mxu0 0.0
        %3403 = vmatpush.msra.mxu0 0.0
        %3404 = vmatpush.msra.mxu0 %v2201
        %3405 = vmatpush.msra.mxu0 %v2197
        %3406 = vmatmul.f32.gmra.mxu0 %v3328
        %v3407 = vpop.f32.mrf.mxu0
        %v3408 = vadd.f32 0.0, %v3407
        %3409 = vdwg.mxu0
        %s3410 = scalar_lea.vmem [#allocation9], 3072
        %v3411 = vld [vmem:[%s3410] sm:$0xff]
        %v3412 = vld [vmem:[%s3410 + $0x8] sm:$0xff]
        %v3413 = vld [vmem:[%s3410 + $0x10] sm:$0xff]
        %v3414 = vld [vmem:[%s3410 + $0x18] sm:$0xff]
        %v3415 = vld [vmem:[%s3410 + $0x20] sm:$0xff]
        %v3416 = vld [vmem:[%s3410 + $0x28] sm:$0xff]
        %v3417 = vld [vmem:[%s3410 + $0x30] sm:$0xff]
        %v3418 = vld [vmem:[%s3410 + $0x38] sm:$0xff]
        %v3419 = vld [vmem:[%s3410 + $0x40] sm:$0xff]
        %v3420 = vld [vmem:[%s3410 + $0x48] sm:$0xff]
        %v3421 = vld [vmem:[%s3410 + $0x50] sm:$0xff]
        %v3422 = vld [vmem:[%s3410 + $0x58] sm:$0xff]
        %v3423 = vld [vmem:[%s3410 + $0x60] sm:$0xff]
        %v3424 = vld [vmem:[%s3410 + $0x68] sm:$0xff]
        %v3425 = vld [vmem:[%s3410 + $0x70] sm:$0xff]
        %v3426 = vld [vmem:[%s3410 + $0x78] sm:$0xff]
        %v3427 = vld [vmem:[%s3410 + $0x80] sm:$0xff]
        %v3428 = vld [vmem:[%s3410 + $0x88] sm:$0xff]
        %v3429 = vld [vmem:[%s3410 + $0x90] sm:$0xff]
        %v3430 = vld [vmem:[%s3410 + $0x98] sm:$0xff]
        %v3431 = vld [vmem:[%s3410 + $0xa0] sm:$0xff]
        %v3432 = vld [vmem:[%s3410 + $0xa8] sm:$0xff]
        %v3433 = vld [vmem:[%s3410 + $0xb0] sm:$0xff]
        %v3434 = vld [vmem:[%s3410 + $0xb8] sm:$0xff]
        %v3435 = vld [vmem:[%s3410 + $0xc0] sm:$0xff]
        %v3436 = vld [vmem:[%s3410 + $0xc8] sm:$0xff]
        %v3437 = vld [vmem:[%s3410 + $0xd0] sm:$0xff]
        %v3438 = vld [vmem:[%s3410 + $0xd8] sm:$0xff]
        %v3439 = vld [vmem:[%s3410 + $0xe0] sm:$0xff]
        %v3440 = vld [vmem:[%s3410 + $0xe8] sm:$0xff]
        %v3441 = vld [vmem:[%s3410 + $0xf0] sm:$0xff]
        %v3442 = vld [vmem:[%s3410 + $0xf8] sm:$0xff]
        %v3443 = vld [vmem:[%s3410 + $0x100] sm:$0xff]
        %v3444 = vld [vmem:[%s3410 + $0x108] sm:$0xff]
        %v3445 = vld [vmem:[%s3410 + $0x110] sm:$0xff]
        %v3446 = vld [vmem:[%s3410 + $0x118] sm:$0xff]
        %v3447 = vld [vmem:[%s3410 + $0x120] sm:$0xff]
        %v3448 = vld [vmem:[%s3410 + $0x128] sm:$0xff]
        %v3449 = vld [vmem:[%s3410 + $0x130] sm:$0xff]
        %v3450 = vld [vmem:[%s3410 + $0x138] sm:$0xff]
        %v3451 = vld [vmem:[%s3410 + $0x140] sm:$0xff]
        %v3452 = vld [vmem:[%s3410 + $0x148] sm:$0xff]
        %v3453 = vld [vmem:[%s3410 + $0x150] sm:$0xff]
        %v3454 = vld [vmem:[%s3410 + $0x158] sm:$0xff]
        %v3455 = vld [vmem:[%s3410 + $0x160] sm:$0xff]
        %v3456 = vld [vmem:[%s3410 + $0x168] sm:$0xff]
        %v3457 = vld [vmem:[%s3410 + $0x170] sm:$0xff]
        %v3458 = vld [vmem:[%s3410 + $0x178] sm:$0xff]
        %v3459 = vld [vmem:[%s3410 + $0x180] sm:$0xff]
        %v3460 = vld [vmem:[%s3410 + $0x188] sm:$0xff]
        %v3461 = vld [vmem:[%s3410 + $0x190] sm:$0xff]
        %v3462 = vld [vmem:[%s3410 + $0x198] sm:$0xff]
        %v3463 = vld [vmem:[%s3410 + $0x1a0] sm:$0xff]
        %v3464 = vld [vmem:[%s3410 + $0x1a8] sm:$0xff]
        %v3465 = vld [vmem:[%s3410 + $0x1b0] sm:$0xff]
        %v3466 = vld [vmem:[%s3410 + $0x1b8] sm:$0xff]
        %v3467 = vld [vmem:[%s3410 + $0x1c0] sm:$0xff]
        %v3468 = vld [vmem:[%s3410 + $0x1c8] sm:$0xff]
        %v3469 = vld [vmem:[%s3410 + $0x1d0] sm:$0xff]
        %v3470 = vld [vmem:[%s3410 + $0x1d8] sm:$0xff]
        %v3471 = vld [vmem:[%s3410 + $0x1e0] sm:$0xff]
        %v3472 = vld [vmem:[%s3410 + $0x1e8] sm:$0xff]
        %v3473 = vld [vmem:[%s3410 + $0x1f0] sm:$0xff]
        %v3474 = vld [vmem:[%s3410 + $0x1f8] sm:$0xff]
        %v3475 = vld [vmem:[%s3410 + $0x200] sm:$0xff]
        %v3476 = vld [vmem:[%s3410 + $0x208] sm:$0xff]
        %v3477 = vld [vmem:[%s3410 + $0x210] sm:$0xff]
        %v3478 = vld [vmem:[%s3410 + $0x218] sm:$0xff]
        %v3479 = vld [vmem:[%s3410 + $0x220] sm:$0xff]
        %v3480 = vld [vmem:[%s3410 + $0x228] sm:$0xff]
        %v3481 = vld [vmem:[%s3410 + $0x230] sm:$0xff]
        %v3482 = vld [vmem:[%s3410 + $0x238] sm:$0xff]
        %v3483 = vld [vmem:[%s3410 + $0x240] sm:$0xff]
        %v3484 = vld [vmem:[%s3410 + $0x248] sm:$0xff]
        %v3485 = vld [vmem:[%s3410 + $0x250] sm:$0xff]
        %v3486 = vld [vmem:[%s3410 + $0x258] sm:$0xff]
        %v3487 = vld [vmem:[%s3410 + $0x260] sm:$0xff]
        %v3488 = vld [vmem:[%s3410 + $0x268] sm:$0xff]
        %v3489 = vld [vmem:[%s3410 + $0x270] sm:$0xff]
        %v3490 = vld [vmem:[%s3410 + $0x278] sm:$0xff]
        %v3491 = vld [vmem:[%s3410 + $0x280] sm:$0xff]
        %v3492 = vld [vmem:[%s3410 + $0x288] sm:$0xff]
        %v3493 = vld [vmem:[%s3410 + $0x290] sm:$0xff]
        %v3494 = vld [vmem:[%s3410 + $0x298] sm:$0xff]
        %v3495 = vld [vmem:[%s3410 + $0x2a0] sm:$0xff]
        %v3496 = vld [vmem:[%s3410 + $0x2a8] sm:$0xff]
        %v3497 = vld [vmem:[%s3410 + $0x2b0] sm:$0xff]
        %v3498 = vld [vmem:[%s3410 + $0x2b8] sm:$0xff]
        %v3499 = vld [vmem:[%s3410 + $0x2c0] sm:$0xff]
        %v3500 = vld [vmem:[%s3410 + $0x2c8] sm:$0xff]
        %v3501 = vld [vmem:[%s3410 + $0x2d0] sm:$0xff]
        %v3502 = vld [vmem:[%s3410 + $0x2d8] sm:$0xff]
        %v3503 = vld [vmem:[%s3410 + $0x2e0] sm:$0xff]
        %v3504 = vld [vmem:[%s3410 + $0x2e8] sm:$0xff]
        %v3505 = vld [vmem:[%s3410 + $0x2f0] sm:$0xff]
        %v3506 = vld [vmem:[%s3410 + $0x2f8] sm:$0xff]
        %v3507 = vld [vmem:[%s3410 + $0x300] sm:$0xff]
        %v3508 = vld [vmem:[%s3410 + $0x308] sm:$0xff]
        %v3509 = vld [vmem:[%s3410 + $0x310] sm:$0xff]
        %v3510 = vld [vmem:[%s3410 + $0x318] sm:$0xff]
        %v3511 = vld [vmem:[%s3410 + $0x320] sm:$0xff]
        %v3512 = vld [vmem:[%s3410 + $0x328] sm:$0xff]
        %v3513 = vld [vmem:[%s3410 + $0x330] sm:$0xff]
        %v3514 = vld [vmem:[%s3410 + $0x338] sm:$0xff]
        %v3515 = vld [vmem:[%s3410 + $0x340] sm:$0xff]
        %v3516 = vld [vmem:[%s3410 + $0x348] sm:$0xff]
        %v3517 = vld [vmem:[%s3410 + $0x350] sm:$0xff]
        %v3518 = vld [vmem:[%s3410 + $0x358] sm:$0xff]
        %v3519 = vld [vmem:[%s3410 + $0x360] sm:$0xff]
        %v3520 = vld [vmem:[%s3410 + $0x368] sm:$0xff]
        %v3521 = vld [vmem:[%s3410 + $0x370] sm:$0xff]
        %v3522 = vld [vmem:[%s3410 + $0x378] sm:$0xff]
        %v3523 = vld [vmem:[%s3410 + $0x380] sm:$0xff]
        %v3524 = vld [vmem:[%s3410 + $0x388] sm:$0xff]
        %v3525 = vld [vmem:[%s3410 + $0x390] sm:$0xff]
        %v3526 = vld [vmem:[%s3410 + $0x398] sm:$0xff]
        %v3527 = vld [vmem:[%s3410 + $0x3a0] sm:$0xff]
        %v3528 = vld [vmem:[%s3410 + $0x3a8] sm:$0xff]
        %v3529 = vld [vmem:[%s3410 + $0x3b0] sm:$0xff]
        %v3530 = vld [vmem:[%s3410 + $0x3b8] sm:$0xff]
        %v3531 = vld [vmem:[%s3410 + $0x3c0] sm:$0xff]
        %v3532 = vld [vmem:[%s3410 + $0x3c8] sm:$0xff]
        %v3533 = vld [vmem:[%s3410 + $0x3d0] sm:$0xff]
        %v3534 = vld [vmem:[%s3410 + $0x3d8] sm:$0xff]
        %v3535 = vld [vmem:[%s3410 + $0x3e0] sm:$0xff]
        %v3536 = vld [vmem:[%s3410 + $0x3e8] sm:$0xff]
        %v3537 = vld [vmem:[%s3410 + $0x3f0] sm:$0xff]
        %v3538 = vld [vmem:[%s3410 + $0x3f8] sm:$0xff]
        %3539 = vmatpush.msra.mxu0 %v3441
        %3540 = vmatpush.msra.mxu0 %v3439
        %3541 = vmatpush.msra.mxu0 %v3437
        %3542 = vmatpush.msra.mxu0 %v3435
        %3543 = vmatpush.msra.mxu0 %v3433
        %3544 = vmatpush.msra.mxu0 %v3431
        %3545 = vmatpush.msra.mxu0 %v3429
        %3546 = vmatpush.msra.mxu0 %v3427
        %3547 = vmatpush.msra.mxu0 %v3425
        %3548 = vmatpush.msra.mxu0 %v3423
        %3549 = vmatpush.msra.mxu0 %v3421
        %3550 = vmatpush.msra.mxu0 %v3419
        %3551 = vmatpush.msra.mxu0 %v3417
        %3552 = vmatpush.msra.mxu0 %v3415
        %3553 = vmatpush.msra.mxu0 %v3413
        %3554 = vmatpush.msra.mxu0 %v3411
        %3555 = vmatmul.f32.gmra.mxu0 %v3348
        %v3556 = vpop.f32.mrf.mxu0
        %v3557 = vadd.f32 0.0, %v3556
        %3558 = vdwg.mxu0
        %3559 = vmatpush.msra.mxu0 %v3473
        %3560 = vmatpush.msra.mxu0 %v3471
        %3561 = vmatpush.msra.mxu0 %v3469
        %3562 = vmatpush.msra.mxu0 %v3467
        %3563 = vmatpush.msra.mxu0 %v3465
        %3564 = vmatpush.msra.mxu0 %v3463
        %3565 = vmatpush.msra.mxu0 %v3461
        %3566 = vmatpush.msra.mxu0 %v3459
        %3567 = vmatpush.msra.mxu0 %v3457
        %3568 = vmatpush.msra.mxu0 %v3455
        %3569 = vmatpush.msra.mxu0 %v3453
        %3570 = vmatpush.msra.mxu0 %v3451
        %3571 = vmatpush.msra.mxu0 %v3449
        %3572 = vmatpush.msra.mxu0 %v3447
        %3573 = vmatpush.msra.mxu0 %v3445
        %3574 = vmatpush.msra.mxu0 %v3443
        %3575 = vmatmul.f32.gmra.mxu0 %v3368
        %v3576 = vpop.f32.mrf.mxu0
        %v3577 = vadd.f32 %v3557, %v3576
        %3578 = vdwg.mxu0
        %3579 = vmatpush.msra.mxu0 %v3505
        %3580 = vmatpush.msra.mxu0 %v3503
        %3581 = vmatpush.msra.mxu0 %v3501
        %3582 = vmatpush.msra.mxu0 %v3499
        %3583 = vmatpush.msra.mxu0 %v3497
        %3584 = vmatpush.msra.mxu0 %v3495
        %3585 = vmatpush.msra.mxu0 %v3493
        %3586 = vmatpush.msra.mxu0 %v3491
        %3587 = vmatpush.msra.mxu0 %v3489
        %3588 = vmatpush.msra.mxu0 %v3487
        %3589 = vmatpush.msra.mxu0 %v3485
        %3590 = vmatpush.msra.mxu0 %v3483
        %3591 = vmatpush.msra.mxu0 %v3481
        %3592 = vmatpush.msra.mxu0 %v3479
        %3593 = vmatpush.msra.mxu0 %v3477
        %3594 = vmatpush.msra.mxu0 %v3475
        %3595 = vmatmul.f32.gmra.mxu0 %v3388
        %v3596 = vpop.f32.mrf.mxu0
        %v3597 = vadd.f32 %v3577, %v3596
        %3598 = vdwg.mxu0
        %3599 = vmatpush.msra.mxu0 %v3537
        %3600 = vmatpush.msra.mxu0 %v3535
        %3601 = vmatpush.msra.mxu0 %v3533
        %3602 = vmatpush.msra.mxu0 %v3531
        %3603 = vmatpush.msra.mxu0 %v3529
        %3604 = vmatpush.msra.mxu0 %v3527
        %3605 = vmatpush.msra.mxu0 %v3525
        %3606 = vmatpush.msra.mxu0 %v3523
        %3607 = vmatpush.msra.mxu0 %v3521
        %3608 = vmatpush.msra.mxu0 %v3519
        %3609 = vmatpush.msra.mxu0 %v3517
        %3610 = vmatpush.msra.mxu0 %v3515
        %3611 = vmatpush.msra.mxu0 %v3513
        %3612 = vmatpush.msra.mxu0 %v3511
        %3613 = vmatpush.msra.mxu0 %v3509
        %3614 = vmatpush.msra.mxu0 %v3507
        %3615 = vmatmul.f32.gmra.mxu0 %v3408
        %v3616 = vpop.f32.mrf.mxu0
        %v3617 = vadd.f32 %v3597, %v3616
        %3618 = vdwg.mxu0
        %3619 = vmatpush.msra.mxu0 %v3442
        %3620 = vmatpush.msra.mxu0 %v3440
        %3621 = vmatpush.msra.mxu0 %v3438
        %3622 = vmatpush.msra.mxu0 %v3436
        %3623 = vmatpush.msra.mxu0 %v3434
        %3624 = vmatpush.msra.mxu0 %v3432
        %3625 = vmatpush.msra.mxu0 %v3430
        %3626 = vmatpush.msra.mxu0 %v3428
        %3627 = vmatpush.msra.mxu0 %v3426
        %3628 = vmatpush.msra.mxu0 %v3424
        %3629 = vmatpush.msra.mxu0 %v3422
        %3630 = vmatpush.msra.mxu0 %v3420
        %3631 = vmatpush.msra.mxu0 %v3418
        %3632 = vmatpush.msra.mxu0 %v3416
        %3633 = vmatpush.msra.mxu0 %v3414
        %3634 = vmatpush.msra.mxu0 %v3412
        %3635 = vmatmul.f32.gmra.mxu0 %v3348
        %v3636 = vpop.f32.mrf.mxu0
        %v3637 = vadd.f32 0.0, %v3636
        %3638 = vdwg.mxu0
        %3639 = vmatpush.msra.mxu0 %v3474
        %3640 = vmatpush.msra.mxu0 %v3472
        %3641 = vmatpush.msra.mxu0 %v3470
        %3642 = vmatpush.msra.mxu0 %v3468
        %3643 = vmatpush.msra.mxu0 %v3466
        %3644 = vmatpush.msra.mxu0 %v3464
        %3645 = vmatpush.msra.mxu0 %v3462
        %3646 = vmatpush.msra.mxu0 %v3460
        %3647 = vmatpush.msra.mxu0 %v3458
        %3648 = vmatpush.msra.mxu0 %v3456
        %3649 = vmatpush.msra.mxu0 %v3454
        %3650 = vmatpush.msra.mxu0 %v3452
        %3651 = vmatpush.msra.mxu0 %v3450
        %3652 = vmatpush.msra.mxu0 %v3448
        %3653 = vmatpush.msra.mxu0 %v3446
        %3654 = vmatpush.msra.mxu0 %v3444
        %3655 = vmatmul.f32.gmra.mxu0 %v3368
        %v3656 = vpop.f32.mrf.mxu0
        %v3657 = vadd.f32 %v3637, %v3656
        %3658 = vdwg.mxu0
        %3659 = vmatpush.msra.mxu0 %v3506
        %3660 = vmatpush.msra.mxu0 %v3504
        %3661 = vmatpush.msra.mxu0 %v3502
        %3662 = vmatpush.msra.mxu0 %v3500
        %3663 = vmatpush.msra.mxu0 %v3498
        %3664 = vmatpush.msra.mxu0 %v3496
        %3665 = vmatpush.msra.mxu0 %v3494
        %3666 = vmatpush.msra.mxu0 %v3492
        %3667 = vmatpush.msra.mxu0 %v3490
        %3668 = vmatpush.msra.mxu0 %v3488
        %3669 = vmatpush.msra.mxu0 %v3486
        %3670 = vmatpush.msra.mxu0 %v3484
        %3671 = vmatpush.msra.mxu0 %v3482
        %3672 = vmatpush.msra.mxu0 %v3480
        %3673 = vmatpush.msra.mxu0 %v3478
        %3674 = vmatpush.msra.mxu0 %v3476
        %3675 = vmatmul.f32.gmra.mxu0 %v3388
        %v3676 = vpop.f32.mrf.mxu0
        %v3677 = vadd.f32 %v3657, %v3676
        %3678 = vdwg.mxu0
        %3679 = vmatpush.msra.mxu0 %v3538
        %3680 = vmatpush.msra.mxu0 %v3536
        %3681 = vmatpush.msra.mxu0 %v3534
        %3682 = vmatpush.msra.mxu0 %v3532
        %3683 = vmatpush.msra.mxu0 %v3530
        %3684 = vmatpush.msra.mxu0 %v3528
        %3685 = vmatpush.msra.mxu0 %v3526
        %3686 = vmatpush.msra.mxu0 %v3524
        %3687 = vmatpush.msra.mxu0 %v3522
        %3688 = vmatpush.msra.mxu0 %v3520
        %3689 = vmatpush.msra.mxu0 %v3518
        %3690 = vmatpush.msra.mxu0 %v3516
        %3691 = vmatpush.msra.mxu0 %v3514
        %3692 = vmatpush.msra.mxu0 %v3512
        %3693 = vmatpush.msra.mxu0 %v3510
        %3694 = vmatpush.msra.mxu0 %v3508
        %3695 = vmatmul.f32.gmra.mxu0 %v3408
        %v3696 = vpop.f32.mrf.mxu0
        %v3697 = vadd.f32 %v3677, %v3696
        %3698 = vdwg.mxu0
        %v3699 = vadd.f32 %v3323, %v3617
        %v3700 = vadd.f32 %v3324, %v3697
        %s3701 = scalar_lea.vmem [#allocation7], 32
        %v3702 = vld [vmem:[%s3701] sm:$0xff]
        %v3704 = vsel %vm2203, %v3702, 0
        %3706 = vmatpush.msra.mxu0 0.0
        %3707 = vmatpush.msra.mxu0 0.0
        %3708 = vmatpush.msra.mxu0 0.0
        %3709 = vmatpush.msra.mxu0 0.0
        %3710 = vmatpush.msra.mxu0 0.0
        %3711 = vmatpush.msra.mxu0 0.0
        %3712 = vmatpush.msra.mxu0 0.0
        %3713 = vmatpush.msra.mxu0 0.0
        %3714 = vmatpush.msra.mxu0 0.0
        %3715 = vmatpush.msra.mxu0 0.0
        %3716 = vmatpush.msra.mxu0 0.0
        %3717 = vmatpush.msra.mxu0 0.0
        %3718 = vmatpush.msra.mxu0 0.0
        %3719 = vmatpush.msra.mxu0 0.0
        %3720 = vmatpush.msra.mxu0 %v2198
        %3721 = vmatpush.msra.mxu0 %v2194
        %3722 = vmatmul.f32.gmra.mxu0 %v3704
        %v3723 = vpop.f32.mrf.mxu0
        %v3724 = vadd.f32 0.0, %v3723
        %3725 = vdwg.mxu0
        %3726 = vmatpush.msra.mxu0 0.0
        %3727 = vmatpush.msra.mxu0 0.0
        %3728 = vmatpush.msra.mxu0 0.0
        %3729 = vmatpush.msra.mxu0 0.0
        %3730 = vmatpush.msra.mxu0 0.0
        %3731 = vmatpush.msra.mxu0 0.0
        %3732 = vmatpush.msra.mxu0 0.0
        %3733 = vmatpush.msra.mxu0 0.0
        %3734 = vmatpush.msra.mxu0 0.0
        %3735 = vmatpush.msra.mxu0 0.0
        %3736 = vmatpush.msra.mxu0 0.0
        %3737 = vmatpush.msra.mxu0 0.0
        %3738 = vmatpush.msra.mxu0 0.0
        %3739 = vmatpush.msra.mxu0 0.0
        %3740 = vmatpush.msra.mxu0 %v2199
        %3741 = vmatpush.msra.mxu0 %v2195
        %3742 = vmatmul.f32.gmra.mxu0 %v3704
        %v3743 = vpop.f32.mrf.mxu0
        %v3744 = vadd.f32 0.0, %v3743
        %3745 = vdwg.mxu0
        %3746 = vmatpush.msra.mxu0 0.0
        %3747 = vmatpush.msra.mxu0 0.0
        %3748 = vmatpush.msra.mxu0 0.0
        %3749 = vmatpush.msra.mxu0 0.0
        %3750 = vmatpush.msra.mxu0 0.0
        %3751 = vmatpush.msra.mxu0 0.0
        %3752 = vmatpush.msra.mxu0 0.0
        %3753 = vmatpush.msra.mxu0 0.0
        %3754 = vmatpush.msra.mxu0 0.0
        %3755 = vmatpush.msra.mxu0 0.0
        %3756 = vmatpush.msra.mxu0 0.0
        %3757 = vmatpush.msra.mxu0 0.0
        %3758 = vmatpush.msra.mxu0 0.0
        %3759 = vmatpush.msra.mxu0 0.0
        %3760 = vmatpush.msra.mxu0 %v2200
        %3761 = vmatpush.msra.mxu0 %v2196
        %3762 = vmatmul.f32.gmra.mxu0 %v3704
        %v3763 = vpop.f32.mrf.mxu0
        %v3764 = vadd.f32 0.0, %v3763
        %3765 = vdwg.mxu0
        %3766 = vmatpush.msra.mxu0 0.0
        %3767 = vmatpush.msra.mxu0 0.0
        %3768 = vmatpush.msra.mxu0 0.0
        %3769 = vmatpush.msra.mxu0 0.0
        %3770 = vmatpush.msra.mxu0 0.0
        %3771 = vmatpush.msra.mxu0 0.0
        %3772 = vmatpush.msra.mxu0 0.0
        %3773 = vmatpush.msra.mxu0 0.0
        %3774 = vmatpush.msra.mxu0 0.0
        %3775 = vmatpush.msra.mxu0 0.0
        %3776 = vmatpush.msra.mxu0 0.0
        %3777 = vmatpush.msra.mxu0 0.0
        %3778 = vmatpush.msra.mxu0 0.0
        %3779 = vmatpush.msra.mxu0 0.0
        %3780 = vmatpush.msra.mxu0 %v2201
        %3781 = vmatpush.msra.mxu0 %v2197
        %3782 = vmatmul.f32.gmra.mxu0 %v3704
        %v3783 = vpop.f32.mrf.mxu0
        %v3784 = vadd.f32 0.0, %v3783
        %3785 = vdwg.mxu0
        %s3786 = scalar_lea.vmem [#allocation9], 4096
        %v3787 = vld [vmem:[%s3786] sm:$0xff]
        %v3788 = vld [vmem:[%s3786 + $0x8] sm:$0xff]
        %v3789 = vld [vmem:[%s3786 + $0x10] sm:$0xff]
        %v3790 = vld [vmem:[%s3786 + $0x18] sm:$0xff]
        %v3791 = vld [vmem:[%s3786 + $0x20] sm:$0xff]
        %v3792 = vld [vmem:[%s3786 + $0x28] sm:$0xff]
        %v3793 = vld [vmem:[%s3786 + $0x30] sm:$0xff]
        %v3794 = vld [vmem:[%s3786 + $0x38] sm:$0xff]
        %v3795 = vld [vmem:[%s3786 + $0x40] sm:$0xff]
        %v3796 = vld [vmem:[%s3786 + $0x48] sm:$0xff]
        %v3797 = vld [vmem:[%s3786 + $0x50] sm:$0xff]
        %v3798 = vld [vmem:[%s3786 + $0x58] sm:$0xff]
        %v3799 = vld [vmem:[%s3786 + $0x60] sm:$0xff]
        %v3800 = vld [vmem:[%s3786 + $0x68] sm:$0xff]
        %v3801 = vld [vmem:[%s3786 + $0x70] sm:$0xff]
        %v3802 = vld [vmem:[%s3786 + $0x78] sm:$0xff]
        %v3803 = vld [vmem:[%s3786 + $0x80] sm:$0xff]
        %v3804 = vld [vmem:[%s3786 + $0x88] sm:$0xff]
        %v3805 = vld [vmem:[%s3786 + $0x90] sm:$0xff]
        %v3806 = vld [vmem:[%s3786 + $0x98] sm:$0xff]
        %v3807 = vld [vmem:[%s3786 + $0xa0] sm:$0xff]
        %v3808 = vld [vmem:[%s3786 + $0xa8] sm:$0xff]
        %v3809 = vld [vmem:[%s3786 + $0xb0] sm:$0xff]
        %v3810 = vld [vmem:[%s3786 + $0xb8] sm:$0xff]
        %v3811 = vld [vmem:[%s3786 + $0xc0] sm:$0xff]
        %v3812 = vld [vmem:[%s3786 + $0xc8] sm:$0xff]
        %v3813 = vld [vmem:[%s3786 + $0xd0] sm:$0xff]
        %v3814 = vld [vmem:[%s3786 + $0xd8] sm:$0xff]
        %v3815 = vld [vmem:[%s3786 + $0xe0] sm:$0xff]
        %v3816 = vld [vmem:[%s3786 + $0xe8] sm:$0xff]
        %v3817 = vld [vmem:[%s3786 + $0xf0] sm:$0xff]
        %v3818 = vld [vmem:[%s3786 + $0xf8] sm:$0xff]
        %v3819 = vld [vmem:[%s3786 + $0x100] sm:$0xff]
        %v3820 = vld [vmem:[%s3786 + $0x108] sm:$0xff]
        %v3821 = vld [vmem:[%s3786 + $0x110] sm:$0xff]
        %v3822 = vld [vmem:[%s3786 + $0x118] sm:$0xff]
        %v3823 = vld [vmem:[%s3786 + $0x120] sm:$0xff]
        %v3824 = vld [vmem:[%s3786 + $0x128] sm:$0xff]
        %v3825 = vld [vmem:[%s3786 + $0x130] sm:$0xff]
        %v3826 = vld [vmem:[%s3786 + $0x138] sm:$0xff]
        %v3827 = vld [vmem:[%s3786 + $0x140] sm:$0xff]
        %v3828 = vld [vmem:[%s3786 + $0x148] sm:$0xff]
        %v3829 = vld [vmem:[%s3786 + $0x150] sm:$0xff]
        %v3830 = vld [vmem:[%s3786 + $0x158] sm:$0xff]
        %v3831 = vld [vmem:[%s3786 + $0x160] sm:$0xff]
        %v3832 = vld [vmem:[%s3786 + $0x168] sm:$0xff]
        %v3833 = vld [vmem:[%s3786 + $0x170] sm:$0xff]
        %v3834 = vld [vmem:[%s3786 + $0x178] sm:$0xff]
        %v3835 = vld [vmem:[%s3786 + $0x180] sm:$0xff]
        %v3836 = vld [vmem:[%s3786 + $0x188] sm:$0xff]
        %v3837 = vld [vmem:[%s3786 + $0x190] sm:$0xff]
        %v3838 = vld [vmem:[%s3786 + $0x198] sm:$0xff]
        %v3839 = vld [vmem:[%s3786 + $0x1a0] sm:$0xff]
        %v3840 = vld [vmem:[%s3786 + $0x1a8] sm:$0xff]
        %v3841 = vld [vmem:[%s3786 + $0x1b0] sm:$0xff]
        %v3842 = vld [vmem:[%s3786 + $0x1b8] sm:$0xff]
        %v3843 = vld [vmem:[%s3786 + $0x1c0] sm:$0xff]
        %v3844 = vld [vmem:[%s3786 + $0x1c8] sm:$0xff]
        %v3845 = vld [vmem:[%s3786 + $0x1d0] sm:$0xff]
        %v3846 = vld [vmem:[%s3786 + $0x1d8] sm:$0xff]
        %v3847 = vld [vmem:[%s3786 + $0x1e0] sm:$0xff]
        %v3848 = vld [vmem:[%s3786 + $0x1e8] sm:$0xff]
        %v3849 = vld [vmem:[%s3786 + $0x1f0] sm:$0xff]
        %v3850 = vld [vmem:[%s3786 + $0x1f8] sm:$0xff]
        %v3851 = vld [vmem:[%s3786 + $0x200] sm:$0xff]
        %v3852 = vld [vmem:[%s3786 + $0x208] sm:$0xff]
        %v3853 = vld [vmem:[%s3786 + $0x210] sm:$0xff]
        %v3854 = vld [vmem:[%s3786 + $0x218] sm:$0xff]
        %v3855 = vld [vmem:[%s3786 + $0x220] sm:$0xff]
        %v3856 = vld [vmem:[%s3786 + $0x228] sm:$0xff]
        %v3857 = vld [vmem:[%s3786 + $0x230] sm:$0xff]
        %v3858 = vld [vmem:[%s3786 + $0x238] sm:$0xff]
        %v3859 = vld [vmem:[%s3786 + $0x240] sm:$0xff]
        %v3860 = vld [vmem:[%s3786 + $0x248] sm:$0xff]
        %v3861 = vld [vmem:[%s3786 + $0x250] sm:$0xff]
        %v3862 = vld [vmem:[%s3786 + $0x258] sm:$0xff]
        %v3863 = vld [vmem:[%s3786 + $0x260] sm:$0xff]
        %v3864 = vld [vmem:[%s3786 + $0x268] sm:$0xff]
        %v3865 = vld [vmem:[%s3786 + $0x270] sm:$0xff]
        %v3866 = vld [vmem:[%s3786 + $0x278] sm:$0xff]
        %v3867 = vld [vmem:[%s3786 + $0x280] sm:$0xff]
        %v3868 = vld [vmem:[%s3786 + $0x288] sm:$0xff]
        %v3869 = vld [vmem:[%s3786 + $0x290] sm:$0xff]
        %v3870 = vld [vmem:[%s3786 + $0x298] sm:$0xff]
        %v3871 = vld [vmem:[%s3786 + $0x2a0] sm:$0xff]
        %v3872 = vld [vmem:[%s3786 + $0x2a8] sm:$0xff]
        %v3873 = vld [vmem:[%s3786 + $0x2b0] sm:$0xff]
        %v3874 = vld [vmem:[%s3786 + $0x2b8] sm:$0xff]
        %v3875 = vld [vmem:[%s3786 + $0x2c0] sm:$0xff]
        %v3876 = vld [vmem:[%s3786 + $0x2c8] sm:$0xff]
        %v3877 = vld [vmem:[%s3786 + $0x2d0] sm:$0xff]
        %v3878 = vld [vmem:[%s3786 + $0x2d8] sm:$0xff]
        %v3879 = vld [vmem:[%s3786 + $0x2e0] sm:$0xff]
        %v3880 = vld [vmem:[%s3786 + $0x2e8] sm:$0xff]
        %v3881 = vld [vmem:[%s3786 + $0x2f0] sm:$0xff]
        %v3882 = vld [vmem:[%s3786 + $0x2f8] sm:$0xff]
        %v3883 = vld [vmem:[%s3786 + $0x300] sm:$0xff]
        %v3884 = vld [vmem:[%s3786 + $0x308] sm:$0xff]
        %v3885 = vld [vmem:[%s3786 + $0x310] sm:$0xff]
        %v3886 = vld [vmem:[%s3786 + $0x318] sm:$0xff]
        %v3887 = vld [vmem:[%s3786 + $0x320] sm:$0xff]
        %v3888 = vld [vmem:[%s3786 + $0x328] sm:$0xff]
        %v3889 = vld [vmem:[%s3786 + $0x330] sm:$0xff]
        %v3890 = vld [vmem:[%s3786 + $0x338] sm:$0xff]
        %v3891 = vld [vmem:[%s3786 + $0x340] sm:$0xff]
        %v3892 = vld [vmem:[%s3786 + $0x348] sm:$0xff]
        %v3893 = vld [vmem:[%s3786 + $0x350] sm:$0xff]
        %v3894 = vld [vmem:[%s3786 + $0x358] sm:$0xff]
        %v3895 = vld [vmem:[%s3786 + $0x360] sm:$0xff]
        %v3896 = vld [vmem:[%s3786 + $0x368] sm:$0xff]
        %v3897 = vld [vmem:[%s3786 + $0x370] sm:$0xff]
        %v3898 = vld [vmem:[%s3786 + $0x378] sm:$0xff]
        %v3899 = vld [vmem:[%s3786 + $0x380] sm:$0xff]
        %v3900 = vld [vmem:[%s3786 + $0x388] sm:$0xff]
        %v3901 = vld [vmem:[%s3786 + $0x390] sm:$0xff]
        %v3902 = vld [vmem:[%s3786 + $0x398] sm:$0xff]
        %v3903 = vld [vmem:[%s3786 + $0x3a0] sm:$0xff]
        %v3904 = vld [vmem:[%s3786 + $0x3a8] sm:$0xff]
        %v3905 = vld [vmem:[%s3786 + $0x3b0] sm:$0xff]
        %v3906 = vld [vmem:[%s3786 + $0x3b8] sm:$0xff]
        %v3907 = vld [vmem:[%s3786 + $0x3c0] sm:$0xff]
        %v3908 = vld [vmem:[%s3786 + $0x3c8] sm:$0xff]
        %v3909 = vld [vmem:[%s3786 + $0x3d0] sm:$0xff]
        %v3910 = vld [vmem:[%s3786 + $0x3d8] sm:$0xff]
        %v3911 = vld [vmem:[%s3786 + $0x3e0] sm:$0xff]
        %v3912 = vld [vmem:[%s3786 + $0x3e8] sm:$0xff]
        %v3913 = vld [vmem:[%s3786 + $0x3f0] sm:$0xff]
        %v3914 = vld [vmem:[%s3786 + $0x3f8] sm:$0xff]
        %3915 = vmatpush.msra.mxu0 %v3817
        %3916 = vmatpush.msra.mxu0 %v3815
        %3917 = vmatpush.msra.mxu0 %v3813
        %3918 = vmatpush.msra.mxu0 %v3811
        %3919 = vmatpush.msra.mxu0 %v3809
        %3920 = vmatpush.msra.mxu0 %v3807
        %3921 = vmatpush.msra.mxu0 %v3805
        %3922 = vmatpush.msra.mxu0 %v3803
        %3923 = vmatpush.msra.mxu0 %v3801
        %3924 = vmatpush.msra.mxu0 %v3799
        %3925 = vmatpush.msra.mxu0 %v3797
        %3926 = vmatpush.msra.mxu0 %v3795
        %3927 = vmatpush.msra.mxu0 %v3793
        %3928 = vmatpush.msra.mxu0 %v3791
        %3929 = vmatpush.msra.mxu0 %v3789
        %3930 = vmatpush.msra.mxu0 %v3787
        %3931 = vmatmul.f32.gmra.mxu0 %v3724
        %v3932 = vpop.f32.mrf.mxu0
        %v3933 = vadd.f32 0.0, %v3932
        %3934 = vdwg.mxu0
        %3935 = vmatpush.msra.mxu0 %v3849
        %3936 = vmatpush.msra.mxu0 %v3847
        %3937 = vmatpush.msra.mxu0 %v3845
        %3938 = vmatpush.msra.mxu0 %v3843
        %3939 = vmatpush.msra.mxu0 %v3841
        %3940 = vmatpush.msra.mxu0 %v3839
        %3941 = vmatpush.msra.mxu0 %v3837
        %3942 = vmatpush.msra.mxu0 %v3835
        %3943 = vmatpush.msra.mxu0 %v3833
        %3944 = vmatpush.msra.mxu0 %v3831
        %3945 = vmatpush.msra.mxu0 %v3829
        %3946 = vmatpush.msra.mxu0 %v3827
        %3947 = vmatpush.msra.mxu0 %v3825
        %3948 = vmatpush.msra.mxu0 %v3823
        %3949 = vmatpush.msra.mxu0 %v3821
        %3950 = vmatpush.msra.mxu0 %v3819
        %3951 = vmatmul.f32.gmra.mxu0 %v3744
        %v3952 = vpop.f32.mrf.mxu0
        %v3953 = vadd.f32 %v3933, %v3952
        %3954 = vdwg.mxu0
        %3955 = vmatpush.msra.mxu0 %v3881
        %3956 = vmatpush.msra.mxu0 %v3879
        %3957 = vmatpush.msra.mxu0 %v3877
        %3958 = vmatpush.msra.mxu0 %v3875
        %3959 = vmatpush.msra.mxu0 %v3873
        %3960 = vmatpush.msra.mxu0 %v3871
        %3961 = vmatpush.msra.mxu0 %v3869
        %3962 = vmatpush.msra.mxu0 %v3867
        %3963 = vmatpush.msra.mxu0 %v3865
        %3964 = vmatpush.msra.mxu0 %v3863
        %3965 = vmatpush.msra.mxu0 %v3861
        %3966 = vmatpush.msra.mxu0 %v3859
        %3967 = vmatpush.msra.mxu0 %v3857
        %3968 = vmatpush.msra.mxu0 %v3855
        %3969 = vmatpush.msra.mxu0 %v3853
        %3970 = vmatpush.msra.mxu0 %v3851
        %3971 = vmatmul.f32.gmra.mxu0 %v3764
        %v3972 = vpop.f32.mrf.mxu0
        %v3973 = vadd.f32 %v3953, %v3972
        %3974 = vdwg.mxu0
        %3975 = vmatpush.msra.mxu0 %v3913
        %3976 = vmatpush.msra.mxu0 %v3911
        %3977 = vmatpush.msra.mxu0 %v3909
        %3978 = vmatpush.msra.mxu0 %v3907
        %3979 = vmatpush.msra.mxu0 %v3905
        %3980 = vmatpush.msra.mxu0 %v3903
        %3981 = vmatpush.msra.mxu0 %v3901
        %3982 = vmatpush.msra.mxu0 %v3899
        %3983 = vmatpush.msra.mxu0 %v3897
        %3984 = vmatpush.msra.mxu0 %v3895
        %3985 = vmatpush.msra.mxu0 %v3893
        %3986 = vmatpush.msra.mxu0 %v3891
        %3987 = vmatpush.msra.mxu0 %v3889
        %3988 = vmatpush.msra.mxu0 %v3887
        %3989 = vmatpush.msra.mxu0 %v3885
        %3990 = vmatpush.msra.mxu0 %v3883
        %3991 = vmatmul.f32.gmra.mxu0 %v3784
        %v3992 = vpop.f32.mrf.mxu0
        %v3993 = vadd.f32 %v3973, %v3992
        %3994 = vdwg.mxu0
        %3995 = vmatpush.msra.mxu0 %v3818
        %3996 = vmatpush.msra.mxu0 %v3816
        %3997 = vmatpush.msra.mxu0 %v3814
        %3998 = vmatpush.msra.mxu0 %v3812
        %3999 = vmatpush.msra.mxu0 %v3810
        %4000 = vmatpush.msra.mxu0 %v3808
        %4001 = vmatpush.msra.mxu0 %v3806
        %4002 = vmatpush.msra.mxu0 %v3804
        %4003 = vmatpush.msra.mxu0 %v3802
        %4004 = vmatpush.msra.mxu0 %v3800
        %4005 = vmatpush.msra.mxu0 %v3798
        %4006 = vmatpush.msra.mxu0 %v3796
        %4007 = vmatpush.msra.mxu0 %v3794
        %4008 = vmatpush.msra.mxu0 %v3792
        %4009 = vmatpush.msra.mxu0 %v3790
        %4010 = vmatpush.msra.mxu0 %v3788
        %4011 = vmatmul.f32.gmra.mxu0 %v3724
        %v4012 = vpop.f32.mrf.mxu0
        %v4013 = vadd.f32 0.0, %v4012
        %4014 = vdwg.mxu0
        %4015 = vmatpush.msra.mxu0 %v3850
        %4016 = vmatpush.msra.mxu0 %v3848
        %4017 = vmatpush.msra.mxu0 %v3846
        %4018 = vmatpush.msra.mxu0 %v3844
        %4019 = vmatpush.msra.mxu0 %v3842
        %4020 = vmatpush.msra.mxu0 %v3840
        %4021 = vmatpush.msra.mxu0 %v3838
        %4022 = vmatpush.msra.mxu0 %v3836
        %4023 = vmatpush.msra.mxu0 %v3834
        %4024 = vmatpush.msra.mxu0 %v3832
        %4025 = vmatpush.msra.mxu0 %v3830
        %4026 = vmatpush.msra.mxu0 %v3828
        %4027 = vmatpush.msra.mxu0 %v3826
        %4028 = vmatpush.msra.mxu0 %v3824
        %4029 = vmatpush.msra.mxu0 %v3822
        %4030 = vmatpush.msra.mxu0 %v3820
        %4031 = vmatmul.f32.gmra.mxu0 %v3744
        %v4032 = vpop.f32.mrf.mxu0
        %v4033 = vadd.f32 %v4013, %v4032
        %4034 = vdwg.mxu0
        %4035 = vmatpush.msra.mxu0 %v3882
        %4036 = vmatpush.msra.mxu0 %v3880
        %4037 = vmatpush.msra.mxu0 %v3878
        %4038 = vmatpush.msra.mxu0 %v3876
        %4039 = vmatpush.msra.mxu0 %v3874
        %4040 = vmatpush.msra.mxu0 %v3872
        %4041 = vmatpush.msra.mxu0 %v3870
        %4042 = vmatpush.msra.mxu0 %v3868
        %4043 = vmatpush.msra.mxu0 %v3866
        %4044 = vmatpush.msra.mxu0 %v3864
        %4045 = vmatpush.msra.mxu0 %v3862
        %4046 = vmatpush.msra.mxu0 %v3860
        %4047 = vmatpush.msra.mxu0 %v3858
        %4048 = vmatpush.msra.mxu0 %v3856
        %4049 = vmatpush.msra.mxu0 %v3854
        %4050 = vmatpush.msra.mxu0 %v3852
        %4051 = vmatmul.f32.gmra.mxu0 %v3764
        %v4052 = vpop.f32.mrf.mxu0
        %v4053 = vadd.f32 %v4033, %v4052
        %4054 = vdwg.mxu0
        %4055 = vmatpush.msra.mxu0 %v3914
        %4056 = vmatpush.msra.mxu0 %v3912
        %4057 = vmatpush.msra.mxu0 %v3910
        %4058 = vmatpush.msra.mxu0 %v3908
        %4059 = vmatpush.msra.mxu0 %v3906
        %4060 = vmatpush.msra.mxu0 %v3904
        %4061 = vmatpush.msra.mxu0 %v3902
        %4062 = vmatpush.msra.mxu0 %v3900
        %4063 = vmatpush.msra.mxu0 %v3898
        %4064 = vmatpush.msra.mxu0 %v3896
        %4065 = vmatpush.msra.mxu0 %v3894
        %4066 = vmatpush.msra.mxu0 %v3892
        %4067 = vmatpush.msra.mxu0 %v3890
        %4068 = vmatpush.msra.mxu0 %v3888
        %4069 = vmatpush.msra.mxu0 %v3886
        %4070 = vmatpush.msra.mxu0 %v3884
        %4071 = vmatmul.f32.gmra.mxu0 %v3784
        %v4072 = vpop.f32.mrf.mxu0
        %v4073 = vadd.f32 %v4053, %v4072
        %4074 = vdwg.mxu0
        %v4075 = vadd.f32 %v3699, %v3993
        %v4076 = vadd.f32 %v3700, %v4073
        %v4077 = vld [vmem:[#allocation10] sm:$0x3]
        %v4079 = vperm.slane %v4077, 0
        %v4080 = vperm.slane %v4077, 1
        %v4083 = vadd.f32 %v4075, %v4079
        %v4084 = vadd.f32 %v4076, %v4080
        %v4085 = vmax.f32 %v4083, 0.0
        %v4086 = vmax.f32 %v4084, 0.0
        %v4087 = vld [vmem:[#allocation12] sm:$0xf]
        %vm4088 = vcmask 64512
        %v4090 = vsel %vm4088, %v4087, 0
        %4092 = vmatpush.msra.mxu0 0.0
        %4093 = vmatpush.msra.mxu0 0.0
        %4094 = vmatpush.msra.mxu0 0.0
        %4095 = vmatpush.msra.mxu0 0.0
        %4096 = vmatpush.msra.mxu0 0.0
        %4097 = vmatpush.msra.mxu0 0.0
        %4098 = vmatpush.msra.mxu0 0.0
        %4099 = vmatpush.msra.mxu0 0.0
        %4100 = vmatpush.msra.mxu0 0.0
        %4101 = vmatpush.msra.mxu0 0.0
        %4102 = vmatpush.msra.mxu0 0.0
        %4103 = vmatpush.msra.mxu0 0.0
        %4104 = vmatpush.msra.mxu0 0.0
        %4105 = vmatpush.msra.mxu0 0.0
        %4106 = vmatpush.msra.mxu0 0.0
        %4107 = vmatpush.msra.mxu0 %v4085
        %4108 = vmatmul.f32.gmra.mxu0 %v4090
        %v4109 = vpop.f32.mrf.mxu0
        %v4110 = vadd.f32 0.0, %v4109
        %4111 = vdwg.mxu0
        %4112 = vmatpush.msra.mxu0 0.0
        %4113 = vmatpush.msra.mxu0 0.0
        %4114 = vmatpush.msra.mxu0 0.0
        %4115 = vmatpush.msra.mxu0 0.0
        %4116 = vmatpush.msra.mxu0 0.0
        %4117 = vmatpush.msra.mxu0 0.0
        %4118 = vmatpush.msra.mxu0 0.0
        %4119 = vmatpush.msra.mxu0 0.0
        %4120 = vmatpush.msra.mxu0 0.0
        %4121 = vmatpush.msra.mxu0 0.0
        %4122 = vmatpush.msra.mxu0 0.0
        %4123 = vmatpush.msra.mxu0 0.0
        %4124 = vmatpush.msra.mxu0 0.0
        %4125 = vmatpush.msra.mxu0 0.0
        %4126 = vmatpush.msra.mxu0 0.0
        %4127 = vmatpush.msra.mxu0 %v4086
        %4128 = vmatmul.f32.gmra.mxu0 %v4090
        %v4129 = vpop.f32.mrf.mxu0
        %v4130 = vadd.f32 0.0, %v4129
        %4131 = vdwg.mxu0
        %v4132 = vld [vmem:[#allocation13] sm:$0xff]
        %v4133 = vld [vmem:[#allocation13 + $0x8] sm:$0xff]
        %v4134 = vld [vmem:[#allocation13 + $0x10] sm:$0xff]
        %v4135 = vld [vmem:[#allocation13 + $0x18] sm:$0xff]
        %v4136 = vld [vmem:[#allocation13 + $0x20] sm:$0xff]
        %v4137 = vld [vmem:[#allocation13 + $0x28] sm:$0xff]
        %v4138 = vld [vmem:[#allocation13 + $0x30] sm:$0xff]
        %v4139 = vld [vmem:[#allocation13 + $0x38] sm:$0xff]
        %v4140 = vld [vmem:[#allocation13 + $0x40] sm:$0xff]
        %v4141 = vld [vmem:[#allocation13 + $0x48] sm:$0xff]
        %v4142 = vld [vmem:[#allocation13 + $0x50] sm:$0xff]
        %v4143 = vld [vmem:[#allocation13 + $0x58] sm:$0xff]
        %v4144 = vld [vmem:[#allocation13 + $0x60] sm:$0xff]
        %v4145 = vld [vmem:[#allocation13 + $0x68] sm:$0xff]
        %v4146 = vld [vmem:[#allocation13 + $0x70] sm:$0xff]
        %v4147 = vld [vmem:[#allocation13 + $0x78] sm:$0xff]
        %v4148 = vld [vmem:[#allocation13 + $0x80] sm:$0xff]
        %v4149 = vld [vmem:[#allocation13 + $0x88] sm:$0xff]
        %v4150 = vld [vmem:[#allocation13 + $0x90] sm:$0xff]
        %v4151 = vld [vmem:[#allocation13 + $0x98] sm:$0xff]
        %v4152 = vld [vmem:[#allocation13 + $0xa0] sm:$0xff]
        %v4153 = vld [vmem:[#allocation13 + $0xa8] sm:$0xff]
        %v4154 = vld [vmem:[#allocation13 + $0xb0] sm:$0xff]
        %v4155 = vld [vmem:[#allocation13 + $0xb8] sm:$0xff]
        %v4156 = vld [vmem:[#allocation13 + $0xc0] sm:$0xff]
        %v4157 = vld [vmem:[#allocation13 + $0xc8] sm:$0xff]
        %v4158 = vld [vmem:[#allocation13 + $0xd0] sm:$0xff]
        %v4159 = vld [vmem:[#allocation13 + $0xd8] sm:$0xff]
        %v4160 = vld [vmem:[#allocation13 + $0xe0] sm:$0xff]
        %v4161 = vld [vmem:[#allocation13 + $0xe8] sm:$0xff]
        %v4162 = vld [vmem:[#allocation13 + $0xf0] sm:$0xff]
        %v4163 = vld [vmem:[#allocation13 + $0xf8] sm:$0xff]
        %s4164 = scalar_lea.vmem [#allocation12], 4
        %v4165 = vld [vmem:[%s4164] sm:$0xf]
        %v4167 = vsel %vm4088, %v4165, 0
        %4169 = vmatpush.msra.mxu0 0.0
        %4170 = vmatpush.msra.mxu0 0.0
        %4171 = vmatpush.msra.mxu0 0.0
        %4172 = vmatpush.msra.mxu0 0.0
        %4173 = vmatpush.msra.mxu0 0.0
        %4174 = vmatpush.msra.mxu0 0.0
        %4175 = vmatpush.msra.mxu0 0.0
        %4176 = vmatpush.msra.mxu0 0.0
        %4177 = vmatpush.msra.mxu0 0.0
        %4178 = vmatpush.msra.mxu0 0.0
        %4179 = vmatpush.msra.mxu0 0.0
        %4180 = vmatpush.msra.mxu0 0.0
        %4181 = vmatpush.msra.mxu0 0.0
        %4182 = vmatpush.msra.mxu0 0.0
        %4183 = vmatpush.msra.mxu0 0.0
        %4184 = vmatpush.msra.mxu0 %v4085
        %4185 = vmatmul.f32.gmra.mxu0 %v4167
        %v4186 = vpop.f32.mrf.mxu0
        %v4187 = vadd.f32 0.0, %v4186
        %4188 = vdwg.mxu0
        %4189 = vmatpush.msra.mxu0 0.0
        %4190 = vmatpush.msra.mxu0 0.0
        %4191 = vmatpush.msra.mxu0 0.0
        %4192 = vmatpush.msra.mxu0 0.0
        %4193 = vmatpush.msra.mxu0 0.0
        %4194 = vmatpush.msra.mxu0 0.0
        %4195 = vmatpush.msra.mxu0 0.0
        %4196 = vmatpush.msra.mxu0 0.0
        %4197 = vmatpush.msra.mxu0 0.0
        %4198 = vmatpush.msra.mxu0 0.0
        %4199 = vmatpush.msra.mxu0 0.0
        %4200 = vmatpush.msra.mxu0 0.0
        %4201 = vmatpush.msra.mxu0 0.0
        %4202 = vmatpush.msra.mxu0 0.0
        %4203 = vmatpush.msra.mxu0 0.0
        %4204 = vmatpush.msra.mxu0 %v4086
        %4205 = vmatmul.f32.gmra.mxu0 %v4167
        %v4206 = vpop.f32.mrf.mxu0
        %v4207 = vadd.f32 0.0, %v4206
        %4208 = vdwg.mxu0
        %s4209 = scalar_lea.vmem [#allocation13], 256
        %v4210 = vld [vmem:[%s4209] sm:$0xff]
        %v4211 = vld [vmem:[%s4209 + $0x8] sm:$0xff]
        %v4212 = vld [vmem:[%s4209 + $0x10] sm:$0xff]
        %v4213 = vld [vmem:[%s4209 + $0x18] sm:$0xff]
        %v4214 = vld [vmem:[%s4209 + $0x20] sm:$0xff]
        %v4215 = vld [vmem:[%s4209 + $0x28] sm:$0xff]
        %v4216 = vld [vmem:[%s4209 + $0x30] sm:$0xff]
        %v4217 = vld [vmem:[%s4209 + $0x38] sm:$0xff]
        %v4218 = vld [vmem:[%s4209 + $0x40] sm:$0xff]
        %v4219 = vld [vmem:[%s4209 + $0x48] sm:$0xff]
        %v4220 = vld [vmem:[%s4209 + $0x50] sm:$0xff]
        %v4221 = vld [vmem:[%s4209 + $0x58] sm:$0xff]
        %v4222 = vld [vmem:[%s4209 + $0x60] sm:$0xff]
        %v4223 = vld [vmem:[%s4209 + $0x68] sm:$0xff]
        %v4224 = vld [vmem:[%s4209 + $0x70] sm:$0xff]
        %v4225 = vld [vmem:[%s4209 + $0x78] sm:$0xff]
        %v4226 = vld [vmem:[%s4209 + $0x80] sm:$0xff]
        %v4227 = vld [vmem:[%s4209 + $0x88] sm:$0xff]
        %v4228 = vld [vmem:[%s4209 + $0x90] sm:$0xff]
        %v4229 = vld [vmem:[%s4209 + $0x98] sm:$0xff]
        %v4230 = vld [vmem:[%s4209 + $0xa0] sm:$0xff]
        %v4231 = vld [vmem:[%s4209 + $0xa8] sm:$0xff]
        %v4232 = vld [vmem:[%s4209 + $0xb0] sm:$0xff]
        %v4233 = vld [vmem:[%s4209 + $0xb8] sm:$0xff]
        %v4234 = vld [vmem:[%s4209 + $0xc0] sm:$0xff]
        %v4235 = vld [vmem:[%s4209 + $0xc8] sm:$0xff]
        %v4236 = vld [vmem:[%s4209 + $0xd0] sm:$0xff]
        %v4237 = vld [vmem:[%s4209 + $0xd8] sm:$0xff]
        %v4238 = vld [vmem:[%s4209 + $0xe0] sm:$0xff]
        %v4239 = vld [vmem:[%s4209 + $0xe8] sm:$0xff]
        %v4240 = vld [vmem:[%s4209 + $0xf0] sm:$0xff]
        %v4241 = vld [vmem:[%s4209 + $0xf8] sm:$0xff]
        %4242 = vmatpush.msra.mxu0 %v4225
        %4243 = vmatpush.msra.mxu0 %v4224
        %4244 = vmatpush.msra.mxu0 %v4223
        %4245 = vmatpush.msra.mxu0 %v4222
        %4246 = vmatpush.msra.mxu0 %v4221
        %4247 = vmatpush.msra.mxu0 %v4220
        %4248 = vmatpush.msra.mxu0 %v4219
        %4249 = vmatpush.msra.mxu0 %v4218
        %4250 = vmatpush.msra.mxu0 %v4217
        %4251 = vmatpush.msra.mxu0 %v4216
        %4252 = vmatpush.msra.mxu0 %v4215
        %4253 = vmatpush.msra.mxu0 %v4214
        %4254 = vmatpush.msra.mxu0 %v4213
        %4255 = vmatpush.msra.mxu0 %v4212
        %4256 = vmatpush.msra.mxu0 %v4211
        %4257 = vmatpush.msra.mxu0 %v4210
        %4258 = vmatmul.f32.gmra.mxu0 %v4187
        %v4259 = vpop.f32.mrf.mxu0
        %v4260 = vadd.f32 0.0, %v4259
        %4261 = vdwg.mxu0
        %4262 = vmatpush.msra.mxu0 %v4241
        %4263 = vmatpush.msra.mxu0 %v4240
        %4264 = vmatpush.msra.mxu0 %v4239
        %4265 = vmatpush.msra.mxu0 %v4238
        %4266 = vmatpush.msra.mxu0 %v4237
        %4267 = vmatpush.msra.mxu0 %v4236
        %4268 = vmatpush.msra.mxu0 %v4235
        %4269 = vmatpush.msra.mxu0 %v4234
        %4270 = vmatpush.msra.mxu0 %v4233
        %4271 = vmatpush.msra.mxu0 %v4232
        %4272 = vmatpush.msra.mxu0 %v4231
        %4273 = vmatpush.msra.mxu0 %v4230
        %4274 = vmatpush.msra.mxu0 %v4229
        %4275 = vmatpush.msra.mxu0 %v4228
        %4276 = vmatpush.msra.mxu0 %v4227
        %4277 = vmatpush.msra.mxu0 %v4226
        %4278 = vmatmul.f32.gmra.mxu0 %v4207
        %v4279 = vpop.f32.mrf.mxu0
        %v4280 = vadd.f32 %v4260, %v4279
        %4281 = vdwg.mxu0
        %4282 = vmatpush.msra.mxu0 %v4147
        %4283 = vmatpush.msra.mxu0 %v4146
        %4284 = vmatpush.msra.mxu0 %v4145
        %4285 = vmatpush.msra.mxu0 %v4144
        %4286 = vmatpush.msra.mxu0 %v4143
        %4287 = vmatpush.msra.mxu0 %v4142
        %4288 = vmatpush.msra.mxu0 %v4141
        %4289 = vmatpush.msra.mxu0 %v4140
        %4290 = vmatpush.msra.mxu0 %v4139
        %4291 = vmatpush.msra.mxu0 %v4138
        %4292 = vmatpush.msra.mxu0 %v4137
        %4293 = vmatpush.msra.mxu0 %v4136
        %4294 = vmatpush.msra.mxu0 %v4135
        %4295 = vmatpush.msra.mxu0 %v4134
        %4296 = vmatpush.msra.mxu0 %v4133
        %4297 = vmatpush.msra.mxu0 %v4132
        %4298 = vmatmul.f32.gmra.mxu0 %v4110
        %v4299 = vpop.f32.mrf.mxu0
        %v4300 = vadd.f32 %v4280, %v4299
        %4301 = vdwg.mxu0
        %4302 = vmatpush.msra.mxu0 %v4163
        %4303 = vmatpush.msra.mxu0 %v4162
        %4304 = vmatpush.msra.mxu0 %v4161
        %4305 = vmatpush.msra.mxu0 %v4160
        %4306 = vmatpush.msra.mxu0 %v4159
        %4307 = vmatpush.msra.mxu0 %v4158
        %4308 = vmatpush.msra.mxu0 %v4157
        %4309 = vmatpush.msra.mxu0 %v4156
        %4310 = vmatpush.msra.mxu0 %v4155
        %4311 = vmatpush.msra.mxu0 %v4154
        %4312 = vmatpush.msra.mxu0 %v4153
        %4313 = vmatpush.msra.mxu0 %v4152
        %4314 = vmatpush.msra.mxu0 %v4151
        %4315 = vmatpush.msra.mxu0 %v4150
        %4316 = vmatpush.msra.mxu0 %v4149
        %4317 = vmatpush.msra.mxu0 %v4148
        %4318 = vmatmul.f32.gmra.mxu0 %v4130
        %v4319 = vpop.f32.mrf.mxu0
        %v4320 = vadd.f32 %v4300, %v4319
        %4321 = vdwg.mxu0
        %s4322 = scalar_lea.vmem [#allocation12], 8
        %v4323 = vld [vmem:[%s4322] sm:$0xf]
        %v4325 = vsel %vm4088, %v4323, 0
        %4327 = vmatpush.msra.mxu0 0.0
        %4328 = vmatpush.msra.mxu0 0.0
        %4329 = vmatpush.msra.mxu0 0.0
        %4330 = vmatpush.msra.mxu0 0.0
        %4331 = vmatpush.msra.mxu0 0.0
        %4332 = vmatpush.msra.mxu0 0.0
        %4333 = vmatpush.msra.mxu0 0.0
        %4334 = vmatpush.msra.mxu0 0.0
        %4335 = vmatpush.msra.mxu0 0.0
        %4336 = vmatpush.msra.mxu0 0.0
        %4337 = vmatpush.msra.mxu0 0.0
        %4338 = vmatpush.msra.mxu0 0.0
        %4339 = vmatpush.msra.mxu0 0.0
        %4340 = vmatpush.msra.mxu0 0.0
        %4341 = vmatpush.msra.mxu0 0.0
        %4342 = vmatpush.msra.mxu0 %v4085
        %4343 = vmatmul.f32.gmra.mxu0 %v4325
        %v4344 = vpop.f32.mrf.mxu0
        %v4345 = vadd.f32 0.0, %v4344
        %4346 = vdwg.mxu0
        %4347 = vmatpush.msra.mxu0 0.0
        %4348 = vmatpush.msra.mxu0 0.0
        %4349 = vmatpush.msra.mxu0 0.0
        %4350 = vmatpush.msra.mxu0 0.0
        %4351 = vmatpush.msra.mxu0 0.0
        %4352 = vmatpush.msra.mxu0 0.0
        %4353 = vmatpush.msra.mxu0 0.0
        %4354 = vmatpush.msra.mxu0 0.0
        %4355 = vmatpush.msra.mxu0 0.0
        %4356 = vmatpush.msra.mxu0 0.0
        %4357 = vmatpush.msra.mxu0 0.0
        %4358 = vmatpush.msra.mxu0 0.0
        %4359 = vmatpush.msra.mxu0 0.0
        %4360 = vmatpush.msra.mxu0 0.0
        %4361 = vmatpush.msra.mxu0 0.0
        %4362 = vmatpush.msra.mxu0 %v4086
        %4363 = vmatmul.f32.gmra.mxu0 %v4325
        %v4364 = vpop.f32.mrf.mxu0
        %v4365 = vadd.f32 0.0, %v4364
        %4366 = vdwg.mxu0
        %s4367 = scalar_lea.vmem [#allocation13], 512
        %v4368 = vld [vmem:[%s4367] sm:$0xff]
        %v4369 = vld [vmem:[%s4367 + $0x8] sm:$0xff]
        %v4370 = vld [vmem:[%s4367 + $0x10] sm:$0xff]
        %v4371 = vld [vmem:[%s4367 + $0x18] sm:$0xff]
        %v4372 = vld [vmem:[%s4367 + $0x20] sm:$0xff]
        %v4373 = vld [vmem:[%s4367 + $0x28] sm:$0xff]
        %v4374 = vld [vmem:[%s4367 + $0x30] sm:$0xff]
        %v4375 = vld [vmem:[%s4367 + $0x38] sm:$0xff]
        %v4376 = vld [vmem:[%s4367 + $0x40] sm:$0xff]
        %v4377 = vld [vmem:[%s4367 + $0x48] sm:$0xff]
        %v4378 = vld [vmem:[%s4367 + $0x50] sm:$0xff]
        %v4379 = vld [vmem:[%s4367 + $0x58] sm:$0xff]
        %v4380 = vld [vmem:[%s4367 + $0x60] sm:$0xff]
        %v4381 = vld [vmem:[%s4367 + $0x68] sm:$0xff]
        %v4382 = vld [vmem:[%s4367 + $0x70] sm:$0xff]
        %v4383 = vld [vmem:[%s4367 + $0x78] sm:$0xff]
        %v4384 = vld [vmem:[%s4367 + $0x80] sm:$0xff]
        %v4385 = vld [vmem:[%s4367 + $0x88] sm:$0xff]
        %v4386 = vld [vmem:[%s4367 + $0x90] sm:$0xff]
        %v4387 = vld [vmem:[%s4367 + $0x98] sm:$0xff]
        %v4388 = vld [vmem:[%s4367 + $0xa0] sm:$0xff]
        %v4389 = vld [vmem:[%s4367 + $0xa8] sm:$0xff]
        %v4390 = vld [vmem:[%s4367 + $0xb0] sm:$0xff]
        %v4391 = vld [vmem:[%s4367 + $0xb8] sm:$0xff]
        %v4392 = vld [vmem:[%s4367 + $0xc0] sm:$0xff]
        %v4393 = vld [vmem:[%s4367 + $0xc8] sm:$0xff]
        %v4394 = vld [vmem:[%s4367 + $0xd0] sm:$0xff]
        %v4395 = vld [vmem:[%s4367 + $0xd8] sm:$0xff]
        %v4396 = vld [vmem:[%s4367 + $0xe0] sm:$0xff]
        %v4397 = vld [vmem:[%s4367 + $0xe8] sm:$0xff]
        %v4398 = vld [vmem:[%s4367 + $0xf0] sm:$0xff]
        %v4399 = vld [vmem:[%s4367 + $0xf8] sm:$0xff]
        %4400 = vmatpush.msra.mxu0 %v4383
        %4401 = vmatpush.msra.mxu0 %v4382
        %4402 = vmatpush.msra.mxu0 %v4381
        %4403 = vmatpush.msra.mxu0 %v4380
        %4404 = vmatpush.msra.mxu0 %v4379
        %4405 = vmatpush.msra.mxu0 %v4378
        %4406 = vmatpush.msra.mxu0 %v4377
        %4407 = vmatpush.msra.mxu0 %v4376
        %4408 = vmatpush.msra.mxu0 %v4375
        %4409 = vmatpush.msra.mxu0 %v4374
        %4410 = vmatpush.msra.mxu0 %v4373
        %4411 = vmatpush.msra.mxu0 %v4372
        %4412 = vmatpush.msra.mxu0 %v4371
        %4413 = vmatpush.msra.mxu0 %v4370
        %4414 = vmatpush.msra.mxu0 %v4369
        %4415 = vmatpush.msra.mxu0 %v4368
        %4416 = vmatmul.f32.gmra.mxu0 %v4345
        %v4417 = vpop.f32.mrf.mxu0
        %v4418 = vadd.f32 0.0, %v4417
        %4419 = vdwg.mxu0
        %4420 = vmatpush.msra.mxu0 %v4399
        %4421 = vmatpush.msra.mxu0 %v4398
        %4422 = vmatpush.msra.mxu0 %v4397
        %4423 = vmatpush.msra.mxu0 %v4396
        %4424 = vmatpush.msra.mxu0 %v4395
        %4425 = vmatpush.msra.mxu0 %v4394
        %4426 = vmatpush.msra.mxu0 %v4393
        %4427 = vmatpush.msra.mxu0 %v4392
        %4428 = vmatpush.msra.mxu0 %v4391
        %4429 = vmatpush.msra.mxu0 %v4390
        %4430 = vmatpush.msra.mxu0 %v4389
        %4431 = vmatpush.msra.mxu0 %v4388
        %4432 = vmatpush.msra.mxu0 %v4387
        %4433 = vmatpush.msra.mxu0 %v4386
        %4434 = vmatpush.msra.mxu0 %v4385
        %4435 = vmatpush.msra.mxu0 %v4384
        %4436 = vmatmul.f32.gmra.mxu0 %v4365
        %v4437 = vpop.f32.mrf.mxu0
        %v4438 = vadd.f32 %v4418, %v4437
        %4439 = vdwg.mxu0
        %v4440 = vadd.f32 %v4320, %v4438
        %s4441 = scalar_lea.vmem [#allocation12], 12
        %v4442 = vld [vmem:[%s4441] sm:$0xf]
        %v4444 = vsel %vm4088, %v4442, 0
        %4446 = vmatpush.msra.mxu0 0.0
        %4447 = vmatpush.msra.mxu0 0.0
        %4448 = vmatpush.msra.mxu0 0.0
        %4449 = vmatpush.msra.mxu0 0.0
        %4450 = vmatpush.msra.mxu0 0.0
        %4451 = vmatpush.msra.mxu0 0.0
        %4452 = vmatpush.msra.mxu0 0.0
        %4453 = vmatpush.msra.mxu0 0.0
        %4454 = vmatpush.msra.mxu0 0.0
        %4455 = vmatpush.msra.mxu0 0.0
        %4456 = vmatpush.msra.mxu0 0.0
        %4457 = vmatpush.msra.mxu0 0.0
        %4458 = vmatpush.msra.mxu0 0.0
        %4459 = vmatpush.msra.mxu0 0.0
        %4460 = vmatpush.msra.mxu0 0.0
        %4461 = vmatpush.msra.mxu0 %v4085
        %4462 = vmatmul.f32.gmra.mxu0 %v4444
        %v4463 = vpop.f32.mrf.mxu0
        %v4464 = vadd.f32 0.0, %v4463
        %4465 = vdwg.mxu0
        %4466 = vmatpush.msra.mxu0 0.0
        %4467 = vmatpush.msra.mxu0 0.0
        %4468 = vmatpush.msra.mxu0 0.0
        %4469 = vmatpush.msra.mxu0 0.0
        %4470 = vmatpush.msra.mxu0 0.0
        %4471 = vmatpush.msra.mxu0 0.0
        %4472 = vmatpush.msra.mxu0 0.0
        %4473 = vmatpush.msra.mxu0 0.0
        %4474 = vmatpush.msra.mxu0 0.0
        %4475 = vmatpush.msra.mxu0 0.0
        %4476 = vmatpush.msra.mxu0 0.0
        %4477 = vmatpush.msra.mxu0 0.0
        %4478 = vmatpush.msra.mxu0 0.0
        %4479 = vmatpush.msra.mxu0 0.0
        %4480 = vmatpush.msra.mxu0 0.0
        %4481 = vmatpush.msra.mxu0 %v4086
        %4482 = vmatmul.f32.gmra.mxu0 %v4444
        %v4483 = vpop.f32.mrf.mxu0
        %v4484 = vadd.f32 0.0, %v4483
        %4485 = vdwg.mxu0
        %s4486 = scalar_lea.vmem [#allocation13], 768
        %v4487 = vld [vmem:[%s4486] sm:$0xff]
        %v4488 = vld [vmem:[%s4486 + $0x8] sm:$0xff]
        %v4489 = vld [vmem:[%s4486 + $0x10] sm:$0xff]
        %v4490 = vld [vmem:[%s4486 + $0x18] sm:$0xff]
        %v4491 = vld [vmem:[%s4486 + $0x20] sm:$0xff]
        %v4492 = vld [vmem:[%s4486 + $0x28] sm:$0xff]
        %v4493 = vld [vmem:[%s4486 + $0x30] sm:$0xff]
        %v4494 = vld [vmem:[%s4486 + $0x38] sm:$0xff]
        %v4495 = vld [vmem:[%s4486 + $0x40] sm:$0xff]
        %v4496 = vld [vmem:[%s4486 + $0x48] sm:$0xff]
        %v4497 = vld [vmem:[%s4486 + $0x50] sm:$0xff]
        %v4498 = vld [vmem:[%s4486 + $0x58] sm:$0xff]
        %v4499 = vld [vmem:[%s4486 + $0x60] sm:$0xff]
        %v4500 = vld [vmem:[%s4486 + $0x68] sm:$0xff]
        %v4501 = vld [vmem:[%s4486 + $0x70] sm:$0xff]
        %v4502 = vld [vmem:[%s4486 + $0x78] sm:$0xff]
        %v4503 = vld [vmem:[%s4486 + $0x80] sm:$0xff]
        %v4504 = vld [vmem:[%s4486 + $0x88] sm:$0xff]
        %v4505 = vld [vmem:[%s4486 + $0x90] sm:$0xff]
        %v4506 = vld [vmem:[%s4486 + $0x98] sm:$0xff]
        %v4507 = vld [vmem:[%s4486 + $0xa0] sm:$0xff]
        %v4508 = vld [vmem:[%s4486 + $0xa8] sm:$0xff]
        %v4509 = vld [vmem:[%s4486 + $0xb0] sm:$0xff]
        %v4510 = vld [vmem:[%s4486 + $0xb8] sm:$0xff]
        %v4511 = vld [vmem:[%s4486 + $0xc0] sm:$0xff]
        %v4512 = vld [vmem:[%s4486 + $0xc8] sm:$0xff]
        %v4513 = vld [vmem:[%s4486 + $0xd0] sm:$0xff]
        %v4514 = vld [vmem:[%s4486 + $0xd8] sm:$0xff]
        %v4515 = vld [vmem:[%s4486 + $0xe0] sm:$0xff]
        %v4516 = vld [vmem:[%s4486 + $0xe8] sm:$0xff]
        %v4517 = vld [vmem:[%s4486 + $0xf0] sm:$0xff]
        %v4518 = vld [vmem:[%s4486 + $0xf8] sm:$0xff]
        %4519 = vmatpush.msra.mxu0 %v4502
        %4520 = vmatpush.msra.mxu0 %v4501
        %4521 = vmatpush.msra.mxu0 %v4500
        %4522 = vmatpush.msra.mxu0 %v4499
        %4523 = vmatpush.msra.mxu0 %v4498
        %4524 = vmatpush.msra.mxu0 %v4497
        %4525 = vmatpush.msra.mxu0 %v4496
        %4526 = vmatpush.msra.mxu0 %v4495
        %4527 = vmatpush.msra.mxu0 %v4494
        %4528 = vmatpush.msra.mxu0 %v4493
        %4529 = vmatpush.msra.mxu0 %v4492
        %4530 = vmatpush.msra.mxu0 %v4491
        %4531 = vmatpush.msra.mxu0 %v4490
        %4532 = vmatpush.msra.mxu0 %v4489
        %4533 = vmatpush.msra.mxu0 %v4488
        %4534 = vmatpush.msra.mxu0 %v4487
        %4535 = vmatmul.f32.gmra.mxu0 %v4464
        %v4536 = vpop.f32.mrf.mxu0
        %v4537 = vadd.f32 0.0, %v4536
        %4538 = vdwg.mxu0
        %4539 = vmatpush.msra.mxu0 %v4518
        %4540 = vmatpush.msra.mxu0 %v4517
        %4541 = vmatpush.msra.mxu0 %v4516
        %4542 = vmatpush.msra.mxu0 %v4515
        %4543 = vmatpush.msra.mxu0 %v4514
        %4544 = vmatpush.msra.mxu0 %v4513
        %4545 = vmatpush.msra.mxu0 %v4512
        %4546 = vmatpush.msra.mxu0 %v4511
        %4547 = vmatpush.msra.mxu0 %v4510
        %4548 = vmatpush.msra.mxu0 %v4509
        %4549 = vmatpush.msra.mxu0 %v4508
        %4550 = vmatpush.msra.mxu0 %v4507
        %4551 = vmatpush.msra.mxu0 %v4506
        %4552 = vmatpush.msra.mxu0 %v4505
        %4553 = vmatpush.msra.mxu0 %v4504
        %4554 = vmatpush.msra.mxu0 %v4503
        %4555 = vmatmul.f32.gmra.mxu0 %v4484
        %v4556 = vpop.f32.mrf.mxu0
        %v4557 = vadd.f32 %v4537, %v4556
        %4558 = vdwg.mxu0
        %v4559 = vadd.f32 %v4440, %v4557
        %s4560 = scalar_lea.vmem [#allocation12], 16
        %v4561 = vld [vmem:[%s4560] sm:$0xf]
        %v4563 = vsel %vm4088, %v4561, 0
        %4565 = vmatpush.msra.mxu0 0.0
        %4566 = vmatpush.msra.mxu0 0.0
        %4567 = vmatpush.msra.mxu0 0.0
        %4568 = vmatpush.msra.mxu0 0.0
        %4569 = vmatpush.msra.mxu0 0.0
        %4570 = vmatpush.msra.mxu0 0.0
        %4571 = vmatpush.msra.mxu0 0.0
        %4572 = vmatpush.msra.mxu0 0.0
        %4573 = vmatpush.msra.mxu0 0.0
        %4574 = vmatpush.msra.mxu0 0.0
        %4575 = vmatpush.msra.mxu0 0.0
        %4576 = vmatpush.msra.mxu0 0.0
        %4577 = vmatpush.msra.mxu0 0.0
        %4578 = vmatpush.msra.mxu0 0.0
        %4579 = vmatpush.msra.mxu0 0.0
        %4580 = vmatpush.msra.mxu0 %v4085
        %4581 = vmatmul.f32.gmra.mxu0 %v4563
        %v4582 = vpop.f32.mrf.mxu0
        %v4583 = vadd.f32 0.0, %v4582
        %4584 = vdwg.mxu0
        %4585 = vmatpush.msra.mxu0 0.0
        %4586 = vmatpush.msra.mxu0 0.0
        %4587 = vmatpush.msra.mxu0 0.0
        %4588 = vmatpush.msra.mxu0 0.0
        %4589 = vmatpush.msra.mxu0 0.0
        %4590 = vmatpush.msra.mxu0 0.0
        %4591 = vmatpush.msra.mxu0 0.0
        %4592 = vmatpush.msra.mxu0 0.0
        %4593 = vmatpush.msra.mxu0 0.0
        %4594 = vmatpush.msra.mxu0 0.0
        %4595 = vmatpush.msra.mxu0 0.0
        %4596 = vmatpush.msra.mxu0 0.0
        %4597 = vmatpush.msra.mxu0 0.0
        %4598 = vmatpush.msra.mxu0 0.0
        %4599 = vmatpush.msra.mxu0 0.0
        %4600 = vmatpush.msra.mxu0 %v4086
        %4601 = vmatmul.f32.gmra.mxu0 %v4563
        %v4602 = vpop.f32.mrf.mxu0
        %v4603 = vadd.f32 0.0, %v4602
        %4604 = vdwg.mxu0
        %s4605 = scalar_lea.vmem [#allocation13], 1024
        %v4606 = vld [vmem:[%s4605] sm:$0xff]
        %v4607 = vld [vmem:[%s4605 + $0x8] sm:$0xff]
        %v4608 = vld [vmem:[%s4605 + $0x10] sm:$0xff]
        %v4609 = vld [vmem:[%s4605 + $0x18] sm:$0xff]
        %v4610 = vld [vmem:[%s4605 + $0x20] sm:$0xff]
        %v4611 = vld [vmem:[%s4605 + $0x28] sm:$0xff]
        %v4612 = vld [vmem:[%s4605 + $0x30] sm:$0xff]
        %v4613 = vld [vmem:[%s4605 + $0x38] sm:$0xff]
        %v4614 = vld [vmem:[%s4605 + $0x40] sm:$0xff]
        %v4615 = vld [vmem:[%s4605 + $0x48] sm:$0xff]
        %v4616 = vld [vmem:[%s4605 + $0x50] sm:$0xff]
        %v4617 = vld [vmem:[%s4605 + $0x58] sm:$0xff]
        %v4618 = vld [vmem:[%s4605 + $0x60] sm:$0xff]
        %v4619 = vld [vmem:[%s4605 + $0x68] sm:$0xff]
        %v4620 = vld [vmem:[%s4605 + $0x70] sm:$0xff]
        %v4621 = vld [vmem:[%s4605 + $0x78] sm:$0xff]
        %v4622 = vld [vmem:[%s4605 + $0x80] sm:$0xff]
        %v4623 = vld [vmem:[%s4605 + $0x88] sm:$0xff]
        %v4624 = vld [vmem:[%s4605 + $0x90] sm:$0xff]
        %v4625 = vld [vmem:[%s4605 + $0x98] sm:$0xff]
        %v4626 = vld [vmem:[%s4605 + $0xa0] sm:$0xff]
        %v4627 = vld [vmem:[%s4605 + $0xa8] sm:$0xff]
        %v4628 = vld [vmem:[%s4605 + $0xb0] sm:$0xff]
        %v4629 = vld [vmem:[%s4605 + $0xb8] sm:$0xff]
        %v4630 = vld [vmem:[%s4605 + $0xc0] sm:$0xff]
        %v4631 = vld [vmem:[%s4605 + $0xc8] sm:$0xff]
        %v4632 = vld [vmem:[%s4605 + $0xd0] sm:$0xff]
        %v4633 = vld [vmem:[%s4605 + $0xd8] sm:$0xff]
        %v4634 = vld [vmem:[%s4605 + $0xe0] sm:$0xff]
        %v4635 = vld [vmem:[%s4605 + $0xe8] sm:$0xff]
        %v4636 = vld [vmem:[%s4605 + $0xf0] sm:$0xff]
        %v4637 = vld [vmem:[%s4605 + $0xf8] sm:$0xff]
        %4638 = vmatpush.msra.mxu0 %v4621
        %4639 = vmatpush.msra.mxu0 %v4620
        %4640 = vmatpush.msra.mxu0 %v4619
        %4641 = vmatpush.msra.mxu0 %v4618
        %4642 = vmatpush.msra.mxu0 %v4617
        %4643 = vmatpush.msra.mxu0 %v4616
        %4644 = vmatpush.msra.mxu0 %v4615
        %4645 = vmatpush.msra.mxu0 %v4614
        %4646 = vmatpush.msra.mxu0 %v4613
        %4647 = vmatpush.msra.mxu0 %v4612
        %4648 = vmatpush.msra.mxu0 %v4611
        %4649 = vmatpush.msra.mxu0 %v4610
        %4650 = vmatpush.msra.mxu0 %v4609
        %4651 = vmatpush.msra.mxu0 %v4608
        %4652 = vmatpush.msra.mxu0 %v4607
        %4653 = vmatpush.msra.mxu0 %v4606
        %4654 = vmatmul.f32.gmra.mxu0 %v4583
        %v4655 = vpop.f32.mrf.mxu0
        %v4656 = vadd.f32 0.0, %v4655
        %4657 = vdwg.mxu0
        %4658 = vmatpush.msra.mxu0 %v4637
        %4659 = vmatpush.msra.mxu0 %v4636
        %4660 = vmatpush.msra.mxu0 %v4635
        %4661 = vmatpush.msra.mxu0 %v4634
        %4662 = vmatpush.msra.mxu0 %v4633
        %4663 = vmatpush.msra.mxu0 %v4632
        %4664 = vmatpush.msra.mxu0 %v4631
        %4665 = vmatpush.msra.mxu0 %v4630
        %4666 = vmatpush.msra.mxu0 %v4629
        %4667 = vmatpush.msra.mxu0 %v4628
        %4668 = vmatpush.msra.mxu0 %v4627
        %4669 = vmatpush.msra.mxu0 %v4626
        %4670 = vmatpush.msra.mxu0 %v4625
        %4671 = vmatpush.msra.mxu0 %v4624
        %4672 = vmatpush.msra.mxu0 %v4623
        %4673 = vmatpush.msra.mxu0 %v4622
        %4674 = vmatmul.f32.gmra.mxu0 %v4603
        %v4675 = vpop.f32.mrf.mxu0
        %v4676 = vadd.f32 %v4656, %v4675
        %4677 = vdwg.mxu0
        %v4678 = vadd.f32 %v4559, %v4676
        %v4679 = vld [vmem:[#allocation15] sm:$0x1]
        %v4681 = vperm.slane %v4679, 0
        %v4683 = vadd.f32 %v4678, %v4681
        %v4684 = vmax.f32 %v4683, 0.0
        %v4685 = vld [vmem:[%s21] sm:$0x3]
        %vm4686 = vcmask 31744
        %v4688 = vsel %vm4686, %v4685, 0
        %vm4690 = vcmask 1043456
        %v4692 = vsel %vm4690, %v4684, 0
        %4694 = vmatpush.msra.mxu0 0.0
        %4695 = vmatpush.msra.mxu0 0.0
        %4696 = vmatpush.msra.mxu0 0.0
        %4697 = vmatpush.msra.mxu0 0.0
        %4698 = vmatpush.msra.mxu0 0.0
        %4699 = vmatpush.msra.mxu0 0.0
        %4700 = vmatpush.msra.mxu0 0.0
        %4701 = vmatpush.msra.mxu0 0.0
        %4702 = vmatpush.msra.mxu0 0.0
        %4703 = vmatpush.msra.mxu0 0.0
        %4704 = vmatpush.msra.mxu0 0.0
        %4705 = vmatpush.msra.mxu0 0.0
        %4706 = vmatpush.msra.mxu0 0.0
        %4707 = vmatpush.msra.mxu0 0.0
        %4708 = vmatpush.msra.mxu0 0.0
        %4709 = vmatpush.msra.mxu0 %v4692
        %4710 = vmatmul.f32.gmra.mxu0 %v4688
        %v4711 = vpop.f32.mrf.mxu0
        %v4712 = vadd.f32 0.0, %v4711
        %4713 = vdwg.mxu0
        %v4714 = vld [vmem:[%s23] sm:$0xff]
        %v4715 = vld [vmem:[%s23 + $0x8] sm:$0xff]
        %v4716 = vld [vmem:[%s23 + $0x10] sm:$0xff]
        %v4717 = vld [vmem:[%s23 + $0x18] sm:$0xff]
        %v4718 = vld [vmem:[%s23 + $0x20] sm:$0xff]
        %v4719 = vld [vmem:[%s23 + $0x28] sm:$0xff]
        %v4720 = vld [vmem:[%s23 + $0x30] sm:$0xff]
        %v4721 = vld [vmem:[%s23 + $0x38] sm:$0xff]
        %v4722 = vld [vmem:[%s23 + $0x40] sm:$0xff]
        %v4723 = vld [vmem:[%s23 + $0x48] sm:$0xff]
        %v4724 = vld [vmem:[%s23 + $0x50] sm:$0xff]
        %v4725 = vld [vmem:[%s23 + $0x58] sm:$0xff]
        %v4726 = vld [vmem:[%s23 + $0x60] sm:$0xff]
        %v4727 = vld [vmem:[%s23 + $0x68] sm:$0xff]
        %v4728 = vld [vmem:[%s23 + $0x70] sm:$0xff]
        %v4729 = vld [vmem:[%s23 + $0x78] sm:$0xff]
        %s4730 = scalar_lea.vmem %s21, 2
        %v4731 = vld [vmem:[%s4730] sm:$0x3]
        %v4733 = vsel %vm4686, %v4731, 0
        %4735 = vmatpush.msra.mxu0 0.0
        %4736 = vmatpush.msra.mxu0 0.0
        %4737 = vmatpush.msra.mxu0 0.0
        %4738 = vmatpush.msra.mxu0 0.0
        %4739 = vmatpush.msra.mxu0 0.0
        %4740 = vmatpush.msra.mxu0 0.0
        %4741 = vmatpush.msra.mxu0 0.0
        %4742 = vmatpush.msra.mxu0 0.0
        %4743 = vmatpush.msra.mxu0 0.0
        %4744 = vmatpush.msra.mxu0 0.0
        %4745 = vmatpush.msra.mxu0 0.0
        %4746 = vmatpush.msra.mxu0 0.0
        %4747 = vmatpush.msra.mxu0 0.0
        %4748 = vmatpush.msra.mxu0 0.0
        %4749 = vmatpush.msra.mxu0 0.0
        %4750 = vmatpush.msra.mxu0 %v4692
        %4751 = vmatmul.f32.gmra.mxu0 %v4733
        %v4752 = vpop.f32.mrf.mxu0
        %v4753 = vadd.f32 0.0, %v4752
        %4754 = vdwg.mxu0
        %s4755 = scalar_lea.vmem %s23, 128
        %v4756 = vld [vmem:[%s4755] sm:$0xff]
        %v4757 = vld [vmem:[%s4755 + $0x8] sm:$0xff]
        %v4758 = vld [vmem:[%s4755 + $0x10] sm:$0xff]
        %v4759 = vld [vmem:[%s4755 + $0x18] sm:$0xff]
        %v4760 = vld [vmem:[%s4755 + $0x20] sm:$0xff]
        %v4761 = vld [vmem:[%s4755 + $0x28] sm:$0xff]
        %v4762 = vld [vmem:[%s4755 + $0x30] sm:$0xff]
        %v4763 = vld [vmem:[%s4755 + $0x38] sm:$0xff]
        %v4764 = vld [vmem:[%s4755 + $0x40] sm:$0xff]
        %v4765 = vld [vmem:[%s4755 + $0x48] sm:$0xff]
        %v4766 = vld [vmem:[%s4755 + $0x50] sm:$0xff]
        %v4767 = vld [vmem:[%s4755 + $0x58] sm:$0xff]
        %v4768 = vld [vmem:[%s4755 + $0x60] sm:$0xff]
        %v4769 = vld [vmem:[%s4755 + $0x68] sm:$0xff]
        %v4770 = vld [vmem:[%s4755 + $0x70] sm:$0xff]
        %v4771 = vld [vmem:[%s4755 + $0x78] sm:$0xff]
        %4772 = vmatpush.msra.mxu0 %v4771
        %4773 = vmatpush.msra.mxu0 %v4770
        %4774 = vmatpush.msra.mxu0 %v4769
        %4775 = vmatpush.msra.mxu0 %v4768
        %4776 = vmatpush.msra.mxu0 %v4767
        %4777 = vmatpush.msra.mxu0 %v4766
        %4778 = vmatpush.msra.mxu0 %v4765
        %4779 = vmatpush.msra.mxu0 %v4764
        %4780 = vmatpush.msra.mxu0 %v4763
        %4781 = vmatpush.msra.mxu0 %v4762
        %4782 = vmatpush.msra.mxu0 %v4761
        %4783 = vmatpush.msra.mxu0 %v4760
        %4784 = vmatpush.msra.mxu0 %v4759
        %4785 = vmatpush.msra.mxu0 %v4758
        %4786 = vmatpush.msra.mxu0 %v4757
        %4787 = vmatpush.msra.mxu0 %v4756
        %4788 = vmatmul.f32.gmra.mxu0 %v4753
        %v4789 = vpop.f32.mrf.mxu0
        %v4790 = vadd.f32 0.0, %v4789
        %4791 = vdwg.mxu0
        %4792 = vmatpush.msra.mxu0 %v4729
        %4793 = vmatpush.msra.mxu0 %v4728
        %4794 = vmatpush.msra.mxu0 %v4727
        %4795 = vmatpush.msra.mxu0 %v4726
        %4796 = vmatpush.msra.mxu0 %v4725
        %4797 = vmatpush.msra.mxu0 %v4724
        %4798 = vmatpush.msra.mxu0 %v4723
        %4799 = vmatpush.msra.mxu0 %v4722
        %4800 = vmatpush.msra.mxu0 %v4721
        %4801 = vmatpush.msra.mxu0 %v4720
        %4802 = vmatpush.msra.mxu0 %v4719
        %4803 = vmatpush.msra.mxu0 %v4718
        %4804 = vmatpush.msra.mxu0 %v4717
        %4805 = vmatpush.msra.mxu0 %v4716
        %4806 = vmatpush.msra.mxu0 %v4715
        %4807 = vmatpush.msra.mxu0 %v4714
        %4808 = vmatmul.f32.gmra.mxu0 %v4712
        %v4809 = vpop.f32.mrf.mxu0
        %v4810 = vadd.f32 %v4790, %v4809
        %4811 = vdwg.mxu0
        %s4812 = scalar_lea.vmem %s21, 4
        %v4813 = vld [vmem:[%s4812] sm:$0x3]
        %v4815 = vsel %vm4686, %v4813, 0
        %4817 = vmatpush.msra.mxu0 0.0
        %4818 = vmatpush.msra.mxu0 0.0
        %4819 = vmatpush.msra.mxu0 0.0
        %4820 = vmatpush.msra.mxu0 0.0
        %4821 = vmatpush.msra.mxu0 0.0
        %4822 = vmatpush.msra.mxu0 0.0
        %4823 = vmatpush.msra.mxu0 0.0
        %4824 = vmatpush.msra.mxu0 0.0
        %4825 = vmatpush.msra.mxu0 0.0
        %4826 = vmatpush.msra.mxu0 0.0
        %4827 = vmatpush.msra.mxu0 0.0
        %4828 = vmatpush.msra.mxu0 0.0
        %4829 = vmatpush.msra.mxu0 0.0
        %4830 = vmatpush.msra.mxu0 0.0
        %4831 = vmatpush.msra.mxu0 0.0
        %4832 = vmatpush.msra.mxu0 %v4692
        %4833 = vmatmul.f32.gmra.mxu0 %v4815
        %v4834 = vpop.f32.mrf.mxu0
        %v4835 = vadd.f32 0.0, %v4834
        %4836 = vdwg.mxu0
        %s4837 = scalar_lea.vmem %s23, 256
        %v4838 = vld [vmem:[%s4837] sm:$0xff]
        %v4839 = vld [vmem:[%s4837 + $0x8] sm:$0xff]
        %v4840 = vld [vmem:[%s4837 + $0x10] sm:$0xff]
        %v4841 = vld [vmem:[%s4837 + $0x18] sm:$0xff]
        %v4842 = vld [vmem:[%s4837 + $0x20] sm:$0xff]
        %v4843 = vld [vmem:[%s4837 + $0x28] sm:$0xff]
        %v4844 = vld [vmem:[%s4837 + $0x30] sm:$0xff]
        %v4845 = vld [vmem:[%s4837 + $0x38] sm:$0xff]
        %v4846 = vld [vmem:[%s4837 + $0x40] sm:$0xff]
        %v4847 = vld [vmem:[%s4837 + $0x48] sm:$0xff]
        %v4848 = vld [vmem:[%s4837 + $0x50] sm:$0xff]
        %v4849 = vld [vmem:[%s4837 + $0x58] sm:$0xff]
        %v4850 = vld [vmem:[%s4837 + $0x60] sm:$0xff]
        %v4851 = vld [vmem:[%s4837 + $0x68] sm:$0xff]
        %v4852 = vld [vmem:[%s4837 + $0x70] sm:$0xff]
        %v4853 = vld [vmem:[%s4837 + $0x78] sm:$0xff]
        %4854 = vmatpush.msra.mxu0 %v4853
        %4855 = vmatpush.msra.mxu0 %v4852
        %4856 = vmatpush.msra.mxu0 %v4851
        %4857 = vmatpush.msra.mxu0 %v4850
        %4858 = vmatpush.msra.mxu0 %v4849
        %4859 = vmatpush.msra.mxu0 %v4848
        %4860 = vmatpush.msra.mxu0 %v4847
        %4861 = vmatpush.msra.mxu0 %v4846
        %4862 = vmatpush.msra.mxu0 %v4845
        %4863 = vmatpush.msra.mxu0 %v4844
        %4864 = vmatpush.msra.mxu0 %v4843
        %4865 = vmatpush.msra.mxu0 %v4842
        %4866 = vmatpush.msra.mxu0 %v4841
        %4867 = vmatpush.msra.mxu0 %v4840
        %4868 = vmatpush.msra.mxu0 %v4839
        %4869 = vmatpush.msra.mxu0 %v4838
        %4870 = vmatmul.f32.gmra.mxu0 %v4835
        %v4871 = vpop.f32.mrf.mxu0
        %v4872 = vadd.f32 0.0, %v4871
        %4873 = vdwg.mxu0
        %v4874 = vadd.f32 %v4810, %v4872
        %s4875 = scalar_lea.vmem %s21, 6
        %v4876 = vld [vmem:[%s4875] sm:$0x3]
        %v4878 = vsel %vm4686, %v4876, 0
        %4880 = vmatpush.msra.mxu0 0.0
        %4881 = vmatpush.msra.mxu0 0.0
        %4882 = vmatpush.msra.mxu0 0.0
        %4883 = vmatpush.msra.mxu0 0.0
        %4884 = vmatpush.msra.mxu0 0.0
        %4885 = vmatpush.msra.mxu0 0.0
        %4886 = vmatpush.msra.mxu0 0.0
        %4887 = vmatpush.msra.mxu0 0.0
        %4888 = vmatpush.msra.mxu0 0.0
        %4889 = vmatpush.msra.mxu0 0.0
        %4890 = vmatpush.msra.mxu0 0.0
        %4891 = vmatpush.msra.mxu0 0.0
        %4892 = vmatpush.msra.mxu0 0.0
        %4893 = vmatpush.msra.mxu0 0.0
        %4894 = vmatpush.msra.mxu0 0.0
        %4895 = vmatpush.msra.mxu0 %v4692
        %4896 = vmatmul.f32.gmra.mxu0 %v4878
        %v4897 = vpop.f32.mrf.mxu0
        %v4898 = vadd.f32 0.0, %v4897
        %4899 = vdwg.mxu0
        %s4900 = scalar_lea.vmem %s23, 384
        %v4901 = vld [vmem:[%s4900] sm:$0xff]
        %v4902 = vld [vmem:[%s4900 + $0x8] sm:$0xff]
        %v4903 = vld [vmem:[%s4900 + $0x10] sm:$0xff]
        %v4904 = vld [vmem:[%s4900 + $0x18] sm:$0xff]
        %v4905 = vld [vmem:[%s4900 + $0x20] sm:$0xff]
        %v4906 = vld [vmem:[%s4900 + $0x28] sm:$0xff]
        %v4907 = vld [vmem:[%s4900 + $0x30] sm:$0xff]
        %v4908 = vld [vmem:[%s4900 + $0x38] sm:$0xff]
        %v4909 = vld [vmem:[%s4900 + $0x40] sm:$0xff]
        %v4910 = vld [vmem:[%s4900 + $0x48] sm:$0xff]
        %v4911 = vld [vmem:[%s4900 + $0x50] sm:$0xff]
        %v4912 = vld [vmem:[%s4900 + $0x58] sm:$0xff]
        %v4913 = vld [vmem:[%s4900 + $0x60] sm:$0xff]
        %v4914 = vld [vmem:[%s4900 + $0x68] sm:$0xff]
        %v4915 = vld [vmem:[%s4900 + $0x70] sm:$0xff]
        %v4916 = vld [vmem:[%s4900 + $0x78] sm:$0xff]
        %4917 = vmatpush.msra.mxu0 %v4916
        %4918 = vmatpush.msra.mxu0 %v4915
        %4919 = vmatpush.msra.mxu0 %v4914
        %4920 = vmatpush.msra.mxu0 %v4913
        %4921 = vmatpush.msra.mxu0 %v4912
        %4922 = vmatpush.msra.mxu0 %v4911
        %4923 = vmatpush.msra.mxu0 %v4910
        %4924 = vmatpush.msra.mxu0 %v4909
        %4925 = vmatpush.msra.mxu0 %v4908
        %4926 = vmatpush.msra.mxu0 %v4907
        %4927 = vmatpush.msra.mxu0 %v4906
        %4928 = vmatpush.msra.mxu0 %v4905
        %4929 = vmatpush.msra.mxu0 %v4904
        %4930 = vmatpush.msra.mxu0 %v4903
        %4931 = vmatpush.msra.mxu0 %v4902
        %4932 = vmatpush.msra.mxu0 %v4901
        %4933 = vmatmul.f32.gmra.mxu0 %v4898
        %v4934 = vpop.f32.mrf.mxu0
        %v4935 = vadd.f32 0.0, %v4934
        %4936 = vdwg.mxu0
        %v4937 = vadd.f32 %v4874, %v4935
        %s4938 = scalar_lea.vmem %s21, 8
        %v4939 = vld [vmem:[%s4938] sm:$0x3]
        %v4941 = vsel %vm4686, %v4939, 0
        %4943 = vmatpush.msra.mxu0 0.0
        %4944 = vmatpush.msra.mxu0 0.0
        %4945 = vmatpush.msra.mxu0 0.0
        %4946 = vmatpush.msra.mxu0 0.0
        %4947 = vmatpush.msra.mxu0 0.0
        %4948 = vmatpush.msra.mxu0 0.0
        %4949 = vmatpush.msra.mxu0 0.0
        %4950 = vmatpush.msra.mxu0 0.0
        %4951 = vmatpush.msra.mxu0 0.0
        %4952 = vmatpush.msra.mxu0 0.0
        %4953 = vmatpush.msra.mxu0 0.0
        %4954 = vmatpush.msra.mxu0 0.0
        %4955 = vmatpush.msra.mxu0 0.0
        %4956 = vmatpush.msra.mxu0 0.0
        %4957 = vmatpush.msra.mxu0 0.0
        %4958 = vmatpush.msra.mxu0 %v4692
        %4959 = vmatmul.f32.gmra.mxu0 %v4941
        %v4960 = vpop.f32.mrf.mxu0
        %v4961 = vadd.f32 0.0, %v4960
        %4962 = vdwg.mxu0
        %s4963 = scalar_lea.vmem %s23, 512
        %v4964 = vld [vmem:[%s4963] sm:$0xff]
        %v4965 = vld [vmem:[%s4963 + $0x8] sm:$0xff]
        %v4966 = vld [vmem:[%s4963 + $0x10] sm:$0xff]
        %v4967 = vld [vmem:[%s4963 + $0x18] sm:$0xff]
        %v4968 = vld [vmem:[%s4963 + $0x20] sm:$0xff]
        %v4969 = vld [vmem:[%s4963 + $0x28] sm:$0xff]
        %v4970 = vld [vmem:[%s4963 + $0x30] sm:$0xff]
        %v4971 = vld [vmem:[%s4963 + $0x38] sm:$0xff]
        %v4972 = vld [vmem:[%s4963 + $0x40] sm:$0xff]
        %v4973 = vld [vmem:[%s4963 + $0x48] sm:$0xff]
        %v4974 = vld [vmem:[%s4963 + $0x50] sm:$0xff]
        %v4975 = vld [vmem:[%s4963 + $0x58] sm:$0xff]
        %v4976 = vld [vmem:[%s4963 + $0x60] sm:$0xff]
        %v4977 = vld [vmem:[%s4963 + $0x68] sm:$0xff]
        %v4978 = vld [vmem:[%s4963 + $0x70] sm:$0xff]
        %v4979 = vld [vmem:[%s4963 + $0x78] sm:$0xff]
        %4980 = vmatpush.msra.mxu0 %v4979
        %4981 = vmatpush.msra.mxu0 %v4978
        %4982 = vmatpush.msra.mxu0 %v4977
        %4983 = vmatpush.msra.mxu0 %v4976
        %4984 = vmatpush.msra.mxu0 %v4975
        %4985 = vmatpush.msra.mxu0 %v4974
        %4986 = vmatpush.msra.mxu0 %v4973
        %4987 = vmatpush.msra.mxu0 %v4972
        %4988 = vmatpush.msra.mxu0 %v4971
        %4989 = vmatpush.msra.mxu0 %v4970
        %4990 = vmatpush.msra.mxu0 %v4969
        %4991 = vmatpush.msra.mxu0 %v4968
        %4992 = vmatpush.msra.mxu0 %v4967
        %4993 = vmatpush.msra.mxu0 %v4966
        %4994 = vmatpush.msra.mxu0 %v4965
        %4995 = vmatpush.msra.mxu0 %v4964
        %4996 = vmatmul.f32.gmra.mxu0 %v4961
        %v4997 = vpop.f32.mrf.mxu0
        %v4998 = vadd.f32 0.0, %v4997
        %4999 = vdwg.mxu0
        %v5000 = vadd.f32 %v4937, %v4998
        %v5001 = vld [vmem:[#allocation16] sm:$0x1]
        %v5003 = vperm.slane %v5001, 0
        %v5005 = vadd.f32 %v5000, %v5003
        %v5006 = vmax.f32 %v5005, 0.0
        %v5007 = vld [vmem:[%s27] sm:$0x1]
        %5009 = vset.pattern.permute.xlu0 0
        %5010 = vperm.xlu0 %5009, %v5007
        %v5011 = vpop.permute.xlu0 %5010
        %v5013 = vperm.slane %v5011, 0
        %v5014 = vmul.f32 %v5013, %v5006
        %5015 = vset.pattern.permute.xlu0 1
        %5016 = vperm.xlu0 %5015, %v5007
        %v5017 = vpop.permute.xlu0 %5016
        %v5019 = vperm.slane %v5017, 0
        %v5020 = vmul.f32 %v5019, %v5006
        %v5022 = vrot.slane %v5020, 1
        %v5024 = vadd.f32 %v5014, %v5022
        %v5025 = vld [vmem:[%s29] sm:$0xff]
        %v5026 = vld [vmem:[%s29 + $0x8] sm:$0xff]
        %v5027 = vld [vmem:[%s29 + $0x10] sm:$0xff]
        %v5028 = vld [vmem:[%s29 + $0x18] sm:$0xff]
        %v5029 = vld [vmem:[%s29 + $0x20] sm:$0xff]
        %v5030 = vld [vmem:[%s29 + $0x28] sm:$0xff]
        %v5031 = vld [vmem:[%s29 + $0x30] sm:$0xff]
        %v5032 = vld [vmem:[%s29 + $0x38] sm:$0xff]
        %s5033 = scalar_lea.vmem %s27, 1
        %v5034 = vld [vmem:[%s5033] sm:$0x1]
        %5036 = vset.pattern.permute.xlu0 0
        %5037 = vperm.xlu0 %5036, %v5034
        %v5038 = vpop.permute.xlu0 %5037
        %v5040 = vperm.slane %v5038, 0
        %v5041 = vmul.f32 %v5040, %v5006
        %5042 = vset.pattern.permute.xlu0 1
        %5043 = vperm.xlu0 %5042, %v5034
        %v5044 = vpop.permute.xlu0 %5043
        %v5046 = vperm.slane %v5044, 0
        %v5047 = vmul.f32 %v5046, %v5006
        %v5049 = vrot.slane %v5047, 1
        %v5051 = vadd.f32 %v5041, %v5049
        %s5052 = scalar_lea.vmem %s29, 64
        %v5053 = vld [vmem:[%s5052] sm:$0xff]
        %v5054 = vld [vmem:[%s5052 + $0x8] sm:$0xff]
        %v5055 = vld [vmem:[%s5052 + $0x10] sm:$0xff]
        %v5056 = vld [vmem:[%s5052 + $0x18] sm:$0xff]
        %v5057 = vld [vmem:[%s5052 + $0x20] sm:$0xff]
        %v5058 = vld [vmem:[%s5052 + $0x28] sm:$0xff]
        %v5059 = vld [vmem:[%s5052 + $0x30] sm:$0xff]
        %v5060 = vld [vmem:[%s5052 + $0x38] sm:$0xff]
        %vm5061 = vcmask 523264
        %v5063 = vsel %vm5061, %v5051, 0
        %5065 = vmatpush.msra.mxu0 0.0
        %5066 = vmatpush.msra.mxu0 0.0
        %5067 = vmatpush.msra.mxu0 0.0
        %5068 = vmatpush.msra.mxu0 0.0
        %5069 = vmatpush.msra.mxu0 0.0
        %5070 = vmatpush.msra.mxu0 0.0
        %5071 = vmatpush.msra.mxu0 0.0
        %5072 = vmatpush.msra.mxu0 0.0
        %5073 = vmatpush.msra.mxu0 %v5060
        %5074 = vmatpush.msra.mxu0 %v5059
        %5075 = vmatpush.msra.mxu0 %v5058
        %5076 = vmatpush.msra.mxu0 %v5057
        %5077 = vmatpush.msra.mxu0 %v5056
        %5078 = vmatpush.msra.mxu0 %v5055
        %5079 = vmatpush.msra.mxu0 %v5054
        %5080 = vmatpush.msra.mxu0 %v5053
        %5081 = vmatmul.f32.gmra.mxu0 %v5063
        %v5082 = vpop.f32.mrf.mxu0
        %v5083 = vadd.f32 0.0, %v5082
        %5084 = vdwg.mxu0
        %v5086 = vsel %vm5061, %v5024, 0
        %5088 = vmatpush.msra.mxu0 0.0
        %5089 = vmatpush.msra.mxu0 0.0
        %5090 = vmatpush.msra.mxu0 0.0
        %5091 = vmatpush.msra.mxu0 0.0
        %5092 = vmatpush.msra.mxu0 0.0
        %5093 = vmatpush.msra.mxu0 0.0
        %5094 = vmatpush.msra.mxu0 0.0
        %5095 = vmatpush.msra.mxu0 0.0
        %5096 = vmatpush.msra.mxu0 %v5032
        %5097 = vmatpush.msra.mxu0 %v5031
        %5098 = vmatpush.msra.mxu0 %v5030
        %5099 = vmatpush.msra.mxu0 %v5029
        %5100 = vmatpush.msra.mxu0 %v5028
        %5101 = vmatpush.msra.mxu0 %v5027
        %5102 = vmatpush.msra.mxu0 %v5026
        %5103 = vmatpush.msra.mxu0 %v5025
        %5104 = vmatmul.f32.gmra.mxu0 %v5086
        %v5105 = vpop.f32.mrf.mxu0
        %v5106 = vadd.f32 %v5083, %v5105
        %5107 = vdwg.mxu0
        %s5108 = scalar_lea.vmem %s27, 2
        %v5109 = vld [vmem:[%s5108] sm:$0x1]
        %5111 = vset.pattern.permute.xlu0 0
        %5112 = vperm.xlu0 %5111, %v5109
        %v5113 = vpop.permute.xlu0 %5112
        %v5115 = vperm.slane %v5113, 0
        %v5116 = vmul.f32 %v5115, %v5006
        %5117 = vset.pattern.permute.xlu0 1
        %5118 = vperm.xlu0 %5117, %v5109
        %v5119 = vpop.permute.xlu0 %5118
        %v5121 = vperm.slane %v5119, 0
        %v5122 = vmul.f32 %v5121, %v5006
        %v5124 = vrot.slane %v5122, 1
        %v5126 = vadd.f32 %v5116, %v5124
        %s5127 = scalar_lea.vmem %s29, 128
        %v5128 = vld [vmem:[%s5127] sm:$0xff]
        %v5129 = vld [vmem:[%s5127 + $0x8] sm:$0xff]
        %v5130 = vld [vmem:[%s5127 + $0x10] sm:$0xff]
        %v5131 = vld [vmem:[%s5127 + $0x18] sm:$0xff]
        %v5132 = vld [vmem:[%s5127 + $0x20] sm:$0xff]
        %v5133 = vld [vmem:[%s5127 + $0x28] sm:$0xff]
        %v5134 = vld [vmem:[%s5127 + $0x30] sm:$0xff]
        %v5135 = vld [vmem:[%s5127 + $0x38] sm:$0xff]
        %v5137 = vsel %vm5061, %v5126, 0
        %5139 = vmatpush.msra.mxu0 0.0
        %5140 = vmatpush.msra.mxu0 0.0
        %5141 = vmatpush.msra.mxu0 0.0
        %5142 = vmatpush.msra.mxu0 0.0
        %5143 = vmatpush.msra.mxu0 0.0
        %5144 = vmatpush.msra.mxu0 0.0
        %5145 = vmatpush.msra.mxu0 0.0
        %5146 = vmatpush.msra.mxu0 0.0
        %5147 = vmatpush.msra.mxu0 %v5135
        %5148 = vmatpush.msra.mxu0 %v5134
        %5149 = vmatpush.msra.mxu0 %v5133
        %5150 = vmatpush.msra.mxu0 %v5132
        %5151 = vmatpush.msra.mxu0 %v5131
        %5152 = vmatpush.msra.mxu0 %v5130
        %5153 = vmatpush.msra.mxu0 %v5129
        %5154 = vmatpush.msra.mxu0 %v5128
        %5155 = vmatmul.f32.gmra.mxu0 %v5137
        %v5156 = vpop.f32.mrf.mxu0
        %v5157 = vadd.f32 0.0, %v5156
        %5158 = vdwg.mxu0
        %v5159 = vadd.f32 %v5106, %v5157
        %s5160 = scalar_lea.vmem %s27, 3
        %v5161 = vld [vmem:[%s5160] sm:$0x1]
        %5163 = vset.pattern.permute.xlu0 0
        %5164 = vperm.xlu0 %5163, %v5161
        %v5165 = vpop.permute.xlu0 %5164
        %v5167 = vperm.slane %v5165, 0
        %v5168 = vmul.f32 %v5167, %v5006
        %5169 = vset.pattern.permute.xlu0 1
        %5170 = vperm.xlu0 %5169, %v5161
        %v5171 = vpop.permute.xlu0 %5170
        %v5173 = vperm.slane %v5171, 0
        %v5174 = vmul.f32 %v5173, %v5006
        %v5176 = vrot.slane %v5174, 1
        %v5178 = vadd.f32 %v5168, %v5176
        %s5179 = scalar_lea.vmem %s29, 192
        %v5180 = vld [vmem:[%s5179] sm:$0xff]
        %v5181 = vld [vmem:[%s5179 + $0x8] sm:$0xff]
        %v5182 = vld [vmem:[%s5179 + $0x10] sm:$0xff]
        %v5183 = vld [vmem:[%s5179 + $0x18] sm:$0xff]
        %v5184 = vld [vmem:[%s5179 + $0x20] sm:$0xff]
        %v5185 = vld [vmem:[%s5179 + $0x28] sm:$0xff]
        %v5186 = vld [vmem:[%s5179 + $0x30] sm:$0xff]
        %v5187 = vld [vmem:[%s5179 + $0x38] sm:$0xff]
        %v5189 = vsel %vm5061, %v5178, 0
        %5191 = vmatpush.msra.mxu0 0.0
        %5192 = vmatpush.msra.mxu0 0.0
        %5193 = vmatpush.msra.mxu0 0.0
        %5194 = vmatpush.msra.mxu0 0.0
        %5195 = vmatpush.msra.mxu0 0.0
        %5196 = vmatpush.msra.mxu0 0.0
        %5197 = vmatpush.msra.mxu0 0.0
        %5198 = vmatpush.msra.mxu0 0.0
        %5199 = vmatpush.msra.mxu0 %v5187
        %5200 = vmatpush.msra.mxu0 %v5186
        %5201 = vmatpush.msra.mxu0 %v5185
        %5202 = vmatpush.msra.mxu0 %v5184
        %5203 = vmatpush.msra.mxu0 %v5183
        %5204 = vmatpush.msra.mxu0 %v5182
        %5205 = vmatpush.msra.mxu0 %v5181
        %5206 = vmatpush.msra.mxu0 %v5180
        %5207 = vmatmul.f32.gmra.mxu0 %v5189
        %v5208 = vpop.f32.mrf.mxu0
        %v5209 = vadd.f32 0.0, %v5208
        %5210 = vdwg.mxu0
        %v5211 = vadd.f32 %v5159, %v5209
        %s5212 = scalar_lea.vmem %s27, 4
        %v5213 = vld [vmem:[%s5212] sm:$0x1]
        %5215 = vset.pattern.permute.xlu0 0
        %5216 = vperm.xlu0 %5215, %v5213
        %v5217 = vpop.permute.xlu0 %5216
        %v5219 = vperm.slane %v5217, 0
        %v5220 = vmul.f32 %v5219, %v5006
        %5221 = vset.pattern.permute.xlu0 1
        %5222 = vperm.xlu0 %5221, %v5213
        %v5223 = vpop.permute.xlu0 %5222
        %v5225 = vperm.slane %v5223, 0
        %v5226 = vmul.f32 %v5225, %v5006
        %v5228 = vrot.slane %v5226, 1
        %v5230 = vadd.f32 %v5220, %v5228
        %s5231 = scalar_lea.vmem %s29, 256
        %v5232 = vld [vmem:[%s5231] sm:$0xff]
        %v5233 = vld [vmem:[%s5231 + $0x8] sm:$0xff]
        %v5234 = vld [vmem:[%s5231 + $0x10] sm:$0xff]
        %v5235 = vld [vmem:[%s5231 + $0x18] sm:$0xff]
        %v5236 = vld [vmem:[%s5231 + $0x20] sm:$0xff]
        %v5237 = vld [vmem:[%s5231 + $0x28] sm:$0xff]
        %v5238 = vld [vmem:[%s5231 + $0x30] sm:$0xff]
        %v5239 = vld [vmem:[%s5231 + $0x38] sm:$0xff]
        %v5241 = vsel %vm5061, %v5230, 0
        %5243 = vmatpush.msra.mxu0 0.0
        %5244 = vmatpush.msra.mxu0 0.0
        %5245 = vmatpush.msra.mxu0 0.0
        %5246 = vmatpush.msra.mxu0 0.0
        %5247 = vmatpush.msra.mxu0 0.0
        %5248 = vmatpush.msra.mxu0 0.0
        %5249 = vmatpush.msra.mxu0 0.0
        %5250 = vmatpush.msra.mxu0 0.0
        %5251 = vmatpush.msra.mxu0 %v5239
        %5252 = vmatpush.msra.mxu0 %v5238
        %5253 = vmatpush.msra.mxu0 %v5237
        %5254 = vmatpush.msra.mxu0 %v5236
        %5255 = vmatpush.msra.mxu0 %v5235
        %5256 = vmatpush.msra.mxu0 %v5234
        %5257 = vmatpush.msra.mxu0 %v5233
        %5258 = vmatpush.msra.mxu0 %v5232
        %5259 = vmatmul.f32.gmra.mxu0 %v5241
        %v5260 = vpop.f32.mrf.mxu0
        %v5261 = vadd.f32 0.0, %v5260
        %5262 = vdwg.mxu0
        %v5263 = vadd.f32 %v5211, %v5261
        %v5264 = vld [vmem:[#allocation18] sm:$0x1]
        %v5265 = vadd.f32 %v5263, %v5264
        %v5266 = vmax.f32 %v5265, 0.0
        %v5267 = vld [vmem:[%s33] sm:$0x3]
        %5269 = vset.pattern.permute.xlu0 0
        %5270 = vperm.xlu0 %5269, %v5267
        %v5271 = vpop.permute.xlu0 %5270
        %v5273 = vperm.slane %v5266, 0
        %v5274 = vmul.f32 %v5271, %v5273
        %v5275 = vld [vmem:[%s35] sm:$0xff]
        %v5276 = vld [vmem:[%s35 + $0x8] sm:$0xff]
        %v5277 = vld [vmem:[%s35 + $0x10] sm:$0xff]
        %v5278 = vld [vmem:[%s35 + $0x18] sm:$0xff]
        %s5279 = scalar_lea.vmem %s33, 2
        %v5280 = vld [vmem:[%s5279] sm:$0x3]
        %5282 = vset.pattern.permute.xlu0 0
        %5283 = vperm.xlu0 %5282, %v5280
        %v5284 = vpop.permute.xlu0 %5283
        %v5286 = vmul.f32 %v5284, %v5273
        %s5287 = scalar_lea.vmem %s35, 32
        %v5288 = vld [vmem:[%s5287] sm:$0xff]
        %v5289 = vld [vmem:[%s5287 + $0x8] sm:$0xff]
        %v5290 = vld [vmem:[%s5287 + $0x10] sm:$0xff]
        %v5291 = vld [vmem:[%s5287 + $0x18] sm:$0xff]
        %v5293 = vsel %vm1259, %v5286, 0
        %5295 = vmatpush.msra.mxu0 0.0
        %5296 = vmatpush.msra.mxu0 0.0
        %5297 = vmatpush.msra.mxu0 0.0
        %5298 = vmatpush.msra.mxu0 0.0
        %5299 = vmatpush.msra.mxu0 0.0
        %5300 = vmatpush.msra.mxu0 0.0
        %5301 = vmatpush.msra.mxu0 0.0
        %5302 = vmatpush.msra.mxu0 0.0
        %5303 = vmatpush.msra.mxu0 0.0
        %5304 = vmatpush.msra.mxu0 0.0
        %5305 = vmatpush.msra.mxu0 0.0
        %5306 = vmatpush.msra.mxu0 0.0
        %5307 = vmatpush.msra.mxu0 %v5291
        %5308 = vmatpush.msra.mxu0 %v5290
        %5309 = vmatpush.msra.mxu0 %v5289
        %5310 = vmatpush.msra.mxu0 %v5288
        %5311 = vmatmul.f32.gmra.mxu0 %v5293
        %v5312 = vpop.f32.mrf.mxu0
        %v5313 = vadd.f32 0.0, %v5312
        %5314 = vdwg.mxu0
        %v5316 = vsel %vm1259, %v5274, 0
        %5318 = vmatpush.msra.mxu0 0.0
        %5319 = vmatpush.msra.mxu0 0.0
        %5320 = vmatpush.msra.mxu0 0.0
        %5321 = vmatpush.msra.mxu0 0.0
        %5322 = vmatpush.msra.mxu0 0.0
        %5323 = vmatpush.msra.mxu0 0.0
        %5324 = vmatpush.msra.mxu0 0.0
        %5325 = vmatpush.msra.mxu0 0.0
        %5326 = vmatpush.msra.mxu0 0.0
        %5327 = vmatpush.msra.mxu0 0.0
        %5328 = vmatpush.msra.mxu0 0.0
        %5329 = vmatpush.msra.mxu0 0.0
        %5330 = vmatpush.msra.mxu0 %v5278
        %5331 = vmatpush.msra.mxu0 %v5277
        %5332 = vmatpush.msra.mxu0 %v5276
        %5333 = vmatpush.msra.mxu0 %v5275
        %5334 = vmatmul.f32.gmra.mxu0 %v5316
        %v5335 = vpop.f32.mrf.mxu0
        %v5336 = vadd.f32 %v5313, %v5335
        %5337 = vdwg.mxu0
        %s5338 = scalar_lea.vmem %s33, 4
        %v5339 = vld [vmem:[%s5338] sm:$0x3]
        %5341 = vset.pattern.permute.xlu0 0
        %5342 = vperm.xlu0 %5341, %v5339
        %v5343 = vpop.permute.xlu0 %5342
        %v5345 = vmul.f32 %v5343, %v5273
        %s5346 = scalar_lea.vmem %s35, 64
        %v5347 = vld [vmem:[%s5346] sm:$0xff]
        %v5348 = vld [vmem:[%s5346 + $0x8] sm:$0xff]
        %v5349 = vld [vmem:[%s5346 + $0x10] sm:$0xff]
        %v5350 = vld [vmem:[%s5346 + $0x18] sm:$0xff]
        %v5352 = vsel %vm1259, %v5345, 0
        %5354 = vmatpush.msra.mxu0 0.0
        %5355 = vmatpush.msra.mxu0 0.0
        %5356 = vmatpush.msra.mxu0 0.0
        %5357 = vmatpush.msra.mxu0 0.0
        %5358 = vmatpush.msra.mxu0 0.0
        %5359 = vmatpush.msra.mxu0 0.0
        %5360 = vmatpush.msra.mxu0 0.0
        %5361 = vmatpush.msra.mxu0 0.0
        %5362 = vmatpush.msra.mxu0 0.0
        %5363 = vmatpush.msra.mxu0 0.0
        %5364 = vmatpush.msra.mxu0 0.0
        %5365 = vmatpush.msra.mxu0 0.0
        %5366 = vmatpush.msra.mxu0 %v5350
        %5367 = vmatpush.msra.mxu0 %v5349
        %5368 = vmatpush.msra.mxu0 %v5348
        %5369 = vmatpush.msra.mxu0 %v5347
        %5370 = vmatmul.f32.gmra.mxu0 %v5352
        %v5371 = vpop.f32.mrf.mxu0
        %v5372 = vadd.f32 0.0, %v5371
        %5373 = vdwg.mxu0
        %v5374 = vadd.f32 %v5336, %v5372
        %s5375 = scalar_lea.vmem %s33, 6
        %v5376 = vld [vmem:[%s5375] sm:$0x3]
        %5378 = vset.pattern.permute.xlu0 0
        %5379 = vperm.xlu0 %5378, %v5376
        %v5380 = vpop.permute.xlu0 %5379
        %v5382 = vmul.f32 %v5380, %v5273
        %s5383 = scalar_lea.vmem %s35, 96
        %v5384 = vld [vmem:[%s5383] sm:$0xff]
        %v5385 = vld [vmem:[%s5383 + $0x8] sm:$0xff]
        %v5386 = vld [vmem:[%s5383 + $0x10] sm:$0xff]
        %v5387 = vld [vmem:[%s5383 + $0x18] sm:$0xff]
        %v5389 = vsel %vm1259, %v5382, 0
        %5391 = vmatpush.msra.mxu0 0.0
        %5392 = vmatpush.msra.mxu0 0.0
        %5393 = vmatpush.msra.mxu0 0.0
        %5394 = vmatpush.msra.mxu0 0.0
        %5395 = vmatpush.msra.mxu0 0.0
        %5396 = vmatpush.msra.mxu0 0.0
        %5397 = vmatpush.msra.mxu0 0.0
        %5398 = vmatpush.msra.mxu0 0.0
        %5399 = vmatpush.msra.mxu0 0.0
        %5400 = vmatpush.msra.mxu0 0.0
        %5401 = vmatpush.msra.mxu0 0.0
        %5402 = vmatpush.msra.mxu0 0.0
        %5403 = vmatpush.msra.mxu0 %v5387
        %5404 = vmatpush.msra.mxu0 %v5386
        %5405 = vmatpush.msra.mxu0 %v5385
        %5406 = vmatpush.msra.mxu0 %v5384
        %5407 = vmatmul.f32.gmra.mxu0 %v5389
        %v5408 = vpop.f32.mrf.mxu0
        %v5409 = vadd.f32 0.0, %v5408
        %5410 = vdwg.mxu0
        %v5411 = vadd.f32 %v5374, %v5409
        %v5412 = vld [vmem:[#allocation19] sm:$0x1]
        %v5414 = vperm.slane %v5412, 0
        %v5416 = vadd.f32 %v5411, %v5414
        %v5417 = vld [vmem:[%s39] sm:$0xf]
        %5419 = vset.pattern.permute.xlu0 0
        %5420 = vperm.xlu0 %5419, %v5417
        %v5421 = vpop.permute.xlu0 %5420
        %v5423 = vperm.slane %v5416, 0
        %v5424 = vmul.f32 %v5421, %v5423
        %5425 = vset.pattern.permute.xlu0 1
        %5426 = vperm.xlu0 %5425, %v5417
        %v5427 = vpop.permute.xlu0 %5426
        %v5429 = vperm.slane %v5416, 1
        %v5430 = vmul.f32 %v5427, %v5429
        %v5431 = vadd.f32 %v5424, %v5430
        %v5432 = vld [vmem:[#allocation21] sm:$0xff]
        %v5433 = vld [vmem:[#allocation21 + $0x8] sm:$0xff]
        %s5434 = scalar_lea.vmem %s39, 4
        %v5435 = vld [vmem:[%s5434] sm:$0xf]
        %5437 = vset.pattern.permute.xlu0 0
        %5438 = vperm.xlu0 %5437, %v5435
        %v5439 = vpop.permute.xlu0 %5438
        %v5441 = vmul.f32 %v5439, %v5423
        %5442 = vset.pattern.permute.xlu0 1
        %5443 = vperm.xlu0 %5442, %v5435
        %v5444 = vpop.permute.xlu0 %5443
        %v5446 = vmul.f32 %v5444, %v5429
        %v5447 = vadd.f32 %v5441, %v5446
        %s5448 = scalar_lea.vmem [#allocation21], 16
        %v5449 = vld [vmem:[%s5448] sm:$0xff]
        %v5450 = vld [vmem:[%s5448 + $0x8] sm:$0xff]
        %v5452 = vsel %vm2203, %v5447, 0
        %5454 = vmatpush.msra.mxu0 0.0
        %5455 = vmatpush.msra.mxu0 0.0
        %5456 = vmatpush.msra.mxu0 0.0
        %5457 = vmatpush.msra.mxu0 0.0
        %5458 = vmatpush.msra.mxu0 0.0
        %5459 = vmatpush.msra.mxu0 0.0
        %5460 = vmatpush.msra.mxu0 0.0
        %5461 = vmatpush.msra.mxu0 0.0
        %5462 = vmatpush.msra.mxu0 0.0
        %5463 = vmatpush.msra.mxu0 0.0
        %5464 = vmatpush.msra.mxu0 0.0
        %5465 = vmatpush.msra.mxu0 0.0
        %5466 = vmatpush.msra.mxu0 0.0
        %5467 = vmatpush.msra.mxu0 0.0
        %5468 = vmatpush.msra.mxu0 %v5450
        %5469 = vmatpush.msra.mxu0 %v5449
        %5470 = vmatmul.f32.gmra.mxu0 %v5452
        %v5471 = vpop.f32.mrf.mxu0
        %v5472 = vadd.f32 0.0, %v5471
        %5473 = vdwg.mxu0
        %v5475 = vsel %vm2203, %v5431, 0
        %5477 = vmatpush.msra.mxu0 0.0
        %5478 = vmatpush.msra.mxu0 0.0
        %5479 = vmatpush.msra.mxu0 0.0
        %5480 = vmatpush.msra.mxu0 0.0
        %5481 = vmatpush.msra.mxu0 0.0
        %5482 = vmatpush.msra.mxu0 0.0
        %5483 = vmatpush.msra.mxu0 0.0
        %5484 = vmatpush.msra.mxu0 0.0
        %5485 = vmatpush.msra.mxu0 0.0
        %5486 = vmatpush.msra.mxu0 0.0
        %5487 = vmatpush.msra.mxu0 0.0
        %5488 = vmatpush.msra.mxu0 0.0
        %5489 = vmatpush.msra.mxu0 0.0
        %5490 = vmatpush.msra.mxu0 0.0
        %5491 = vmatpush.msra.mxu0 %v5433
        %5492 = vmatpush.msra.mxu0 %v5432
        %5493 = vmatmul.f32.gmra.mxu0 %v5475
        %v5494 = vpop.f32.mrf.mxu0
        %v5495 = vadd.f32 %v5472, %v5494
        %5496 = vdwg.mxu0
        %s5497 = scalar_lea.vmem %s39, 8
        %v5498 = vld [vmem:[%s5497] sm:$0xf]
        %5500 = vset.pattern.permute.xlu0 0
        %5501 = vperm.xlu0 %5500, %v5498
        %v5502 = vpop.permute.xlu0 %5501
        %v5504 = vmul.f32 %v5502, %v5423
        %5505 = vset.pattern.permute.xlu0 1
        %5506 = vperm.xlu0 %5505, %v5498
        %v5507 = vpop.permute.xlu0 %5506
        %v5509 = vmul.f32 %v5507, %v5429
        %v5510 = vadd.f32 %v5504, %v5509
        %s5511 = scalar_lea.vmem [#allocation21], 32
        %v5512 = vld [vmem:[%s5511] sm:$0xff]
        %v5513 = vld [vmem:[%s5511 + $0x8] sm:$0xff]
        %v5515 = vsel %vm2203, %v5510, 0
        %5517 = vmatpush.msra.mxu0 0.0
        %5518 = vmatpush.msra.mxu0 0.0
        %5519 = vmatpush.msra.mxu0 0.0
        %5520 = vmatpush.msra.mxu0 0.0
        %5521 = vmatpush.msra.mxu0 0.0
        %5522 = vmatpush.msra.mxu0 0.0
        %5523 = vmatpush.msra.mxu0 0.0
        %5524 = vmatpush.msra.mxu0 0.0
        %5525 = vmatpush.msra.mxu0 0.0
        %5526 = vmatpush.msra.mxu0 0.0
        %5527 = vmatpush.msra.mxu0 0.0
        %5528 = vmatpush.msra.mxu0 0.0
        %5529 = vmatpush.msra.mxu0 0.0
        %5530 = vmatpush.msra.mxu0 0.0
        %5531 = vmatpush.msra.mxu0 %v5513
        %5532 = vmatpush.msra.mxu0 %v5512
        %5533 = vmatmul.f32.gmra.mxu0 %v5515
        %v5534 = vpop.f32.mrf.mxu0
        %v5535 = vadd.f32 0.0, %v5534
        %5536 = vdwg.mxu0
        %v5537 = vadd.f32 %v5495, %v5535
        %s5538 = scalar_lea.vmem %s39, 12
        %v5539 = vld [vmem:[%s5538] sm:$0xf]
        %5541 = vset.pattern.permute.xlu0 0
        %5542 = vperm.xlu0 %5541, %v5539
        %v5543 = vpop.permute.xlu0 %5542
        %v5545 = vmul.f32 %v5543, %v5423
        %5546 = vset.pattern.permute.xlu0 1
        %5547 = vperm.xlu0 %5546, %v5539
        %v5548 = vpop.permute.xlu0 %5547
        %v5550 = vmul.f32 %v5548, %v5429
        %v5551 = vadd.f32 %v5545, %v5550
        %s5552 = scalar_lea.vmem [#allocation21], 48
        %v5553 = vld [vmem:[%s5552] sm:$0xff]
        %v5554 = vld [vmem:[%s5552 + $0x8] sm:$0xff]
        %v5556 = vsel %vm2203, %v5551, 0
        %5558 = vmatpush.msra.mxu0 0.0
        %5559 = vmatpush.msra.mxu0 0.0
        %5560 = vmatpush.msra.mxu0 0.0
        %5561 = vmatpush.msra.mxu0 0.0
        %5562 = vmatpush.msra.mxu0 0.0
        %5563 = vmatpush.msra.mxu0 0.0
        %5564 = vmatpush.msra.mxu0 0.0
        %5565 = vmatpush.msra.mxu0 0.0
        %5566 = vmatpush.msra.mxu0 0.0
        %5567 = vmatpush.msra.mxu0 0.0
        %5568 = vmatpush.msra.mxu0 0.0
        %5569 = vmatpush.msra.mxu0 0.0
        %5570 = vmatpush.msra.mxu0 0.0
        %5571 = vmatpush.msra.mxu0 0.0
        %5572 = vmatpush.msra.mxu0 %v5554
        %5573 = vmatpush.msra.mxu0 %v5553
        %5574 = vmatmul.f32.gmra.mxu0 %v5556
        %v5575 = vpop.f32.mrf.mxu0
        %v5576 = vadd.f32 0.0, %v5575
        %5577 = vdwg.mxu0
        %v5578 = vadd.f32 %v5537, %v5576
        %v5579 = vld [vmem:[#allocation22] sm:$0x1]
        %v5581 = vperm.slane %v5579, 0
        %v5583 = vadd.f32 %v5578, %v5581
        %v5584 = vld [vmem:[%s45] sm:$0xff]
        %v5586 = vsel %vm4686, %v5584, 0
        %v5589 = vsel %vm4690, %v5583, 0
        %5591 = vmatpush.msra.mxu0 0.0
        %5592 = vmatpush.msra.mxu0 0.0
        %5593 = vmatpush.msra.mxu0 0.0
        %5594 = vmatpush.msra.mxu0 0.0
        %5595 = vmatpush.msra.mxu0 0.0
        %5596 = vmatpush.msra.mxu0 0.0
        %5597 = vmatpush.msra.mxu0 0.0
        %5598 = vmatpush.msra.mxu0 0.0
        %5599 = vmatpush.msra.mxu0 0.0
        %5600 = vmatpush.msra.mxu0 0.0
        %5601 = vmatpush.msra.mxu0 0.0
        %5602 = vmatpush.msra.mxu0 0.0
        %5603 = vmatpush.msra.mxu0 0.0
        %5604 = vmatpush.msra.mxu0 0.0
        %5605 = vmatpush.msra.mxu0 0.0
        %5606 = vmatpush.msra.mxu0 %v5589
        %5607 = vmatmul.f32.gmra.mxu0 %v5586
        %v5608 = vpop.f32.mrf.mxu0
        %v5609 = vadd.f32 0.0, %v5608
        %5610 = vdwg.mxu0
        %v5611 = vld [vmem:[#allocation24] sm:$0xff]
        %v5612 = vld [vmem:[#allocation24 + $0x8] sm:$0xff]
        %v5613 = vld [vmem:[#allocation24 + $0x10] sm:$0xff]
        %v5614 = vld [vmem:[#allocation24 + $0x18] sm:$0xff]
        %s5615 = scalar_lea.vmem %s45, 8
        %v5616 = vld [vmem:[%s5615] sm:$0xff]
        %v5618 = vsel %vm4686, %v5616, 0
        %5620 = vmatpush.msra.mxu0 0.0
        %5621 = vmatpush.msra.mxu0 0.0
        %5622 = vmatpush.msra.mxu0 0.0
        %5623 = vmatpush.msra.mxu0 0.0
        %5624 = vmatpush.msra.mxu0 0.0
        %5625 = vmatpush.msra.mxu0 0.0
        %5626 = vmatpush.msra.mxu0 0.0
        %5627 = vmatpush.msra.mxu0 0.0
        %5628 = vmatpush.msra.mxu0 0.0
        %5629 = vmatpush.msra.mxu0 0.0
        %5630 = vmatpush.msra.mxu0 0.0
        %5631 = vmatpush.msra.mxu0 0.0
        %5632 = vmatpush.msra.mxu0 0.0
        %5633 = vmatpush.msra.mxu0 0.0
        %5634 = vmatpush.msra.mxu0 0.0
        %5635 = vmatpush.msra.mxu0 %v5589
        %5636 = vmatmul.f32.gmra.mxu0 %v5618
        %v5637 = vpop.f32.mrf.mxu0
        %v5638 = vadd.f32 0.0, %v5637
        %5639 = vdwg.mxu0
        %s5640 = scalar_lea.vmem [#allocation24], 32
        %v5641 = vld [vmem:[%s5640] sm:$0xff]
        %v5642 = vld [vmem:[%s5640 + $0x8] sm:$0xff]
        %v5643 = vld [vmem:[%s5640 + $0x10] sm:$0xff]
        %v5644 = vld [vmem:[%s5640 + $0x18] sm:$0xff]
        %v5646 = vsel %vm1259, %v5638, 0
        %5648 = vmatpush.msra.mxu0 0.0
        %5649 = vmatpush.msra.mxu0 0.0
        %5650 = vmatpush.msra.mxu0 0.0
        %5651 = vmatpush.msra.mxu0 0.0
        %5652 = vmatpush.msra.mxu0 0.0
        %5653 = vmatpush.msra.mxu0 0.0
        %5654 = vmatpush.msra.mxu0 0.0
        %5655 = vmatpush.msra.mxu0 0.0
        %5656 = vmatpush.msra.mxu0 0.0
        %5657 = vmatpush.msra.mxu0 0.0
        %5658 = vmatpush.msra.mxu0 0.0
        %5659 = vmatpush.msra.mxu0 0.0
        %5660 = vmatpush.msra.mxu0 %v5644
        %5661 = vmatpush.msra.mxu0 %v5643
        %5662 = vmatpush.msra.mxu0 %v5642
        %5663 = vmatpush.msra.mxu0 %v5641
        %5664 = vmatmul.f32.gmra.mxu0 %v5646
        %v5665 = vpop.f32.mrf.mxu0
        %v5666 = vadd.f32 0.0, %v5665
        %5667 = vdwg.mxu0
        %v5669 = vsel %vm1259, %v5609, 0
        %5671 = vmatpush.msra.mxu0 0.0
        %5672 = vmatpush.msra.mxu0 0.0
        %5673 = vmatpush.msra.mxu0 0.0
        %5674 = vmatpush.msra.mxu0 0.0
        %5675 = vmatpush.msra.mxu0 0.0
        %5676 = vmatpush.msra.mxu0 0.0
        %5677 = vmatpush.msra.mxu0 0.0
        %5678 = vmatpush.msra.mxu0 0.0
        %5679 = vmatpush.msra.mxu0 0.0
        %5680 = vmatpush.msra.mxu0 0.0
        %5681 = vmatpush.msra.mxu0 0.0
        %5682 = vmatpush.msra.mxu0 0.0
        %5683 = vmatpush.msra.mxu0 %v5614
        %5684 = vmatpush.msra.mxu0 %v5613
        %5685 = vmatpush.msra.mxu0 %v5612
        %5686 = vmatpush.msra.mxu0 %v5611
        %5687 = vmatmul.f32.gmra.mxu0 %v5669
        %v5688 = vpop.f32.mrf.mxu0
        %v5689 = vadd.f32 %v5666, %v5688
        %5690 = vdwg.mxu0
        %s5691 = scalar_lea.vmem %s45, 16
        %v5692 = vld [vmem:[%s5691] sm:$0xff]
        %v5694 = vsel %vm4686, %v5692, 0
        %5696 = vmatpush.msra.mxu0 0.0
        %5697 = vmatpush.msra.mxu0 0.0
        %5698 = vmatpush.msra.mxu0 0.0
        %5699 = vmatpush.msra.mxu0 0.0
        %5700 = vmatpush.msra.mxu0 0.0
        %5701 = vmatpush.msra.mxu0 0.0
        %5702 = vmatpush.msra.mxu0 0.0
        %5703 = vmatpush.msra.mxu0 0.0
        %5704 = vmatpush.msra.mxu0 0.0
        %5705 = vmatpush.msra.mxu0 0.0
        %5706 = vmatpush.msra.mxu0 0.0
        %5707 = vmatpush.msra.mxu0 0.0
        %5708 = vmatpush.msra.mxu0 0.0
        %5709 = vmatpush.msra.mxu0 0.0
        %5710 = vmatpush.msra.mxu0 0.0
        %5711 = vmatpush.msra.mxu0 %v5589
        %5712 = vmatmul.f32.gmra.mxu0 %v5694
        %v5713 = vpop.f32.mrf.mxu0
        %v5714 = vadd.f32 0.0, %v5713
        %5715 = vdwg.mxu0
        %s5716 = scalar_lea.vmem [#allocation24], 64
        %v5717 = vld [vmem:[%s5716] sm:$0xff]
        %v5718 = vld [vmem:[%s5716 + $0x8] sm:$0xff]
        %v5719 = vld [vmem:[%s5716 + $0x10] sm:$0xff]
        %v5720 = vld [vmem:[%s5716 + $0x18] sm:$0xff]
        %v5722 = vsel %vm1259, %v5714, 0
        %5724 = vmatpush.msra.mxu0 0.0
        %5725 = vmatpush.msra.mxu0 0.0
        %5726 = vmatpush.msra.mxu0 0.0
        %5727 = vmatpush.msra.mxu0 0.0
        %5728 = vmatpush.msra.mxu0 0.0
        %5729 = vmatpush.msra.mxu0 0.0
        %5730 = vmatpush.msra.mxu0 0.0
        %5731 = vmatpush.msra.mxu0 0.0
        %5732 = vmatpush.msra.mxu0 0.0
        %5733 = vmatpush.msra.mxu0 0.0
        %5734 = vmatpush.msra.mxu0 0.0
        %5735 = vmatpush.msra.mxu0 0.0
        %5736 = vmatpush.msra.mxu0 %v5720
        %5737 = vmatpush.msra.mxu0 %v5719
        %5738 = vmatpush.msra.mxu0 %v5718
        %5739 = vmatpush.msra.mxu0 %v5717
        %5740 = vmatmul.f32.gmra.mxu0 %v5722
        %v5741 = vpop.f32.mrf.mxu0
        %v5742 = vadd.f32 0.0, %v5741
        %5743 = vdwg.mxu0
        %v5744 = vadd.f32 %v5689, %v5742
        %s5745 = scalar_lea.vmem %s45, 24
        %v5746 = vld [vmem:[%s5745] sm:$0xff]
        %v5748 = vsel %vm4686, %v5746, 0
        %5750 = vmatpush.msra.mxu0 0.0
        %5751 = vmatpush.msra.mxu0 0.0
        %5752 = vmatpush.msra.mxu0 0.0
        %5753 = vmatpush.msra.mxu0 0.0
        %5754 = vmatpush.msra.mxu0 0.0
        %5755 = vmatpush.msra.mxu0 0.0
        %5756 = vmatpush.msra.mxu0 0.0
        %5757 = vmatpush.msra.mxu0 0.0
        %5758 = vmatpush.msra.mxu0 0.0
        %5759 = vmatpush.msra.mxu0 0.0
        %5760 = vmatpush.msra.mxu0 0.0
        %5761 = vmatpush.msra.mxu0 0.0
        %5762 = vmatpush.msra.mxu0 0.0
        %5763 = vmatpush.msra.mxu0 0.0
        %5764 = vmatpush.msra.mxu0 0.0
        %5765 = vmatpush.msra.mxu0 %v5589
        %5766 = vmatmul.f32.gmra.mxu0 %v5748
        %v5767 = vpop.f32.mrf.mxu0
        %v5768 = vadd.f32 0.0, %v5767
        %5769 = vdwg.mxu0
        %s5770 = scalar_lea.vmem [#allocation24], 96
        %v5771 = vld [vmem:[%s5770] sm:$0xff]
        %v5772 = vld [vmem:[%s5770 + $0x8] sm:$0xff]
        %v5773 = vld [vmem:[%s5770 + $0x10] sm:$0xff]
        %v5774 = vld [vmem:[%s5770 + $0x18] sm:$0xff]
        %v5776 = vsel %vm1259, %v5768, 0
        %5778 = vmatpush.msra.mxu0 0.0
        %5779 = vmatpush.msra.mxu0 0.0
        %5780 = vmatpush.msra.mxu0 0.0
        %5781 = vmatpush.msra.mxu0 0.0
        %5782 = vmatpush.msra.mxu0 0.0
        %5783 = vmatpush.msra.mxu0 0.0
        %5784 = vmatpush.msra.mxu0 0.0
        %5785 = vmatpush.msra.mxu0 0.0
        %5786 = vmatpush.msra.mxu0 0.0
        %5787 = vmatpush.msra.mxu0 0.0
        %5788 = vmatpush.msra.mxu0 0.0
        %5789 = vmatpush.msra.mxu0 0.0
        %5790 = vmatpush.msra.mxu0 %v5774
        %5791 = vmatpush.msra.mxu0 %v5773
        %5792 = vmatpush.msra.mxu0 %v5772
        %5793 = vmatpush.msra.mxu0 %v5771
        %5794 = vmatmul.f32.gmra.mxu0 %v5776
        %v5795 = vpop.f32.mrf.mxu0
        %v5796 = vadd.f32 0.0, %v5795
        %5797 = vdwg.mxu0
        %v5798 = vadd.f32 %v5744, %v5796
        %v5799 = vld [vmem:[#allocation25] sm:$0x1]
        %v5801 = vperm.slane %v5799, 0
        %v5803 = vadd.f32 %v5798, %v5801
        %v5804 = vld [vmem:[%s51] sm:$0xff]
        %v5805 = vld [vmem:[%s51 + $0x8] sm:$0xff]
        %v5807 = vsel %vm4088, %v5804, 0
        %v5810 = vsel %vm4088, %v5805, 0
        %5812 = vmatpush.msra.mxu0 0.0
        %5813 = vmatpush.msra.mxu0 0.0
        %5814 = vmatpush.msra.mxu0 0.0
        %5815 = vmatpush.msra.mxu0 0.0
        %5816 = vmatpush.msra.mxu0 0.0
        %5817 = vmatpush.msra.mxu0 0.0
        %5818 = vmatpush.msra.mxu0 0.0
        %5819 = vmatpush.msra.mxu0 0.0
        %5820 = vmatpush.msra.mxu0 0.0
        %5821 = vmatpush.msra.mxu0 0.0
        %5822 = vmatpush.msra.mxu0 0.0
        %5823 = vmatpush.msra.mxu0 0.0
        %5824 = vmatpush.msra.mxu0 0.0
        %5825 = vmatpush.msra.mxu0 0.0
        %5826 = vmatpush.msra.mxu0 0.0
        %5827 = vmatpush.msra.mxu0 %v5803
        %5828 = vmatmul.f32.gmra.mxu0 %v5807
        %v5829 = vpop.f32.mrf.mxu0
        %v5830 = vadd.f32 0.0, %v5829
        %5831 = vmatmul.f32.gmra.mxu0 %v5810
        %v5832 = vpop.f32.mrf.mxu0
        %v5833 = vadd.f32 0.0, %v5832
        %5834 = vdwg.mxu0
        %v5835 = vld [vmem:[#allocation27] sm:$0xff]
        %v5836 = vld [vmem:[#allocation27 + $0x8] sm:$0xff]
        %v5837 = vld [vmem:[#allocation27 + $0x10] sm:$0xff]
        %v5838 = vld [vmem:[#allocation27 + $0x18] sm:$0xff]
        %v5839 = vld [vmem:[#allocation27 + $0x20] sm:$0xff]
        %v5840 = vld [vmem:[#allocation27 + $0x28] sm:$0xff]
        %v5841 = vld [vmem:[#allocation27 + $0x30] sm:$0xff]
        %v5842 = vld [vmem:[#allocation27 + $0x38] sm:$0xff]
        %s5843 = scalar_lea.vmem %s51, 16
        %v5844 = vld [vmem:[%s5843] sm:$0xff]
        %v5845 = vld [vmem:[%s5843 + $0x8] sm:$0xff]
        %v5847 = vsel %vm4088, %v5844, 0
        %v5850 = vsel %vm4088, %v5845, 0
        %5852 = vmatpush.msra.mxu0 0.0
        %5853 = vmatpush.msra.mxu0 0.0
        %5854 = vmatpush.msra.mxu0 0.0
        %5855 = vmatpush.msra.mxu0 0.0
        %5856 = vmatpush.msra.mxu0 0.0
        %5857 = vmatpush.msra.mxu0 0.0
        %5858 = vmatpush.msra.mxu0 0.0
        %5859 = vmatpush.msra.mxu0 0.0
        %5860 = vmatpush.msra.mxu0 0.0
        %5861 = vmatpush.msra.mxu0 0.0
        %5862 = vmatpush.msra.mxu0 0.0
        %5863 = vmatpush.msra.mxu0 0.0
        %5864 = vmatpush.msra.mxu0 0.0
        %5865 = vmatpush.msra.mxu0 0.0
        %5866 = vmatpush.msra.mxu0 0.0
        %5867 = vmatpush.msra.mxu0 %v5803
        %5868 = vmatmul.f32.gmra.mxu0 %v5847
        %v5869 = vpop.f32.mrf.mxu0
        %v5870 = vadd.f32 0.0, %v5869
        %5871 = vmatmul.f32.gmra.mxu0 %v5850
        %v5872 = vpop.f32.mrf.mxu0
        %v5873 = vadd.f32 0.0, %v5872
        %5874 = vdwg.mxu0
        %s5875 = scalar_lea.vmem [#allocation27], 64
        %v5876 = vld [vmem:[%s5875] sm:$0xff]
        %v5877 = vld [vmem:[%s5875 + $0x8] sm:$0xff]
        %v5878 = vld [vmem:[%s5875 + $0x10] sm:$0xff]
        %v5879 = vld [vmem:[%s5875 + $0x18] sm:$0xff]
        %v5880 = vld [vmem:[%s5875 + $0x20] sm:$0xff]
        %v5881 = vld [vmem:[%s5875 + $0x28] sm:$0xff]
        %v5882 = vld [vmem:[%s5875 + $0x30] sm:$0xff]
        %v5883 = vld [vmem:[%s5875 + $0x38] sm:$0xff]
        %v5885 = vsel %vm5061, %v5870, 0
        %v5888 = vsel %vm5061, %v5873, 0
        %5890 = vmatpush.msra.mxu0 0.0
        %5891 = vmatpush.msra.mxu0 0.0
        %5892 = vmatpush.msra.mxu0 0.0
        %5893 = vmatpush.msra.mxu0 0.0
        %5894 = vmatpush.msra.mxu0 0.0
        %5895 = vmatpush.msra.mxu0 0.0
        %5896 = vmatpush.msra.mxu0 0.0
        %5897 = vmatpush.msra.mxu0 0.0
        %5898 = vmatpush.msra.mxu0 %v5883
        %5899 = vmatpush.msra.mxu0 %v5882
        %5900 = vmatpush.msra.mxu0 %v5881
        %5901 = vmatpush.msra.mxu0 %v5880
        %5902 = vmatpush.msra.mxu0 %v5879
        %5903 = vmatpush.msra.mxu0 %v5878
        %5904 = vmatpush.msra.mxu0 %v5877
        %5905 = vmatpush.msra.mxu0 %v5876
        %5906 = vmatmul.f32.gmra.mxu0 %v5885
        %v5907 = vpop.f32.mrf.mxu0
        %v5908 = vadd.f32 0.0, %v5907
        %5909 = vmatmul.f32.gmra.mxu0 %v5888
        %v5910 = vpop.f32.mrf.mxu0
        %v5911 = vadd.f32 0.0, %v5910
        %5912 = vdwg.mxu0
        %v5914 = vsel %vm5061, %v5830, 0
        %v5917 = vsel %vm5061, %v5833, 0
        %5919 = vmatpush.msra.mxu0 0.0
        %5920 = vmatpush.msra.mxu0 0.0
        %5921 = vmatpush.msra.mxu0 0.0
        %5922 = vmatpush.msra.mxu0 0.0
        %5923 = vmatpush.msra.mxu0 0.0
        %5924 = vmatpush.msra.mxu0 0.0
        %5925 = vmatpush.msra.mxu0 0.0
        %5926 = vmatpush.msra.mxu0 0.0
        %5927 = vmatpush.msra.mxu0 %v5842
        %5928 = vmatpush.msra.mxu0 %v5841
        %5929 = vmatpush.msra.mxu0 %v5840
        %5930 = vmatpush.msra.mxu0 %v5839
        %5931 = vmatpush.msra.mxu0 %v5838
        %5932 = vmatpush.msra.mxu0 %v5837
        %5933 = vmatpush.msra.mxu0 %v5836
        %5934 = vmatpush.msra.mxu0 %v5835
        %5935 = vmatmul.f32.gmra.mxu0 %v5914
        %v5936 = vpop.f32.mrf.mxu0
        %v5937 = vadd.f32 %v5908, %v5936
        %5938 = vmatmul.f32.gmra.mxu0 %v5917
        %v5939 = vpop.f32.mrf.mxu0
        %v5940 = vadd.f32 %v5911, %v5939
        %5941 = vdwg.mxu0
        %s5942 = scalar_lea.vmem %s51, 32
        %v5943 = vld [vmem:[%s5942] sm:$0xff]
        %v5944 = vld [vmem:[%s5942 + $0x8] sm:$0xff]
        %v5946 = vsel %vm4088, %v5943, 0
        %v5949 = vsel %vm4088, %v5944, 0
        %5951 = vmatpush.msra.mxu0 0.0
        %5952 = vmatpush.msra.mxu0 0.0
        %5953 = vmatpush.msra.mxu0 0.0
        %5954 = vmatpush.msra.mxu0 0.0
        %5955 = vmatpush.msra.mxu0 0.0
        %5956 = vmatpush.msra.mxu0 0.0
        %5957 = vmatpush.msra.mxu0 0.0
        %5958 = vmatpush.msra.mxu0 0.0
        %5959 = vmatpush.msra.mxu0 0.0
        %5960 = vmatpush.msra.mxu0 0.0
        %5961 = vmatpush.msra.mxu0 0.0
        %5962 = vmatpush.msra.mxu0 0.0
        %5963 = vmatpush.msra.mxu0 0.0
        %5964 = vmatpush.msra.mxu0 0.0
        %5965 = vmatpush.msra.mxu0 0.0
        %5966 = vmatpush.msra.mxu0 %v5803
        %5967 = vmatmul.f32.gmra.mxu0 %v5946
        %v5968 = vpop.f32.mrf.mxu0
        %v5969 = vadd.f32 0.0, %v5968
        %5970 = vmatmul.f32.gmra.mxu0 %v5949
        %v5971 = vpop.f32.mrf.mxu0
        %v5972 = vadd.f32 0.0, %v5971
        %5973 = vdwg.mxu0
        %s5974 = scalar_lea.vmem [#allocation27], 128
        %v5975 = vld [vmem:[%s5974] sm:$0xff]
        %v5976 = vld [vmem:[%s5974 + $0x8] sm:$0xff]
        %v5977 = vld [vmem:[%s5974 + $0x10] sm:$0xff]
        %v5978 = vld [vmem:[%s5974 + $0x18] sm:$0xff]
        %v5979 = vld [vmem:[%s5974 + $0x20] sm:$0xff]
        %v5980 = vld [vmem:[%s5974 + $0x28] sm:$0xff]
        %v5981 = vld [vmem:[%s5974 + $0x30] sm:$0xff]
        %v5982 = vld [vmem:[%s5974 + $0x38] sm:$0xff]
        %v5984 = vsel %vm5061, %v5969, 0
        %v5987 = vsel %vm5061, %v5972, 0
        %5989 = vmatpush.msra.mxu0 0.0
        %5990 = vmatpush.msra.mxu0 0.0
        %5991 = vmatpush.msra.mxu0 0.0
        %5992 = vmatpush.msra.mxu0 0.0
        %5993 = vmatpush.msra.mxu0 0.0
        %5994 = vmatpush.msra.mxu0 0.0
        %5995 = vmatpush.msra.mxu0 0.0
        %5996 = vmatpush.msra.mxu0 0.0
        %5997 = vmatpush.msra.mxu0 %v5982
        %5998 = vmatpush.msra.mxu0 %v5981
        %5999 = vmatpush.msra.mxu0 %v5980
        %6000 = vmatpush.msra.mxu0 %v5979
        %6001 = vmatpush.msra.mxu0 %v5978
        %6002 = vmatpush.msra.mxu0 %v5977
        %6003 = vmatpush.msra.mxu0 %v5976
        %6004 = vmatpush.msra.mxu0 %v5975
        %6005 = vmatmul.f32.gmra.mxu0 %v5984
        %v6006 = vpop.f32.mrf.mxu0
        %v6007 = vadd.f32 0.0, %v6006
        %6008 = vmatmul.f32.gmra.mxu0 %v5987
        %v6009 = vpop.f32.mrf.mxu0
        %v6010 = vadd.f32 0.0, %v6009
        %6011 = vdwg.mxu0
        %v6012 = vadd.f32 %v5937, %v6007
        %v6013 = vadd.f32 %v5940, %v6010
        %s6014 = scalar_lea.vmem %s51, 48
        %v6015 = vld [vmem:[%s6014] sm:$0xff]
        %v6016 = vld [vmem:[%s6014 + $0x8] sm:$0xff]
        %v6018 = vsel %vm4088, %v6015, 0
        %v6021 = vsel %vm4088, %v6016, 0
        %6023 = vmatpush.msra.mxu0 0.0
        %6024 = vmatpush.msra.mxu0 0.0
        %6025 = vmatpush.msra.mxu0 0.0
        %6026 = vmatpush.msra.mxu0 0.0
        %6027 = vmatpush.msra.mxu0 0.0
        %6028 = vmatpush.msra.mxu0 0.0
        %6029 = vmatpush.msra.mxu0 0.0
        %6030 = vmatpush.msra.mxu0 0.0
        %6031 = vmatpush.msra.mxu0 0.0
        %6032 = vmatpush.msra.mxu0 0.0
        %6033 = vmatpush.msra.mxu0 0.0
        %6034 = vmatpush.msra.mxu0 0.0
        %6035 = vmatpush.msra.mxu0 0.0
        %6036 = vmatpush.msra.mxu0 0.0
        %6037 = vmatpush.msra.mxu0 0.0
        %6038 = vmatpush.msra.mxu0 %v5803
        %6039 = vmatmul.f32.gmra.mxu0 %v6018
        %v6040 = vpop.f32.mrf.mxu0
        %v6041 = vadd.f32 0.0, %v6040
        %6042 = vmatmul.f32.gmra.mxu0 %v6021
        %v6043 = vpop.f32.mrf.mxu0
        %v6044 = vadd.f32 0.0, %v6043
        %6045 = vdwg.mxu0
        %s6046 = scalar_lea.vmem [#allocation27], 192
        %v6047 = vld [vmem:[%s6046] sm:$0xff]
        %v6048 = vld [vmem:[%s6046 + $0x8] sm:$0xff]
        %v6049 = vld [vmem:[%s6046 + $0x10] sm:$0xff]
        %v6050 = vld [vmem:[%s6046 + $0x18] sm:$0xff]
        %v6051 = vld [vmem:[%s6046 + $0x20] sm:$0xff]
        %v6052 = vld [vmem:[%s6046 + $0x28] sm:$0xff]
        %v6053 = vld [vmem:[%s6046 + $0x30] sm:$0xff]
        %v6054 = vld [vmem:[%s6046 + $0x38] sm:$0xff]
        %v6056 = vsel %vm5061, %v6041, 0
        %v6059 = vsel %vm5061, %v6044, 0
        %6061 = vmatpush.msra.mxu0 0.0
        %6062 = vmatpush.msra.mxu0 0.0
        %6063 = vmatpush.msra.mxu0 0.0
        %6064 = vmatpush.msra.mxu0 0.0
        %6065 = vmatpush.msra.mxu0 0.0
        %6066 = vmatpush.msra.mxu0 0.0
        %6067 = vmatpush.msra.mxu0 0.0
        %6068 = vmatpush.msra.mxu0 0.0
        %6069 = vmatpush.msra.mxu0 %v6054
        %6070 = vmatpush.msra.mxu0 %v6053
        %6071 = vmatpush.msra.mxu0 %v6052
        %6072 = vmatpush.msra.mxu0 %v6051
        %6073 = vmatpush.msra.mxu0 %v6050
        %6074 = vmatpush.msra.mxu0 %v6049
        %6075 = vmatpush.msra.mxu0 %v6048
        %6076 = vmatpush.msra.mxu0 %v6047
        %6077 = vmatmul.f32.gmra.mxu0 %v6056
        %v6078 = vpop.f32.mrf.mxu0
        %v6079 = vadd.f32 0.0, %v6078
        %6080 = vmatmul.f32.gmra.mxu0 %v6059
        %v6081 = vpop.f32.mrf.mxu0
        %v6082 = vadd.f32 0.0, %v6081
        %6083 = vdwg.mxu0
        %v6084 = vadd.f32 %v6012, %v6079
        %v6085 = vadd.f32 %v6013, %v6082
        %v6086 = vld [vmem:[#allocation28] sm:$0x1]
        %v6088 = vperm.slane %v6086, 0
        %v6090 = vadd.f32 %v6084, %v6088
        %v6091 = vadd.f32 %v6085, %v6088
        %v6092 = vld [vmem:[%s57] sm:$0xff]
        %v6093 = vld [vmem:[%s57 + $0x8] sm:$0xff]
        %v6094 = vld [vmem:[%s57 + $0x10] sm:$0xff]
        %v6095 = vld [vmem:[%s57 + $0x18] sm:$0xff]
        %v6097 = vsel %vm2203, %v6092, 0
        %v6100 = vsel %vm2203, %v6093, 0
        %v6103 = vsel %vm2203, %v6094, 0
        %v6106 = vsel %vm2203, %v6095, 0
        %6108 = vmatpush.msra.mxu0 0.0
        %6109 = vmatpush.msra.mxu0 0.0
        %6110 = vmatpush.msra.mxu0 0.0
        %6111 = vmatpush.msra.mxu0 0.0
        %6112 = vmatpush.msra.mxu0 0.0
        %6113 = vmatpush.msra.mxu0 0.0
        %6114 = vmatpush.msra.mxu0 0.0
        %6115 = vmatpush.msra.mxu0 0.0
        %6116 = vmatpush.msra.mxu0 0.0
        %6117 = vmatpush.msra.mxu0 0.0
        %6118 = vmatpush.msra.mxu0 0.0
        %6119 = vmatpush.msra.mxu0 0.0
        %6120 = vmatpush.msra.mxu0 0.0
        %6121 = vmatpush.msra.mxu0 0.0
        %6122 = vmatpush.msra.mxu0 %v6091
        %6123 = vmatpush.msra.mxu0 %v6090
        %6124 = vmatmul.f32.gmra.mxu0 %v6097
        %v6125 = vpop.f32.mrf.mxu0
        %v6126 = vadd.f32 0.0, %v6125
        %6127 = vmatmul.f32.gmra.mxu0 %v6100
        %v6128 = vpop.f32.mrf.mxu0
        %v6129 = vadd.f32 0.0, %v6128
        %6130 = vmatmul.f32.gmra.mxu0 %v6103
        %v6131 = vpop.f32.mrf.mxu0
        %v6132 = vadd.f32 0.0, %v6131
        %6133 = vmatmul.f32.gmra.mxu0 %v6106
        %v6134 = vpop.f32.mrf.mxu0
        %v6135 = vadd.f32 0.0, %v6134
        %6136 = vdwg.mxu0
        %v6137 = vld [vmem:[%s59] sm:$0xff]
        %v6138 = vld [vmem:[%s59 + $0x8] sm:$0xff]
        %v6139 = vld [vmem:[%s59 + $0x10] sm:$0xff]
        %v6140 = vld [vmem:[%s59 + $0x18] sm:$0xff]
        %v6141 = vld [vmem:[%s59 + $0x20] sm:$0xff]
        %v6142 = vld [vmem:[%s59 + $0x28] sm:$0xff]
        %v6143 = vld [vmem:[%s59 + $0x30] sm:$0xff]
        %v6144 = vld [vmem:[%s59 + $0x38] sm:$0xff]
        %v6145 = vld [vmem:[%s59 + $0x40] sm:$0xff]
        %v6146 = vld [vmem:[%s59 + $0x48] sm:$0xff]
        %v6147 = vld [vmem:[%s59 + $0x50] sm:$0xff]
        %v6148 = vld [vmem:[%s59 + $0x58] sm:$0xff]
        %v6149 = vld [vmem:[%s59 + $0x60] sm:$0xff]
        %v6150 = vld [vmem:[%s59 + $0x68] sm:$0xff]
        %v6151 = vld [vmem:[%s59 + $0x70] sm:$0xff]
        %v6152 = vld [vmem:[%s59 + $0x78] sm:$0xff]
        %s6153 = scalar_lea.vmem %s57, 32
        %v6154 = vld [vmem:[%s6153] sm:$0xff]
        %v6155 = vld [vmem:[%s6153 + $0x8] sm:$0xff]
        %v6156 = vld [vmem:[%s6153 + $0x10] sm:$0xff]
        %v6157 = vld [vmem:[%s6153 + $0x18] sm:$0xff]
        %v6159 = vsel %vm2203, %v6154, 0
        %v6162 = vsel %vm2203, %v6155, 0
        %v6165 = vsel %vm2203, %v6156, 0
        %v6168 = vsel %vm2203, %v6157, 0
        %6170 = vmatpush.msra.mxu0 0.0
        %6171 = vmatpush.msra.mxu0 0.0
        %6172 = vmatpush.msra.mxu0 0.0
        %6173 = vmatpush.msra.mxu0 0.0
        %6174 = vmatpush.msra.mxu0 0.0
        %6175 = vmatpush.msra.mxu0 0.0
        %6176 = vmatpush.msra.mxu0 0.0
        %6177 = vmatpush.msra.mxu0 0.0
        %6178 = vmatpush.msra.mxu0 0.0
        %6179 = vmatpush.msra.mxu0 0.0
        %6180 = vmatpush.msra.mxu0 0.0
        %6181 = vmatpush.msra.mxu0 0.0
        %6182 = vmatpush.msra.mxu0 0.0
        %6183 = vmatpush.msra.mxu0 0.0
        %6184 = vmatpush.msra.mxu0 %v6091
        %6185 = vmatpush.msra.mxu0 %v6090
        %6186 = vmatmul.f32.gmra.mxu0 %v6159
        %v6187 = vpop.f32.mrf.mxu0
        %v6188 = vadd.f32 0.0, %v6187
        %6189 = vmatmul.f32.gmra.mxu0 %v6162
        %v6190 = vpop.f32.mrf.mxu0
        %v6191 = vadd.f32 0.0, %v6190
        %6192 = vmatmul.f32.gmra.mxu0 %v6165
        %v6193 = vpop.f32.mrf.mxu0
        %v6194 = vadd.f32 0.0, %v6193
        %6195 = vmatmul.f32.gmra.mxu0 %v6168
        %v6196 = vpop.f32.mrf.mxu0
        %v6197 = vadd.f32 0.0, %v6196
        %6198 = vdwg.mxu0
        %s6199 = scalar_lea.vmem %s59, 128
        %v6200 = vld [vmem:[%s6199] sm:$0xff]
        %v6201 = vld [vmem:[%s6199 + $0x8] sm:$0xff]
        %v6202 = vld [vmem:[%s6199 + $0x10] sm:$0xff]
        %v6203 = vld [vmem:[%s6199 + $0x18] sm:$0xff]
        %v6204 = vld [vmem:[%s6199 + $0x20] sm:$0xff]
        %v6205 = vld [vmem:[%s6199 + $0x28] sm:$0xff]
        %v6206 = vld [vmem:[%s6199 + $0x30] sm:$0xff]
        %v6207 = vld [vmem:[%s6199 + $0x38] sm:$0xff]
        %v6208 = vld [vmem:[%s6199 + $0x40] sm:$0xff]
        %v6209 = vld [vmem:[%s6199 + $0x48] sm:$0xff]
        %v6210 = vld [vmem:[%s6199 + $0x50] sm:$0xff]
        %v6211 = vld [vmem:[%s6199 + $0x58] sm:$0xff]
        %v6212 = vld [vmem:[%s6199 + $0x60] sm:$0xff]
        %v6213 = vld [vmem:[%s6199 + $0x68] sm:$0xff]
        %v6214 = vld [vmem:[%s6199 + $0x70] sm:$0xff]
        %v6215 = vld [vmem:[%s6199 + $0x78] sm:$0xff]
        %6216 = vmatpush.msra.mxu0 %v6215
        %6217 = vmatpush.msra.mxu0 %v6214
        %6218 = vmatpush.msra.mxu0 %v6213
        %6219 = vmatpush.msra.mxu0 %v6212
        %6220 = vmatpush.msra.mxu0 %v6211
        %6221 = vmatpush.msra.mxu0 %v6210
        %6222 = vmatpush.msra.mxu0 %v6209
        %6223 = vmatpush.msra.mxu0 %v6208
        %6224 = vmatpush.msra.mxu0 %v6207
        %6225 = vmatpush.msra.mxu0 %v6206
        %6226 = vmatpush.msra.mxu0 %v6205
        %6227 = vmatpush.msra.mxu0 %v6204
        %6228 = vmatpush.msra.mxu0 %v6203
        %6229 = vmatpush.msra.mxu0 %v6202
        %6230 = vmatpush.msra.mxu0 %v6201
        %6231 = vmatpush.msra.mxu0 %v6200
        %6232 = vmatmul.f32.gmra.mxu0 %v6188
        %v6233 = vpop.f32.mrf.mxu0
        %v6234 = vadd.f32 0.0, %v6233
        %6235 = vmatmul.f32.gmra.mxu0 %v6191
        %v6236 = vpop.f32.mrf.mxu0
        %v6237 = vadd.f32 0.0, %v6236
        %6238 = vmatmul.f32.gmra.mxu0 %v6194
        %v6239 = vpop.f32.mrf.mxu0
        %v6240 = vadd.f32 0.0, %v6239
        %6241 = vmatmul.f32.gmra.mxu0 %v6197
        %v6242 = vpop.f32.mrf.mxu0
        %v6243 = vadd.f32 0.0, %v6242
        %6244 = vdwg.mxu0
        %6245 = vmatpush.msra.mxu0 %v6152
        %6246 = vmatpush.msra.mxu0 %v6151
        %6247 = vmatpush.msra.mxu0 %v6150
        %6248 = vmatpush.msra.mxu0 %v6149
        %6249 = vmatpush.msra.mxu0 %v6148
        %6250 = vmatpush.msra.mxu0 %v6147
        %6251 = vmatpush.msra.mxu0 %v6146
        %6252 = vmatpush.msra.mxu0 %v6145
        %6253 = vmatpush.msra.mxu0 %v6144
        %6254 = vmatpush.msra.mxu0 %v6143
        %6255 = vmatpush.msra.mxu0 %v6142
        %6256 = vmatpush.msra.mxu0 %v6141
        %6257 = vmatpush.msra.mxu0 %v6140
        %6258 = vmatpush.msra.mxu0 %v6139
        %6259 = vmatpush.msra.mxu0 %v6138
        %6260 = vmatpush.msra.mxu0 %v6137
        %6261 = vmatmul.f32.gmra.mxu0 %v6126
        %v6262 = vpop.f32.mrf.mxu0
        %v6263 = vadd.f32 %v6234, %v6262
        %6264 = vmatmul.f32.gmra.mxu0 %v6129
        %v6265 = vpop.f32.mrf.mxu0
        %v6266 = vadd.f32 %v6237, %v6265
        %6267 = vmatmul.f32.gmra.mxu0 %v6132
        %v6268 = vpop.f32.mrf.mxu0
        %v6269 = vadd.f32 %v6240, %v6268
        %6270 = vmatmul.f32.gmra.mxu0 %v6135
        %v6271 = vpop.f32.mrf.mxu0
        %v6272 = vadd.f32 %v6243, %v6271
        %6273 = vdwg.mxu0
        %s6274 = scalar_lea.vmem %s57, 64
        %v6275 = vld [vmem:[%s6274] sm:$0xff]
        %v6276 = vld [vmem:[%s6274 + $0x8] sm:$0xff]
        %v6277 = vld [vmem:[%s6274 + $0x10] sm:$0xff]
        %v6278 = vld [vmem:[%s6274 + $0x18] sm:$0xff]
        %v6280 = vsel %vm2203, %v6275, 0
        %v6283 = vsel %vm2203, %v6276, 0
        %v6286 = vsel %vm2203, %v6277, 0
        %v6289 = vsel %vm2203, %v6278, 0
        %6291 = vmatpush.msra.mxu0 0.0
        %6292 = vmatpush.msra.mxu0 0.0
        %6293 = vmatpush.msra.mxu0 0.0
        %6294 = vmatpush.msra.mxu0 0.0
        %6295 = vmatpush.msra.mxu0 0.0
        %6296 = vmatpush.msra.mxu0 0.0
        %6297 = vmatpush.msra.mxu0 0.0
        %6298 = vmatpush.msra.mxu0 0.0
        %6299 = vmatpush.msra.mxu0 0.0
        %6300 = vmatpush.msra.mxu0 0.0
        %6301 = vmatpush.msra.mxu0 0.0
        %6302 = vmatpush.msra.mxu0 0.0
        %6303 = vmatpush.msra.mxu0 0.0
        %6304 = vmatpush.msra.mxu0 0.0
        %6305 = vmatpush.msra.mxu0 %v6091
        %6306 = vmatpush.msra.mxu0 %v6090
        %6307 = vmatmul.f32.gmra.mxu0 %v6280
        %v6308 = vpop.f32.mrf.mxu0
        %v6309 = vadd.f32 0.0, %v6308
        %6310 = vmatmul.f32.gmra.mxu0 %v6283
        %v6311 = vpop.f32.mrf.mxu0
        %v6312 = vadd.f32 0.0, %v6311
        %6313 = vmatmul.f32.gmra.mxu0 %v6286
        %v6314 = vpop.f32.mrf.mxu0
        %v6315 = vadd.f32 0.0, %v6314
        %6316 = vmatmul.f32.gmra.mxu0 %v6289
        %v6317 = vpop.f32.mrf.mxu0
        %v6318 = vadd.f32 0.0, %v6317
        %6319 = vdwg.mxu0
        %s6320 = scalar_lea.vmem %s59, 256
        %v6321 = vld [vmem:[%s6320] sm:$0xff]
        %v6322 = vld [vmem:[%s6320 + $0x8] sm:$0xff]
        %v6323 = vld [vmem:[%s6320 + $0x10] sm:$0xff]
        %v6324 = vld [vmem:[%s6320 + $0x18] sm:$0xff]
        %v6325 = vld [vmem:[%s6320 + $0x20] sm:$0xff]
        %v6326 = vld [vmem:[%s6320 + $0x28] sm:$0xff]
        %v6327 = vld [vmem:[%s6320 + $0x30] sm:$0xff]
        %v6328 = vld [vmem:[%s6320 + $0x38] sm:$0xff]
        %v6329 = vld [vmem:[%s6320 + $0x40] sm:$0xff]
        %v6330 = vld [vmem:[%s6320 + $0x48] sm:$0xff]
        %v6331 = vld [vmem:[%s6320 + $0x50] sm:$0xff]
        %v6332 = vld [vmem:[%s6320 + $0x58] sm:$0xff]
        %v6333 = vld [vmem:[%s6320 + $0x60] sm:$0xff]
        %v6334 = vld [vmem:[%s6320 + $0x68] sm:$0xff]
        %v6335 = vld [vmem:[%s6320 + $0x70] sm:$0xff]
        %v6336 = vld [vmem:[%s6320 + $0x78] sm:$0xff]
        %6337 = vmatpush.msra.mxu0 %v6336
        %6338 = vmatpush.msra.mxu0 %v6335
        %6339 = vmatpush.msra.mxu0 %v6334
        %6340 = vmatpush.msra.mxu0 %v6333
        %6341 = vmatpush.msra.mxu0 %v6332
        %6342 = vmatpush.msra.mxu0 %v6331
        %6343 = vmatpush.msra.mxu0 %v6330
        %6344 = vmatpush.msra.mxu0 %v6329
        %6345 = vmatpush.msra.mxu0 %v6328
        %6346 = vmatpush.msra.mxu0 %v6327
        %6347 = vmatpush.msra.mxu0 %v6326
        %6348 = vmatpush.msra.mxu0 %v6325
        %6349 = vmatpush.msra.mxu0 %v6324
        %6350 = vmatpush.msra.mxu0 %v6323
        %6351 = vmatpush.msra.mxu0 %v6322
        %6352 = vmatpush.msra.mxu0 %v6321
        %6353 = vmatmul.f32.gmra.mxu0 %v6309
        %v6354 = vpop.f32.mrf.mxu0
        %v6355 = vadd.f32 0.0, %v6354
        %6356 = vmatmul.f32.gmra.mxu0 %v6312
        %v6357 = vpop.f32.mrf.mxu0
        %v6358 = vadd.f32 0.0, %v6357
        %6359 = vmatmul.f32.gmra.mxu0 %v6315
        %v6360 = vpop.f32.mrf.mxu0
        %v6361 = vadd.f32 0.0, %v6360
        %6362 = vmatmul.f32.gmra.mxu0 %v6318
        %v6363 = vpop.f32.mrf.mxu0
        %v6364 = vadd.f32 0.0, %v6363
        %6365 = vdwg.mxu0
        %v6366 = vadd.f32 %v6263, %v6355
        %v6367 = vadd.f32 %v6266, %v6358
        %v6368 = vadd.f32 %v6269, %v6361
        %v6369 = vadd.f32 %v6272, %v6364
        %s6370 = scalar_lea.vmem %s57, 96
        %v6371 = vld [vmem:[%s6370] sm:$0xff]
        %v6372 = vld [vmem:[%s6370 + $0x8] sm:$0xff]
        %v6373 = vld [vmem:[%s6370 + $0x10] sm:$0xff]
        %v6374 = vld [vmem:[%s6370 + $0x18] sm:$0xff]
        %v6376 = vsel %vm2203, %v6371, 0
        %v6379 = vsel %vm2203, %v6372, 0
        %v6382 = vsel %vm2203, %v6373, 0
        %v6385 = vsel %vm2203, %v6374, 0
        %6387 = vmatpush.msra.mxu0 0.0
        %6388 = vmatpush.msra.mxu0 0.0
        %6389 = vmatpush.msra.mxu0 0.0
        %6390 = vmatpush.msra.mxu0 0.0
        %6391 = vmatpush.msra.mxu0 0.0
        %6392 = vmatpush.msra.mxu0 0.0
        %6393 = vmatpush.msra.mxu0 0.0
        %6394 = vmatpush.msra.mxu0 0.0
        %6395 = vmatpush.msra.mxu0 0.0
        %6396 = vmatpush.msra.mxu0 0.0
        %6397 = vmatpush.msra.mxu0 0.0
        %6398 = vmatpush.msra.mxu0 0.0
        %6399 = vmatpush.msra.mxu0 0.0
        %6400 = vmatpush.msra.mxu0 0.0
        %6401 = vmatpush.msra.mxu0 %v6091
        %6402 = vmatpush.msra.mxu0 %v6090
        %6403 = vmatmul.f32.gmra.mxu0 %v6376
        %v6404 = vpop.f32.mrf.mxu0
        %v6405 = vadd.f32 0.0, %v6404
        %6406 = vmatmul.f32.gmra.mxu0 %v6379
        %v6407 = vpop.f32.mrf.mxu0
        %v6408 = vadd.f32 0.0, %v6407
        %6409 = vmatmul.f32.gmra.mxu0 %v6382
        %v6410 = vpop.f32.mrf.mxu0
        %v6411 = vadd.f32 0.0, %v6410
        %6412 = vmatmul.f32.gmra.mxu0 %v6385
        %v6413 = vpop.f32.mrf.mxu0
        %v6414 = vadd.f32 0.0, %v6413
        %6415 = vdwg.mxu0
        %s6416 = scalar_lea.vmem %s59, 384
        %v6417 = vld [vmem:[%s6416] sm:$0xff]
        %v6418 = vld [vmem:[%s6416 + $0x8] sm:$0xff]
        %v6419 = vld [vmem:[%s6416 + $0x10] sm:$0xff]
        %v6420 = vld [vmem:[%s6416 + $0x18] sm:$0xff]
        %v6421 = vld [vmem:[%s6416 + $0x20] sm:$0xff]
        %v6422 = vld [vmem:[%s6416 + $0x28] sm:$0xff]
        %v6423 = vld [vmem:[%s6416 + $0x30] sm:$0xff]
        %v6424 = vld [vmem:[%s6416 + $0x38] sm:$0xff]
        %v6425 = vld [vmem:[%s6416 + $0x40] sm:$0xff]
        %v6426 = vld [vmem:[%s6416 + $0x48] sm:$0xff]
        %v6427 = vld [vmem:[%s6416 + $0x50] sm:$0xff]
        %v6428 = vld [vmem:[%s6416 + $0x58] sm:$0xff]
        %v6429 = vld [vmem:[%s6416 + $0x60] sm:$0xff]
        %v6430 = vld [vmem:[%s6416 + $0x68] sm:$0xff]
        %v6431 = vld [vmem:[%s6416 + $0x70] sm:$0xff]
        %v6432 = vld [vmem:[%s6416 + $0x78] sm:$0xff]
        %6433 = vmatpush.msra.mxu0 %v6432
        %6434 = vmatpush.msra.mxu0 %v6431
        %6435 = vmatpush.msra.mxu0 %v6430
        %6436 = vmatpush.msra.mxu0 %v6429
        %6437 = vmatpush.msra.mxu0 %v6428
        %6438 = vmatpush.msra.mxu0 %v6427
        %6439 = vmatpush.msra.mxu0 %v6426
        %6440 = vmatpush.msra.mxu0 %v6425
        %6441 = vmatpush.msra.mxu0 %v6424
        %6442 = vmatpush.msra.mxu0 %v6423
        %6443 = vmatpush.msra.mxu0 %v6422
        %6444 = vmatpush.msra.mxu0 %v6421
        %6445 = vmatpush.msra.mxu0 %v6420
        %6446 = vmatpush.msra.mxu0 %v6419
        %6447 = vmatpush.msra.mxu0 %v6418
        %6448 = vmatpush.msra.mxu0 %v6417
        %6449 = vmatmul.f32.gmra.mxu0 %v6405
        %v6450 = vpop.f32.mrf.mxu0
        %v6451 = vadd.f32 0.0, %v6450
        %6452 = vmatmul.f32.gmra.mxu0 %v6408
        %v6453 = vpop.f32.mrf.mxu0
        %v6454 = vadd.f32 0.0, %v6453
        %6455 = vmatmul.f32.gmra.mxu0 %v6411
        %v6456 = vpop.f32.mrf.mxu0
        %v6457 = vadd.f32 0.0, %v6456
        %6458 = vmatmul.f32.gmra.mxu0 %v6414
        %v6459 = vpop.f32.mrf.mxu0
        %v6460 = vadd.f32 0.0, %v6459
        %6461 = vdwg.mxu0
        %v6462 = vadd.f32 %v6366, %v6451
        %v6463 = vadd.f32 %v6367, %v6454
        %v6464 = vadd.f32 %v6368, %v6457
        %v6465 = vadd.f32 %v6369, %v6460
        %v6466 = vld [vmem:[#allocation30] sm:$0x1]
        %v6468 = vperm.slane %v6466, 0
        %v6470 = vadd.f32 %v6462, %v6468
        %v6471 = vadd.f32 %v6463, %v6468
        %v6472 = vadd.f32 %v6464, %v6468
        %v6473 = vadd.f32 %v6465, %v6468
        %6474 = vst.msk [vmem:[%s1252] sm:$0xff] %vm5061, %v6470
        %6475 = vst.msk [vmem:[%s1252 + $0x8] sm:$0xff] %vm5061, %v6471
        %6476 = vst.msk [vmem:[%s1252 + $0x10] sm:$0xff] %vm5061, %v6472
        %6477 = vst.msk [vmem:[%s1252 + $0x18] sm:$0xff] %vm5061, %v6473
        %p6478 = scmp.lt.s32.totalorder %s84, 1
        %s6479 = scalar_select %p6478, %s84, 1
        %s6480 = smul.addr %s6479, 4
        %s6481 = smul.addr %s6480, 8
        %s6482 = scalar_lea.vmem %s63, %s6481
        // Predicated region
        $region221: #{fused_forward.1} parent=143 // pred_check
          %p6483 = pneg %p758
        $region222: #{fused_forward.1} parent=143 // pred_check_branch
          %6485 = sbr.rel (%p6483) target = $region224
        $region223: #{fused_forward.1} parent=143 // pred_region
          _
        $region224: #{fused_forward.1} parent=143 // pred_fallthru
          _
      $region144: #{fused_forward.1} parent=5 // pred_fallthru
        _
      %p6486 = scmp.le.s32.totalorder 2, %s79
      // Predicated region
      $region225: #{fused_forward.1} parent=5 // pred_check
        %p6487 = pneg %p6486
      $region226: #{fused_forward.1} parent=5 // pred_check_branch
        %6489 = sbr.rel (%p6487) target = $region228
      $region227: #{fused_forward.1} parent=5 // pred_region
        %s6490 = ssub.s32 %s79, 2
        // Predicated region
        $region229: #{fused_forward.1} parent=227 // pred_check
          %p6491 = pneg %p764
        $region230: #{fused_forward.1} parent=227 // pred_check_branch
          %6493 = sbr.rel (%p6491) target = $region232
        $region231: #{fused_forward.1} parent=227 // pred_region
          %p6494 = scmp.lt.s32.totalorder %s85, 1
          %s6495 = scalar_select %p6494, %s85, 1
          %s6496 = smul.addr %s6495, 4
          %s6497 = smul.addr %s6496, 8
          %s6498 = scalar_lea.vmem %s63, %s6497
        $region232: #{fused_forward.1} parent=227 // pred_fallthru
          _
      $region228: #{fused_forward.1} parent=5 // pred_fallthru
        _
    $region6: #{fused_forward.1} parent=1 // loop_footer
      %s83 = sadd.s32 1, %s79
    $region7: #{fused_forward.1} parent=1 // loop_footer_branch
      %78 = sbr.rel target = $region3
    $region8: #{fused_forward.1} parent=1 // loop_exit
      _
    %6499 = vsyncpa [#allocation3], 1
    %s6500 = scalar_lea.sflag [#allocation3], 1
    %6501 = vsyncpa %s6500, 1
    %6502 = vsyncpa [#allocation5], 1
    %6503 = vsyncpa [#allocation8], 1
    %6504 = vsyncpa [#allocation11], 1
    %6505 = vsyncpa [#allocation14], 1
    %6506 = vsyncpa [#allocation17], 1
    %6507 = vsyncpa [#allocation20], 1
    %6508 = vsyncpa [#allocation23], 1
    %6509 = vsyncpa [#allocation26], 1
    %6510 = vsyncpa [#allocation29], 1

</llo_original>
